<compile_context>
chip_gen: v6e
topology: v6e:2x2x1
jax: 0.10.0
libtpu: 0.0.40
codegen_flags: <defaults>
</compile_context>

<pallas_src>
import functools

import jax
import jax.numpy as jnp
from jax.experimental import pallas as pl
from jax.experimental.pallas import tpu as pltpu


# ----------------------------------------------------------------------------
# Module-level configuration (matches the KE head cfg used below)
# ----------------------------------------------------------------------------
POOL_RES = 8
SPATIAL_SCALE = 1.0
NUM_KES = 8
NUM_MTY = 4


# ----------------------------------------------------------------------------
# Fused Pallas kernel: 4x(conv3x3+ReLU) + deconv2x2+ReLU + fused 1x1 heads
# One grid step == one ROI; every layer's activation stays in VMEM.
# ----------------------------------------------------------------------------
def _ke_head_fused_kernel(x_ref, wc_ref, bc_ref, wd_ref, bd_ref, wh_ref, bh_ref,
                          feat_ref, heads_ref, xpad_ref, *, n_conv, pool, ch):
    P = pool
    M = P * P

    # Zero the spatially padded scratch (keeps the 1-pixel zero border that
    # "same" 3x3 convolution needs), then drop the pooled input in the middle.
    xpad_ref[...] = jnp.zeros_like(xpad_ref)
    xpad_ref[1:P + 1, 1:P + 1, :] = x_ref[0]

    # ---- 4x conv3x3 + ReLU : 9 shifted accumulating matmuls per layer ------
    h = None
    for layer in range(n_conv):
        acc = None
        for t in range(9):
            ky, kx = divmod(t, 3)
            xs = xpad_ref[ky:ky + P, kx:kx + P, :].reshape(M, ch)   # (M, CH)
            part = jnp.dot(xs, wc_ref[layer, t],
                           preferred_element_type=jnp.float32)
            acc = part if acc is None else acc + part
        h = jnp.maximum(acc + bc_ref[layer], 0.0)                    # (M, CH)
        if layer + 1 < n_conv:
            xpad_ref[1:P + 1, 1:P + 1, :] = h.reshape(P, P, ch)

    # feature-extractor output x (returned by the module)
    feat_ref[0] = h

    # ---- ConvTranspose2d(k=2, s=2) + ReLU: one per-pixel matmul -------------
    # column layout: (ky*2+kx)*CH + cout  (the 4 sub-pixel outputs)
    yd = jnp.maximum(
        jnp.dot(h, wd_ref[...], preferred_element_type=jnp.float32) + bd_ref[...],
        0.0)                                                         # (M, 4*CH)

    # ---- three 1x1 heads (ke_x | ke_y | mty) fused into ONE block-diagonal
    #      lane-dense matmul; column layout: (ky*2+kx)*NHP + head_channel ----
    heads_ref[0] = (jnp.dot(yd, wh_ref[...],
                            preferred_element_type=jnp.float32) + bh_ref[...])


def ke_head_fused_call(x_pooled, prep):
    """x_pooled: (R, P, P, CH) channel-padded pooled features.
    Returns (feat (R, P*P, CH), heads (R, P*P, 4*NHP))."""
    R, P, _, CH = x_pooled.shape
    M = P * P
    NL = prep["wc"].shape[0]
    C4 = prep["wd"].shape[1]          # 4*CH
    HP = prep["wh"].shape[1]          # 4*NHP  (lane-dense: 128 here)

    kernel = functools.partial(_ke_head_fused_kernel, n_conv=NL, pool=P, ch=CH)

    feat, heads = pl.pallas_call(
        kernel,
        out_shape=(jax.ShapeDtypeStruct((R, M, CH), jnp.float32),
                   jax.ShapeDtypeStruct((R, M, HP), jnp.float32)),
        grid_spec=pltpu.PrefetchScalarGridSpec(
            num_scalar_prefetch=0,
            grid=(R,),
            in_specs=[
                pl.BlockSpec((1, P, P, CH), lambda r: (r, 0, 0, 0)),   # pooled x
                pl.BlockSpec((NL, 9, CH, CH), lambda r: (0, 0, 0, 0)),  # conv W
                pl.BlockSpec((NL, 1, CH), lambda r: (0, 0, 0)),         # conv b
                pl.BlockSpec((CH, C4), lambda r: (0, 0)),               # deconv W
                pl.BlockSpec((1, C4), lambda r: (0, 0)),                # deconv b
                pl.BlockSpec((C4, HP), lambda r: (0, 0)),               # heads W
                pl.BlockSpec((1, HP), lambda r: (0, 0)),                # heads b
            ],
            out_specs=[
                pl.BlockSpec((1, M, CH), lambda r: (r, 0, 0)),
                pl.BlockSpec((1, M, HP), lambda r: (r, 0, 0)),
            ],
            scratch_shapes=[pltpu.VMEM((P + 2, P + 2, CH), jnp.float32)],
        ),
        compiler_params=pltpu.CompilerParams(
            dimension_semantics=("parallel",)),     # v7x: split ROIs over 2 TCs
    )(x_pooled, prep["wc"], prep["bc"], prep["wd"], prep["bd"],
      prep["wh"], prep["bh"])
    return feat, heads


# ----------------------------------------------------------------------------
# JAX glue: ROIAlign (data-dependent bilinear gather -> plain JAX)
# ----------------------------------------------------------------------------
def _bilinear_sample(img, ys, xs):
    """img:(H,W,C), ys:(P,), xs:(P,)  ->  (P, P, C)."""
    H, W, _ = img.shape
    y = jnp.clip(ys, 0.0, H - 1.0)
    x = jnp.clip(xs, 0.0, W - 1.0)
    y0 = jnp.floor(y).astype(jnp.int32)
    x0 = jnp.floor(x).astype(jnp.int32)
    y1 = jnp.minimum(y0 + 1, H - 1)
    x1 = jnp.minimum(x0 + 1, W - 1)
    wy = (y - y0.astype(y.dtype))[:, None, None]
    wx = (x - x0.astype(x.dtype))[None, :, None]
    v00 = img[y0[:, None], x0[None, :], :]
    v01 = img[y0[:, None], x1[None, :], :]
    v10 = img[y1[:, None], x0[None, :], :]
    v11 = img[y1[:, None], x1[None, :], :]
    return (v00 * (1 - wy) * (1 - wx) + v01 * (1 - wy) * wx +
            v10 * wy * (1 - wx) + v11 * wy * wx)


def roi_align(feat_nhwc, boxes, batch_idx, out_size, spatial_scale):
    """Simplified ROIAlign (sampling_ratio=1, one sample per bin center).
    feat:(N,H,W,C), boxes:(R,4) xyxy, batch_idx:(R,) -> (R, out, out, C)."""
    # TODO(synk): data-dependent gather kept in plain JAX; maskrcnn_benchmark's
    # ROIAlign averages sampling_ratio^2 samples per bin (numerics differ).
    def one(box, img):
        x1, y1, x2, y2 = box * spatial_scale
        roi_w = jnp.maximum(x2 - x1, 1.0)
        roi_h = jnp.maximum(y2 - y1, 1.0)
        bw = roi_w / out_size
        bh = roi_h / out_size
        xs = x1 + (jnp.arange(out_size, dtype=jnp.float32) + 0.5) * bw
        ys = y1 + (jnp.arange(out_size, dtype=jnp.float32) + 0.5) * bh
        return _bilinear_sample(img, ys, xs)

    feats_per_roi = jnp.take(feat_nhwc, batch_idx, axis=0)
    return jax.vmap(one)(boxes, feats_per_roi)


# ----------------------------------------------------------------------------
# Parameters (deterministic, synthetic; PyTorch weight layouts)
# ----------------------------------------------------------------------------
def init_params(key, in_channels=16, hidden=32, num_kes=8, num_mty=4):
    ks = jax.random.split(key, 16)
    s = 0.05
    params = {}
    convs = []
    cin = in_channels
    for i in range(4):
        w = jax.random.normal(ks[i], (hidden, cin, 3, 3), jnp.float32) * s
        b = jnp.zeros((hidden,), jnp.float32)
        convs.append((w, b))
        cin = hidden
    params["convs"] = convs
    params["deconv"] = (
        jax.random.normal(ks[4], (hidden, hidden, 2, 2), jnp.float32) * s,
        jnp.zeros((hidden,), jnp.float32))
    params["ke_x"] = (
        jax.random.normal(ks[5], (num_kes, hidden, 1, 1), jnp.float32) * s,
        jnp.zeros((num_kes,), jnp.float32))
    params["ke_y"] = (
        jax.random.normal(ks[6], (num_kes, hidden, 1, 1), jnp.float32) * s,
        jnp.zeros((num_kes,), jnp.float32))
    params["mty"] = (
        jax.random.normal(ks[7], (num_mty, hidden, 1, 1), jnp.float32) * s,
        jnp.zeros((num_mty,), jnp.float32))
    return params


def prepare_params(params):
    """One-time (outside the jitted hot path) weight re-layout + padding into
    the matrices the fused kernel consumes."""
    convs = params["convs"]
    hidden = convs[0][0].shape[0]
    CH = hidden

    wc_list, bc_list = [], []
    for (w, b) in convs:
        cout, cin = w.shape[0], w.shape[1]
        assert cin <= CH and cout <= CH
        # (Cout,Cin,3,3) -> (9, Cin, Cout), tap t = ky*3 + kx
        wm = jnp.transpose(w, (2, 3, 1, 0)).reshape(9, cin, cout)
        wm = jnp.pad(wm, ((0, 0), (0, CH - cin), (0, CH - cout)))
        wc_list.append(wm)
        bc_list.append(jnp.pad(b, (0, CH - cout)).reshape(1, CH))
    wc = jnp.stack(wc_list)                 # (NL, 9, CH, CH)
    bc = jnp.stack(bc_list)                 # (NL, 1, CH)

    # ConvTranspose2d weight (Cin, Cout, 2, 2) -> (Cin, 4*Cout), col=(ky*2+kx)*CH+co
    wt, bt = params["deconv"]
    wd = jnp.transpose(wt, (0, 2, 3, 1)).reshape(CH, 4 * CH)
    bd = jnp.tile(bt, 4).reshape(1, 4 * CH)

    # Three 1x1 heads fused: Wh (CH, 8+8+4), then block-diagonal over the 4
    # deconv sub-pixel positions, padded per-block to 32 -> lane-dense 128 cols.
    def c1(w):  # (Cout, Cin, 1, 1) -> (Cin, Cout)
        return jnp.transpose(w[:, :, 0, 0], (1, 0))
    wx, bx = params["ke_x"]
    wy, by = params["ke_y"]
    wm_, bm = params["mty"]
    wh_small = jnp.concatenate([c1(wx), c1(wy), c1(wm_)], axis=1)   # (CH, NH)
    bh_small = jnp.concatenate([bx, by, bm])                        # (NH,)
    NH = wh_small.shape[1]
    NHP = ((NH + 31) // 32) * 32
    wh_pad = jnp.zeros((CH, NHP), jnp.float32).at[:, :NH].set(wh_small)
    bh_pad = jnp.zeros((NHP,), jnp.float32).at[:NH].set(bh_small)
    wh = jnp.zeros((4 * CH, 4 * NHP), jnp.float32)
    for s in range(4):
        wh = wh.at[s * CH:(s + 1) * CH, s * NHP:(s + 1) * NHP].set(wh_pad)
    bh = jnp.tile(bh_pad, 4).reshape(1, 4 * NHP)

    return {"wc": wc, "bc": bc, "wd": wd, "bd": bd, "wh": wh, "bh": bh}


# ----------------------------------------------------------------------------
# ROIKEHead forward (eval path)
# ----------------------------------------------------------------------------
def roi_ke_head_forward(prep, features, boxes, batch_idx):
    # features: list of NCHW tensors (single FPN level used here)
    feat_nhwc = jnp.transpose(features[0], (0, 2, 3, 1))   # NCHW -> NHWC
    CH = prep["wd"].shape[0]                                # hidden channels

    # ---- pooler -------------------------------------------------------------
    x = roi_align(feat_nhwc, boxes, batch_idx, POOL_RES, SPATIAL_SCALE)
    R, P, _, Cin = x.shape
    assert Cin <= CH
    x = jnp.pad(x, ((0, 0), (0, 0), (0, 0), (0, CH - Cin)))  # channel pad -> CH

    # ---- fused head (single pallas_call, VMEM-resident layers) --------------
    feat2d, heads2d = ke_head_fused_call(x, prep)

    H2, W2 = 2 * P, 2 * P
    NHP = prep["wh"].shape[1] // 4

    # feature extractor output x, back to PyTorch NCHW
    x_out = feat2d.reshape(R, P, P, CH).transpose(0, 3, 1, 2)

    # pixel shuffle of the (tiny) head output: (r,i,j,ky,kx,c) -> (r,2i+ky,2j+kx,c)
    heads = heads2d.reshape(R, P, P, 2, 2, NHP)
    heads = heads.transpose(0, 1, 3, 2, 4, 5).reshape(R, H2, W2, NHP)

    ke_x = heads[..., :NUM_KES].transpose(0, 3, 1, 2)
    ke_y = heads[..., NUM_KES:2 * NUM_KES].transpose(0, 3, 1, 2)
    mty = jnp.mean(heads[..., 2 * NUM_KES:2 * NUM_KES + NUM_MTY], axis=(1, 2))

    # TODO(synk): post_processor (BoxList decoding) and loss_evaluator
    # (training subsample + loss_ke/loss_mty) have no Pallas equivalent; the
    # eval-mode contract (x, predictions, {}, {}) is returned instead.
    return x_out, (ke_x, ke_y, mty), {}, {}


# ----------------------------------------------------------------------------
# Pure-JAX reference (same math, no Pallas) for a self-check
# ----------------------------------------------------------------------------
def _im2col_3x3(x_nhwc):
    N, H, W, C = x_nhwc.shape
    xp = jnp.pad(x_nhwc, ((0, 0), (1, 1), (1, 1), (0, 0)))
    cols = [xp[:, ky:ky + H, kx:kx + W, :] for ky in range(3) for kx in range(3)]
    return jnp.concatenate(cols, axis=-1).reshape(N * H * W, 9 * C)


def _reference_forward(raw, features, boxes, batch_idx):
    feat = jnp.transpose(features[0], (0, 2, 3, 1))
    x = roi_align(feat, boxes, batch_idx, POOL_RES, SPATIAL_SCALE)
    for w, b in raw["convs"]:
        R, H, W, C = x.shape
        wm = jnp.transpose(w, (2, 3, 1, 0)).reshape(9 * C, -1)
        x = jnp.maximum(_im2col_3x3(x) @ wm + b, 0.0).reshape(R, H, W, -1)
    R, H, W, C = x.shape
    wt, bt = raw["deconv"]
    cred = wt.shape[1]
    wd = jnp.transpose(wt, (0, 2, 3, 1)).reshape(C, 4 * cred)
    y = jnp.maximum(x.reshape(R * H * W, C) @ wd + jnp.tile(bt, 4), 0.0)
    y = (y.reshape(R, H, W, 2, 2, cred).transpose(0, 1, 3, 2, 4, 5)
          .reshape(R, 2 * H, 2 * W, cred))
    flat = y.reshape(-1, cred)
    def c1(w): return jnp.transpose(w[:, :, 0, 0], (1, 0))
    wx, bx = raw["ke_x"]; wy, by = raw["ke_y"]; wm_, bm = raw["mty"]
    ke_x = (flat @ c1(wx) + bx).reshape(R, 2 * H, 2 * W, -1)
    ke_y = (flat @ c1(wy) + by).reshape(R, 2 * H, 2 * W, -1)
    mty = jnp.mean((flat @ c1(wm_) + bm).reshape(R, 2 * H, 2 * W, -1), axis=(1, 2))
    return (jnp.transpose(x, (0, 3, 1, 2)),
            jnp.transpose(ke_x, (0, 3, 1, 2)),
            jnp.transpose(ke_y, (0, 3, 1, 2)), mty)


# ----------------------------------------------------------------------------
if __name__ == "__main__":
    key = jax.random.PRNGKey(0)
    k_feat, k_param = jax.random.split(key)

    # small synthetic shapes: batch=2, in_channels=16, 16x16 feature map, 4 ROIs
    N, Cin, H, W = 2, 16, 16, 16
    features = [jax.random.normal(k_feat, (N, Cin, H, W), jnp.float32)]
    boxes = jnp.array([[1.0, 1.0, 9.0, 9.0],
                       [4.0, 2.0, 14.0, 12.0],
                       [0.0, 0.0, 15.0, 15.0],
                       [3.0, 5.0, 11.0, 13.0]], jnp.float32)
    batch_idx = jnp.array([0, 0, 1, 1], jnp.int32)

    raw_params = init_params(k_param, in_channels=Cin, hidden=32,
                             num_kes=NUM_KES, num_mty=NUM_MTY)
    prep = prepare_params(raw_params)          # hoisted out of the hot path

    fwd = jax.jit(roi_ke_head_forward)
    x, (ke_x, ke_y, mty), loss_ke, loss_mty = fwd(prep, features, boxes, batch_idx)
    jax.block_until_ready((x, ke_x, ke_y, mty))

    assert x.shape == (4, 32, 8, 8)
    assert ke_x.shape == (4, NUM_KES, 16, 16)
    assert ke_y.shape == (4, NUM_KES, 16, 16)
    assert mty.shape == (4, NUM_MTY)
    assert loss_ke == {} and loss_mty == {}

    # numerical self-check against the pure-JAX reference
    rx, rkx, rky, rm = jax.jit(_reference_forward)(raw_params, features,
                                                   boxes, batch_idx)
    jax.block_until_ready((rx, rkx, rky, rm))
    assert bool(jnp.allclose(x, rx, rtol=1e-4, atol=1e-4))
    assert bool(jnp.allclose(ke_x, rkx, rtol=1e-4, atol=1e-4))
    assert bool(jnp.allclose(ke_y, rky, rtol=1e-4, atol=1e-4))
    assert bool(jnp.allclose(mty, rm, rtol=1e-4, atol=1e-4))

    print("KERNEL_OK")
</pallas_src>

<mosaic_0001>
module attributes {stable_mosaic.version = 11 : i64} {
  func.func @_ke_head_fused_kernel(%arg0: i32, %arg1: memref<1x8x8x32xf32, #tpu.memory_space<vmem>>, %arg2: memref<4x9x32x32xf32, #tpu.memory_space<vmem>>, %arg3: memref<4x1x32xf32, #tpu.memory_space<vmem>>, %arg4: memref<32x128xf32, #tpu.memory_space<vmem>>, %arg5: memref<1x128xf32, #tpu.memory_space<vmem>>, %arg6: memref<128x128xf32, #tpu.memory_space<vmem>>, %arg7: memref<1x128xf32, #tpu.memory_space<vmem>>, %arg8: memref<1x64x32xf32, #tpu.memory_space<vmem>>, %arg9: memref<1x64x128xf32, #tpu.memory_space<vmem>>, %arg10: memref<10x10x32xf32, #tpu.memory_space<vmem>>) attributes {dimension_semantics = [#tpu.dimension_semantics<parallel>], iteration_bounds = array<i64: 4>, scalar_prefetch = 0 : i64, scratch_operands = 1 : i64, tpu.core_type = #tpu.core_type<tc>, window_params = [{transform_indices = @transform_0, window_bounds = array<i64: 1, 8, 8, 32>}, {pipeline_mode = #tpu.pipeline_mode<synchronous>, transform_indices = @transform_1, window_bounds = array<i64: 4, 9, 32, 32>}, {pipeline_mode = #tpu.pipeline_mode<synchronous>, transform_indices = @transform_2, window_bounds = array<i64: 4, 1, 32>}, {pipeline_mode = #tpu.pipeline_mode<synchronous>, transform_indices = @transform_3, window_bounds = array<i64: 32, 128>}, {pipeline_mode = #tpu.pipeline_mode<synchronous>, transform_indices = @transform_4, window_bounds = array<i64: 1, 128>}, {pipeline_mode = #tpu.pipeline_mode<synchronous>, transform_indices = @transform_5, window_bounds = array<i64: 128, 128>}, {pipeline_mode = #tpu.pipeline_mode<synchronous>, transform_indices = @transform_6, window_bounds = array<i64: 1, 128>}, {transform_indices = @transform_7, window_bounds = array<i64: 1, 64, 32>}, {transform_indices = @transform_8, window_bounds = array<i64: 1, 64, 128>}]} {
    %cst = arith.constant 0.000000e+00 : f32
    %0 = vector.broadcast %cst : f32 to vector<10x10x32xf32>
    %c0 = arith.constant 0 : index
    %c0_0 = arith.constant 0 : index
    %c0_1 = arith.constant 0 : index
    %1 = vector.load %arg10[%c0, %c0_0, %c0_1] : memref<10x10x32xf32, #tpu.memory_space<vmem>>, vector<10x10x32xf32>
    tpu.vector_store %arg10[%c0, %c0_0, %c0_1], %0 {strides = array<i32>} : memref<10x10x32xf32, #tpu.memory_space<vmem>>, vector<10x10x32xf32>,
    %c0_2 = arith.constant 0 : index
    %c0_3 = arith.constant 0 : index
    %c0_4 = arith.constant 0 : index
    %c0_5 = arith.constant 0 : index
    %2 = vector.load %arg1[%c0_2, %c0_3, %c0_4, %c0_5] : memref<1x8x8x32xf32, #tpu.memory_space<vmem>>, vector<1x8x8x32xf32>
    %3 = vector.shape_cast %2 : vector<1x8x8x32xf32> to vector<8x8x32xf32>
    %c1 = arith.constant 1 : index
    %c1_6 = arith.constant 1 : index
    %c0_7 = arith.constant 0 : index
    %4 = vector.load %arg10[%c1, %c1_6, %c0_7] : memref<10x10x32xf32, #tpu.memory_space<vmem>>, vector<8x8x32xf32>
    tpu.vector_store %arg10[%c1, %c1_6, %c0_7], %3 {strides = array<i32>} : memref<10x10x32xf32, #tpu.memory_space<vmem>>, vector<8x8x32xf32>,
    %c0_8 = arith.constant 0 : index
    %c0_9 = arith.constant 0 : index
    %c0_10 = arith.constant 0 : index
    %5 = vector.load %arg10[%c0_8, %c0_9, %c0_10] : memref<10x10x32xf32, #tpu.memory_space<vmem>>, vector<8x8x32xf32>
    %6 = vector.shape_cast %5 : vector<8x8x32xf32> to vector<64x32xf32>
    %c0_11 = arith.constant 0 : index
    %c0_12 = arith.constant 0 : index
    %c0_13 = arith.constant 0 : index
    %c0_14 = arith.constant 0 : index
    %7 = vector.load %arg2[%c0_11, %c0_12, %c0_13, %c0_14] : memref<4x9x32x32xf32, #tpu.memory_space<vmem>>, vector<1x1x32x32xf32>
    %8 = vector.shape_cast %7 : vector<1x1x32x32xf32> to vector<32x32xf32>
    %cst_15 = arith.constant dense<0.000000e+00> : vector<64x32xf32>
    %9 = tpu.matmul %6, %8, %cst_15 {dimension_numbers = #tpu.dot_dimension_numbers<[1], [0], [0], [1], [0, 0, 1, 1], [], []>} : vector<64x32xf32>, vector<32x32xf32>, vector<64x32xf32> -> vector<64x32xf32>
    %c0_16 = arith.constant 0 : index
    %c1_17 = arith.constant 1 : index
    %c0_18 = arith.constant 0 : index
    %10 = vector.load %arg10[%c0_16, %c1_17, %c0_18] : memref<10x10x32xf32, #tpu.memory_space<vmem>>, vector<8x8x32xf32>
    %11 = vector.shape_cast %10 : vector<8x8x32xf32> to vector<64x32xf32>
    %c0_19 = arith.constant 0 : index
    %c1_20 = arith.constant 1 : index
    %c0_21 = arith.constant 0 : index
    %c0_22 = arith.constant 0 : index
    %12 = vector.load %arg2[%c0_19, %c1_20, %c0_21, %c0_22] : memref<4x9x32x32xf32, #tpu.memory_space<vmem>>, vector<1x1x32x32xf32>
    %13 = vector.shape_cast %12 : vector<1x1x32x32xf32> to vector<32x32xf32>
    %cst_23 = arith.constant dense<0.000000e+00> : vector<64x32xf32>
    %14 = tpu.matmul %11, %13, %cst_23 {dimension_numbers = #tpu.dot_dimension_numbers<[1], [0], [0], [1], [0, 0, 1, 1], [], []>} : vector<64x32xf32>, vector<32x32xf32>, vector<64x32xf32> -> vector<64x32xf32>
    %15 = arith.addf %9, %14 : vector<64x32xf32>
    %c0_24 = arith.constant 0 : index
    %c2 = arith.constant 2 : index
    %c0_25 = arith.constant 0 : index
    %16 = vector.load %arg10[%c0_24, %c2, %c0_25] : memref<10x10x32xf32, #tpu.memory_space<vmem>>, vector<8x8x32xf32>
    %17 = vector.shape_cast %16 : vector<8x8x32xf32> to vector<64x32xf32>
    %c0_26 = arith.constant 0 : index
    %c2_27 = arith.constant 2 : index
    %c0_28 = arith.constant 0 : index
    %c0_29 = arith.constant 0 : index
    %18 = vector.load %arg2[%c0_26, %c2_27, %c0_28, %c0_29] : memref<4x9x32x32xf32, #tpu.memory_space<vmem>>, vector<1x1x32x32xf32>
    %19 = vector.shape_cast %18 : vector<1x1x32x32xf32> to vector<32x32xf32>
    %cst_30 = arith.constant dense<0.000000e+00> : vector<64x32xf32>
    %20 = tpu.matmul %17, %19, %cst_30 {dimension_numbers = #tpu.dot_dimension_numbers<[1], [0], [0], [1], [0, 0, 1, 1], [], []>} : vector<64x32xf32>, vector<32x32xf32>, vector<64x32xf32> -> vector<64x32xf32>
    %21 = arith.addf %15, %20 : vector<64x32xf32>
    %c1_31 = arith.constant 1 : index
    %c0_32 = arith.constant 0 : index
    %c0_33 = arith.constant 0 : index
    %22 = vector.load %arg10[%c1_31, %c0_32, %c0_33] : memref<10x10x32xf32, #tpu.memory_space<vmem>>, vector<8x8x32xf32>
    %23 = vector.shape_cast %22 : vector<8x8x32xf32> to vector<64x32xf32>
    %c0_34 = arith.constant 0 : index
    %c3 = arith.constant 3 : index
    %c0_35 = arith.constant 0 : index
    %c0_36 = arith.constant 0 : index
    %24 = vector.load %arg2[%c0_34, %c3, %c0_35, %c0_36] : memref<4x9x32x32xf32, #tpu.memory_space<vmem>>, vector<1x1x32x32xf32>
    %25 = vector.shape_cast %24 : vector<1x1x32x32xf32> to vector<32x32xf32>
    %cst_37 = arith.constant dense<0.000000e+00> : vector<64x32xf32>
    %26 = tpu.matmul %23, %25, %cst_37 {dimension_numbers = #tpu.dot_dimension_numbers<[1], [0], [0], [1], [0, 0, 1, 1], [], []>} : vector<64x32xf32>, vector<32x32xf32>, vector<64x32xf32> -> vector<64x32xf32>
    %27 = arith.addf %21, %26 : vector<64x32xf32>
    %c1_38 = arith.constant 1 : index
    %c1_39 = arith.constant 1 : index
    %c0_40 = arith.constant 0 : index
    %28 = vector.load %arg10[%c1_38, %c1_39, %c0_40] : memref<10x10x32xf32, #tpu.memory_space<vmem>>, vector<8x8x32xf32>
    %29 = vector.shape_cast %28 : vector<8x8x32xf32> to vector<64x32xf32>
    %c0_41 = arith.constant 0 : index
    %c4 = arith.constant 4 : index
    %c0_42 = arith.constant 0 : index
    %c0_43 = arith.constant 0 : index
    %30 = vector.load %arg2[%c0_41, %c4, %c0_42, %c0_43] : memref<4x9x32x32xf32, #tpu.memory_space<vmem>>, vector<1x1x32x32xf32>
    %31 = vector.shape_cast %30 : vector<1x1x32x32xf32> to vector<32x32xf32>
    %cst_44 = arith.constant dense<0.000000e+00> : vector<64x32xf32>
    %32 = tpu.matmul %29, %31, %cst_44 {dimension_numbers = #tpu.dot_dimension_numbers<[1], [0], [0], [1], [0, 0, 1, 1], [], []>} : vector<64x32xf32>, vector<32x32xf32>, vector<64x32xf32> -> vector<64x32xf32>
    %33 = arith.addf %27, %32 : vector<64x32xf32>
    %c1_45 = arith.constant 1 : index
    %c2_46 = arith.constant 2 : index
    %c0_47 = arith.constant 0 : index
    %34 = vector.load %arg10[%c1_45, %c2_46, %c0_47] : memref<10x10x32xf32, #tpu.memory_space<vmem>>, vector<8x8x32xf32>
    %35 = vector.shape_cast %34 : vector<8x8x32xf32> to vector<64x32xf32>
    %c0_48 = arith.constant 0 : index
    %c5 = arith.constant 5 : index
    %c0_49 = arith.constant 0 : index
    %c0_50 = arith.constant 0 : index
    %36 = vector.load %arg2[%c0_48, %c5, %c0_49, %c0_50] : memref<4x9x32x32xf32, #tpu.memory_space<vmem>>, vector<1x1x32x32xf32>
    %37 = vector.shape_cast %36 : vector<1x1x32x32xf32> to vector<32x32xf32>
    %cst_51 = arith.constant dense<0.000000e+00> : vector<64x32xf32>
    %38 = tpu.matmul %35, %37, %cst_51 {dimension_numbers = #tpu.dot_dimension_numbers<[1], [0], [0], [1], [0, 0, 1, 1], [], []>} : vector<64x32xf32>, vector<32x32xf32>, vector<64x32xf32> -> vector<64x32xf32>
    %39 = arith.addf %33, %38 : vector<64x32xf32>
    %c2_52 = arith.constant 2 : index
    %c0_53 = arith.constant 0 : index
    %c0_54 = arith.constant 0 : index
    %40 = vector.load %arg10[%c2_52, %c0_53, %c0_54] : memref<10x10x32xf32, #tpu.memory_space<vmem>>, vector<8x8x32xf32>
    %41 = vector.shape_cast %40 : vector<8x8x32xf32> to vector<64x32xf32>
    %c0_55 = arith.constant 0 : index
    %c6 = arith.constant 6 : index
    %c0_56 = arith.constant 0 : index
    %c0_57 = arith.constant 0 : index
    %42 = vector.load %arg2[%c0_55, %c6, %c0_56, %c0_57] : memref<4x9x32x32xf32, #tpu.memory_space<vmem>>, vector<1x1x32x32xf32>
    %43 = vector.shape_cast %42 : vector<1x1x32x32xf32> to vector<32x32xf32>
    %cst_58 = arith.constant dense<0.000000e+00> : vector<64x32xf32>
    %44 = tpu.matmul %41, %43, %cst_58 {dimension_numbers = #tpu.dot_dimension_numbers<[1], [0], [0], [1], [0, 0, 1, 1], [], []>} : vector<64x32xf32>, vector<32x32xf32>, vector<64x32xf32> -> vector<64x32xf32>
    %45 = arith.addf %39, %44 : vector<64x32xf32>
    %c2_59 = arith.constant 2 : index
    %c1_60 = arith.constant 1 : index
    %c0_61 = arith.constant 0 : index
    %46 = vector.load %arg10[%c2_59, %c1_60, %c0_61] : memref<10x10x32xf32, #tpu.memory_space<vmem>>, vector<8x8x32xf32>
    %47 = vector.shape_cast %46 : vector<8x8x32xf32> to vector<64x32xf32>
    %c0_62 = arith.constant 0 : index
    %c7 = arith.constant 7 : index
    %c0_63 = arith.constant 0 : index
    %c0_64 = arith.constant 0 : index
    %48 = vector.load %arg2[%c0_62, %c7, %c0_63, %c0_64] : memref<4x9x32x32xf32, #tpu.memory_space<vmem>>, vector<1x1x32x32xf32>
    %49 = vector.shape_cast %48 : vector<1x1x32x32xf32> to vector<32x32xf32>
    %cst_65 = arith.constant dense<0.000000e+00> : vector<64x32xf32>
    %50 = tpu.matmul %47, %49, %cst_65 {dimension_numbers = #tpu.dot_dimension_numbers<[1], [0], [0], [1], [0, 0, 1, 1], [], []>} : vector<64x32xf32>, vector<32x32xf32>, vector<64x32xf32> -> vector<64x32xf32>
    %51 = arith.addf %45, %50 : vector<64x32xf32>
    %c2_66 = arith.constant 2 : index
    %c2_67 = arith.constant 2 : index
    %c0_68 = arith.constant 0 : index
    %52 = vector.load %arg10[%c2_66, %c2_67, %c0_68] : memref<10x10x32xf32, #tpu.memory_space<vmem>>, vector<8x8x32xf32>
    %53 = vector.shape_cast %52 : vector<8x8x32xf32> to vector<64x32xf32>
    %c0_69 = arith.constant 0 : index
    %c8 = arith.constant 8 : index
    %c0_70 = arith.constant 0 : index
    %c0_71 = arith.constant 0 : index
    %54 = vector.load %arg2[%c0_69, %c8, %c0_70, %c0_71] : memref<4x9x32x32xf32, #tpu.memory_space<vmem>>, vector<1x1x32x32xf32>
    %55 = vector.shape_cast %54 : vector<1x1x32x32xf32> to vector<32x32xf32>
    %cst_72 = arith.constant dense<0.000000e+00> : vector<64x32xf32>
    %56 = tpu.matmul %53, %55, %cst_72 {dimension_numbers = #tpu.dot_dimension_numbers<[1], [0], [0], [1], [0, 0, 1, 1], [], []>} : vector<64x32xf32>, vector<32x32xf32>, vector<64x32xf32> -> vector<64x32xf32>
    %57 = arith.addf %51, %56 : vector<64x32xf32>
    %c0_73 = arith.constant 0 : index
    %c0_74 = arith.constant 0 : index
    %c0_75 = arith.constant 0 : index
    %58 = vector.load %arg3[%c0_73, %c0_74, %c0_75] : memref<4x1x32xf32, #tpu.memory_space<vmem>>, vector<1x1x32xf32>
    %59 = vector.shape_cast %58 : vector<1x1x32xf32> to vector<1x32xf32>
    %60 = vector.broadcast %59 : vector<1x32xf32> to vector<64x32xf32>
    %61 = arith.addf %57, %60 : vector<64x32xf32>
    %cst_76 = arith.constant 0.000000e+00 : f32
    %62 = vector.broadcast %cst_76 : f32 to vector<64x32xf32>
    %63 = arith.maximumf %61, %62 : vector<64x32xf32>
    %64 = vector.shape_cast %63 : vector<64x32xf32> to vector<8x8x32xf32>
    %c1_77 = arith.constant 1 : index
    %c1_78 = arith.constant 1 : index
    %c0_79 = arith.constant 0 : index
    %65 = vector.load %arg10[%c1_77, %c1_78, %c0_79] : memref<10x10x32xf32, #tpu.memory_space<vmem>>, vector<8x8x32xf32>
    tpu.vector_store %arg10[%c1_77, %c1_78, %c0_79], %64 {strides = array<i32>} : memref<10x10x32xf32, #tpu.memory_space<vmem>>, vector<8x8x32xf32>,
    %c0_80 = arith.constant 0 : index
    %c0_81 = arith.constant 0 : index
    %c0_82 = arith.constant 0 : index
    %66 = vector.load %arg10[%c0_80, %c0_81, %c0_82] : memref<10x10x32xf32, #tpu.memory_space<vmem>>, vector<8x8x32xf32>
    %67 = vector.shape_cast %66 : vector<8x8x32xf32> to vector<64x32xf32>
    %c1_83 = arith.constant 1 : index
    %c0_84 = arith.constant 0 : index
    %c0_85 = arith.constant 0 : index
    %c0_86 = arith.constant 0 : index
    %68 = vector.load %arg2[%c1_83, %c0_84, %c0_85, %c0_86] : memref<4x9x32x32xf32, #tpu.memory_space<vmem>>, vector<1x1x32x32xf32>
    %69 = vector.shape_cast %68 : vector<1x1x32x32xf32> to vector<32x32xf32>
    %cst_87 = arith.constant dense<0.000000e+00> : vector<64x32xf32>
    %70 = tpu.matmul %67, %69, %cst_87 {dimension_numbers = #tpu.dot_dimension_numbers<[1], [0], [0], [1], [0, 0, 1, 1], [], []>} : vector<64x32xf32>, vector<32x32xf32>, vector<64x32xf32> -> vector<64x32xf32>
    %c0_88 = arith.constant 0 : index
    %c1_89 = arith.constant 1 : index
    %c0_90 = arith.constant 0 : index
    %71 = vector.load %arg10[%c0_88, %c1_89, %c0_90] : memref<10x10x32xf32, #tpu.memory_space<vmem>>, vector<8x8x32xf32>
    %72 = vector.shape_cast %71 : vector<8x8x32xf32> to vector<64x32xf32>
    %c1_91 = arith.constant 1 : index
    %c1_92 = arith.constant 1 : index
    %c0_93 = arith.constant 0 : index
    %c0_94 = arith.constant 0 : index
    %73 = vector.load %arg2[%c1_91, %c1_92, %c0_93, %c0_94] : memref<4x9x32x32xf32, #tpu.memory_space<vmem>>, vector<1x1x32x32xf32>
    %74 = vector.shape_cast %73 : vector<1x1x32x32xf32> to vector<32x32xf32>
    %cst_95 = arith.constant dense<0.000000e+00> : vector<64x32xf32>
    %75 = tpu.matmul %72, %74, %cst_95 {dimension_numbers = #tpu.dot_dimension_numbers<[1], [0], [0], [1], [0, 0, 1, 1], [], []>} : vector<64x32xf32>, vector<32x32xf32>, vector<64x32xf32> -> vector<64x32xf32>
    %76 = arith.addf %70, %75 : vector<64x32xf32>
    %c0_96 = arith.constant 0 : index
    %c2_97 = arith.constant 2 : index
    %c0_98 = arith.constant 0 : index
    %77 = vector.load %arg10[%c0_96, %c2_97, %c0_98] : memref<10x10x32xf32, #tpu.memory_space<vmem>>, vector<8x8x32xf32>
    %78 = vector.shape_cast %77 : vector<8x8x32xf32> to vector<64x32xf32>
    %c1_99 = arith.constant 1 : index
    %c2_100 = arith.constant 2 : index
    %c0_101 = arith.constant 0 : index
    %c0_102 = arith.constant 0 : index
    %79 = vector.load %arg2[%c1_99, %c2_100, %c0_101, %c0_102] : memref<4x9x32x32xf32, #tpu.memory_space<vmem>>, vector<1x1x32x32xf32>
    %80 = vector.shape_cast %79 : vector<1x1x32x32xf32> to vector<32x32xf32>
    %cst_103 = arith.constant dense<0.000000e+00> : vector<64x32xf32>
    %81 = tpu.matmul %78, %80, %cst_103 {dimension_numbers = #tpu.dot_dimension_numbers<[1], [0], [0], [1], [0, 0, 1, 1], [], []>} : vector<64x32xf32>, vector<32x32xf32>, vector<64x32xf32> -> vector<64x32xf32>
    %82 = arith.addf %76, %81 : vector<64x32xf32>
    %c1_104 = arith.constant 1 : index
    %c0_105 = arith.constant 0 : index
    %c0_106 = arith.constant 0 : index
    %83 = vector.load %arg10[%c1_104, %c0_105, %c0_106] : memref<10x10x32xf32, #tpu.memory_space<vmem>>, vector<8x8x32xf32>
    %84 = vector.shape_cast %83 : vector<8x8x32xf32> to vector<64x32xf32>
    %c1_107 = arith.constant 1 : index
    %c3_108 = arith.constant 3 : index
    %c0_109 = arith.constant 0 : index
    %c0_110 = arith.constant 0 : index
    %85 = vector.load %arg2[%c1_107, %c3_108, %c0_109, %c0_110] : memref<4x9x32x32xf32, #tpu.memory_space<vmem>>, vector<1x1x32x32xf32>
    %86 = vector.shape_cast %85 : vector<1x1x32x32xf32> to vector<32x32xf32>
    %cst_111 = arith.constant dense<0.000000e+00> : vector<64x32xf32>
    %87 = tpu.matmul %84, %86, %cst_111 {dimension_numbers = #tpu.dot_dimension_numbers<[1], [0], [0], [1], [0, 0, 1, 1], [], []>} : vector<64x32xf32>, vector<32x32xf32>, vector<64x32xf32> -> vector<64x32xf32>
    %88 = arith.addf %82, %87 : vector<64x32xf32>
    %c1_112 = arith.constant 1 : index
    %c1_113 = arith.constant 1 : index
    %c0_114 = arith.constant 0 : index
    %89 = vector.load %arg10[%c1_112, %c1_113, %c0_114] : memref<10x10x32xf32, #tpu.memory_space<vmem>>, vector<8x8x32xf32>
    %90 = vector.shape_cast %89 : vector<8x8x32xf32> to vector<64x32xf32>
    %c1_115 = arith.constant 1 : index
    %c4_116 = arith.constant 4 : index
    %c0_117 = arith.constant 0 : index
    %c0_118 = arith.constant 0 : index
    %91 = vector.load %arg2[%c1_115, %c4_116, %c0_117, %c0_118] : memref<4x9x32x32xf32, #tpu.memory_space<vmem>>, vector<1x1x32x32xf32>
    %92 = vector.shape_cast %91 : vector<1x1x32x32xf32> to vector<32x32xf32>
    %cst_119 = arith.constant dense<0.000000e+00> : vector<64x32xf32>
    %93 = tpu.matmul %90, %92, %cst_119 {dimension_numbers = #tpu.dot_dimension_numbers<[1], [0], [0], [1], [0, 0, 1, 1], [], []>} : vector<64x32xf32>, vector<32x32xf32>, vector<64x32xf32> -> vector<64x32xf32>
    %94 = arith.addf %88, %93 : vector<64x32xf32>
    %c1_120 = arith.constant 1 : index
    %c2_121 = arith.constant 2 : index
    %c0_122 = arith.constant 0 : index
    %95 = vector.load %arg10[%c1_120, %c2_121, %c0_122] : memref<10x10x32xf32, #tpu.memory_space<vmem>>, vector<8x8x32xf32>
    %96 = vector.shape_cast %95 : vector<8x8x32xf32> to vector<64x32xf32>
    %c1_123 = arith.constant 1 : index
    %c5_124 = arith.constant 5 : index
    %c0_125 = arith.constant 0 : index
    %c0_126 = arith.constant 0 : index
    %97 = vector.load %arg2[%c1_123, %c5_124, %c0_125, %c0_126] : memref<4x9x32x32xf32, #tpu.memory_space<vmem>>, vector<1x1x32x32xf32>
    %98 = vector.shape_cast %97 : vector<1x1x32x32xf32> to vector<32x32xf32>
    %cst_127 = arith.constant dense<0.000000e+00> : vector<64x32xf32>
    %99 = tpu.matmul %96, %98, %cst_127 {dimension_numbers = #tpu.dot_dimension_numbers<[1], [0], [0], [1], [0, 0, 1, 1], [], []>} : vector<64x32xf32>, vector<32x32xf32>, vector<64x32xf32> -> vector<64x32xf32>
    %100 = arith.addf %94, %99 : vector<64x32xf32>
    %c2_128 = arith.constant 2 : index
    %c0_129 = arith.constant 0 : index
    %c0_130 = arith.constant 0 : index
    %101 = vector.load %arg10[%c2_128, %c0_129, %c0_130] : memref<10x10x32xf32, #tpu.memory_space<vmem>>, vector<8x8x32xf32>
    %102 = vector.shape_cast %101 : vector<8x8x32xf32> to vector<64x32xf32>
    %c1_131 = arith.constant 1 : index
    %c6_132 = arith.constant 6 : index
    %c0_133 = arith.constant 0 : index
    %c0_134 = arith.constant 0 : index
    %103 = vector.load %arg2[%c1_131, %c6_132, %c0_133, %c0_134] : memref<4x9x32x32xf32, #tpu.memory_space<vmem>>, vector<1x1x32x32xf32>
    %104 = vector.shape_cast %103 : vector<1x1x32x32xf32> to vector<32x32xf32>
    %cst_135 = arith.constant dense<0.000000e+00> : vector<64x32xf32>
    %105 = tpu.matmul %102, %104, %cst_135 {dimension_numbers = #tpu.dot_dimension_numbers<[1], [0], [0], [1], [0, 0, 1, 1], [], []>} : vector<64x32xf32>, vector<32x32xf32>, vector<64x32xf32> -> vector<64x32xf32>
    %106 = arith.addf %100, %105 : vector<64x32xf32>
    %c2_136 = arith.constant 2 : index
    %c1_137 = arith.constant 1 : index
    %c0_138 = arith.constant 0 : index
    %107 = vector.load %arg10[%c2_136, %c1_137, %c0_138] : memref<10x10x32xf32, #tpu.memory_space<vmem>>, vector<8x8x32xf32>
    %108 = vector.shape_cast %107 : vector<8x8x32xf32> to vector<64x32xf32>
    %c1_139 = arith.constant 1 : index
    %c7_140 = arith.constant 7 : index
    %c0_141 = arith.constant 0 : index
    %c0_142 = arith.constant 0 : index
    %109 = vector.load %arg2[%c1_139, %c7_140, %c0_141, %c0_142] : memref<4x9x32x32xf32, #tpu.memory_space<vmem>>, vector<1x1x32x32xf32>
    %110 = vector.shape_cast %109 : vector<1x1x32x32xf32> to vector<32x32xf32>
    %cst_143 = arith.constant dense<0.000000e+00> : vector<64x32xf32>
    %111 = tpu.matmul %108, %110, %cst_143 {dimension_numbers = #tpu.dot_dimension_numbers<[1], [0], [0], [1], [0, 0, 1, 1], [], []>} : vector<64x32xf32>, vector<32x32xf32>, vector<64x32xf32> -> vector<64x32xf32>
    %112 = arith.addf %106, %111 : vector<64x32xf32>
    %c2_144 = arith.constant 2 : index
    %c2_145 = arith.constant 2 : index
    %c0_146 = arith.constant 0 : index
    %113 = vector.load %arg10[%c2_144, %c2_145, %c0_146] : memref<10x10x32xf32, #tpu.memory_space<vmem>>, vector<8x8x32xf32>
    %114 = vector.shape_cast %113 : vector<8x8x32xf32> to vector<64x32xf32>
    %c1_147 = arith.constant 1 : index
    %c8_148 = arith.constant 8 : index
    %c0_149 = arith.constant 0 : index
    %c0_150 = arith.constant 0 : index
    %115 = vector.load %arg2[%c1_147, %c8_148, %c0_149, %c0_150] : memref<4x9x32x32xf32, #tpu.memory_space<vmem>>, vector<1x1x32x32xf32>
    %116 = vector.shape_cast %115 : vector<1x1x32x32xf32> to vector<32x32xf32>
    %cst_151 = arith.constant dense<0.000000e+00> : vector<64x32xf32>
    %117 = tpu.matmul %114, %116, %cst_151 {dimension_numbers = #tpu.dot_dimension_numbers<[1], [0], [0], [1], [0, 0, 1, 1], [], []>} : vector<64x32xf32>, vector<32x32xf32>, vector<64x32xf32> -> vector<64x32xf32>
    %118 = arith.addf %112, %117 : vector<64x32xf32>
    %c1_152 = arith.constant 1 : index
    %c0_153 = arith.constant 0 : index
    %c0_154 = arith.constant 0 : index
    %119 = vector.load %arg3[%c1_152, %c0_153, %c0_154] : memref<4x1x32xf32, #tpu.memory_space<vmem>>, vector<1x1x32xf32>
    %120 = vector.shape_cast %119 : vector<1x1x32xf32> to vector<1x32xf32>
    %121 = vector.broadcast %120 : vector<1x32xf32> to vector<64x32xf32>
    %122 = arith.addf %118, %121 : vector<64x32xf32>
    %cst_155 = arith.constant 0.000000e+00 : f32
    %123 = vector.broadcast %cst_155 : f32 to vector<64x32xf32>
    %124 = arith.maximumf %122, %123 : vector<64x32xf32>
    %125 = vector.shape_cast %124 : vector<64x32xf32> to vector<8x8x32xf32>
    %c1_156 = arith.constant 1 : index
    %c1_157 = arith.constant 1 : index
    %c0_158 = arith.constant 0 : index
    %126 = vector.load %arg10[%c1_156, %c1_157, %c0_158] : memref<10x10x32xf32, #tpu.memory_space<vmem>>, vector<8x8x32xf32>
    tpu.vector_store %arg10[%c1_156, %c1_157, %c0_158], %125 {strides = array<i32>} : memref<10x10x32xf32, #tpu.memory_space<vmem>>, vector<8x8x32xf32>,
    %c0_159 = arith.constant 0 : index
    %c0_160 = arith.constant 0 : index
    %c0_161 = arith.constant 0 : index
    %127 = vector.load %arg10[%c0_159, %c0_160, %c0_161] : memref<10x10x32xf32, #tpu.memory_space<vmem>>, vector<8x8x32xf32>
    %128 = vector.shape_cast %127 : vector<8x8x32xf32> to vector<64x32xf32>
    %c2_162 = arith.constant 2 : index
    %c0_163 = arith.constant 0 : index
    %c0_164 = arith.constant 0 : index
    %c0_165 = arith.constant 0 : index
    %129 = vector.load %arg2[%c2_162, %c0_163, %c0_164, %c0_165] : memref<4x9x32x32xf32, #tpu.memory_space<vmem>>, vector<1x1x32x32xf32>
    %130 = vector.shape_cast %129 : vector<1x1x32x32xf32> to vector<32x32xf32>
    %cst_166 = arith.constant dense<0.000000e+00> : vector<64x32xf32>
    %131 = tpu.matmul %128, %130, %cst_166 {dimension_numbers = #tpu.dot_dimension_numbers<[1], [0], [0], [1], [0, 0, 1, 1], [], []>} : vector<64x32xf32>, vector<32x32xf32>, vector<64x32xf32> -> vector<64x32xf32>
    %c0_167 = arith.constant 0 : index
    %c1_168 = arith.constant 1 : index
    %c0_169 = arith.constant 0 : index
    %132 = vector.load %arg10[%c0_167, %c1_168, %c0_169] : memref<10x10x32xf32, #tpu.memory_space<vmem>>, vector<8x8x32xf32>
    %133 = vector.shape_cast %132 : vector<8x8x32xf32> to vector<64x32xf32>
    %c2_170 = arith.constant 2 : index
    %c1_171 = arith.constant 1 : index
    %c0_172 = arith.constant 0 : index
    %c0_173 = arith.constant 0 : index
    %134 = vector.load %arg2[%c2_170, %c1_171, %c0_172, %c0_173] : memref<4x9x32x32xf32, #tpu.memory_space<vmem>>, vector<1x1x32x32xf32>
    %135 = vector.shape_cast %134 : vector<1x1x32x32xf32> to vector<32x32xf32>
    %cst_174 = arith.constant dense<0.000000e+00> : vector<64x32xf32>
    %136 = tpu.matmul %133, %135, %cst_174 {dimension_numbers = #tpu.dot_dimension_numbers<[1], [0], [0], [1], [0, 0, 1, 1], [], []>} : vector<64x32xf32>, vector<32x32xf32>, vector<64x32xf32> -> vector<64x32xf32>
    %137 = arith.addf %131, %136 : vector<64x32xf32>
    %c0_175 = arith.constant 0 : index
    %c2_176 = arith.constant 2 : index
    %c0_177 = arith.constant 0 : index
    %138 = vector.load %arg10[%c0_175, %c2_176, %c0_177] : memref<10x10x32xf32, #tpu.memory_space<vmem>>, vector<8x8x32xf32>
    %139 = vector.shape_cast %138 : vector<8x8x32xf32> to vector<64x32xf32>
    %c2_178 = arith.constant 2 : index
    %c2_179 = arith.constant 2 : index
    %c0_180 = arith.constant 0 : index
    %c0_181 = arith.constant 0 : index
    %140 = vector.load %arg2[%c2_178, %c2_179, %c0_180, %c0_181] : memref<4x9x32x32xf32, #tpu.memory_space<vmem>>, vector<1x1x32x32xf32>
    %141 = vector.shape_cast %140 : vector<1x1x32x32xf32> to vector<32x32xf32>
    %cst_182 = arith.constant dense<0.000000e+00> : vector<64x32xf32>
    %142 = tpu.matmul %139, %141, %cst_182 {dimension_numbers = #tpu.dot_dimension_numbers<[1], [0], [0], [1], [0, 0, 1, 1], [], []>} : vector<64x32xf32>, vector<32x32xf32>, vector<64x32xf32> -> vector<64x32xf32>
    %143 = arith.addf %137, %142 : vector<64x32xf32>
    %c1_183 = arith.constant 1 : index
    %c0_184 = arith.constant 0 : index
    %c0_185 = arith.constant 0 : index
    %144 = vector.load %arg10[%c1_183, %c0_184, %c0_185] : memref<10x10x32xf32, #tpu.memory_space<vmem>>, vector<8x8x32xf32>
    %145 = vector.shape_cast %144 : vector<8x8x32xf32> to vector<64x32xf32>
    %c2_186 = arith.constant 2 : index
    %c3_187 = arith.constant 3 : index
    %c0_188 = arith.constant 0 : index
    %c0_189 = arith.constant 0 : index
    %146 = vector.load %arg2[%c2_186, %c3_187, %c0_188, %c0_189] : memref<4x9x32x32xf32, #tpu.memory_space<vmem>>, vector<1x1x32x32xf32>
    %147 = vector.shape_cast %146 : vector<1x1x32x32xf32> to vector<32x32xf32>
    %cst_190 = arith.constant dense<0.000000e+00> : vector<64x32xf32>
    %148 = tpu.matmul %145, %147, %cst_190 {dimension_numbers = #tpu.dot_dimension_numbers<[1], [0], [0], [1], [0, 0, 1, 1], [], []>} : vector<64x32xf32>, vector<32x32xf32>, vector<64x32xf32> -> vector<64x32xf32>
    %149 = arith.addf %143, %148 : vector<64x32xf32>
    %c1_191 = arith.constant 1 : index
    %c1_192 = arith.constant 1 : index
    %c0_193 = arith.constant 0 : index
    %150 = vector.load %arg10[%c1_191, %c1_192, %c0_193] : memref<10x10x32xf32, #tpu.memory_space<vmem>>, vector<8x8x32xf32>
    %151 = vector.shape_cast %150 : vector<8x8x32xf32> to vector<64x32xf32>
    %c2_194 = arith.constant 2 : index
    %c4_195 = arith.constant 4 : index
    %c0_196 = arith.constant 0 : index
    %c0_197 = arith.constant 0 : index
    %152 = vector.load %arg2[%c2_194, %c4_195, %c0_196, %c0_197] : memref<4x9x32x32xf32, #tpu.memory_space<vmem>>, vector<1x1x32x32xf32>
    %153 = vector.shape_cast %152 : vector<1x1x32x32xf32> to vector<32x32xf32>
    %cst_198 = arith.constant dense<0.000000e+00> : vector<64x32xf32>
    %154 = tpu.matmul %151, %153, %cst_198 {dimension_numbers = #tpu.dot_dimension_numbers<[1], [0], [0], [1], [0, 0, 1, 1], [], []>} : vector<64x32xf32>, vector<32x32xf32>, vector<64x32xf32> -> vector<64x32xf32>
    %155 = arith.addf %149, %154 : vector<64x32xf32>
    %c1_199 = arith.constant 1 : index
    %c2_200 = arith.constant 2 : index
    %c0_201 = arith.constant 0 : index
    %156 = vector.load %arg10[%c1_199, %c2_200, %c0_201] : memref<10x10x32xf32, #tpu.memory_space<vmem>>, vector<8x8x32xf32>
    %157 = vector.shape_cast %156 : vector<8x8x32xf32> to vector<64x32xf32>
    %c2_202 = arith.constant 2 : index
    %c5_203 = arith.constant 5 : index
    %c0_204 = arith.constant 0 : index
    %c0_205 = arith.constant 0 : index
    %158 = vector.load %arg2[%c2_202, %c5_203, %c0_204, %c0_205] : memref<4x9x32x32xf32, #tpu.memory_space<vmem>>, vector<1x1x32x32xf32>
    %159 = vector.shape_cast %158 : vector<1x1x32x32xf32> to vector<32x32xf32>
    %cst_206 = arith.constant dense<0.000000e+00> : vector<64x32xf32>
    %160 = tpu.matmul %157, %159, %cst_206 {dimension_numbers = #tpu.dot_dimension_numbers<[1], [0], [0], [1], [0, 0, 1, 1], [], []>} : vector<64x32xf32>, vector<32x32xf32>, vector<64x32xf32> -> vector<64x32xf32>
    %161 = arith.addf %155, %160 : vector<64x32xf32>
    %c2_207 = arith.constant 2 : index
    %c0_208 = arith.constant 0 : index
    %c0_209 = arith.constant 0 : index
    %162 = vector.load %arg10[%c2_207, %c0_208, %c0_209] : memref<10x10x32xf32, #tpu.memory_space<vmem>>, vector<8x8x32xf32>
    %163 = vector.shape_cast %162 : vector<8x8x32xf32> to vector<64x32xf32>
    %c2_210 = arith.constant 2 : index
    %c6_211 = arith.constant 6 : index
    %c0_212 = arith.constant 0 : index
    %c0_213 = arith.constant 0 : index
    %164 = vector.load %arg2[%c2_210, %c6_211, %c0_212, %c0_213] : memref<4x9x32x32xf32, #tpu.memory_space<vmem>>, vector<1x1x32x32xf32>
    %165 = vector.shape_cast %164 : vector<1x1x32x32xf32> to vector<32x32xf32>
    %cst_214 = arith.constant dense<0.000000e+00> : vector<64x32xf32>
    %166 = tpu.matmul %163, %165, %cst_214 {dimension_numbers = #tpu.dot_dimension_numbers<[1], [0], [0], [1], [0, 0, 1, 1], [], []>} : vector<64x32xf32>, vector<32x32xf32>, vector<64x32xf32> -> vector<64x32xf32>
    %167 = arith.addf %161, %166 : vector<64x32xf32>
    %c2_215 = arith.constant 2 : index
    %c1_216 = arith.constant 1 : index
    %c0_217 = arith.constant 0 : index
    %168 = vector.load %arg10[%c2_215, %c1_216, %c0_217] : memref<10x10x32xf32, #tpu.memory_space<vmem>>, vector<8x8x32xf32>
    %169 = vector.shape_cast %168 : vector<8x8x32xf32> to vector<64x32xf32>
    %c2_218 = arith.constant 2 : index
    %c7_219 = arith.constant 7 : index
    %c0_220 = arith.constant 0 : index
    %c0_221 = arith.constant 0 : index
    %170 = vector.load %arg2[%c2_218, %c7_219, %c0_220, %c0_221] : memref<4x9x32x32xf32, #tpu.memory_space<vmem>>, vector<1x1x32x32xf32>
    %171 = vector.shape_cast %170 : vector<1x1x32x32xf32> to vector<32x32xf32>
    %cst_222 = arith.constant dense<0.000000e+00> : vector<64x32xf32>
    %172 = tpu.matmul %169, %171, %cst_222 {dimension_numbers = #tpu.dot_dimension_numbers<[1], [0], [0], [1], [0, 0, 1, 1], [], []>} : vector<64x32xf32>, vector<32x32xf32>, vector<64x32xf32> -> vector<64x32xf32>
    %173 = arith.addf %167, %172 : vector<64x32xf32>
    %c2_223 = arith.constant 2 : index
    %c2_224 = arith.constant 2 : index
    %c0_225 = arith.constant 0 : index
    %174 = vector.load %arg10[%c2_223, %c2_224, %c0_225] : memref<10x10x32xf32, #tpu.memory_space<vmem>>, vector<8x8x32xf32>
    %175 = vector.shape_cast %174 : vector<8x8x32xf32> to vector<64x32xf32>
    %c2_226 = arith.constant 2 : index
    %c8_227 = arith.constant 8 : index
    %c0_228 = arith.constant 0 : index
    %c0_229 = arith.constant 0 : index
    %176 = vector.load %arg2[%c2_226, %c8_227, %c0_228, %c0_229] : memref<4x9x32x32xf32, #tpu.memory_space<vmem>>, vector<1x1x32x32xf32>
    %177 = vector.shape_cast %176 : vector<1x1x32x32xf32> to vector<32x32xf32>
    %cst_230 = arith.constant dense<0.000000e+00> : vector<64x32xf32>
    %178 = tpu.matmul %175, %177, %cst_230 {dimension_numbers = #tpu.dot_dimension_numbers<[1], [0], [0], [1], [0, 0, 1, 1], [], []>} : vector<64x32xf32>, vector<32x32xf32>, vector<64x32xf32> -> vector<64x32xf32>
    %179 = arith.addf %173, %178 : vector<64x32xf32>
    %c2_231 = arith.constant 2 : index
    %c0_232 = arith.constant 0 : index
    %c0_233 = arith.constant 0 : index
    %180 = vector.load %arg3[%c2_231, %c0_232, %c0_233] : memref<4x1x32xf32, #tpu.memory_space<vmem>>, vector<1x1x32xf32>
    %181 = vector.shape_cast %180 : vector<1x1x32xf32> to vector<1x32xf32>
    %182 = vector.broadcast %181 : vector<1x32xf32> to vector<64x32xf32>
    %183 = arith.addf %179, %182 : vector<64x32xf32>
    %cst_234 = arith.constant 0.000000e+00 : f32
    %184 = vector.broadcast %cst_234 : f32 to vector<64x32xf32>
    %185 = arith.maximumf %183, %184 : vector<64x32xf32>
    %186 = vector.shape_cast %185 : vector<64x32xf32> to vector<8x8x32xf32>
    %c1_235 = arith.constant 1 : index
    %c1_236 = arith.constant 1 : index
    %c0_237 = arith.constant 0 : index
    %187 = vector.load %arg10[%c1_235, %c1_236, %c0_237] : memref<10x10x32xf32, #tpu.memory_space<vmem>>, vector<8x8x32xf32>
    tpu.vector_store %arg10[%c1_235, %c1_236, %c0_237], %186 {strides = array<i32>} : memref<10x10x32xf32, #tpu.memory_space<vmem>>, vector<8x8x32xf32>,
    %c0_238 = arith.constant 0 : index
    %c0_239 = arith.constant 0 : index
    %c0_240 = arith.constant 0 : index
    %188 = vector.load %arg10[%c0_238, %c0_239, %c0_240] : memref<10x10x32xf32, #tpu.memory_space<vmem>>, vector<8x8x32xf32>
    %189 = vector.shape_cast %188 : vector<8x8x32xf32> to vector<64x32xf32>
    %c3_241 = arith.constant 3 : index
    %c0_242 = arith.constant 0 : index
    %c0_243 = arith.constant 0 : index
    %c0_244 = arith.constant 0 : index
    %190 = vector.load %arg2[%c3_241, %c0_242, %c0_243, %c0_244] : memref<4x9x32x32xf32, #tpu.memory_space<vmem>>, vector<1x1x32x32xf32>
    %191 = vector.shape_cast %190 : vector<1x1x32x32xf32> to vector<32x32xf32>
    %cst_245 = arith.constant dense<0.000000e+00> : vector<64x32xf32>
    %192 = tpu.matmul %189, %191, %cst_245 {dimension_numbers = #tpu.dot_dimension_numbers<[1], [0], [0], [1], [0, 0, 1, 1], [], []>} : vector<64x32xf32>, vector<32x32xf32>, vector<64x32xf32> -> vector<64x32xf32>
    %c0_246 = arith.constant 0 : index
    %c1_247 = arith.constant 1 : index
    %c0_248 = arith.constant 0 : index
    %193 = vector.load %arg10[%c0_246, %c1_247, %c0_248] : memref<10x10x32xf32, #tpu.memory_space<vmem>>, vector<8x8x32xf32>
    %194 = vector.shape_cast %193 : vector<8x8x32xf32> to vector<64x32xf32>
    %c3_249 = arith.constant 3 : index
    %c1_250 = arith.constant 1 : index
    %c0_251 = arith.constant 0 : index
    %c0_252 = arith.constant 0 : index
    %195 = vector.load %arg2[%c3_249, %c1_250, %c0_251, %c0_252] : memref<4x9x32x32xf32, #tpu.memory_space<vmem>>, vector<1x1x32x32xf32>
    %196 = vector.shape_cast %195 : vector<1x1x32x32xf32> to vector<32x32xf32>
    %cst_253 = arith.constant dense<0.000000e+00> : vector<64x32xf32>
    %197 = tpu.matmul %194, %196, %cst_253 {dimension_numbers = #tpu.dot_dimension_numbers<[1], [0], [0], [1], [0, 0, 1, 1], [], []>} : vector<64x32xf32>, vector<32x32xf32>, vector<64x32xf32> -> vector<64x32xf32>
    %198 = arith.addf %192, %197 : vector<64x32xf32>
    %c0_254 = arith.constant 0 : index
    %c2_255 = arith.constant 2 : index
    %c0_256 = arith.constant 0 : index
    %199 = vector.load %arg10[%c0_254, %c2_255, %c0_256] : memref<10x10x32xf32, #tpu.memory_space<vmem>>, vector<8x8x32xf32>
    %200 = vector.shape_cast %199 : vector<8x8x32xf32> to vector<64x32xf32>
    %c3_257 = arith.constant 3 : index
    %c2_258 = arith.constant 2 : index
    %c0_259 = arith.constant 0 : index
    %c0_260 = arith.constant 0 : index
    %201 = vector.load %arg2[%c3_257, %c2_258, %c0_259, %c0_260] : memref<4x9x32x32xf32, #tpu.memory_space<vmem>>, vector<1x1x32x32xf32>
    %202 = vector.shape_cast %201 : vector<1x1x32x32xf32> to vector<32x32xf32>
    %cst_261 = arith.constant dense<0.000000e+00> : vector<64x32xf32>
    %203 = tpu.matmul %200, %202, %cst_261 {dimension_numbers = #tpu.dot_dimension_numbers<[1], [0], [0], [1], [0, 0, 1, 1], [], []>} : vector<64x32xf32>, vector<32x32xf32>, vector<64x32xf32> -> vector<64x32xf32>
    %204 = arith.addf %198, %203 : vector<64x32xf32>
    %c1_262 = arith.constant 1 : index
    %c0_263 = arith.constant 0 : index
    %c0_264 = arith.constant 0 : index
    %205 = vector.load %arg10[%c1_262, %c0_263, %c0_264] : memref<10x10x32xf32, #tpu.memory_space<vmem>>, vector<8x8x32xf32>
    %206 = vector.shape_cast %205 : vector<8x8x32xf32> to vector<64x32xf32>
    %c3_265 = arith.constant 3 : index
    %c3_266 = arith.constant 3 : index
    %c0_267 = arith.constant 0 : index
    %c0_268 = arith.constant 0 : index
    %207 = vector.load %arg2[%c3_265, %c3_266, %c0_267, %c0_268] : memref<4x9x32x32xf32, #tpu.memory_space<vmem>>, vector<1x1x32x32xf32>
    %208 = vector.shape_cast %207 : vector<1x1x32x32xf32> to vector<32x32xf32>
    %cst_269 = arith.constant dense<0.000000e+00> : vector<64x32xf32>
    %209 = tpu.matmul %206, %208, %cst_269 {dimension_numbers = #tpu.dot_dimension_numbers<[1], [0], [0], [1], [0, 0, 1, 1], [], []>} : vector<64x32xf32>, vector<32x32xf32>, vector<64x32xf32> -> vector<64x32xf32>
    %210 = arith.addf %204, %209 : vector<64x32xf32>
    %c1_270 = arith.constant 1 : index
    %c1_271 = arith.constant 1 : index
    %c0_272 = arith.constant 0 : index
    %211 = vector.load %arg10[%c1_270, %c1_271, %c0_272] : memref<10x10x32xf32, #tpu.memory_space<vmem>>, vector<8x8x32xf32>
    %212 = vector.shape_cast %211 : vector<8x8x32xf32> to vector<64x32xf32>
    %c3_273 = arith.constant 3 : index
    %c4_274 = arith.constant 4 : index
    %c0_275 = arith.constant 0 : index
    %c0_276 = arith.constant 0 : index
    %213 = vector.load %arg2[%c3_273, %c4_274, %c0_275, %c0_276] : memref<4x9x32x32xf32, #tpu.memory_space<vmem>>, vector<1x1x32x32xf32>
    %214 = vector.shape_cast %213 : vector<1x1x32x32xf32> to vector<32x32xf32>
    %cst_277 = arith.constant dense<0.000000e+00> : vector<64x32xf32>
    %215 = tpu.matmul %212, %214, %cst_277 {dimension_numbers = #tpu.dot_dimension_numbers<[1], [0], [0], [1], [0, 0, 1, 1], [], []>} : vector<64x32xf32>, vector<32x32xf32>, vector<64x32xf32> -> vector<64x32xf32>
    %216 = arith.addf %210, %215 : vector<64x32xf32>
    %c1_278 = arith.constant 1 : index
    %c2_279 = arith.constant 2 : index
    %c0_280 = arith.constant 0 : index
    %217 = vector.load %arg10[%c1_278, %c2_279, %c0_280] : memref<10x10x32xf32, #tpu.memory_space<vmem>>, vector<8x8x32xf32>
    %218 = vector.shape_cast %217 : vector<8x8x32xf32> to vector<64x32xf32>
    %c3_281 = arith.constant 3 : index
    %c5_282 = arith.constant 5 : index
    %c0_283 = arith.constant 0 : index
    %c0_284 = arith.constant 0 : index
    %219 = vector.load %arg2[%c3_281, %c5_282, %c0_283, %c0_284] : memref<4x9x32x32xf32, #tpu.memory_space<vmem>>, vector<1x1x32x32xf32>
    %220 = vector.shape_cast %219 : vector<1x1x32x32xf32> to vector<32x32xf32>
    %cst_285 = arith.constant dense<0.000000e+00> : vector<64x32xf32>
    %221 = tpu.matmul %218, %220, %cst_285 {dimension_numbers = #tpu.dot_dimension_numbers<[1], [0], [0], [1], [0, 0, 1, 1], [], []>} : vector<64x32xf32>, vector<32x32xf32>, vector<64x32xf32> -> vector<64x32xf32>
    %222 = arith.addf %216, %221 : vector<64x32xf32>
    %c2_286 = arith.constant 2 : index
    %c0_287 = arith.constant 0 : index
    %c0_288 = arith.constant 0 : index
    %223 = vector.load %arg10[%c2_286, %c0_287, %c0_288] : memref<10x10x32xf32, #tpu.memory_space<vmem>>, vector<8x8x32xf32>
    %224 = vector.shape_cast %223 : vector<8x8x32xf32> to vector<64x32xf32>
    %c3_289 = arith.constant 3 : index
    %c6_290 = arith.constant 6 : index
    %c0_291 = arith.constant 0 : index
    %c0_292 = arith.constant 0 : index
    %225 = vector.load %arg2[%c3_289, %c6_290, %c0_291, %c0_292] : memref<4x9x32x32xf32, #tpu.memory_space<vmem>>, vector<1x1x32x32xf32>
    %226 = vector.shape_cast %225 : vector<1x1x32x32xf32> to vector<32x32xf32>
    %cst_293 = arith.constant dense<0.000000e+00> : vector<64x32xf32>
    %227 = tpu.matmul %224, %226, %cst_293 {dimension_numbers = #tpu.dot_dimension_numbers<[1], [0], [0], [1], [0, 0, 1, 1], [], []>} : vector<64x32xf32>, vector<32x32xf32>, vector<64x32xf32> -> vector<64x32xf32>
    %228 = arith.addf %222, %227 : vector<64x32xf32>
    %c2_294 = arith.constant 2 : index
    %c1_295 = arith.constant 1 : index
    %c0_296 = arith.constant 0 : index
    %229 = vector.load %arg10[%c2_294, %c1_295, %c0_296] : memref<10x10x32xf32, #tpu.memory_space<vmem>>, vector<8x8x32xf32>
    %230 = vector.shape_cast %229 : vector<8x8x32xf32> to vector<64x32xf32>
    %c3_297 = arith.constant 3 : index
    %c7_298 = arith.constant 7 : index
    %c0_299 = arith.constant 0 : index
    %c0_300 = arith.constant 0 : index
    %231 = vector.load %arg2[%c3_297, %c7_298, %c0_299, %c0_300] : memref<4x9x32x32xf32, #tpu.memory_space<vmem>>, vector<1x1x32x32xf32>
    %232 = vector.shape_cast %231 : vector<1x1x32x32xf32> to vector<32x32xf32>
    %cst_301 = arith.constant dense<0.000000e+00> : vector<64x32xf32>
    %233 = tpu.matmul %230, %232, %cst_301 {dimension_numbers = #tpu.dot_dimension_numbers<[1], [0], [0], [1], [0, 0, 1, 1], [], []>} : vector<64x32xf32>, vector<32x32xf32>, vector<64x32xf32> -> vector<64x32xf32>
    %234 = arith.addf %228, %233 : vector<64x32xf32>
    %c2_302 = arith.constant 2 : index
    %c2_303 = arith.constant 2 : index
    %c0_304 = arith.constant 0 : index
    %235 = vector.load %arg10[%c2_302, %c2_303, %c0_304] : memref<10x10x32xf32, #tpu.memory_space<vmem>>, vector<8x8x32xf32>
    %236 = vector.shape_cast %235 : vector<8x8x32xf32> to vector<64x32xf32>
    %c3_305 = arith.constant 3 : index
    %c8_306 = arith.constant 8 : index
    %c0_307 = arith.constant 0 : index
    %c0_308 = arith.constant 0 : index
    %237 = vector.load %arg2[%c3_305, %c8_306, %c0_307, %c0_308] : memref<4x9x32x32xf32, #tpu.memory_space<vmem>>, vector<1x1x32x32xf32>
    %238 = vector.shape_cast %237 : vector<1x1x32x32xf32> to vector<32x32xf32>
    %cst_309 = arith.constant dense<0.000000e+00> : vector<64x32xf32>
    %239 = tpu.matmul %236, %238, %cst_309 {dimension_numbers = #tpu.dot_dimension_numbers<[1], [0], [0], [1], [0, 0, 1, 1], [], []>} : vector<64x32xf32>, vector<32x32xf32>, vector<64x32xf32> -> vector<64x32xf32>
    %240 = arith.addf %234, %239 : vector<64x32xf32>
    %c3_310 = arith.constant 3 : index
    %c0_311 = arith.constant 0 : index
    %c0_312 = arith.constant 0 : index
    %241 = vector.load %arg3[%c3_310, %c0_311, %c0_312] : memref<4x1x32xf32, #tpu.memory_space<vmem>>, vector<1x1x32xf32>
    %242 = vector.shape_cast %241 : vector<1x1x32xf32> to vector<1x32xf32>
    %243 = vector.broadcast %242 : vector<1x32xf32> to vector<64x32xf32>
    %244 = arith.addf %240, %243 : vector<64x32xf32>
    %cst_313 = arith.constant 0.000000e+00 : f32
    %245 = vector.broadcast %cst_313 : f32 to vector<64x32xf32>
    %246 = arith.maximumf %244, %245 : vector<64x32xf32>
    %c0_314 = arith.constant 0 : index
    %c0_315 = arith.constant 0 : index
    %c0_316 = arith.constant 0 : index
    %247 = vector.load %arg8[%c0_314, %c0_315, %c0_316] : memref<1x64x32xf32, #tpu.memory_space<vmem>>, vector<1x64x32xf32>
    %248 = vector.shape_cast %247 : vector<1x64x32xf32> to vector<64x32xf32>
    %249 = vector.shape_cast %246 : vector<64x32xf32> to vector<1x64x32xf32>
    tpu.vector_store %arg8[%c0_314, %c0_315, %c0_316], %249 {strides = array<i32>} : memref<1x64x32xf32, #tpu.memory_space<vmem>>, vector<1x64x32xf32>,
    %c0_317 = arith.constant 0 : index
    %c0_318 = arith.constant 0 : index
    %250 = vector.load %arg4[%c0_317, %c0_318] : memref<32x128xf32, #tpu.memory_space<vmem>>, vector<32x128xf32>
    %cst_319 = arith.constant dense<0.000000e+00> : vector<64x128xf32>
    %251 = tpu.matmul %246, %250, %cst_319 {dimension_numbers = #tpu.dot_dimension_numbers<[1], [0], [0], [1], [0, 0, 1, 1], [], []>} : vector<64x32xf32>, vector<32x128xf32>, vector<64x128xf32> -> vector<64x128xf32>
    %c0_320 = arith.constant 0 : index
    %c0_321 = arith.constant 0 : index
    %252 = vector.load %arg5[%c0_320, %c0_321] : memref<1x128xf32, #tpu.memory_space<vmem>>, vector<1x128xf32>
    %253 = vector.broadcast %252 : vector<1x128xf32> to vector<64x128xf32>
    %254 = arith.addf %251, %253 : vector<64x128xf32>
    %cst_322 = arith.constant 0.000000e+00 : f32
    %255 = vector.broadcast %cst_322 : f32 to vector<64x128xf32>
    %256 = arith.maximumf %254, %255 : vector<64x128xf32>
    %c0_323 = arith.constant 0 : index
    %c0_324 = arith.constant 0 : index
    %257 = vector.load %arg6[%c0_323, %c0_324] : memref<128x128xf32, #tpu.memory_space<vmem>>, vector<128x128xf32>
    %cst_325 = arith.constant dense<0.000000e+00> : vector<64x128xf32>
    %258 = tpu.matmul %256, %257, %cst_325 {dimension_numbers = #tpu.dot_dimension_numbers<[1], [0], [0], [1], [0, 0, 1, 1], [], []>} : vector<64x128xf32>, vector<128x128xf32>, vector<64x128xf32> -> vector<64x128xf32>
    %c0_326 = arith.constant 0 : index
    %c0_327 = arith.constant 0 : index
    %259 = vector.load %arg7[%c0_326, %c0_327] : memref<1x128xf32, #tpu.memory_space<vmem>>, vector<1x128xf32>
    %260 = vector.broadcast %259 : vector<1x128xf32> to vector<64x128xf32>
    %261 = arith.addf %258, %260 : vector<64x128xf32>
    %c0_328 = arith.constant 0 : index
    %c0_329 = arith.constant 0 : index
    %c0_330 = arith.constant 0 : index
    %262 = vector.load %arg9[%c0_328, %c0_329, %c0_330] : memref<1x64x128xf32, #tpu.memory_space<vmem>>, vector<1x64x128xf32>
    %263 = vector.shape_cast %262 : vector<1x64x128xf32> to vector<64x128xf32>
    %264 = vector.shape_cast %261 : vector<64x128xf32> to vector<1x64x128xf32>
    tpu.vector_store %arg9[%c0_328, %c0_329, %c0_330], %264 {strides = array<i32>} : memref<1x64x128xf32, #tpu.memory_space<vmem>>, vector<1x64x128xf32>,
    return
  }
  func.func @transform_0(%arg0: i32) -> (i32, i32, i32, i32) {
    %c0_i32 = arith.constant 0 : i32
    %c0_i32_0 = arith.constant 0 : i32
    %c0_i32_1 = arith.constant 0 : i32
    %c0_i32_2 = arith.constant 0 : i32
    return %arg0, %c0_i32, %c0_i32_0, %c0_i32_1 : i32, i32, i32, i32
  }
  func.func @transform_1(%arg0: i32) -> (i32, i32, i32, i32) {
    %c0_i32 = arith.constant 0 : i32
    %c0_i32_0 = arith.constant 0 : i32
    %c0_i32_1 = arith.constant 0 : i32
    %c0_i32_2 = arith.constant 0 : i32
    %c0_i32_3 = arith.constant 0 : i32
    return %c0_i32, %c0_i32_0, %c0_i32_1, %c0_i32_2 : i32, i32, i32, i32
  }
  func.func @transform_2(%arg0: i32) -> (i32, i32, i32) {
    %c0_i32 = arith.constant 0 : i32
    %c0_i32_0 = arith.constant 0 : i32
    %c0_i32_1 = arith.constant 0 : i32
    %c0_i32_2 = arith.constant 0 : i32
    return %c0_i32, %c0_i32_0, %c0_i32_1 : i32, i32, i32
  }
  func.func @transform_3(%arg0: i32) -> (i32, i32) {
    %c0_i32 = arith.constant 0 : i32
    %c0_i32_0 = arith.constant 0 : i32
    %c0_i32_1 = arith.constant 0 : i32
    return %c0_i32, %c0_i32_0 : i32, i32
  }
  func.func @transform_4(%arg0: i32) -> (i32, i32) {
    %c0_i32 = arith.constant 0 : i32
    %c0_i32_0 = arith.constant 0 : i32
    %c0_i32_1 = arith.constant 0 : i32
    return %c0_i32, %c0_i32_0 : i32, i32
  }
  func.func @transform_5(%arg0: i32) -> (i32, i32) {
    %c0_i32 = arith.constant 0 : i32
    %c0_i32_0 = arith.constant 0 : i32
    %c0_i32_1 = arith.constant 0 : i32
    return %c0_i32, %c0_i32_0 : i32, i32
  }
  func.func @transform_6(%arg0: i32) -> (i32, i32) {
    %c0_i32 = arith.constant 0 : i32
    %c0_i32_0 = arith.constant 0 : i32
    %c0_i32_1 = arith.constant 0 : i32
    return %c0_i32, %c0_i32_0 : i32, i32
  }
  func.func @transform_7(%arg0: i32) -> (i32, i32, i32) {
    %c0_i32 = arith.constant 0 : i32
    %c0_i32_0 = arith.constant 0 : i32
    %c0_i32_1 = arith.constant 0 : i32
    return %arg0, %c0_i32, %c0_i32_0 : i32, i32, i32
  }
  func.func @transform_8(%arg0: i32) -> (i32, i32, i32) {
    %c0_i32 = arith.constant 0 : i32
    %c0_i32_0 = arith.constant 0 : i32
    %c0_i32_1 = arith.constant 0 : i32
    return %arg0, %c0_i32, %c0_i32_0 : i32, i32, i32
  }
}

</mosaic_0001>

<llo_original>
// kernel: roi_ke_head_forward.1
$region0: #{roi_ke_head_forward.1}
  #allocation0 [shape = 'u32[]', space=smem, size = 0x4, offset = 0x4, fixed_abs, tag = 'smem constant byte address 0x4 - core index']
  #allocation1 [shape = 'u32[144,128]{1,0:T(1,128)}', space=vmem, size = 0x12000, scoped, tag = 'internal scratch']
  #allocation2 [shape = 'f32[10,10,32]{2,1,0:T(8,128)}', space=vmem, size = 0x14000, scoped, tag = 'scratch operand']
  %s0 = inlined_call_operand.vmem [shape: f32[4,8,8,32], index: 0, kind: input, shape index: {}]
  %s1 = inlined_call_operand.vmem [shape: f32[4,9,32,32], index: 1, kind: input, shape index: {}]
  %s2 = inlined_call_operand.vmem [shape: f32[4,1,32], index: 2, kind: input, shape index: {}]
  %s3 = inlined_call_operand.vmem [shape: f32[32,128], index: 3, kind: input, shape index: {}]
  %s4 = inlined_call_operand.vmem [shape: f32[1,128], index: 4, kind: input, shape index: {}]
  %s5 = inlined_call_operand.vmem [shape: f32[128,128], index: 5, kind: input, shape index: {}]
  %s6 = inlined_call_operand.vmem [shape: f32[1,128], index: 6, kind: input, shape index: {}]
  %s7 = inlined_call_operand.hbm [shape: f32[4,64,32], index: 7, kind: output, shape index: {0}]
  %s8 = inlined_call_operand.vmem [shape: f32[4,64,128], index: 8, kind: output, shape index: {1}]
  %9 = xla_tuple %s7, %s8
  %s10 = sld [smem:[#allocation0]]
  $region69: #{roi_ke_head_forward.1} parent=0
    _
  %s12 = ssub.s32 1, %s10
  %s13 = scalar_select 0, %s12, %s10
  $region1: #{roi_ke_head_forward.1} parent=0
    #allocation3 [shape = 'u8[65536]{0}', space=vmem, size = 0x10000, scoped, tag = 'output window, operand 0']
    #allocation4 [shape = 's32[2]{0}', space=sflag, size = 0x8, scoped, tag = 'scoped memory for roi_ke_head_forward.1']
    %14 = vsyncpa [#allocation4], 0
    %s15 = scalar_lea.sflag [#allocation4], 1
    %16 = vsyncpa %s15, 0
    loop: start=0, step=1, limit=6
    $region2: #{roi_ke_head_forward.1} parent=1 // loop_pre_header
      _
    $region3: #{roi_ke_head_forward.1} parent=1 // loop_header
      %s18 = sphi 0, %s22
      %p19 = scmp.ge.s32.totalorder %s18, 6
      %s28 = sphi 0, %s30
      %s31 = sphi 0, %s28
      %s32 = sphi 0, %s31
      %s48 = sphi 0, %s32
      %s52 = sphi 0, %s52
      %s54 = sphi 0, %s52
      %s55 = sphi 0, %s54
      %s69 = sphi 0, %s55
      %s73 = sphi 0, %s73
      %s75 = sphi 0, %s73
      %s76 = sphi 0, %s75
      %s90 = sphi 0, %s76
      %s94 = sphi 0, %s94
      %s96 = sphi 0, %s94
      %s97 = sphi 0, %s96
      %s111 = sphi 0, %s97
      %s115 = sphi 0, %s115
      %s117 = sphi 0, %s115
      %s118 = sphi 0, %s117
      %s132 = sphi 0, %s118
      %s136 = sphi 0, %s136
      %s138 = sphi 0, %s136
      %s139 = sphi 0, %s138
      %s153 = sphi 0, %s139
      %s157 = sphi 0, %s157
      %s159 = sphi 0, %s157
      %s160 = sphi 0, %s159
      %s174 = sphi 0, %s160
      %s180 = sphi 0, %s182
      %s183 = sphi 0, %s180
      %s184 = sphi 0, %s183
      %s200 = sphi 0, %s184
      %s206 = sphi 0, %s208
      %s209 = sphi 0, %s206
      %s210 = sphi 0, %s209
      %s226 = sphi 0, %s210
    $region4: #{roi_ke_head_forward.1} parent=1 // loop_header_branch
      %21 = sbr.rel (%p19) target = $region8
    $region5: #{roi_ke_head_forward.1} parent=1 // loop_body
      %s23 = ssub.s32 %s18, 1
      %s24 = ssub.s32 %s18, 2
      %s25 = sadd.s32 %s18, 1
      %s26 = ssub.s32 %s18, %s25
      %p27 = scmp.eq.s32.totalorder %s26, 0
      %s29 = sadd.s32 %s28, 1
      %s30 = scalar_select %p27, %s28, %s29
      %p33 = pneg %p27
      %p34 = scmp.eq.s32.totalorder %s18, 3
      %p35 = por %p33, %p34
      %p36 = scmp.ne.s32.totalorder %s28, %s31
      %p37 = scmp.eq.s32.totalorder %s18, 0
      %p38 = por %p36, %p37
      %p39 = scmp.ne.s32.totalorder %s28, %s31
      %p40 = scmp.eq.s32.totalorder %s23, 3
      %p41 = por %p39, %p40
      %p42 = scmp.ne.s32.totalorder %s31, %s32
      %p43 = scmp.eq.s32.totalorder %s23, 0
      %p44 = por %p42, %p43
      %p45 = scmp.ne.s32.totalorder %s31, %s32
      %p46 = scmp.eq.s32.totalorder %s24, 3
      %p47 = por %p45, %p46
      %p49 = scmp.ne.s32.totalorder %s32, %s48
      %p50 = scmp.eq.s32.totalorder %s24, 0
      %p51 = por %p49, %p50
      %s53 = sadd.s32 %s52, 1
      %p56 = scmp.eq.s32.totalorder %s18, 3
      %p57 = scmp.ne.s32.totalorder %s52, %s54
      %p58 = scmp.eq.s32.totalorder %s18, 0
      %p59 = por %p57, %p58
      %p60 = scmp.ne.s32.totalorder %s52, %s54
      %p61 = scmp.eq.s32.totalorder %s23, 3
      %p62 = por %p60, %p61
      %p63 = scmp.ne.s32.totalorder %s54, %s55
      %p64 = scmp.eq.s32.totalorder %s23, 0
      %p65 = por %p63, %p64
      %p66 = scmp.ne.s32.totalorder %s54, %s55
      %p67 = scmp.eq.s32.totalorder %s24, 3
      %p68 = por %p66, %p67
      %p70 = scmp.ne.s32.totalorder %s55, %s69
      %p71 = scmp.eq.s32.totalorder %s24, 0
      %p72 = por %p70, %p71
      %s74 = sadd.s32 %s73, 1
      %p77 = scmp.eq.s32.totalorder %s18, 3
      %p78 = scmp.ne.s32.totalorder %s73, %s75
      %p79 = scmp.eq.s32.totalorder %s18, 0
      %p80 = por %p78, %p79
      %p81 = scmp.ne.s32.totalorder %s73, %s75
      %p82 = scmp.eq.s32.totalorder %s23, 3
      %p83 = por %p81, %p82
      %p84 = scmp.ne.s32.totalorder %s75, %s76
      %p85 = scmp.eq.s32.totalorder %s23, 0
      %p86 = por %p84, %p85
      %p87 = scmp.ne.s32.totalorder %s75, %s76
      %p88 = scmp.eq.s32.totalorder %s24, 3
      %p89 = por %p87, %p88
      %p91 = scmp.ne.s32.totalorder %s76, %s90
      %p92 = scmp.eq.s32.totalorder %s24, 0
      %p93 = por %p91, %p92
      %s95 = sadd.s32 %s94, 1
      %p98 = scmp.eq.s32.totalorder %s18, 3
      %p99 = scmp.ne.s32.totalorder %s94, %s96
      %p100 = scmp.eq.s32.totalorder %s18, 0
      %p101 = por %p99, %p100
      %p102 = scmp.ne.s32.totalorder %s94, %s96
      %p103 = scmp.eq.s32.totalorder %s23, 3
      %p104 = por %p102, %p103
      %p105 = scmp.ne.s32.totalorder %s96, %s97
      %p106 = scmp.eq.s32.totalorder %s23, 0
      %p107 = por %p105, %p106
      %p108 = scmp.ne.s32.totalorder %s96, %s97
      %p109 = scmp.eq.s32.totalorder %s24, 3
      %p110 = por %p108, %p109
      %p112 = scmp.ne.s32.totalorder %s97, %s111
      %p113 = scmp.eq.s32.totalorder %s24, 0
      %p114 = por %p112, %p113
      %s116 = sadd.s32 %s115, 1
      %p119 = scmp.eq.s32.totalorder %s18, 3
      %p120 = scmp.ne.s32.totalorder %s115, %s117
      %p121 = scmp.eq.s32.totalorder %s18, 0
      %p122 = por %p120, %p121
      %p123 = scmp.ne.s32.totalorder %s115, %s117
      %p124 = scmp.eq.s32.totalorder %s23, 3
      %p125 = por %p123, %p124
      %p126 = scmp.ne.s32.totalorder %s117, %s118
      %p127 = scmp.eq.s32.totalorder %s23, 0
      %p128 = por %p126, %p127
      %p129 = scmp.ne.s32.totalorder %s117, %s118
      %p130 = scmp.eq.s32.totalorder %s24, 3
      %p131 = por %p129, %p130
      %p133 = scmp.ne.s32.totalorder %s118, %s132
      %p134 = scmp.eq.s32.totalorder %s24, 0
      %p135 = por %p133, %p134
      %s137 = sadd.s32 %s136, 1
      %p140 = scmp.eq.s32.totalorder %s18, 3
      %p141 = scmp.ne.s32.totalorder %s136, %s138
      %p142 = scmp.eq.s32.totalorder %s18, 0
      %p143 = por %p141, %p142
      %p144 = scmp.ne.s32.totalorder %s136, %s138
      %p145 = scmp.eq.s32.totalorder %s23, 3
      %p146 = por %p144, %p145
      %p147 = scmp.ne.s32.totalorder %s138, %s139
      %p148 = scmp.eq.s32.totalorder %s23, 0
      %p149 = por %p147, %p148
      %p150 = scmp.ne.s32.totalorder %s138, %s139
      %p151 = scmp.eq.s32.totalorder %s24, 3
      %p152 = por %p150, %p151
      %p154 = scmp.ne.s32.totalorder %s139, %s153
      %p155 = scmp.eq.s32.totalorder %s24, 0
      %p156 = por %p154, %p155
      %s158 = sadd.s32 %s157, 1
      %p161 = scmp.eq.s32.totalorder %s18, 3
      %p162 = scmp.ne.s32.totalorder %s157, %s159
      %p163 = scmp.eq.s32.totalorder %s18, 0
      %p164 = por %p162, %p163
      %p165 = scmp.ne.s32.totalorder %s157, %s159
      %p166 = scmp.eq.s32.totalorder %s23, 3
      %p167 = por %p165, %p166
      %p168 = scmp.ne.s32.totalorder %s159, %s160
      %p169 = scmp.eq.s32.totalorder %s23, 0
      %p170 = por %p168, %p169
      %p171 = scmp.ne.s32.totalorder %s159, %s160
      %p172 = scmp.eq.s32.totalorder %s24, 3
      %p173 = por %p171, %p172
      %p175 = scmp.ne.s32.totalorder %s160, %s174
      %p176 = scmp.eq.s32.totalorder %s24, 0
      %p177 = por %p175, %p176
      %s178 = ssub.s32 %s18, %s25
      %p179 = scmp.eq.s32.totalorder %s178, 0
      %s181 = sadd.s32 %s180, 1
      %s182 = scalar_select %p179, %s180, %s181
      %p185 = pneg %p179
      %p186 = scmp.eq.s32.totalorder %s18, 3
      %p187 = por %p185, %p186
      %p188 = scmp.ne.s32.totalorder %s180, %s183
      %p189 = scmp.eq.s32.totalorder %s18, 0
      %p190 = por %p188, %p189
      %p191 = scmp.ne.s32.totalorder %s180, %s183
      %p192 = scmp.eq.s32.totalorder %s23, 3
      %p193 = por %p191, %p192
      %p194 = scmp.ne.s32.totalorder %s183, %s184
      %p195 = scmp.eq.s32.totalorder %s23, 0
      %p196 = por %p194, %p195
      %p197 = scmp.ne.s32.totalorder %s183, %s184
      %p198 = scmp.eq.s32.totalorder %s24, 3
      %p199 = por %p197, %p198
      %p201 = scmp.ne.s32.totalorder %s184, %s200
      %p202 = scmp.eq.s32.totalorder %s24, 0
      %p203 = por %p201, %p202
      %s204 = ssub.s32 %s18, %s25
      %p205 = scmp.eq.s32.totalorder %s204, 0
      %s207 = sadd.s32 %s206, 1
      %s208 = scalar_select %p205, %s206, %s207
      %p211 = pneg %p205
      %p212 = scmp.eq.s32.totalorder %s18, 3
      %p213 = por %p211, %p212
      %p214 = scmp.ne.s32.totalorder %s206, %s209
      %p215 = scmp.eq.s32.totalorder %s18, 0
      %p216 = por %p214, %p215
      %p217 = scmp.ne.s32.totalorder %s206, %s209
      %p218 = scmp.eq.s32.totalorder %s23, 3
      %p219 = por %p217, %p218
      %p220 = scmp.ne.s32.totalorder %s209, %s210
      %p221 = scmp.eq.s32.totalorder %s23, 0
      %p222 = por %p220, %p221
      %p223 = scmp.ne.s32.totalorder %s209, %s210
      %p224 = scmp.eq.s32.totalorder %s24, 3
      %p225 = por %p223, %p224
      %p227 = scmp.ne.s32.totalorder %s210, %s226
      %p228 = scmp.eq.s32.totalorder %s24, 0
      %p229 = por %p227, %p228
      %p230 = scmp.le.s32.totalorder 1, %s18
      %p231 = scmp.lt.s32.totalorder %s18, 5
      %p232 = pnand %p230, %p231
      %p233 = pneg %p232
      // Predicated region
      $region9: #{roi_ke_head_forward.1} parent=5 // pred_check
        _
      $region10: #{roi_ke_head_forward.1} parent=5 // pred_check_branch
        %235 = sbr.rel (%p232) target = $region12
      $region11: #{roi_ke_head_forward.1} parent=5 // pred_region
        %s236 = ssub.s32 %s18, 1
        // Predicated region
        $region13: #{roi_ke_head_forward.1} parent=11 // pred_check
          %p237 = pneg %p65
        $region14: #{roi_ke_head_forward.1} parent=11 // pred_check_branch
          %239 = sbr.rel (%p237) target = $region16
        $region15: #{roi_ke_head_forward.1} parent=11 // pred_region
          _
        $region16: #{roi_ke_head_forward.1} parent=11 // pred_fallthru
          _
        // Predicated region
        $region17: #{roi_ke_head_forward.1} parent=11 // pred_check
          %p240 = pneg %p86
        $region18: #{roi_ke_head_forward.1} parent=11 // pred_check_branch
          %242 = sbr.rel (%p240) target = $region20
        $region19: #{roi_ke_head_forward.1} parent=11 // pred_region
          _
        $region20: #{roi_ke_head_forward.1} parent=11 // pred_fallthru
          _
        // Predicated region
        $region21: #{roi_ke_head_forward.1} parent=11 // pred_check
          %p243 = pneg %p107
        $region22: #{roi_ke_head_forward.1} parent=11 // pred_check_branch
          %245 = sbr.rel (%p243) target = $region24
        $region23: #{roi_ke_head_forward.1} parent=11 // pred_region
          _
        $region24: #{roi_ke_head_forward.1} parent=11 // pred_fallthru
          _
        // Predicated region
        $region25: #{roi_ke_head_forward.1} parent=11 // pred_check
          %p246 = pneg %p128
        $region26: #{roi_ke_head_forward.1} parent=11 // pred_check_branch
          %248 = sbr.rel (%p246) target = $region28
        $region27: #{roi_ke_head_forward.1} parent=11 // pred_region
          _
        $region28: #{roi_ke_head_forward.1} parent=11 // pred_fallthru
          _
        // Predicated region
        $region29: #{roi_ke_head_forward.1} parent=11 // pred_check
          %p249 = pneg %p149
        $region30: #{roi_ke_head_forward.1} parent=11 // pred_check_branch
          %251 = sbr.rel (%p249) target = $region32
        $region31: #{roi_ke_head_forward.1} parent=11 // pred_region
          _
        $region32: #{roi_ke_head_forward.1} parent=11 // pred_fallthru
          _
        // Predicated region
        $region33: #{roi_ke_head_forward.1} parent=11 // pred_check
          %p252 = pneg %p170
        $region34: #{roi_ke_head_forward.1} parent=11 // pred_check_branch
          %254 = sbr.rel (%p252) target = $region36
        $region35: #{roi_ke_head_forward.1} parent=11 // pred_region
          _
        $region36: #{roi_ke_head_forward.1} parent=11 // pred_fallthru
          _
      $region12: #{roi_ke_head_forward.1} parent=5 // pred_fallthru
        _
      %p255 = scmp.lt.s32.totalorder %s18, 4
      // Predicated region
      $region37: #{roi_ke_head_forward.1} parent=5 // pred_check
        %p256 = pneg %p255
      $region38: #{roi_ke_head_forward.1} parent=5 // pred_check_branch
        %258 = sbr.rel (%p256) target = $region40
      $region39: #{roi_ke_head_forward.1} parent=5 // pred_region
        // Predicated region
        $region41: #{roi_ke_head_forward.1} parent=39 // pred_check
          %p259 = pneg %p38
        $region42: #{roi_ke_head_forward.1} parent=39 // pred_check_branch
          %261 = sbr.rel (%p259) target = $region44
        $region43: #{roi_ke_head_forward.1} parent=39 // pred_region
          %p262 = scmp.lt.s32.totalorder %s18, 3
          %s263 = scalar_select %p262, %s18, 3
          %s264 = smul.addr %s263, 8
          %s265 = smul.addr %s264, 8
          %s266 = scalar_lea.vmem %s0, %s265
        $region44: #{roi_ke_head_forward.1} parent=39 // pred_fallthru
          _
      $region40: #{roi_ke_head_forward.1} parent=5 // pred_fallthru
        _
      %p267 = scmp.le.s32.totalorder 1, %s18
      %p268 = scmp.lt.s32.totalorder %s18, 5
      %p269 = pnand %p267, %p268
      %p270 = pneg %p269
      // Predicated region
      $region45: #{roi_ke_head_forward.1} parent=5 // pred_check
        _
      $region46: #{roi_ke_head_forward.1} parent=5 // pred_check_branch
        %272 = sbr.rel (%p269) target = $region48
      $region47: #{roi_ke_head_forward.1} parent=5 // pred_region
        %s273 = ssub.s32 %s18, 1
        %p274 = scmp.lt.s32.totalorder %s23, 3
        %s275 = scalar_select %p274, %s23, 3
        %s276 = smul.addr %s275, 8
        %s277 = smul.addr %s276, 8
        %s278 = scalar_lea.vmem %s0, %s277
        %p279 = pneg %p44
        %p280 = pneg %p41
        %p281 = pneg %p65
        %p282 = pneg %p62
        %p283 = pneg %p86
        %p284 = pneg %p83
        %p285 = pneg %p107
        %p286 = pneg %p104
        %p287 = pneg %p128
        %p288 = pneg %p125
        %p289 = pneg %p149
        %p290 = pneg %p146
        %p291 = pneg %p170
        %p292 = pneg %p167
        %p293 = pneg %p196
        %p294 = pneg %p193
        %s295 = sand.u32 %s183, 1
        %s296 = scalar_lea.sflag [#allocation4], %s295
        %s297 = sand.u32 %s183, 1
        %s298 = smul.addr %s297, 64
        %s299 = scalar_lea.vmem [#allocation3], %s298
        %p300 = pneg %p222
        %p301 = pneg %p219
        %p302 = scmp.lt.s32.totalorder %s23, 3
        %s303 = scalar_select %p302, %s23, 3
        %s304 = smul.addr %s303, 8
        %s305 = smul.addr %s304, 8
        %s306 = scalar_lea.vmem %s8, %s305
        %p307 = scmp.lt.s32.totalorder %s23, 3
        %s308 = scalar_select %p307, %s23, 3
        %s309 = smul.addr %s308, 8
        %s310 = smul.addr %s309, 8
        %s311 = scalar_lea.vmem %s0, %s310
        %p312 = scmp.lt.s32.totalorder %s23, 3
        %s313 = scalar_select %p312, %s23, 3
        %s314 = smul.addr %s313, 8
        %s315 = smul.addr %s314, 8
        %s316 = scalar_lea.vmem %s8, %s315
        %vm317 = vcmask 261120
        %318 = vst.msk [vmem:[#allocation2] sm:$0xff] %vm317, 0.0
        %vm319 = vcmask 254976
        %320 = vst.msk [vmem:[#allocation2 + $0x8] sm:$0x3] %vm319, 0.0
        %321 = vst.msk [vmem:[#allocation2 + $0x10] sm:$0xff] %vm317, 0.0
        %322 = vst.msk [vmem:[#allocation2 + $0x18] sm:$0x3] %vm319, 0.0
        %323 = vst.msk [vmem:[#allocation2 + $0x20] sm:$0xff] %vm317, 0.0
        %324 = vst.msk [vmem:[#allocation2 + $0x28] sm:$0x3] %vm319, 0.0
        %325 = vst.msk [vmem:[#allocation2 + $0x30] sm:$0xff] %vm317, 0.0
        %326 = vst.msk [vmem:[#allocation2 + $0x38] sm:$0x3] %vm319, 0.0
        %327 = vst.msk [vmem:[#allocation2 + $0x40] sm:$0xff] %vm317, 0.0
        %328 = vst.msk [vmem:[#allocation2 + $0x48] sm:$0x3] %vm319, 0.0
        %329 = vst.msk [vmem:[#allocation2 + $0x50] sm:$0xff] %vm317, 0.0
        %330 = vst.msk [vmem:[#allocation2 + $0x58] sm:$0x3] %vm319, 0.0
        %331 = vst.msk [vmem:[#allocation2 + $0x60] sm:$0xff] %vm317, 0.0
        %332 = vst.msk [vmem:[#allocation2 + $0x68] sm:$0x3] %vm319, 0.0
        %333 = vst.msk [vmem:[#allocation2 + $0x70] sm:$0xff] %vm317, 0.0
        %334 = vst.msk [vmem:[#allocation2 + $0x78] sm:$0x3] %vm319, 0.0
        %335 = vst.msk [vmem:[#allocation2 + $0x80] sm:$0xff] %vm317, 0.0
        %336 = vst.msk [vmem:[#allocation2 + $0x88] sm:$0x3] %vm319, 0.0
        %337 = vst.msk [vmem:[#allocation2 + $0x90] sm:$0xff] %vm317, 0.0
        %338 = vst.msk [vmem:[#allocation2 + $0x98] sm:$0x3] %vm319, 0.0
        %v339 = vld [vmem:[%s311] sm:$0xff]
        %v340 = vld [vmem:[%s311 + $0x8] sm:$0xff]
        %v341 = vld [vmem:[%s311 + $0x10] sm:$0xff]
        %v342 = vld [vmem:[%s311 + $0x18] sm:$0xff]
        %v343 = vld [vmem:[%s311 + $0x20] sm:$0xff]
        %v344 = vld [vmem:[%s311 + $0x28] sm:$0xff]
        %v345 = vld [vmem:[%s311 + $0x30] sm:$0xff]
        %v346 = vld [vmem:[%s311 + $0x38] sm:$0xff]
        %s347 = scalar_lea.vmem [#allocation2], 16
        %348 = vst.msk [vmem:[%s347 + $0x1] sm:$0xff] %vm317, %v339
        %349 = vst.msk [vmem:[%s347 + $0x11] sm:$0xff] %vm317, %v340
        %350 = vst.msk [vmem:[%s347 + $0x21] sm:$0xff] %vm317, %v341
        %351 = vst.msk [vmem:[%s347 + $0x31] sm:$0xff] %vm317, %v342
        %352 = vst.msk [vmem:[%s347 + $0x41] sm:$0xff] %vm317, %v343
        %353 = vst.msk [vmem:[%s347 + $0x51] sm:$0xff] %vm317, %v344
        %354 = vst.msk [vmem:[%s347 + $0x61] sm:$0xff] %vm317, %v345
        %355 = vst.msk [vmem:[%s347 + $0x71] sm:$0xff] %vm317, %v346
        %v356 = vld [vmem:[#allocation2] sm:$0xff]
        %v357 = vld [vmem:[#allocation2 + $0x10] sm:$0xff]
        %v358 = vld [vmem:[#allocation2 + $0x20] sm:$0xff]
        %v359 = vld [vmem:[#allocation2 + $0x30] sm:$0xff]
        %v360 = vld [vmem:[#allocation2 + $0x40] sm:$0xff]
        %v361 = vld [vmem:[#allocation2 + $0x50] sm:$0xff]
        %v362 = vld [vmem:[#allocation2 + $0x60] sm:$0xff]
        %v363 = vld [vmem:[#allocation2 + $0x70] sm:$0xff]
        %v364 = vld [vmem:[%s1] sm:$0xff]
        %v365 = vld [vmem:[%s1 + $0x8] sm:$0xff]
        %v366 = vld [vmem:[%s1 + $0x10] sm:$0xff]
        %v367 = vld [vmem:[%s1 + $0x18] sm:$0xff]
        %v368 = vld [vmem:[#allocation2 + $0x1] sm:$0xff]
        %v369 = vld [vmem:[#allocation2 + $0x11] sm:$0xff]
        %v370 = vld [vmem:[#allocation2 + $0x21] sm:$0xff]
        %v371 = vld [vmem:[#allocation2 + $0x31] sm:$0xff]
        %v372 = vld [vmem:[#allocation2 + $0x41] sm:$0xff]
        %v373 = vld [vmem:[#allocation2 + $0x51] sm:$0xff]
        %v374 = vld [vmem:[#allocation2 + $0x61] sm:$0xff]
        %v375 = vld [vmem:[#allocation2 + $0x71] sm:$0xff]
        %s376 = scalar_lea.vmem %s1, 32
        %v377 = vld [vmem:[%s376] sm:$0xff]
        %v378 = vld [vmem:[%s376 + $0x8] sm:$0xff]
        %v379 = vld [vmem:[%s376 + $0x10] sm:$0xff]
        %v380 = vld [vmem:[%s376 + $0x18] sm:$0xff]
        %v382 = vsel %vm317, %v368, 0
        %v385 = vsel %vm317, %v369, 0
        %v388 = vsel %vm317, %v370, 0
        %v391 = vsel %vm317, %v371, 0
        %v394 = vsel %vm317, %v372, 0
        %v397 = vsel %vm317, %v373, 0
        %v400 = vsel %vm317, %v374, 0
        %v403 = vsel %vm317, %v375, 0
        %405 = vmatprep.subr.mxu0 0.0
        %406 = vmatpush1.msra.mxu0 0.0
        %407 = vmatprep.subr.mxu0 0.0
        %408 = vmatpush1.msra.mxu0 0.0
        %409 = vmatprep.subr.mxu0 0.0
        %410 = vmatpush1.msra.mxu0 0.0
        %411 = vmatprep.subr.mxu0 0.0
        %412 = vmatpush1.msra.mxu0 0.0
        %413 = vmatprep.subr.mxu0 0.0
        %414 = vmatpush1.msra.mxu0 0.0
        %415 = vmatprep.subr.mxu0 0.0
        %416 = vmatpush1.msra.mxu0 0.0
        %417 = vmatprep.subr.mxu0 0.0
        %418 = vmatpush1.msra.mxu0 0.0
        %419 = vmatprep.subr.mxu0 0.0
        %420 = vmatpush1.msra.mxu0 0.0
        %421 = vmatprep.subr.mxu0 0.0
        %422 = vmatpush1.msra.mxu0 0.0
        %423 = vmatprep.subr.mxu0 0.0
        %424 = vmatpush1.msra.mxu0 0.0
        %425 = vmatprep.subr.mxu0 0.0
        %426 = vmatpush1.msra.mxu0 0.0
        %427 = vmatprep.subr.mxu0 0.0
        %428 = vmatpush1.msra.mxu0 0.0
        %429 = vmatprep.subr.mxu0 0.0
        %430 = vmatpush1.msra.mxu0 %v380
        %431 = vmatprep.subr.mxu0 0.0
        %432 = vmatpush1.msra.mxu0 %v379
        %433 = vmatprep.subr.mxu0 0.0
        %434 = vmatpush1.msra.mxu0 %v378
        %435 = vmatprep.subr.mxu0 0.0
        %436 = vmatpush1.msra.mxu0 %v377
        %437 = vmatprep.subr.mxu0 0.0
        %438 = vmatpush2.msra.mxu0 0.0
        %439 = vmatprep.subr.mxu0 0.0
        %440 = vmatpush2.msra.mxu0 0.0
        %441 = vmatprep.subr.mxu0 0.0
        %442 = vmatpush2.msra.mxu0 0.0
        %443 = vmatprep.subr.mxu0 0.0
        %444 = vmatpush2.msra.mxu0 0.0
        %445 = vmatprep.subr.mxu0 0.0
        %446 = vmatpush2.msra.mxu0 0.0
        %447 = vmatprep.subr.mxu0 0.0
        %448 = vmatpush2.msra.mxu0 0.0
        %449 = vmatprep.subr.mxu0 0.0
        %450 = vmatpush2.msra.mxu0 0.0
        %451 = vmatprep.subr.mxu0 0.0
        %452 = vmatpush2.msra.mxu0 0.0
        %453 = vmatprep.subr.mxu0 0.0
        %454 = vmatpush2.msra.mxu0 0.0
        %455 = vmatprep.subr.mxu0 0.0
        %456 = vmatpush2.msra.mxu0 0.0
        %457 = vmatprep.subr.mxu0 0.0
        %458 = vmatpush2.msra.mxu0 0.0
        %459 = vmatprep.subr.mxu0 0.0
        %460 = vmatpush2.msra.mxu0 0.0
        %461 = vmatprep.subr.mxu0 0.0
        %462 = vmatpush2.msra.mxu0 0.0
        %463 = vmatprep.subr.mxu0 0.0
        %464 = vmatpush2.msra.mxu0 0.0
        %465 = vmatprep.subr.mxu0 0.0
        %466 = vmatpush2.msra.mxu0 0.0
        %467 = vmatprep.subr.mxu0 0.0
        %468 = vmatpush2.msra.mxu0 0.0
        %469 = vmatprep.mubr.f32.mxu0 0.0
        %470 = vmatmul.mubr.f32.gmra.mxu0 %v382
        %v471 = vpop.f32.mrf.mxu0
        %v472 = vadd.f32 0.0, %v471
        %v473 = vpop.f32.mrf.mxu0
        %474 = vmatprep.mubr.f32.mxu0 0.0
        %475 = vmatmul.mubr.f32.gmra.mxu0 %v385
        %v476 = vpop.f32.mrf.mxu0
        %v477 = vadd.f32 0.0, %v476
        %v478 = vpop.f32.mrf.mxu0
        %479 = vmatprep.mubr.f32.mxu0 0.0
        %480 = vmatmul.mubr.f32.gmra.mxu0 %v388
        %v481 = vpop.f32.mrf.mxu0
        %v482 = vadd.f32 0.0, %v481
        %v483 = vpop.f32.mrf.mxu0
        %484 = vmatprep.mubr.f32.mxu0 0.0
        %485 = vmatmul.mubr.f32.gmra.mxu0 %v391
        %v486 = vpop.f32.mrf.mxu0
        %v487 = vadd.f32 0.0, %v486
        %v488 = vpop.f32.mrf.mxu0
        %489 = vmatprep.mubr.f32.mxu0 0.0
        %490 = vmatmul.mubr.f32.gmra.mxu0 %v394
        %v491 = vpop.f32.mrf.mxu0
        %v492 = vadd.f32 0.0, %v491
        %v493 = vpop.f32.mrf.mxu0
        %494 = vmatprep.mubr.f32.mxu0 0.0
        %495 = vmatmul.mubr.f32.gmra.mxu0 %v397
        %v496 = vpop.f32.mrf.mxu0
        %v497 = vadd.f32 0.0, %v496
        %v498 = vpop.f32.mrf.mxu0
        %499 = vmatprep.mubr.f32.mxu0 0.0
        %500 = vmatmul.mubr.f32.gmra.mxu0 %v400
        %v501 = vpop.f32.mrf.mxu0
        %v502 = vadd.f32 0.0, %v501
        %v503 = vpop.f32.mrf.mxu0
        %504 = vmatprep.mubr.f32.mxu0 0.0
        %505 = vmatmul.mubr.f32.gmra.mxu0 %v403
        %v506 = vpop.f32.mrf.mxu0
        %v507 = vadd.f32 0.0, %v506
        %v508 = vpop.f32.mrf.mxu0
        %509 = vdwg.mxu0
        %v511 = vsel %vm317, %v356, 0
        %v514 = vsel %vm317, %v357, 0
        %v517 = vsel %vm317, %v358, 0
        %v520 = vsel %vm317, %v359, 0
        %v523 = vsel %vm317, %v360, 0
        %v526 = vsel %vm317, %v361, 0
        %v529 = vsel %vm317, %v362, 0
        %v532 = vsel %vm317, %v363, 0
        %534 = vmatprep.subr.mxu0 0.0
        %535 = vmatpush1.msra.mxu0 0.0
        %536 = vmatprep.subr.mxu0 0.0
        %537 = vmatpush1.msra.mxu0 0.0
        %538 = vmatprep.subr.mxu0 0.0
        %539 = vmatpush1.msra.mxu0 0.0
        %540 = vmatprep.subr.mxu0 0.0
        %541 = vmatpush1.msra.mxu0 0.0
        %542 = vmatprep.subr.mxu0 0.0
        %543 = vmatpush1.msra.mxu0 0.0
        %544 = vmatprep.subr.mxu0 0.0
        %545 = vmatpush1.msra.mxu0 0.0
        %546 = vmatprep.subr.mxu0 0.0
        %547 = vmatpush1.msra.mxu0 0.0
        %548 = vmatprep.subr.mxu0 0.0
        %549 = vmatpush1.msra.mxu0 0.0
        %550 = vmatprep.subr.mxu0 0.0
        %551 = vmatpush1.msra.mxu0 0.0
        %552 = vmatprep.subr.mxu0 0.0
        %553 = vmatpush1.msra.mxu0 0.0
        %554 = vmatprep.subr.mxu0 0.0
        %555 = vmatpush1.msra.mxu0 0.0
        %556 = vmatprep.subr.mxu0 0.0
        %557 = vmatpush1.msra.mxu0 0.0
        %558 = vmatprep.subr.mxu0 0.0
        %559 = vmatpush1.msra.mxu0 %v367
        %560 = vmatprep.subr.mxu0 0.0
        %561 = vmatpush1.msra.mxu0 %v366
        %562 = vmatprep.subr.mxu0 0.0
        %563 = vmatpush1.msra.mxu0 %v365
        %564 = vmatprep.subr.mxu0 0.0
        %565 = vmatpush1.msra.mxu0 %v364
        %566 = vmatprep.subr.mxu0 0.0
        %567 = vmatpush2.msra.mxu0 0.0
        %568 = vmatprep.subr.mxu0 0.0
        %569 = vmatpush2.msra.mxu0 0.0
        %570 = vmatprep.subr.mxu0 0.0
        %571 = vmatpush2.msra.mxu0 0.0
        %572 = vmatprep.subr.mxu0 0.0
        %573 = vmatpush2.msra.mxu0 0.0
        %574 = vmatprep.subr.mxu0 0.0
        %575 = vmatpush2.msra.mxu0 0.0
        %576 = vmatprep.subr.mxu0 0.0
        %577 = vmatpush2.msra.mxu0 0.0
        %578 = vmatprep.subr.mxu0 0.0
        %579 = vmatpush2.msra.mxu0 0.0
        %580 = vmatprep.subr.mxu0 0.0
        %581 = vmatpush2.msra.mxu0 0.0
        %582 = vmatprep.subr.mxu0 0.0
        %583 = vmatpush2.msra.mxu0 0.0
        %584 = vmatprep.subr.mxu0 0.0
        %585 = vmatpush2.msra.mxu0 0.0
        %586 = vmatprep.subr.mxu0 0.0
        %587 = vmatpush2.msra.mxu0 0.0
        %588 = vmatprep.subr.mxu0 0.0
        %589 = vmatpush2.msra.mxu0 0.0
        %590 = vmatprep.subr.mxu0 0.0
        %591 = vmatpush2.msra.mxu0 0.0
        %592 = vmatprep.subr.mxu0 0.0
        %593 = vmatpush2.msra.mxu0 0.0
        %594 = vmatprep.subr.mxu0 0.0
        %595 = vmatpush2.msra.mxu0 0.0
        %596 = vmatprep.subr.mxu0 0.0
        %597 = vmatpush2.msra.mxu0 0.0
        %598 = vmatprep.mubr.f32.mxu0 0.0
        %599 = vmatmul.mubr.f32.gmra.mxu0 %v511
        %v600 = vpop.f32.mrf.mxu0
        %v601 = vadd.f32 %v472, %v600
        %v602 = vpop.f32.mrf.mxu0
        %603 = vmatprep.mubr.f32.mxu0 0.0
        %604 = vmatmul.mubr.f32.gmra.mxu0 %v514
        %v605 = vpop.f32.mrf.mxu0
        %v606 = vadd.f32 %v477, %v605
        %v607 = vpop.f32.mrf.mxu0
        %608 = vmatprep.mubr.f32.mxu0 0.0
        %609 = vmatmul.mubr.f32.gmra.mxu0 %v517
        %v610 = vpop.f32.mrf.mxu0
        %v611 = vadd.f32 %v482, %v610
        %v612 = vpop.f32.mrf.mxu0
        %613 = vmatprep.mubr.f32.mxu0 0.0
        %614 = vmatmul.mubr.f32.gmra.mxu0 %v520
        %v615 = vpop.f32.mrf.mxu0
        %v616 = vadd.f32 %v487, %v615
        %v617 = vpop.f32.mrf.mxu0
        %618 = vmatprep.mubr.f32.mxu0 0.0
        %619 = vmatmul.mubr.f32.gmra.mxu0 %v523
        %v620 = vpop.f32.mrf.mxu0
        %v621 = vadd.f32 %v492, %v620
        %v622 = vpop.f32.mrf.mxu0
        %623 = vmatprep.mubr.f32.mxu0 0.0
        %624 = vmatmul.mubr.f32.gmra.mxu0 %v526
        %v625 = vpop.f32.mrf.mxu0
        %v626 = vadd.f32 %v497, %v625
        %v627 = vpop.f32.mrf.mxu0
        %628 = vmatprep.mubr.f32.mxu0 0.0
        %629 = vmatmul.mubr.f32.gmra.mxu0 %v529
        %v630 = vpop.f32.mrf.mxu0
        %v631 = vadd.f32 %v502, %v630
        %v632 = vpop.f32.mrf.mxu0
        %633 = vmatprep.mubr.f32.mxu0 0.0
        %634 = vmatmul.mubr.f32.gmra.mxu0 %v532
        %v635 = vpop.f32.mrf.mxu0
        %v636 = vadd.f32 %v507, %v635
        %v637 = vpop.f32.mrf.mxu0
        %638 = vdwg.mxu0
        %v639 = vld [vmem:[#allocation2 + $0x2] sm:$0xff]
        %v640 = vld [vmem:[#allocation2 + $0x12] sm:$0xff]
        %v641 = vld [vmem:[#allocation2 + $0x22] sm:$0xff]
        %v642 = vld [vmem:[#allocation2 + $0x32] sm:$0xff]
        %v643 = vld [vmem:[#allocation2 + $0x42] sm:$0xff]
        %v644 = vld [vmem:[#allocation2 + $0x52] sm:$0xff]
        %v645 = vld [vmem:[#allocation2 + $0x62] sm:$0xff]
        %v646 = vld [vmem:[#allocation2 + $0x72] sm:$0xff]
        %s647 = scalar_lea.vmem %s1, 64
        %v648 = vld [vmem:[%s647] sm:$0xff]
        %v649 = vld [vmem:[%s647 + $0x8] sm:$0xff]
        %v650 = vld [vmem:[%s647 + $0x10] sm:$0xff]
        %v651 = vld [vmem:[%s647 + $0x18] sm:$0xff]
        %v653 = vsel %vm317, %v639, 0
        %v656 = vsel %vm317, %v640, 0
        %v659 = vsel %vm317, %v641, 0
        %v662 = vsel %vm317, %v642, 0
        %v665 = vsel %vm317, %v643, 0
        %v668 = vsel %vm317, %v644, 0
        %v671 = vsel %vm317, %v645, 0
        %v674 = vsel %vm317, %v646, 0
        %676 = vmatprep.subr.mxu0 0.0
        %677 = vmatpush1.msra.mxu0 0.0
        %678 = vmatprep.subr.mxu0 0.0
        %679 = vmatpush1.msra.mxu0 0.0
        %680 = vmatprep.subr.mxu0 0.0
        %681 = vmatpush1.msra.mxu0 0.0
        %682 = vmatprep.subr.mxu0 0.0
        %683 = vmatpush1.msra.mxu0 0.0
        %684 = vmatprep.subr.mxu0 0.0
        %685 = vmatpush1.msra.mxu0 0.0
        %686 = vmatprep.subr.mxu0 0.0
        %687 = vmatpush1.msra.mxu0 0.0
        %688 = vmatprep.subr.mxu0 0.0
        %689 = vmatpush1.msra.mxu0 0.0
        %690 = vmatprep.subr.mxu0 0.0
        %691 = vmatpush1.msra.mxu0 0.0
        %692 = vmatprep.subr.mxu0 0.0
        %693 = vmatpush1.msra.mxu0 0.0
        %694 = vmatprep.subr.mxu0 0.0
        %695 = vmatpush1.msra.mxu0 0.0
        %696 = vmatprep.subr.mxu0 0.0
        %697 = vmatpush1.msra.mxu0 0.0
        %698 = vmatprep.subr.mxu0 0.0
        %699 = vmatpush1.msra.mxu0 0.0
        %700 = vmatprep.subr.mxu0 0.0
        %701 = vmatpush1.msra.mxu0 %v651
        %702 = vmatprep.subr.mxu0 0.0
        %703 = vmatpush1.msra.mxu0 %v650
        %704 = vmatprep.subr.mxu0 0.0
        %705 = vmatpush1.msra.mxu0 %v649
        %706 = vmatprep.subr.mxu0 0.0
        %707 = vmatpush1.msra.mxu0 %v648
        %708 = vmatprep.subr.mxu0 0.0
        %709 = vmatpush2.msra.mxu0 0.0
        %710 = vmatprep.subr.mxu0 0.0
        %711 = vmatpush2.msra.mxu0 0.0
        %712 = vmatprep.subr.mxu0 0.0
        %713 = vmatpush2.msra.mxu0 0.0
        %714 = vmatprep.subr.mxu0 0.0
        %715 = vmatpush2.msra.mxu0 0.0
        %716 = vmatprep.subr.mxu0 0.0
        %717 = vmatpush2.msra.mxu0 0.0
        %718 = vmatprep.subr.mxu0 0.0
        %719 = vmatpush2.msra.mxu0 0.0
        %720 = vmatprep.subr.mxu0 0.0
        %721 = vmatpush2.msra.mxu0 0.0
        %722 = vmatprep.subr.mxu0 0.0
        %723 = vmatpush2.msra.mxu0 0.0
        %724 = vmatprep.subr.mxu0 0.0
        %725 = vmatpush2.msra.mxu0 0.0
        %726 = vmatprep.subr.mxu0 0.0
        %727 = vmatpush2.msra.mxu0 0.0
        %728 = vmatprep.subr.mxu0 0.0
        %729 = vmatpush2.msra.mxu0 0.0
        %730 = vmatprep.subr.mxu0 0.0
        %731 = vmatpush2.msra.mxu0 0.0
        %732 = vmatprep.subr.mxu0 0.0
        %733 = vmatpush2.msra.mxu0 0.0
        %734 = vmatprep.subr.mxu0 0.0
        %735 = vmatpush2.msra.mxu0 0.0
        %736 = vmatprep.subr.mxu0 0.0
        %737 = vmatpush2.msra.mxu0 0.0
        %738 = vmatprep.subr.mxu0 0.0
        %739 = vmatpush2.msra.mxu0 0.0
        %740 = vmatprep.mubr.f32.mxu0 0.0
        %741 = vmatmul.mubr.f32.gmra.mxu0 %v653
        %v742 = vpop.f32.mrf.mxu0
        %v743 = vadd.f32 0.0, %v742
        %v744 = vpop.f32.mrf.mxu0
        %745 = vmatprep.mubr.f32.mxu0 0.0
        %746 = vmatmul.mubr.f32.gmra.mxu0 %v656
        %v747 = vpop.f32.mrf.mxu0
        %v748 = vadd.f32 0.0, %v747
        %v749 = vpop.f32.mrf.mxu0
        %750 = vmatprep.mubr.f32.mxu0 0.0
        %751 = vmatmul.mubr.f32.gmra.mxu0 %v659
        %v752 = vpop.f32.mrf.mxu0
        %v753 = vadd.f32 0.0, %v752
        %v754 = vpop.f32.mrf.mxu0
        %755 = vmatprep.mubr.f32.mxu0 0.0
        %756 = vmatmul.mubr.f32.gmra.mxu0 %v662
        %v757 = vpop.f32.mrf.mxu0
        %v758 = vadd.f32 0.0, %v757
        %v759 = vpop.f32.mrf.mxu0
        %760 = vmatprep.mubr.f32.mxu0 0.0
        %761 = vmatmul.mubr.f32.gmra.mxu0 %v665
        %v762 = vpop.f32.mrf.mxu0
        %v763 = vadd.f32 0.0, %v762
        %v764 = vpop.f32.mrf.mxu0
        %765 = vmatprep.mubr.f32.mxu0 0.0
        %766 = vmatmul.mubr.f32.gmra.mxu0 %v668
        %v767 = vpop.f32.mrf.mxu0
        %v768 = vadd.f32 0.0, %v767
        %v769 = vpop.f32.mrf.mxu0
        %770 = vmatprep.mubr.f32.mxu0 0.0
        %771 = vmatmul.mubr.f32.gmra.mxu0 %v671
        %v772 = vpop.f32.mrf.mxu0
        %v773 = vadd.f32 0.0, %v772
        %v774 = vpop.f32.mrf.mxu0
        %775 = vmatprep.mubr.f32.mxu0 0.0
        %776 = vmatmul.mubr.f32.gmra.mxu0 %v674
        %v777 = vpop.f32.mrf.mxu0
        %v778 = vadd.f32 0.0, %v777
        %v779 = vpop.f32.mrf.mxu0
        %780 = vdwg.mxu0
        %v781 = vadd.f32 %v601, %v743
        %v782 = vadd.f32 %v606, %v748
        %v783 = vadd.f32 %v611, %v753
        %v784 = vadd.f32 %v616, %v758
        %v785 = vadd.f32 %v621, %v763
        %v786 = vadd.f32 %v626, %v768
        %v787 = vadd.f32 %v631, %v773
        %v788 = vadd.f32 %v636, %v778
        %v789 = vld [vmem:[%s347] sm:$0xff]
        %v790 = vld [vmem:[%s347 + $0x10] sm:$0xff]
        %v791 = vld [vmem:[%s347 + $0x20] sm:$0xff]
        %v792 = vld [vmem:[%s347 + $0x30] sm:$0xff]
        %v793 = vld [vmem:[%s347 + $0x40] sm:$0xff]
        %v794 = vld [vmem:[%s347 + $0x50] sm:$0xff]
        %v795 = vld [vmem:[%s347 + $0x60] sm:$0xff]
        %v796 = vld [vmem:[%s347 + $0x70] sm:$0xff]
        %s797 = scalar_lea.vmem %s1, 96
        %v798 = vld [vmem:[%s797] sm:$0xff]
        %v799 = vld [vmem:[%s797 + $0x8] sm:$0xff]
        %v800 = vld [vmem:[%s797 + $0x10] sm:$0xff]
        %v801 = vld [vmem:[%s797 + $0x18] sm:$0xff]
        %v803 = vsel %vm317, %v789, 0
        %v806 = vsel %vm317, %v790, 0
        %v809 = vsel %vm317, %v791, 0
        %v812 = vsel %vm317, %v792, 0
        %v815 = vsel %vm317, %v793, 0
        %v818 = vsel %vm317, %v794, 0
        %v821 = vsel %vm317, %v795, 0
        %v824 = vsel %vm317, %v796, 0
        %826 = vmatprep.subr.mxu0 0.0
        %827 = vmatpush1.msra.mxu0 0.0
        %828 = vmatprep.subr.mxu0 0.0
        %829 = vmatpush1.msra.mxu0 0.0
        %830 = vmatprep.subr.mxu0 0.0
        %831 = vmatpush1.msra.mxu0 0.0
        %832 = vmatprep.subr.mxu0 0.0
        %833 = vmatpush1.msra.mxu0 0.0
        %834 = vmatprep.subr.mxu0 0.0
        %835 = vmatpush1.msra.mxu0 0.0
        %836 = vmatprep.subr.mxu0 0.0
        %837 = vmatpush1.msra.mxu0 0.0
        %838 = vmatprep.subr.mxu0 0.0
        %839 = vmatpush1.msra.mxu0 0.0
        %840 = vmatprep.subr.mxu0 0.0
        %841 = vmatpush1.msra.mxu0 0.0
        %842 = vmatprep.subr.mxu0 0.0
        %843 = vmatpush1.msra.mxu0 0.0
        %844 = vmatprep.subr.mxu0 0.0
        %845 = vmatpush1.msra.mxu0 0.0
        %846 = vmatprep.subr.mxu0 0.0
        %847 = vmatpush1.msra.mxu0 0.0
        %848 = vmatprep.subr.mxu0 0.0
        %849 = vmatpush1.msra.mxu0 0.0
        %850 = vmatprep.subr.mxu0 0.0
        %851 = vmatpush1.msra.mxu0 %v801
        %852 = vmatprep.subr.mxu0 0.0
        %853 = vmatpush1.msra.mxu0 %v800
        %854 = vmatprep.subr.mxu0 0.0
        %855 = vmatpush1.msra.mxu0 %v799
        %856 = vmatprep.subr.mxu0 0.0
        %857 = vmatpush1.msra.mxu0 %v798
        %858 = vmatprep.subr.mxu0 0.0
        %859 = vmatpush2.msra.mxu0 0.0
        %860 = vmatprep.subr.mxu0 0.0
        %861 = vmatpush2.msra.mxu0 0.0
        %862 = vmatprep.subr.mxu0 0.0
        %863 = vmatpush2.msra.mxu0 0.0
        %864 = vmatprep.subr.mxu0 0.0
        %865 = vmatpush2.msra.mxu0 0.0
        %866 = vmatprep.subr.mxu0 0.0
        %867 = vmatpush2.msra.mxu0 0.0
        %868 = vmatprep.subr.mxu0 0.0
        %869 = vmatpush2.msra.mxu0 0.0
        %870 = vmatprep.subr.mxu0 0.0
        %871 = vmatpush2.msra.mxu0 0.0
        %872 = vmatprep.subr.mxu0 0.0
        %873 = vmatpush2.msra.mxu0 0.0
        %874 = vmatprep.subr.mxu0 0.0
        %875 = vmatpush2.msra.mxu0 0.0
        %876 = vmatprep.subr.mxu0 0.0
        %877 = vmatpush2.msra.mxu0 0.0
        %878 = vmatprep.subr.mxu0 0.0
        %879 = vmatpush2.msra.mxu0 0.0
        %880 = vmatprep.subr.mxu0 0.0
        %881 = vmatpush2.msra.mxu0 0.0
        %882 = vmatprep.subr.mxu0 0.0
        %883 = vmatpush2.msra.mxu0 0.0
        %884 = vmatprep.subr.mxu0 0.0
        %885 = vmatpush2.msra.mxu0 0.0
        %886 = vmatprep.subr.mxu0 0.0
        %887 = vmatpush2.msra.mxu0 0.0
        %888 = vmatprep.subr.mxu0 0.0
        %889 = vmatpush2.msra.mxu0 0.0
        %890 = vmatprep.mubr.f32.mxu0 0.0
        %891 = vmatmul.mubr.f32.gmra.mxu0 %v803
        %v892 = vpop.f32.mrf.mxu0
        %v893 = vadd.f32 0.0, %v892
        %v894 = vpop.f32.mrf.mxu0
        %895 = vmatprep.mubr.f32.mxu0 0.0
        %896 = vmatmul.mubr.f32.gmra.mxu0 %v806
        %v897 = vpop.f32.mrf.mxu0
        %v898 = vadd.f32 0.0, %v897
        %v899 = vpop.f32.mrf.mxu0
        %900 = vmatprep.mubr.f32.mxu0 0.0
        %901 = vmatmul.mubr.f32.gmra.mxu0 %v809
        %v902 = vpop.f32.mrf.mxu0
        %v903 = vadd.f32 0.0, %v902
        %v904 = vpop.f32.mrf.mxu0
        %905 = vmatprep.mubr.f32.mxu0 0.0
        %906 = vmatmul.mubr.f32.gmra.mxu0 %v812
        %v907 = vpop.f32.mrf.mxu0
        %v908 = vadd.f32 0.0, %v907
        %v909 = vpop.f32.mrf.mxu0
        %910 = vmatprep.mubr.f32.mxu0 0.0
        %911 = vmatmul.mubr.f32.gmra.mxu0 %v815
        %v912 = vpop.f32.mrf.mxu0
        %v913 = vadd.f32 0.0, %v912
        %v914 = vpop.f32.mrf.mxu0
        %915 = vmatprep.mubr.f32.mxu0 0.0
        %916 = vmatmul.mubr.f32.gmra.mxu0 %v818
        %v917 = vpop.f32.mrf.mxu0
        %v918 = vadd.f32 0.0, %v917
        %v919 = vpop.f32.mrf.mxu0
        %920 = vmatprep.mubr.f32.mxu0 0.0
        %921 = vmatmul.mubr.f32.gmra.mxu0 %v821
        %v922 = vpop.f32.mrf.mxu0
        %v923 = vadd.f32 0.0, %v922
        %v924 = vpop.f32.mrf.mxu0
        %925 = vmatprep.mubr.f32.mxu0 0.0
        %926 = vmatmul.mubr.f32.gmra.mxu0 %v824
        %v927 = vpop.f32.mrf.mxu0
        %v928 = vadd.f32 0.0, %v927
        %v929 = vpop.f32.mrf.mxu0
        %930 = vdwg.mxu0
        %v931 = vadd.f32 %v781, %v893
        %v932 = vadd.f32 %v782, %v898
        %v933 = vadd.f32 %v783, %v903
        %v934 = vadd.f32 %v784, %v908
        %v935 = vadd.f32 %v785, %v913
        %v936 = vadd.f32 %v786, %v918
        %v937 = vadd.f32 %v787, %v923
        %v938 = vadd.f32 %v788, %v928
        %v939 = vld [vmem:[%s347 + $0x1] sm:$0xff]
        %v940 = vld [vmem:[%s347 + $0x11] sm:$0xff]
        %v941 = vld [vmem:[%s347 + $0x21] sm:$0xff]
        %v942 = vld [vmem:[%s347 + $0x31] sm:$0xff]
        %v943 = vld [vmem:[%s347 + $0x41] sm:$0xff]
        %v944 = vld [vmem:[%s347 + $0x51] sm:$0xff]
        %v945 = vld [vmem:[%s347 + $0x61] sm:$0xff]
        %v946 = vld [vmem:[%s347 + $0x71] sm:$0xff]
        %s947 = scalar_lea.vmem %s1, 128
        %v948 = vld [vmem:[%s947] sm:$0xff]
        %v949 = vld [vmem:[%s947 + $0x8] sm:$0xff]
        %v950 = vld [vmem:[%s947 + $0x10] sm:$0xff]
        %v951 = vld [vmem:[%s947 + $0x18] sm:$0xff]
        %v953 = vsel %vm317, %v939, 0
        %v956 = vsel %vm317, %v940, 0
        %v959 = vsel %vm317, %v941, 0
        %v962 = vsel %vm317, %v942, 0
        %v965 = vsel %vm317, %v943, 0
        %v968 = vsel %vm317, %v944, 0
        %v971 = vsel %vm317, %v945, 0
        %v974 = vsel %vm317, %v946, 0
        %976 = vmatprep.subr.mxu0 0.0
        %977 = vmatpush1.msra.mxu0 0.0
        %978 = vmatprep.subr.mxu0 0.0
        %979 = vmatpush1.msra.mxu0 0.0
        %980 = vmatprep.subr.mxu0 0.0
        %981 = vmatpush1.msra.mxu0 0.0
        %982 = vmatprep.subr.mxu0 0.0
        %983 = vmatpush1.msra.mxu0 0.0
        %984 = vmatprep.subr.mxu0 0.0
        %985 = vmatpush1.msra.mxu0 0.0
        %986 = vmatprep.subr.mxu0 0.0
        %987 = vmatpush1.msra.mxu0 0.0
        %988 = vmatprep.subr.mxu0 0.0
        %989 = vmatpush1.msra.mxu0 0.0
        %990 = vmatprep.subr.mxu0 0.0
        %991 = vmatpush1.msra.mxu0 0.0
        %992 = vmatprep.subr.mxu0 0.0
        %993 = vmatpush1.msra.mxu0 0.0
        %994 = vmatprep.subr.mxu0 0.0
        %995 = vmatpush1.msra.mxu0 0.0
        %996 = vmatprep.subr.mxu0 0.0
        %997 = vmatpush1.msra.mxu0 0.0
        %998 = vmatprep.subr.mxu0 0.0
        %999 = vmatpush1.msra.mxu0 0.0
        %1000 = vmatprep.subr.mxu0 0.0
        %1001 = vmatpush1.msra.mxu0 %v951
        %1002 = vmatprep.subr.mxu0 0.0
        %1003 = vmatpush1.msra.mxu0 %v950
        %1004 = vmatprep.subr.mxu0 0.0
        %1005 = vmatpush1.msra.mxu0 %v949
        %1006 = vmatprep.subr.mxu0 0.0
        %1007 = vmatpush1.msra.mxu0 %v948
        %1008 = vmatprep.subr.mxu0 0.0
        %1009 = vmatpush2.msra.mxu0 0.0
        %1010 = vmatprep.subr.mxu0 0.0
        %1011 = vmatpush2.msra.mxu0 0.0
        %1012 = vmatprep.subr.mxu0 0.0
        %1013 = vmatpush2.msra.mxu0 0.0
        %1014 = vmatprep.subr.mxu0 0.0
        %1015 = vmatpush2.msra.mxu0 0.0
        %1016 = vmatprep.subr.mxu0 0.0
        %1017 = vmatpush2.msra.mxu0 0.0
        %1018 = vmatprep.subr.mxu0 0.0
        %1019 = vmatpush2.msra.mxu0 0.0
        %1020 = vmatprep.subr.mxu0 0.0
        %1021 = vmatpush2.msra.mxu0 0.0
        %1022 = vmatprep.subr.mxu0 0.0
        %1023 = vmatpush2.msra.mxu0 0.0
        %1024 = vmatprep.subr.mxu0 0.0
        %1025 = vmatpush2.msra.mxu0 0.0
        %1026 = vmatprep.subr.mxu0 0.0
        %1027 = vmatpush2.msra.mxu0 0.0
        %1028 = vmatprep.subr.mxu0 0.0
        %1029 = vmatpush2.msra.mxu0 0.0
        %1030 = vmatprep.subr.mxu0 0.0
        %1031 = vmatpush2.msra.mxu0 0.0
        %1032 = vmatprep.subr.mxu0 0.0
        %1033 = vmatpush2.msra.mxu0 0.0
        %1034 = vmatprep.subr.mxu0 0.0
        %1035 = vmatpush2.msra.mxu0 0.0
        %1036 = vmatprep.subr.mxu0 0.0
        %1037 = vmatpush2.msra.mxu0 0.0
        %1038 = vmatprep.subr.mxu0 0.0
        %1039 = vmatpush2.msra.mxu0 0.0
        %1040 = vmatprep.mubr.f32.mxu0 0.0
        %1041 = vmatmul.mubr.f32.gmra.mxu0 %v953
        %v1042 = vpop.f32.mrf.mxu0
        %v1043 = vadd.f32 0.0, %v1042
        %v1044 = vpop.f32.mrf.mxu0
        %1045 = vmatprep.mubr.f32.mxu0 0.0
        %1046 = vmatmul.mubr.f32.gmra.mxu0 %v956
        %v1047 = vpop.f32.mrf.mxu0
        %v1048 = vadd.f32 0.0, %v1047
        %v1049 = vpop.f32.mrf.mxu0
        %1050 = vmatprep.mubr.f32.mxu0 0.0
        %1051 = vmatmul.mubr.f32.gmra.mxu0 %v959
        %v1052 = vpop.f32.mrf.mxu0
        %v1053 = vadd.f32 0.0, %v1052
        %v1054 = vpop.f32.mrf.mxu0
        %1055 = vmatprep.mubr.f32.mxu0 0.0
        %1056 = vmatmul.mubr.f32.gmra.mxu0 %v962
        %v1057 = vpop.f32.mrf.mxu0
        %v1058 = vadd.f32 0.0, %v1057
        %v1059 = vpop.f32.mrf.mxu0
        %1060 = vmatprep.mubr.f32.mxu0 0.0
        %1061 = vmatmul.mubr.f32.gmra.mxu0 %v965
        %v1062 = vpop.f32.mrf.mxu0
        %v1063 = vadd.f32 0.0, %v1062
        %v1064 = vpop.f32.mrf.mxu0
        %1065 = vmatprep.mubr.f32.mxu0 0.0
        %1066 = vmatmul.mubr.f32.gmra.mxu0 %v968
        %v1067 = vpop.f32.mrf.mxu0
        %v1068 = vadd.f32 0.0, %v1067
        %v1069 = vpop.f32.mrf.mxu0
        %1070 = vmatprep.mubr.f32.mxu0 0.0
        %1071 = vmatmul.mubr.f32.gmra.mxu0 %v971
        %v1072 = vpop.f32.mrf.mxu0
        %v1073 = vadd.f32 0.0, %v1072
        %v1074 = vpop.f32.mrf.mxu0
        %1075 = vmatprep.mubr.f32.mxu0 0.0
        %1076 = vmatmul.mubr.f32.gmra.mxu0 %v974
        %v1077 = vpop.f32.mrf.mxu0
        %v1078 = vadd.f32 0.0, %v1077
        %v1079 = vpop.f32.mrf.mxu0
        %1080 = vdwg.mxu0
        %v1081 = vadd.f32 %v931, %v1043
        %v1082 = vadd.f32 %v932, %v1048
        %v1083 = vadd.f32 %v933, %v1053
        %v1084 = vadd.f32 %v934, %v1058
        %v1085 = vadd.f32 %v935, %v1063
        %v1086 = vadd.f32 %v936, %v1068
        %v1087 = vadd.f32 %v937, %v1073
        %v1088 = vadd.f32 %v938, %v1078
        %v1089 = vld [vmem:[%s347 + $0x2] sm:$0xff]
        %v1090 = vld [vmem:[%s347 + $0x12] sm:$0xff]
        %v1091 = vld [vmem:[%s347 + $0x22] sm:$0xff]
        %v1092 = vld [vmem:[%s347 + $0x32] sm:$0xff]
        %v1093 = vld [vmem:[%s347 + $0x42] sm:$0xff]
        %v1094 = vld [vmem:[%s347 + $0x52] sm:$0xff]
        %v1095 = vld [vmem:[%s347 + $0x62] sm:$0xff]
        %v1096 = vld [vmem:[%s347 + $0x72] sm:$0xff]
        %s1097 = scalar_lea.vmem %s1, 160
        %v1098 = vld [vmem:[%s1097] sm:$0xff]
        %v1099 = vld [vmem:[%s1097 + $0x8] sm:$0xff]
        %v1100 = vld [vmem:[%s1097 + $0x10] sm:$0xff]
        %v1101 = vld [vmem:[%s1097 + $0x18] sm:$0xff]
        %v1103 = vsel %vm317, %v1089, 0
        %v1106 = vsel %vm317, %v1090, 0
        %v1109 = vsel %vm317, %v1091, 0
        %v1112 = vsel %vm317, %v1092, 0
        %v1115 = vsel %vm317, %v1093, 0
        %v1118 = vsel %vm317, %v1094, 0
        %v1121 = vsel %vm317, %v1095, 0
        %v1124 = vsel %vm317, %v1096, 0
        %1126 = vmatprep.subr.mxu0 0.0
        %1127 = vmatpush1.msra.mxu0 0.0
        %1128 = vmatprep.subr.mxu0 0.0
        %1129 = vmatpush1.msra.mxu0 0.0
        %1130 = vmatprep.subr.mxu0 0.0
        %1131 = vmatpush1.msra.mxu0 0.0
        %1132 = vmatprep.subr.mxu0 0.0
        %1133 = vmatpush1.msra.mxu0 0.0
        %1134 = vmatprep.subr.mxu0 0.0
        %1135 = vmatpush1.msra.mxu0 0.0
        %1136 = vmatprep.subr.mxu0 0.0
        %1137 = vmatpush1.msra.mxu0 0.0
        %1138 = vmatprep.subr.mxu0 0.0
        %1139 = vmatpush1.msra.mxu0 0.0
        %1140 = vmatprep.subr.mxu0 0.0
        %1141 = vmatpush1.msra.mxu0 0.0
        %1142 = vmatprep.subr.mxu0 0.0
        %1143 = vmatpush1.msra.mxu0 0.0
        %1144 = vmatprep.subr.mxu0 0.0
        %1145 = vmatpush1.msra.mxu0 0.0
        %1146 = vmatprep.subr.mxu0 0.0
        %1147 = vmatpush1.msra.mxu0 0.0
        %1148 = vmatprep.subr.mxu0 0.0
        %1149 = vmatpush1.msra.mxu0 0.0
        %1150 = vmatprep.subr.mxu0 0.0
        %1151 = vmatpush1.msra.mxu0 %v1101
        %1152 = vmatprep.subr.mxu0 0.0
        %1153 = vmatpush1.msra.mxu0 %v1100
        %1154 = vmatprep.subr.mxu0 0.0
        %1155 = vmatpush1.msra.mxu0 %v1099
        %1156 = vmatprep.subr.mxu0 0.0
        %1157 = vmatpush1.msra.mxu0 %v1098
        %1158 = vmatprep.subr.mxu0 0.0
        %1159 = vmatpush2.msra.mxu0 0.0
        %1160 = vmatprep.subr.mxu0 0.0
        %1161 = vmatpush2.msra.mxu0 0.0
        %1162 = vmatprep.subr.mxu0 0.0
        %1163 = vmatpush2.msra.mxu0 0.0
        %1164 = vmatprep.subr.mxu0 0.0
        %1165 = vmatpush2.msra.mxu0 0.0
        %1166 = vmatprep.subr.mxu0 0.0
        %1167 = vmatpush2.msra.mxu0 0.0
        %1168 = vmatprep.subr.mxu0 0.0
        %1169 = vmatpush2.msra.mxu0 0.0
        %1170 = vmatprep.subr.mxu0 0.0
        %1171 = vmatpush2.msra.mxu0 0.0
        %1172 = vmatprep.subr.mxu0 0.0
        %1173 = vmatpush2.msra.mxu0 0.0
        %1174 = vmatprep.subr.mxu0 0.0
        %1175 = vmatpush2.msra.mxu0 0.0
        %1176 = vmatprep.subr.mxu0 0.0
        %1177 = vmatpush2.msra.mxu0 0.0
        %1178 = vmatprep.subr.mxu0 0.0
        %1179 = vmatpush2.msra.mxu0 0.0
        %1180 = vmatprep.subr.mxu0 0.0
        %1181 = vmatpush2.msra.mxu0 0.0
        %1182 = vmatprep.subr.mxu0 0.0
        %1183 = vmatpush2.msra.mxu0 0.0
        %1184 = vmatprep.subr.mxu0 0.0
        %1185 = vmatpush2.msra.mxu0 0.0
        %1186 = vmatprep.subr.mxu0 0.0
        %1187 = vmatpush2.msra.mxu0 0.0
        %1188 = vmatprep.subr.mxu0 0.0
        %1189 = vmatpush2.msra.mxu0 0.0
        %1190 = vmatprep.mubr.f32.mxu0 0.0
        %1191 = vmatmul.mubr.f32.gmra.mxu0 %v1103
        %v1192 = vpop.f32.mrf.mxu0
        %v1193 = vadd.f32 0.0, %v1192
        %v1194 = vpop.f32.mrf.mxu0
        %1195 = vmatprep.mubr.f32.mxu0 0.0
        %1196 = vmatmul.mubr.f32.gmra.mxu0 %v1106
        %v1197 = vpop.f32.mrf.mxu0
        %v1198 = vadd.f32 0.0, %v1197
        %v1199 = vpop.f32.mrf.mxu0
        %1200 = vmatprep.mubr.f32.mxu0 0.0
        %1201 = vmatmul.mubr.f32.gmra.mxu0 %v1109
        %v1202 = vpop.f32.mrf.mxu0
        %v1203 = vadd.f32 0.0, %v1202
        %v1204 = vpop.f32.mrf.mxu0
        %1205 = vmatprep.mubr.f32.mxu0 0.0
        %1206 = vmatmul.mubr.f32.gmra.mxu0 %v1112
        %v1207 = vpop.f32.mrf.mxu0
        %v1208 = vadd.f32 0.0, %v1207
        %v1209 = vpop.f32.mrf.mxu0
        %1210 = vmatprep.mubr.f32.mxu0 0.0
        %1211 = vmatmul.mubr.f32.gmra.mxu0 %v1115
        %v1212 = vpop.f32.mrf.mxu0
        %v1213 = vadd.f32 0.0, %v1212
        %v1214 = vpop.f32.mrf.mxu0
        %1215 = vmatprep.mubr.f32.mxu0 0.0
        %1216 = vmatmul.mubr.f32.gmra.mxu0 %v1118
        %v1217 = vpop.f32.mrf.mxu0
        %v1218 = vadd.f32 0.0, %v1217
        %v1219 = vpop.f32.mrf.mxu0
        %1220 = vmatprep.mubr.f32.mxu0 0.0
        %1221 = vmatmul.mubr.f32.gmra.mxu0 %v1121
        %v1222 = vpop.f32.mrf.mxu0
        %v1223 = vadd.f32 0.0, %v1222
        %v1224 = vpop.f32.mrf.mxu0
        %1225 = vmatprep.mubr.f32.mxu0 0.0
        %1226 = vmatmul.mubr.f32.gmra.mxu0 %v1124
        %v1227 = vpop.f32.mrf.mxu0
        %v1228 = vadd.f32 0.0, %v1227
        %v1229 = vpop.f32.mrf.mxu0
        %1230 = vdwg.mxu0
        %v1231 = vadd.f32 %v1081, %v1193
        %v1232 = vadd.f32 %v1082, %v1198
        %v1233 = vadd.f32 %v1083, %v1203
        %v1234 = vadd.f32 %v1084, %v1208
        %v1235 = vadd.f32 %v1085, %v1213
        %v1236 = vadd.f32 %v1086, %v1218
        %v1237 = vadd.f32 %v1087, %v1223
        %v1238 = vadd.f32 %v1088, %v1228
        %s1239 = scalar_lea.vmem [#allocation2], 32
        %v1240 = vld [vmem:[%s1239] sm:$0xff]
        %v1241 = vld [vmem:[%s1239 + $0x10] sm:$0xff]
        %v1242 = vld [vmem:[%s1239 + $0x20] sm:$0xff]
        %v1243 = vld [vmem:[%s1239 + $0x30] sm:$0xff]
        %v1244 = vld [vmem:[%s1239 + $0x40] sm:$0xff]
        %v1245 = vld [vmem:[%s1239 + $0x50] sm:$0xff]
        %v1246 = vld [vmem:[%s1239 + $0x60] sm:$0xff]
        %v1247 = vld [vmem:[%s1239 + $0x70] sm:$0xff]
        %s1248 = scalar_lea.vmem %s1, 192
        %v1249 = vld [vmem:[%s1248] sm:$0xff]
        %v1250 = vld [vmem:[%s1248 + $0x8] sm:$0xff]
        %v1251 = vld [vmem:[%s1248 + $0x10] sm:$0xff]
        %v1252 = vld [vmem:[%s1248 + $0x18] sm:$0xff]
        %v1254 = vsel %vm317, %v1240, 0
        %v1257 = vsel %vm317, %v1241, 0
        %v1260 = vsel %vm317, %v1242, 0
        %v1263 = vsel %vm317, %v1243, 0
        %v1266 = vsel %vm317, %v1244, 0
        %v1269 = vsel %vm317, %v1245, 0
        %v1272 = vsel %vm317, %v1246, 0
        %v1275 = vsel %vm317, %v1247, 0
        %1277 = vmatprep.subr.mxu0 0.0
        %1278 = vmatpush1.msra.mxu0 0.0
        %1279 = vmatprep.subr.mxu0 0.0
        %1280 = vmatpush1.msra.mxu0 0.0
        %1281 = vmatprep.subr.mxu0 0.0
        %1282 = vmatpush1.msra.mxu0 0.0
        %1283 = vmatprep.subr.mxu0 0.0
        %1284 = vmatpush1.msra.mxu0 0.0
        %1285 = vmatprep.subr.mxu0 0.0
        %1286 = vmatpush1.msra.mxu0 0.0
        %1287 = vmatprep.subr.mxu0 0.0
        %1288 = vmatpush1.msra.mxu0 0.0
        %1289 = vmatprep.subr.mxu0 0.0
        %1290 = vmatpush1.msra.mxu0 0.0
        %1291 = vmatprep.subr.mxu0 0.0
        %1292 = vmatpush1.msra.mxu0 0.0
        %1293 = vmatprep.subr.mxu0 0.0
        %1294 = vmatpush1.msra.mxu0 0.0
        %1295 = vmatprep.subr.mxu0 0.0
        %1296 = vmatpush1.msra.mxu0 0.0
        %1297 = vmatprep.subr.mxu0 0.0
        %1298 = vmatpush1.msra.mxu0 0.0
        %1299 = vmatprep.subr.mxu0 0.0
        %1300 = vmatpush1.msra.mxu0 0.0
        %1301 = vmatprep.subr.mxu0 0.0
        %1302 = vmatpush1.msra.mxu0 %v1252
        %1303 = vmatprep.subr.mxu0 0.0
        %1304 = vmatpush1.msra.mxu0 %v1251
        %1305 = vmatprep.subr.mxu0 0.0
        %1306 = vmatpush1.msra.mxu0 %v1250
        %1307 = vmatprep.subr.mxu0 0.0
        %1308 = vmatpush1.msra.mxu0 %v1249
        %1309 = vmatprep.subr.mxu0 0.0
        %1310 = vmatpush2.msra.mxu0 0.0
        %1311 = vmatprep.subr.mxu0 0.0
        %1312 = vmatpush2.msra.mxu0 0.0
        %1313 = vmatprep.subr.mxu0 0.0
        %1314 = vmatpush2.msra.mxu0 0.0
        %1315 = vmatprep.subr.mxu0 0.0
        %1316 = vmatpush2.msra.mxu0 0.0
        %1317 = vmatprep.subr.mxu0 0.0
        %1318 = vmatpush2.msra.mxu0 0.0
        %1319 = vmatprep.subr.mxu0 0.0
        %1320 = vmatpush2.msra.mxu0 0.0
        %1321 = vmatprep.subr.mxu0 0.0
        %1322 = vmatpush2.msra.mxu0 0.0
        %1323 = vmatprep.subr.mxu0 0.0
        %1324 = vmatpush2.msra.mxu0 0.0
        %1325 = vmatprep.subr.mxu0 0.0
        %1326 = vmatpush2.msra.mxu0 0.0
        %1327 = vmatprep.subr.mxu0 0.0
        %1328 = vmatpush2.msra.mxu0 0.0
        %1329 = vmatprep.subr.mxu0 0.0
        %1330 = vmatpush2.msra.mxu0 0.0
        %1331 = vmatprep.subr.mxu0 0.0
        %1332 = vmatpush2.msra.mxu0 0.0
        %1333 = vmatprep.subr.mxu0 0.0
        %1334 = vmatpush2.msra.mxu0 0.0
        %1335 = vmatprep.subr.mxu0 0.0
        %1336 = vmatpush2.msra.mxu0 0.0
        %1337 = vmatprep.subr.mxu0 0.0
        %1338 = vmatpush2.msra.mxu0 0.0
        %1339 = vmatprep.subr.mxu0 0.0
        %1340 = vmatpush2.msra.mxu0 0.0
        %1341 = vmatprep.mubr.f32.mxu0 0.0
        %1342 = vmatmul.mubr.f32.gmra.mxu0 %v1254
        %v1343 = vpop.f32.mrf.mxu0
        %v1344 = vadd.f32 0.0, %v1343
        %v1345 = vpop.f32.mrf.mxu0
        %1346 = vmatprep.mubr.f32.mxu0 0.0
        %1347 = vmatmul.mubr.f32.gmra.mxu0 %v1257
        %v1348 = vpop.f32.mrf.mxu0
        %v1349 = vadd.f32 0.0, %v1348
        %v1350 = vpop.f32.mrf.mxu0
        %1351 = vmatprep.mubr.f32.mxu0 0.0
        %1352 = vmatmul.mubr.f32.gmra.mxu0 %v1260
        %v1353 = vpop.f32.mrf.mxu0
        %v1354 = vadd.f32 0.0, %v1353
        %v1355 = vpop.f32.mrf.mxu0
        %1356 = vmatprep.mubr.f32.mxu0 0.0
        %1357 = vmatmul.mubr.f32.gmra.mxu0 %v1263
        %v1358 = vpop.f32.mrf.mxu0
        %v1359 = vadd.f32 0.0, %v1358
        %v1360 = vpop.f32.mrf.mxu0
        %1361 = vmatprep.mubr.f32.mxu0 0.0
        %1362 = vmatmul.mubr.f32.gmra.mxu0 %v1266
        %v1363 = vpop.f32.mrf.mxu0
        %v1364 = vadd.f32 0.0, %v1363
        %v1365 = vpop.f32.mrf.mxu0
        %1366 = vmatprep.mubr.f32.mxu0 0.0
        %1367 = vmatmul.mubr.f32.gmra.mxu0 %v1269
        %v1368 = vpop.f32.mrf.mxu0
        %v1369 = vadd.f32 0.0, %v1368
        %v1370 = vpop.f32.mrf.mxu0
        %1371 = vmatprep.mubr.f32.mxu0 0.0
        %1372 = vmatmul.mubr.f32.gmra.mxu0 %v1272
        %v1373 = vpop.f32.mrf.mxu0
        %v1374 = vadd.f32 0.0, %v1373
        %v1375 = vpop.f32.mrf.mxu0
        %1376 = vmatprep.mubr.f32.mxu0 0.0
        %1377 = vmatmul.mubr.f32.gmra.mxu0 %v1275
        %v1378 = vpop.f32.mrf.mxu0
        %v1379 = vadd.f32 0.0, %v1378
        %v1380 = vpop.f32.mrf.mxu0
        %1381 = vdwg.mxu0
        %v1382 = vadd.f32 %v1231, %v1344
        %v1383 = vadd.f32 %v1232, %v1349
        %v1384 = vadd.f32 %v1233, %v1354
        %v1385 = vadd.f32 %v1234, %v1359
        %v1386 = vadd.f32 %v1235, %v1364
        %v1387 = vadd.f32 %v1236, %v1369
        %v1388 = vadd.f32 %v1237, %v1374
        %v1389 = vadd.f32 %v1238, %v1379
        %v1390 = vld [vmem:[%s1239 + $0x1] sm:$0xff]
        %v1391 = vld [vmem:[%s1239 + $0x11] sm:$0xff]
        %v1392 = vld [vmem:[%s1239 + $0x21] sm:$0xff]
        %v1393 = vld [vmem:[%s1239 + $0x31] sm:$0xff]
        %v1394 = vld [vmem:[%s1239 + $0x41] sm:$0xff]
        %v1395 = vld [vmem:[%s1239 + $0x51] sm:$0xff]
        %v1396 = vld [vmem:[%s1239 + $0x61] sm:$0xff]
        %v1397 = vld [vmem:[%s1239 + $0x71] sm:$0xff]
        %s1398 = scalar_lea.vmem %s1, 224
        %v1399 = vld [vmem:[%s1398] sm:$0xff]
        %v1400 = vld [vmem:[%s1398 + $0x8] sm:$0xff]
        %v1401 = vld [vmem:[%s1398 + $0x10] sm:$0xff]
        %v1402 = vld [vmem:[%s1398 + $0x18] sm:$0xff]
        %v1404 = vsel %vm317, %v1390, 0
        %v1407 = vsel %vm317, %v1391, 0
        %v1410 = vsel %vm317, %v1392, 0
        %v1413 = vsel %vm317, %v1393, 0
        %v1416 = vsel %vm317, %v1394, 0
        %v1419 = vsel %vm317, %v1395, 0
        %v1422 = vsel %vm317, %v1396, 0
        %v1425 = vsel %vm317, %v1397, 0
        %1427 = vmatprep.subr.mxu0 0.0
        %1428 = vmatpush1.msra.mxu0 0.0
        %1429 = vmatprep.subr.mxu0 0.0
        %1430 = vmatpush1.msra.mxu0 0.0
        %1431 = vmatprep.subr.mxu0 0.0
        %1432 = vmatpush1.msra.mxu0 0.0
        %1433 = vmatprep.subr.mxu0 0.0
        %1434 = vmatpush1.msra.mxu0 0.0
        %1435 = vmatprep.subr.mxu0 0.0
        %1436 = vmatpush1.msra.mxu0 0.0
        %1437 = vmatprep.subr.mxu0 0.0
        %1438 = vmatpush1.msra.mxu0 0.0
        %1439 = vmatprep.subr.mxu0 0.0
        %1440 = vmatpush1.msra.mxu0 0.0
        %1441 = vmatprep.subr.mxu0 0.0
        %1442 = vmatpush1.msra.mxu0 0.0
        %1443 = vmatprep.subr.mxu0 0.0
        %1444 = vmatpush1.msra.mxu0 0.0
        %1445 = vmatprep.subr.mxu0 0.0
        %1446 = vmatpush1.msra.mxu0 0.0
        %1447 = vmatprep.subr.mxu0 0.0
        %1448 = vmatpush1.msra.mxu0 0.0
        %1449 = vmatprep.subr.mxu0 0.0
        %1450 = vmatpush1.msra.mxu0 0.0
        %1451 = vmatprep.subr.mxu0 0.0
        %1452 = vmatpush1.msra.mxu0 %v1402
        %1453 = vmatprep.subr.mxu0 0.0
        %1454 = vmatpush1.msra.mxu0 %v1401
        %1455 = vmatprep.subr.mxu0 0.0
        %1456 = vmatpush1.msra.mxu0 %v1400
        %1457 = vmatprep.subr.mxu0 0.0
        %1458 = vmatpush1.msra.mxu0 %v1399
        %1459 = vmatprep.subr.mxu0 0.0
        %1460 = vmatpush2.msra.mxu0 0.0
        %1461 = vmatprep.subr.mxu0 0.0
        %1462 = vmatpush2.msra.mxu0 0.0
        %1463 = vmatprep.subr.mxu0 0.0
        %1464 = vmatpush2.msra.mxu0 0.0
        %1465 = vmatprep.subr.mxu0 0.0
        %1466 = vmatpush2.msra.mxu0 0.0
        %1467 = vmatprep.subr.mxu0 0.0
        %1468 = vmatpush2.msra.mxu0 0.0
        %1469 = vmatprep.subr.mxu0 0.0
        %1470 = vmatpush2.msra.mxu0 0.0
        %1471 = vmatprep.subr.mxu0 0.0
        %1472 = vmatpush2.msra.mxu0 0.0
        %1473 = vmatprep.subr.mxu0 0.0
        %1474 = vmatpush2.msra.mxu0 0.0
        %1475 = vmatprep.subr.mxu0 0.0
        %1476 = vmatpush2.msra.mxu0 0.0
        %1477 = vmatprep.subr.mxu0 0.0
        %1478 = vmatpush2.msra.mxu0 0.0
        %1479 = vmatprep.subr.mxu0 0.0
        %1480 = vmatpush2.msra.mxu0 0.0
        %1481 = vmatprep.subr.mxu0 0.0
        %1482 = vmatpush2.msra.mxu0 0.0
        %1483 = vmatprep.subr.mxu0 0.0
        %1484 = vmatpush2.msra.mxu0 0.0
        %1485 = vmatprep.subr.mxu0 0.0
        %1486 = vmatpush2.msra.mxu0 0.0
        %1487 = vmatprep.subr.mxu0 0.0
        %1488 = vmatpush2.msra.mxu0 0.0
        %1489 = vmatprep.subr.mxu0 0.0
        %1490 = vmatpush2.msra.mxu0 0.0
        %1491 = vmatprep.mubr.f32.mxu0 0.0
        %1492 = vmatmul.mubr.f32.gmra.mxu0 %v1404
        %v1493 = vpop.f32.mrf.mxu0
        %v1494 = vadd.f32 0.0, %v1493
        %v1495 = vpop.f32.mrf.mxu0
        %1496 = vmatprep.mubr.f32.mxu0 0.0
        %1497 = vmatmul.mubr.f32.gmra.mxu0 %v1407
        %v1498 = vpop.f32.mrf.mxu0
        %v1499 = vadd.f32 0.0, %v1498
        %v1500 = vpop.f32.mrf.mxu0
        %1501 = vmatprep.mubr.f32.mxu0 0.0
        %1502 = vmatmul.mubr.f32.gmra.mxu0 %v1410
        %v1503 = vpop.f32.mrf.mxu0
        %v1504 = vadd.f32 0.0, %v1503
        %v1505 = vpop.f32.mrf.mxu0
        %1506 = vmatprep.mubr.f32.mxu0 0.0
        %1507 = vmatmul.mubr.f32.gmra.mxu0 %v1413
        %v1508 = vpop.f32.mrf.mxu0
        %v1509 = vadd.f32 0.0, %v1508
        %v1510 = vpop.f32.mrf.mxu0
        %1511 = vmatprep.mubr.f32.mxu0 0.0
        %1512 = vmatmul.mubr.f32.gmra.mxu0 %v1416
        %v1513 = vpop.f32.mrf.mxu0
        %v1514 = vadd.f32 0.0, %v1513
        %v1515 = vpop.f32.mrf.mxu0
        %1516 = vmatprep.mubr.f32.mxu0 0.0
        %1517 = vmatmul.mubr.f32.gmra.mxu0 %v1419
        %v1518 = vpop.f32.mrf.mxu0
        %v1519 = vadd.f32 0.0, %v1518
        %v1520 = vpop.f32.mrf.mxu0
        %1521 = vmatprep.mubr.f32.mxu0 0.0
        %1522 = vmatmul.mubr.f32.gmra.mxu0 %v1422
        %v1523 = vpop.f32.mrf.mxu0
        %v1524 = vadd.f32 0.0, %v1523
        %v1525 = vpop.f32.mrf.mxu0
        %1526 = vmatprep.mubr.f32.mxu0 0.0
        %1527 = vmatmul.mubr.f32.gmra.mxu0 %v1425
        %v1528 = vpop.f32.mrf.mxu0
        %v1529 = vadd.f32 0.0, %v1528
        %v1530 = vpop.f32.mrf.mxu0
        %1531 = vdwg.mxu0
        %v1532 = vadd.f32 %v1382, %v1494
        %v1533 = vadd.f32 %v1383, %v1499
        %v1534 = vadd.f32 %v1384, %v1504
        %v1535 = vadd.f32 %v1385, %v1509
        %v1536 = vadd.f32 %v1386, %v1514
        %v1537 = vadd.f32 %v1387, %v1519
        %v1538 = vadd.f32 %v1388, %v1524
        %v1539 = vadd.f32 %v1389, %v1529
        %v1540 = vld [vmem:[%s1239 + $0x2] sm:$0xff]
        %v1541 = vld [vmem:[%s1239 + $0x12] sm:$0xff]
        %v1542 = vld [vmem:[%s1239 + $0x22] sm:$0xff]
        %v1543 = vld [vmem:[%s1239 + $0x32] sm:$0xff]
        %v1544 = vld [vmem:[%s1239 + $0x42] sm:$0xff]
        %v1545 = vld [vmem:[%s1239 + $0x52] sm:$0xff]
        %v1546 = vld [vmem:[%s1239 + $0x62] sm:$0xff]
        %v1547 = vld [vmem:[%s1239 + $0x72] sm:$0xff]
        %s1548 = scalar_lea.vmem %s1, 256
        %v1549 = vld [vmem:[%s1548] sm:$0xff]
        %v1550 = vld [vmem:[%s1548 + $0x8] sm:$0xff]
        %v1551 = vld [vmem:[%s1548 + $0x10] sm:$0xff]
        %v1552 = vld [vmem:[%s1548 + $0x18] sm:$0xff]
        %v1554 = vsel %vm317, %v1540, 0
        %v1557 = vsel %vm317, %v1541, 0
        %v1560 = vsel %vm317, %v1542, 0
        %v1563 = vsel %vm317, %v1543, 0
        %v1566 = vsel %vm317, %v1544, 0
        %v1569 = vsel %vm317, %v1545, 0
        %v1572 = vsel %vm317, %v1546, 0
        %v1575 = vsel %vm317, %v1547, 0
        %1577 = vmatprep.subr.mxu0 0.0
        %1578 = vmatpush1.msra.mxu0 0.0
        %1579 = vmatprep.subr.mxu0 0.0
        %1580 = vmatpush1.msra.mxu0 0.0
        %1581 = vmatprep.subr.mxu0 0.0
        %1582 = vmatpush1.msra.mxu0 0.0
        %1583 = vmatprep.subr.mxu0 0.0
        %1584 = vmatpush1.msra.mxu0 0.0
        %1585 = vmatprep.subr.mxu0 0.0
        %1586 = vmatpush1.msra.mxu0 0.0
        %1587 = vmatprep.subr.mxu0 0.0
        %1588 = vmatpush1.msra.mxu0 0.0
        %1589 = vmatprep.subr.mxu0 0.0
        %1590 = vmatpush1.msra.mxu0 0.0
        %1591 = vmatprep.subr.mxu0 0.0
        %1592 = vmatpush1.msra.mxu0 0.0
        %1593 = vmatprep.subr.mxu0 0.0
        %1594 = vmatpush1.msra.mxu0 0.0
        %1595 = vmatprep.subr.mxu0 0.0
        %1596 = vmatpush1.msra.mxu0 0.0
        %1597 = vmatprep.subr.mxu0 0.0
        %1598 = vmatpush1.msra.mxu0 0.0
        %1599 = vmatprep.subr.mxu0 0.0
        %1600 = vmatpush1.msra.mxu0 0.0
        %1601 = vmatprep.subr.mxu0 0.0
        %1602 = vmatpush1.msra.mxu0 %v1552
        %1603 = vmatprep.subr.mxu0 0.0
        %1604 = vmatpush1.msra.mxu0 %v1551
        %1605 = vmatprep.subr.mxu0 0.0
        %1606 = vmatpush1.msra.mxu0 %v1550
        %1607 = vmatprep.subr.mxu0 0.0
        %1608 = vmatpush1.msra.mxu0 %v1549
        %1609 = vmatprep.subr.mxu0 0.0
        %1610 = vmatpush2.msra.mxu0 0.0
        %1611 = vmatprep.subr.mxu0 0.0
        %1612 = vmatpush2.msra.mxu0 0.0
        %1613 = vmatprep.subr.mxu0 0.0
        %1614 = vmatpush2.msra.mxu0 0.0
        %1615 = vmatprep.subr.mxu0 0.0
        %1616 = vmatpush2.msra.mxu0 0.0
        %1617 = vmatprep.subr.mxu0 0.0
        %1618 = vmatpush2.msra.mxu0 0.0
        %1619 = vmatprep.subr.mxu0 0.0
        %1620 = vmatpush2.msra.mxu0 0.0
        %1621 = vmatprep.subr.mxu0 0.0
        %1622 = vmatpush2.msra.mxu0 0.0
        %1623 = vmatprep.subr.mxu0 0.0
        %1624 = vmatpush2.msra.mxu0 0.0
        %1625 = vmatprep.subr.mxu0 0.0
        %1626 = vmatpush2.msra.mxu0 0.0
        %1627 = vmatprep.subr.mxu0 0.0
        %1628 = vmatpush2.msra.mxu0 0.0
        %1629 = vmatprep.subr.mxu0 0.0
        %1630 = vmatpush2.msra.mxu0 0.0
        %1631 = vmatprep.subr.mxu0 0.0
        %1632 = vmatpush2.msra.mxu0 0.0
        %1633 = vmatprep.subr.mxu0 0.0
        %1634 = vmatpush2.msra.mxu0 0.0
        %1635 = vmatprep.subr.mxu0 0.0
        %1636 = vmatpush2.msra.mxu0 0.0
        %1637 = vmatprep.subr.mxu0 0.0
        %1638 = vmatpush2.msra.mxu0 0.0
        %1639 = vmatprep.subr.mxu0 0.0
        %1640 = vmatpush2.msra.mxu0 0.0
        %1641 = vmatprep.mubr.f32.mxu0 0.0
        %1642 = vmatmul.mubr.f32.gmra.mxu0 %v1554
        %v1643 = vpop.f32.mrf.mxu0
        %v1644 = vadd.f32 0.0, %v1643
        %v1645 = vpop.f32.mrf.mxu0
        %1646 = vmatprep.mubr.f32.mxu0 0.0
        %1647 = vmatmul.mubr.f32.gmra.mxu0 %v1557
        %v1648 = vpop.f32.mrf.mxu0
        %v1649 = vadd.f32 0.0, %v1648
        %v1650 = vpop.f32.mrf.mxu0
        %1651 = vmatprep.mubr.f32.mxu0 0.0
        %1652 = vmatmul.mubr.f32.gmra.mxu0 %v1560
        %v1653 = vpop.f32.mrf.mxu0
        %v1654 = vadd.f32 0.0, %v1653
        %v1655 = vpop.f32.mrf.mxu0
        %1656 = vmatprep.mubr.f32.mxu0 0.0
        %1657 = vmatmul.mubr.f32.gmra.mxu0 %v1563
        %v1658 = vpop.f32.mrf.mxu0
        %v1659 = vadd.f32 0.0, %v1658
        %v1660 = vpop.f32.mrf.mxu0
        %1661 = vmatprep.mubr.f32.mxu0 0.0
        %1662 = vmatmul.mubr.f32.gmra.mxu0 %v1566
        %v1663 = vpop.f32.mrf.mxu0
        %v1664 = vadd.f32 0.0, %v1663
        %v1665 = vpop.f32.mrf.mxu0
        %1666 = vmatprep.mubr.f32.mxu0 0.0
        %1667 = vmatmul.mubr.f32.gmra.mxu0 %v1569
        %v1668 = vpop.f32.mrf.mxu0
        %v1669 = vadd.f32 0.0, %v1668
        %v1670 = vpop.f32.mrf.mxu0
        %1671 = vmatprep.mubr.f32.mxu0 0.0
        %1672 = vmatmul.mubr.f32.gmra.mxu0 %v1572
        %v1673 = vpop.f32.mrf.mxu0
        %v1674 = vadd.f32 0.0, %v1673
        %v1675 = vpop.f32.mrf.mxu0
        %1676 = vmatprep.mubr.f32.mxu0 0.0
        %1677 = vmatmul.mubr.f32.gmra.mxu0 %v1575
        %v1678 = vpop.f32.mrf.mxu0
        %v1679 = vadd.f32 0.0, %v1678
        %v1680 = vpop.f32.mrf.mxu0
        %1681 = vdwg.mxu0
        %v1682 = vadd.f32 %v1532, %v1644
        %v1683 = vadd.f32 %v1533, %v1649
        %v1684 = vadd.f32 %v1534, %v1654
        %v1685 = vadd.f32 %v1535, %v1659
        %v1686 = vadd.f32 %v1536, %v1664
        %v1687 = vadd.f32 %v1537, %v1669
        %v1688 = vadd.f32 %v1538, %v1674
        %v1689 = vadd.f32 %v1539, %v1679
        %v1690 = vld [vmem:[%s2] sm:$0x1]
        %v1692 = vlaneseq
        %v1693 = vshrl.u32 %v1692, 7
        %v1694 = vsub.s32 0, %v1693
        %v1695 = vrot.slane %v1690, %v1694
        %v1697 = vadd.f32 %v1682, %v1695
        %v1698 = vadd.f32 %v1683, %v1695
        %v1699 = vadd.f32 %v1684, %v1695
        %v1700 = vadd.f32 %v1685, %v1695
        %v1701 = vadd.f32 %v1686, %v1695
        %v1702 = vadd.f32 %v1687, %v1695
        %v1703 = vadd.f32 %v1688, %v1695
        %v1704 = vadd.f32 %v1689, %v1695
        %v1705 = vmax.f32 %v1697, 0.0
        %v1706 = vmax.f32 %v1698, 0.0
        %v1707 = vmax.f32 %v1699, 0.0
        %v1708 = vmax.f32 %v1700, 0.0
        %v1709 = vmax.f32 %v1701, 0.0
        %v1710 = vmax.f32 %v1702, 0.0
        %v1711 = vmax.f32 %v1703, 0.0
        %v1712 = vmax.f32 %v1704, 0.0
        %1713 = vst.msk [vmem:[%s347 + $0x1] sm:$0xff] %vm317, %v1705
        %1714 = vst.msk [vmem:[%s347 + $0x11] sm:$0xff] %vm317, %v1706
        %1715 = vst.msk [vmem:[%s347 + $0x21] sm:$0xff] %vm317, %v1707
        %1716 = vst.msk [vmem:[%s347 + $0x31] sm:$0xff] %vm317, %v1708
        %1717 = vst.msk [vmem:[%s347 + $0x41] sm:$0xff] %vm317, %v1709
        %1718 = vst.msk [vmem:[%s347 + $0x51] sm:$0xff] %vm317, %v1710
        %1719 = vst.msk [vmem:[%s347 + $0x61] sm:$0xff] %vm317, %v1711
        %1720 = vst.msk [vmem:[%s347 + $0x71] sm:$0xff] %vm317, %v1712
        %v1721 = vld [vmem:[#allocation2] sm:$0xff]
        %v1722 = vld [vmem:[#allocation2 + $0x10] sm:$0xff]
        %v1723 = vld [vmem:[#allocation2 + $0x20] sm:$0xff]
        %v1724 = vld [vmem:[#allocation2 + $0x30] sm:$0xff]
        %v1725 = vld [vmem:[#allocation2 + $0x40] sm:$0xff]
        %v1726 = vld [vmem:[#allocation2 + $0x50] sm:$0xff]
        %v1727 = vld [vmem:[#allocation2 + $0x60] sm:$0xff]
        %v1728 = vld [vmem:[#allocation2 + $0x70] sm:$0xff]
        %s1729 = scalar_lea.vmem %s1, 288
        %v1730 = vld [vmem:[%s1729] sm:$0xff]
        %v1731 = vld [vmem:[%s1729 + $0x8] sm:$0xff]
        %v1732 = vld [vmem:[%s1729 + $0x10] sm:$0xff]
        %v1733 = vld [vmem:[%s1729 + $0x18] sm:$0xff]
        %v1734 = vld [vmem:[#allocation2 + $0x1] sm:$0xff]
        %v1735 = vld [vmem:[#allocation2 + $0x11] sm:$0xff]
        %v1736 = vld [vmem:[#allocation2 + $0x21] sm:$0xff]
        %v1737 = vld [vmem:[#allocation2 + $0x31] sm:$0xff]
        %v1738 = vld [vmem:[#allocation2 + $0x41] sm:$0xff]
        %v1739 = vld [vmem:[#allocation2 + $0x51] sm:$0xff]
        %v1740 = vld [vmem:[#allocation2 + $0x61] sm:$0xff]
        %v1741 = vld [vmem:[#allocation2 + $0x71] sm:$0xff]
        %s1742 = scalar_lea.vmem %s1, 320
        %v1743 = vld [vmem:[%s1742] sm:$0xff]
        %v1744 = vld [vmem:[%s1742 + $0x8] sm:$0xff]
        %v1745 = vld [vmem:[%s1742 + $0x10] sm:$0xff]
        %v1746 = vld [vmem:[%s1742 + $0x18] sm:$0xff]
        %v1748 = vsel %vm317, %v1734, 0
        %v1751 = vsel %vm317, %v1735, 0
        %v1754 = vsel %vm317, %v1736, 0
        %v1757 = vsel %vm317, %v1737, 0
        %v1760 = vsel %vm317, %v1738, 0
        %v1763 = vsel %vm317, %v1739, 0
        %v1766 = vsel %vm317, %v1740, 0
        %v1769 = vsel %vm317, %v1741, 0
        %1771 = vmatprep.subr.mxu0 0.0
        %1772 = vmatpush1.msra.mxu0 0.0
        %1773 = vmatprep.subr.mxu0 0.0
        %1774 = vmatpush1.msra.mxu0 0.0
        %1775 = vmatprep.subr.mxu0 0.0
        %1776 = vmatpush1.msra.mxu0 0.0
        %1777 = vmatprep.subr.mxu0 0.0
        %1778 = vmatpush1.msra.mxu0 0.0
        %1779 = vmatprep.subr.mxu0 0.0
        %1780 = vmatpush1.msra.mxu0 0.0
        %1781 = vmatprep.subr.mxu0 0.0
        %1782 = vmatpush1.msra.mxu0 0.0
        %1783 = vmatprep.subr.mxu0 0.0
        %1784 = vmatpush1.msra.mxu0 0.0
        %1785 = vmatprep.subr.mxu0 0.0
        %1786 = vmatpush1.msra.mxu0 0.0
        %1787 = vmatprep.subr.mxu0 0.0
        %1788 = vmatpush1.msra.mxu0 0.0
        %1789 = vmatprep.subr.mxu0 0.0
        %1790 = vmatpush1.msra.mxu0 0.0
        %1791 = vmatprep.subr.mxu0 0.0
        %1792 = vmatpush1.msra.mxu0 0.0
        %1793 = vmatprep.subr.mxu0 0.0
        %1794 = vmatpush1.msra.mxu0 0.0
        %1795 = vmatprep.subr.mxu0 0.0
        %1796 = vmatpush1.msra.mxu0 %v1746
        %1797 = vmatprep.subr.mxu0 0.0
        %1798 = vmatpush1.msra.mxu0 %v1745
        %1799 = vmatprep.subr.mxu0 0.0
        %1800 = vmatpush1.msra.mxu0 %v1744
        %1801 = vmatprep.subr.mxu0 0.0
        %1802 = vmatpush1.msra.mxu0 %v1743
        %1803 = vmatprep.subr.mxu0 0.0
        %1804 = vmatpush2.msra.mxu0 0.0
        %1805 = vmatprep.subr.mxu0 0.0
        %1806 = vmatpush2.msra.mxu0 0.0
        %1807 = vmatprep.subr.mxu0 0.0
        %1808 = vmatpush2.msra.mxu0 0.0
        %1809 = vmatprep.subr.mxu0 0.0
        %1810 = vmatpush2.msra.mxu0 0.0
        %1811 = vmatprep.subr.mxu0 0.0
        %1812 = vmatpush2.msra.mxu0 0.0
        %1813 = vmatprep.subr.mxu0 0.0
        %1814 = vmatpush2.msra.mxu0 0.0
        %1815 = vmatprep.subr.mxu0 0.0
        %1816 = vmatpush2.msra.mxu0 0.0
        %1817 = vmatprep.subr.mxu0 0.0
        %1818 = vmatpush2.msra.mxu0 0.0
        %1819 = vmatprep.subr.mxu0 0.0
        %1820 = vmatpush2.msra.mxu0 0.0
        %1821 = vmatprep.subr.mxu0 0.0
        %1822 = vmatpush2.msra.mxu0 0.0
        %1823 = vmatprep.subr.mxu0 0.0
        %1824 = vmatpush2.msra.mxu0 0.0
        %1825 = vmatprep.subr.mxu0 0.0
        %1826 = vmatpush2.msra.mxu0 0.0
        %1827 = vmatprep.subr.mxu0 0.0
        %1828 = vmatpush2.msra.mxu0 0.0
        %1829 = vmatprep.subr.mxu0 0.0
        %1830 = vmatpush2.msra.mxu0 0.0
        %1831 = vmatprep.subr.mxu0 0.0
        %1832 = vmatpush2.msra.mxu0 0.0
        %1833 = vmatprep.subr.mxu0 0.0
        %1834 = vmatpush2.msra.mxu0 0.0
        %1835 = vmatprep.mubr.f32.mxu0 0.0
        %1836 = vmatmul.mubr.f32.gmra.mxu0 %v1748
        %v1837 = vpop.f32.mrf.mxu0
        %v1838 = vadd.f32 0.0, %v1837
        %v1839 = vpop.f32.mrf.mxu0
        %1840 = vmatprep.mubr.f32.mxu0 0.0
        %1841 = vmatmul.mubr.f32.gmra.mxu0 %v1751
        %v1842 = vpop.f32.mrf.mxu0
        %v1843 = vadd.f32 0.0, %v1842
        %v1844 = vpop.f32.mrf.mxu0
        %1845 = vmatprep.mubr.f32.mxu0 0.0
        %1846 = vmatmul.mubr.f32.gmra.mxu0 %v1754
        %v1847 = vpop.f32.mrf.mxu0
        %v1848 = vadd.f32 0.0, %v1847
        %v1849 = vpop.f32.mrf.mxu0
        %1850 = vmatprep.mubr.f32.mxu0 0.0
        %1851 = vmatmul.mubr.f32.gmra.mxu0 %v1757
        %v1852 = vpop.f32.mrf.mxu0
        %v1853 = vadd.f32 0.0, %v1852
        %v1854 = vpop.f32.mrf.mxu0
        %1855 = vmatprep.mubr.f32.mxu0 0.0
        %1856 = vmatmul.mubr.f32.gmra.mxu0 %v1760
        %v1857 = vpop.f32.mrf.mxu0
        %v1858 = vadd.f32 0.0, %v1857
        %v1859 = vpop.f32.mrf.mxu0
        %1860 = vmatprep.mubr.f32.mxu0 0.0
        %1861 = vmatmul.mubr.f32.gmra.mxu0 %v1763
        %v1862 = vpop.f32.mrf.mxu0
        %v1863 = vadd.f32 0.0, %v1862
        %v1864 = vpop.f32.mrf.mxu0
        %1865 = vmatprep.mubr.f32.mxu0 0.0
        %1866 = vmatmul.mubr.f32.gmra.mxu0 %v1766
        %v1867 = vpop.f32.mrf.mxu0
        %v1868 = vadd.f32 0.0, %v1867
        %v1869 = vpop.f32.mrf.mxu0
        %1870 = vmatprep.mubr.f32.mxu0 0.0
        %1871 = vmatmul.mubr.f32.gmra.mxu0 %v1769
        %v1872 = vpop.f32.mrf.mxu0
        %v1873 = vadd.f32 0.0, %v1872
        %v1874 = vpop.f32.mrf.mxu0
        %1875 = vdwg.mxu0
        %v1877 = vsel %vm317, %v1721, 0
        %v1880 = vsel %vm317, %v1722, 0
        %v1883 = vsel %vm317, %v1723, 0
        %v1886 = vsel %vm317, %v1724, 0
        %v1889 = vsel %vm317, %v1725, 0
        %v1892 = vsel %vm317, %v1726, 0
        %v1895 = vsel %vm317, %v1727, 0
        %v1898 = vsel %vm317, %v1728, 0
        %1900 = vmatprep.subr.mxu0 0.0
        %1901 = vmatpush1.msra.mxu0 0.0
        %1902 = vmatprep.subr.mxu0 0.0
        %1903 = vmatpush1.msra.mxu0 0.0
        %1904 = vmatprep.subr.mxu0 0.0
        %1905 = vmatpush1.msra.mxu0 0.0
        %1906 = vmatprep.subr.mxu0 0.0
        %1907 = vmatpush1.msra.mxu0 0.0
        %1908 = vmatprep.subr.mxu0 0.0
        %1909 = vmatpush1.msra.mxu0 0.0
        %1910 = vmatprep.subr.mxu0 0.0
        %1911 = vmatpush1.msra.mxu0 0.0
        %1912 = vmatprep.subr.mxu0 0.0
        %1913 = vmatpush1.msra.mxu0 0.0
        %1914 = vmatprep.subr.mxu0 0.0
        %1915 = vmatpush1.msra.mxu0 0.0
        %1916 = vmatprep.subr.mxu0 0.0
        %1917 = vmatpush1.msra.mxu0 0.0
        %1918 = vmatprep.subr.mxu0 0.0
        %1919 = vmatpush1.msra.mxu0 0.0
        %1920 = vmatprep.subr.mxu0 0.0
        %1921 = vmatpush1.msra.mxu0 0.0
        %1922 = vmatprep.subr.mxu0 0.0
        %1923 = vmatpush1.msra.mxu0 0.0
        %1924 = vmatprep.subr.mxu0 0.0
        %1925 = vmatpush1.msra.mxu0 %v1733
        %1926 = vmatprep.subr.mxu0 0.0
        %1927 = vmatpush1.msra.mxu0 %v1732
        %1928 = vmatprep.subr.mxu0 0.0
        %1929 = vmatpush1.msra.mxu0 %v1731
        %1930 = vmatprep.subr.mxu0 0.0
        %1931 = vmatpush1.msra.mxu0 %v1730
        %1932 = vmatprep.subr.mxu0 0.0
        %1933 = vmatpush2.msra.mxu0 0.0
        %1934 = vmatprep.subr.mxu0 0.0
        %1935 = vmatpush2.msra.mxu0 0.0
        %1936 = vmatprep.subr.mxu0 0.0
        %1937 = vmatpush2.msra.mxu0 0.0
        %1938 = vmatprep.subr.mxu0 0.0
        %1939 = vmatpush2.msra.mxu0 0.0
        %1940 = vmatprep.subr.mxu0 0.0
        %1941 = vmatpush2.msra.mxu0 0.0
        %1942 = vmatprep.subr.mxu0 0.0
        %1943 = vmatpush2.msra.mxu0 0.0
        %1944 = vmatprep.subr.mxu0 0.0
        %1945 = vmatpush2.msra.mxu0 0.0
        %1946 = vmatprep.subr.mxu0 0.0
        %1947 = vmatpush2.msra.mxu0 0.0
        %1948 = vmatprep.subr.mxu0 0.0
        %1949 = vmatpush2.msra.mxu0 0.0
        %1950 = vmatprep.subr.mxu0 0.0
        %1951 = vmatpush2.msra.mxu0 0.0
        %1952 = vmatprep.subr.mxu0 0.0
        %1953 = vmatpush2.msra.mxu0 0.0
        %1954 = vmatprep.subr.mxu0 0.0
        %1955 = vmatpush2.msra.mxu0 0.0
        %1956 = vmatprep.subr.mxu0 0.0
        %1957 = vmatpush2.msra.mxu0 0.0
        %1958 = vmatprep.subr.mxu0 0.0
        %1959 = vmatpush2.msra.mxu0 0.0
        %1960 = vmatprep.subr.mxu0 0.0
        %1961 = vmatpush2.msra.mxu0 0.0
        %1962 = vmatprep.subr.mxu0 0.0
        %1963 = vmatpush2.msra.mxu0 0.0
        %1964 = vmatprep.mubr.f32.mxu0 0.0
        %1965 = vmatmul.mubr.f32.gmra.mxu0 %v1877
        %v1966 = vpop.f32.mrf.mxu0
        %v1967 = vadd.f32 %v1838, %v1966
        %v1968 = vpop.f32.mrf.mxu0
        %1969 = vmatprep.mubr.f32.mxu0 0.0
        %1970 = vmatmul.mubr.f32.gmra.mxu0 %v1880
        %v1971 = vpop.f32.mrf.mxu0
        %v1972 = vadd.f32 %v1843, %v1971
        %v1973 = vpop.f32.mrf.mxu0
        %1974 = vmatprep.mubr.f32.mxu0 0.0
        %1975 = vmatmul.mubr.f32.gmra.mxu0 %v1883
        %v1976 = vpop.f32.mrf.mxu0
        %v1977 = vadd.f32 %v1848, %v1976
        %v1978 = vpop.f32.mrf.mxu0
        %1979 = vmatprep.mubr.f32.mxu0 0.0
        %1980 = vmatmul.mubr.f32.gmra.mxu0 %v1886
        %v1981 = vpop.f32.mrf.mxu0
        %v1982 = vadd.f32 %v1853, %v1981
        %v1983 = vpop.f32.mrf.mxu0
        %1984 = vmatprep.mubr.f32.mxu0 0.0
        %1985 = vmatmul.mubr.f32.gmra.mxu0 %v1889
        %v1986 = vpop.f32.mrf.mxu0
        %v1987 = vadd.f32 %v1858, %v1986
        %v1988 = vpop.f32.mrf.mxu0
        %1989 = vmatprep.mubr.f32.mxu0 0.0
        %1990 = vmatmul.mubr.f32.gmra.mxu0 %v1892
        %v1991 = vpop.f32.mrf.mxu0
        %v1992 = vadd.f32 %v1863, %v1991
        %v1993 = vpop.f32.mrf.mxu0
        %1994 = vmatprep.mubr.f32.mxu0 0.0
        %1995 = vmatmul.mubr.f32.gmra.mxu0 %v1895
        %v1996 = vpop.f32.mrf.mxu0
        %v1997 = vadd.f32 %v1868, %v1996
        %v1998 = vpop.f32.mrf.mxu0
        %1999 = vmatprep.mubr.f32.mxu0 0.0
        %2000 = vmatmul.mubr.f32.gmra.mxu0 %v1898
        %v2001 = vpop.f32.mrf.mxu0
        %v2002 = vadd.f32 %v1873, %v2001
        %v2003 = vpop.f32.mrf.mxu0
        %2004 = vdwg.mxu0
        %v2005 = vld [vmem:[#allocation2 + $0x2] sm:$0xff]
        %v2006 = vld [vmem:[#allocation2 + $0x12] sm:$0xff]
        %v2007 = vld [vmem:[#allocation2 + $0x22] sm:$0xff]
        %v2008 = vld [vmem:[#allocation2 + $0x32] sm:$0xff]
        %v2009 = vld [vmem:[#allocation2 + $0x42] sm:$0xff]
        %v2010 = vld [vmem:[#allocation2 + $0x52] sm:$0xff]
        %v2011 = vld [vmem:[#allocation2 + $0x62] sm:$0xff]
        %v2012 = vld [vmem:[#allocation2 + $0x72] sm:$0xff]
        %s2013 = scalar_lea.vmem %s1, 352
        %v2014 = vld [vmem:[%s2013] sm:$0xff]
        %v2015 = vld [vmem:[%s2013 + $0x8] sm:$0xff]
        %v2016 = vld [vmem:[%s2013 + $0x10] sm:$0xff]
        %v2017 = vld [vmem:[%s2013 + $0x18] sm:$0xff]
        %v2019 = vsel %vm317, %v2005, 0
        %v2022 = vsel %vm317, %v2006, 0
        %v2025 = vsel %vm317, %v2007, 0
        %v2028 = vsel %vm317, %v2008, 0
        %v2031 = vsel %vm317, %v2009, 0
        %v2034 = vsel %vm317, %v2010, 0
        %v2037 = vsel %vm317, %v2011, 0
        %v2040 = vsel %vm317, %v2012, 0
        %2042 = vmatprep.subr.mxu0 0.0
        %2043 = vmatpush1.msra.mxu0 0.0
        %2044 = vmatprep.subr.mxu0 0.0
        %2045 = vmatpush1.msra.mxu0 0.0
        %2046 = vmatprep.subr.mxu0 0.0
        %2047 = vmatpush1.msra.mxu0 0.0
        %2048 = vmatprep.subr.mxu0 0.0
        %2049 = vmatpush1.msra.mxu0 0.0
        %2050 = vmatprep.subr.mxu0 0.0
        %2051 = vmatpush1.msra.mxu0 0.0
        %2052 = vmatprep.subr.mxu0 0.0
        %2053 = vmatpush1.msra.mxu0 0.0
        %2054 = vmatprep.subr.mxu0 0.0
        %2055 = vmatpush1.msra.mxu0 0.0
        %2056 = vmatprep.subr.mxu0 0.0
        %2057 = vmatpush1.msra.mxu0 0.0
        %2058 = vmatprep.subr.mxu0 0.0
        %2059 = vmatpush1.msra.mxu0 0.0
        %2060 = vmatprep.subr.mxu0 0.0
        %2061 = vmatpush1.msra.mxu0 0.0
        %2062 = vmatprep.subr.mxu0 0.0
        %2063 = vmatpush1.msra.mxu0 0.0
        %2064 = vmatprep.subr.mxu0 0.0
        %2065 = vmatpush1.msra.mxu0 0.0
        %2066 = vmatprep.subr.mxu0 0.0
        %2067 = vmatpush1.msra.mxu0 %v2017
        %2068 = vmatprep.subr.mxu0 0.0
        %2069 = vmatpush1.msra.mxu0 %v2016
        %2070 = vmatprep.subr.mxu0 0.0
        %2071 = vmatpush1.msra.mxu0 %v2015
        %2072 = vmatprep.subr.mxu0 0.0
        %2073 = vmatpush1.msra.mxu0 %v2014
        %2074 = vmatprep.subr.mxu0 0.0
        %2075 = vmatpush2.msra.mxu0 0.0
        %2076 = vmatprep.subr.mxu0 0.0
        %2077 = vmatpush2.msra.mxu0 0.0
        %2078 = vmatprep.subr.mxu0 0.0
        %2079 = vmatpush2.msra.mxu0 0.0
        %2080 = vmatprep.subr.mxu0 0.0
        %2081 = vmatpush2.msra.mxu0 0.0
        %2082 = vmatprep.subr.mxu0 0.0
        %2083 = vmatpush2.msra.mxu0 0.0
        %2084 = vmatprep.subr.mxu0 0.0
        %2085 = vmatpush2.msra.mxu0 0.0
        %2086 = vmatprep.subr.mxu0 0.0
        %2087 = vmatpush2.msra.mxu0 0.0
        %2088 = vmatprep.subr.mxu0 0.0
        %2089 = vmatpush2.msra.mxu0 0.0
        %2090 = vmatprep.subr.mxu0 0.0
        %2091 = vmatpush2.msra.mxu0 0.0
        %2092 = vmatprep.subr.mxu0 0.0
        %2093 = vmatpush2.msra.mxu0 0.0
        %2094 = vmatprep.subr.mxu0 0.0
        %2095 = vmatpush2.msra.mxu0 0.0
        %2096 = vmatprep.subr.mxu0 0.0
        %2097 = vmatpush2.msra.mxu0 0.0
        %2098 = vmatprep.subr.mxu0 0.0
        %2099 = vmatpush2.msra.mxu0 0.0
        %2100 = vmatprep.subr.mxu0 0.0
        %2101 = vmatpush2.msra.mxu0 0.0
        %2102 = vmatprep.subr.mxu0 0.0
        %2103 = vmatpush2.msra.mxu0 0.0
        %2104 = vmatprep.subr.mxu0 0.0
        %2105 = vmatpush2.msra.mxu0 0.0
        %2106 = vmatprep.mubr.f32.mxu0 0.0
        %2107 = vmatmul.mubr.f32.gmra.mxu0 %v2019
        %v2108 = vpop.f32.mrf.mxu0
        %v2109 = vadd.f32 0.0, %v2108
        %v2110 = vpop.f32.mrf.mxu0
        %2111 = vmatprep.mubr.f32.mxu0 0.0
        %2112 = vmatmul.mubr.f32.gmra.mxu0 %v2022
        %v2113 = vpop.f32.mrf.mxu0
        %v2114 = vadd.f32 0.0, %v2113
        %v2115 = vpop.f32.mrf.mxu0
        %2116 = vmatprep.mubr.f32.mxu0 0.0
        %2117 = vmatmul.mubr.f32.gmra.mxu0 %v2025
        %v2118 = vpop.f32.mrf.mxu0
        %v2119 = vadd.f32 0.0, %v2118
        %v2120 = vpop.f32.mrf.mxu0
        %2121 = vmatprep.mubr.f32.mxu0 0.0
        %2122 = vmatmul.mubr.f32.gmra.mxu0 %v2028
        %v2123 = vpop.f32.mrf.mxu0
        %v2124 = vadd.f32 0.0, %v2123
        %v2125 = vpop.f32.mrf.mxu0
        %2126 = vmatprep.mubr.f32.mxu0 0.0
        %2127 = vmatmul.mubr.f32.gmra.mxu0 %v2031
        %v2128 = vpop.f32.mrf.mxu0
        %v2129 = vadd.f32 0.0, %v2128
        %v2130 = vpop.f32.mrf.mxu0
        %2131 = vmatprep.mubr.f32.mxu0 0.0
        %2132 = vmatmul.mubr.f32.gmra.mxu0 %v2034
        %v2133 = vpop.f32.mrf.mxu0
        %v2134 = vadd.f32 0.0, %v2133
        %v2135 = vpop.f32.mrf.mxu0
        %2136 = vmatprep.mubr.f32.mxu0 0.0
        %2137 = vmatmul.mubr.f32.gmra.mxu0 %v2037
        %v2138 = vpop.f32.mrf.mxu0
        %v2139 = vadd.f32 0.0, %v2138
        %v2140 = vpop.f32.mrf.mxu0
        %2141 = vmatprep.mubr.f32.mxu0 0.0
        %2142 = vmatmul.mubr.f32.gmra.mxu0 %v2040
        %v2143 = vpop.f32.mrf.mxu0
        %v2144 = vadd.f32 0.0, %v2143
        %v2145 = vpop.f32.mrf.mxu0
        %2146 = vdwg.mxu0
        %v2147 = vadd.f32 %v1967, %v2109
        %v2148 = vadd.f32 %v1972, %v2114
        %v2149 = vadd.f32 %v1977, %v2119
        %v2150 = vadd.f32 %v1982, %v2124
        %v2151 = vadd.f32 %v1987, %v2129
        %v2152 = vadd.f32 %v1992, %v2134
        %v2153 = vadd.f32 %v1997, %v2139
        %v2154 = vadd.f32 %v2002, %v2144
        %v2155 = vld [vmem:[%s347] sm:$0xff]
        %v2156 = vld [vmem:[%s347 + $0x10] sm:$0xff]
        %v2157 = vld [vmem:[%s347 + $0x20] sm:$0xff]
        %v2158 = vld [vmem:[%s347 + $0x30] sm:$0xff]
        %v2159 = vld [vmem:[%s347 + $0x40] sm:$0xff]
        %v2160 = vld [vmem:[%s347 + $0x50] sm:$0xff]
        %v2161 = vld [vmem:[%s347 + $0x60] sm:$0xff]
        %v2162 = vld [vmem:[%s347 + $0x70] sm:$0xff]
        %s2163 = scalar_lea.vmem %s1, 384
        %v2164 = vld [vmem:[%s2163] sm:$0xff]
        %v2165 = vld [vmem:[%s2163 + $0x8] sm:$0xff]
        %v2166 = vld [vmem:[%s2163 + $0x10] sm:$0xff]
        %v2167 = vld [vmem:[%s2163 + $0x18] sm:$0xff]
        %v2169 = vsel %vm317, %v2155, 0
        %v2172 = vsel %vm317, %v2156, 0
        %v2175 = vsel %vm317, %v2157, 0
        %v2178 = vsel %vm317, %v2158, 0
        %v2181 = vsel %vm317, %v2159, 0
        %v2184 = vsel %vm317, %v2160, 0
        %v2187 = vsel %vm317, %v2161, 0
        %v2190 = vsel %vm317, %v2162, 0
        %2192 = vmatprep.subr.mxu0 0.0
        %2193 = vmatpush1.msra.mxu0 0.0
        %2194 = vmatprep.subr.mxu0 0.0
        %2195 = vmatpush1.msra.mxu0 0.0
        %2196 = vmatprep.subr.mxu0 0.0
        %2197 = vmatpush1.msra.mxu0 0.0
        %2198 = vmatprep.subr.mxu0 0.0
        %2199 = vmatpush1.msra.mxu0 0.0
        %2200 = vmatprep.subr.mxu0 0.0
        %2201 = vmatpush1.msra.mxu0 0.0
        %2202 = vmatprep.subr.mxu0 0.0
        %2203 = vmatpush1.msra.mxu0 0.0
        %2204 = vmatprep.subr.mxu0 0.0
        %2205 = vmatpush1.msra.mxu0 0.0
        %2206 = vmatprep.subr.mxu0 0.0
        %2207 = vmatpush1.msra.mxu0 0.0
        %2208 = vmatprep.subr.mxu0 0.0
        %2209 = vmatpush1.msra.mxu0 0.0
        %2210 = vmatprep.subr.mxu0 0.0
        %2211 = vmatpush1.msra.mxu0 0.0
        %2212 = vmatprep.subr.mxu0 0.0
        %2213 = vmatpush1.msra.mxu0 0.0
        %2214 = vmatprep.subr.mxu0 0.0
        %2215 = vmatpush1.msra.mxu0 0.0
        %2216 = vmatprep.subr.mxu0 0.0
        %2217 = vmatpush1.msra.mxu0 %v2167
        %2218 = vmatprep.subr.mxu0 0.0
        %2219 = vmatpush1.msra.mxu0 %v2166
        %2220 = vmatprep.subr.mxu0 0.0
        %2221 = vmatpush1.msra.mxu0 %v2165
        %2222 = vmatprep.subr.mxu0 0.0
        %2223 = vmatpush1.msra.mxu0 %v2164
        %2224 = vmatprep.subr.mxu0 0.0
        %2225 = vmatpush2.msra.mxu0 0.0
        %2226 = vmatprep.subr.mxu0 0.0
        %2227 = vmatpush2.msra.mxu0 0.0
        %2228 = vmatprep.subr.mxu0 0.0
        %2229 = vmatpush2.msra.mxu0 0.0
        %2230 = vmatprep.subr.mxu0 0.0
        %2231 = vmatpush2.msra.mxu0 0.0
        %2232 = vmatprep.subr.mxu0 0.0
        %2233 = vmatpush2.msra.mxu0 0.0
        %2234 = vmatprep.subr.mxu0 0.0
        %2235 = vmatpush2.msra.mxu0 0.0
        %2236 = vmatprep.subr.mxu0 0.0
        %2237 = vmatpush2.msra.mxu0 0.0
        %2238 = vmatprep.subr.mxu0 0.0
        %2239 = vmatpush2.msra.mxu0 0.0
        %2240 = vmatprep.subr.mxu0 0.0
        %2241 = vmatpush2.msra.mxu0 0.0
        %2242 = vmatprep.subr.mxu0 0.0
        %2243 = vmatpush2.msra.mxu0 0.0
        %2244 = vmatprep.subr.mxu0 0.0
        %2245 = vmatpush2.msra.mxu0 0.0
        %2246 = vmatprep.subr.mxu0 0.0
        %2247 = vmatpush2.msra.mxu0 0.0
        %2248 = vmatprep.subr.mxu0 0.0
        %2249 = vmatpush2.msra.mxu0 0.0
        %2250 = vmatprep.subr.mxu0 0.0
        %2251 = vmatpush2.msra.mxu0 0.0
        %2252 = vmatprep.subr.mxu0 0.0
        %2253 = vmatpush2.msra.mxu0 0.0
        %2254 = vmatprep.subr.mxu0 0.0
        %2255 = vmatpush2.msra.mxu0 0.0
        %2256 = vmatprep.mubr.f32.mxu0 0.0
        %2257 = vmatmul.mubr.f32.gmra.mxu0 %v2169
        %v2258 = vpop.f32.mrf.mxu0
        %v2259 = vadd.f32 0.0, %v2258
        %v2260 = vpop.f32.mrf.mxu0
        %2261 = vmatprep.mubr.f32.mxu0 0.0
        %2262 = vmatmul.mubr.f32.gmra.mxu0 %v2172
        %v2263 = vpop.f32.mrf.mxu0
        %v2264 = vadd.f32 0.0, %v2263
        %v2265 = vpop.f32.mrf.mxu0
        %2266 = vmatprep.mubr.f32.mxu0 0.0
        %2267 = vmatmul.mubr.f32.gmra.mxu0 %v2175
        %v2268 = vpop.f32.mrf.mxu0
        %v2269 = vadd.f32 0.0, %v2268
        %v2270 = vpop.f32.mrf.mxu0
        %2271 = vmatprep.mubr.f32.mxu0 0.0
        %2272 = vmatmul.mubr.f32.gmra.mxu0 %v2178
        %v2273 = vpop.f32.mrf.mxu0
        %v2274 = vadd.f32 0.0, %v2273
        %v2275 = vpop.f32.mrf.mxu0
        %2276 = vmatprep.mubr.f32.mxu0 0.0
        %2277 = vmatmul.mubr.f32.gmra.mxu0 %v2181
        %v2278 = vpop.f32.mrf.mxu0
        %v2279 = vadd.f32 0.0, %v2278
        %v2280 = vpop.f32.mrf.mxu0
        %2281 = vmatprep.mubr.f32.mxu0 0.0
        %2282 = vmatmul.mubr.f32.gmra.mxu0 %v2184
        %v2283 = vpop.f32.mrf.mxu0
        %v2284 = vadd.f32 0.0, %v2283
        %v2285 = vpop.f32.mrf.mxu0
        %2286 = vmatprep.mubr.f32.mxu0 0.0
        %2287 = vmatmul.mubr.f32.gmra.mxu0 %v2187
        %v2288 = vpop.f32.mrf.mxu0
        %v2289 = vadd.f32 0.0, %v2288
        %v2290 = vpop.f32.mrf.mxu0
        %2291 = vmatprep.mubr.f32.mxu0 0.0
        %2292 = vmatmul.mubr.f32.gmra.mxu0 %v2190
        %v2293 = vpop.f32.mrf.mxu0
        %v2294 = vadd.f32 0.0, %v2293
        %v2295 = vpop.f32.mrf.mxu0
        %2296 = vdwg.mxu0
        %v2297 = vadd.f32 %v2147, %v2259
        %v2298 = vadd.f32 %v2148, %v2264
        %v2299 = vadd.f32 %v2149, %v2269
        %v2300 = vadd.f32 %v2150, %v2274
        %v2301 = vadd.f32 %v2151, %v2279
        %v2302 = vadd.f32 %v2152, %v2284
        %v2303 = vadd.f32 %v2153, %v2289
        %v2304 = vadd.f32 %v2154, %v2294
        %v2305 = vld [vmem:[%s347 + $0x1] sm:$0xff]
        %v2306 = vld [vmem:[%s347 + $0x11] sm:$0xff]
        %v2307 = vld [vmem:[%s347 + $0x21] sm:$0xff]
        %v2308 = vld [vmem:[%s347 + $0x31] sm:$0xff]
        %v2309 = vld [vmem:[%s347 + $0x41] sm:$0xff]
        %v2310 = vld [vmem:[%s347 + $0x51] sm:$0xff]
        %v2311 = vld [vmem:[%s347 + $0x61] sm:$0xff]
        %v2312 = vld [vmem:[%s347 + $0x71] sm:$0xff]
        %s2313 = scalar_lea.vmem %s1, 416
        %v2314 = vld [vmem:[%s2313] sm:$0xff]
        %v2315 = vld [vmem:[%s2313 + $0x8] sm:$0xff]
        %v2316 = vld [vmem:[%s2313 + $0x10] sm:$0xff]
        %v2317 = vld [vmem:[%s2313 + $0x18] sm:$0xff]
        %v2319 = vsel %vm317, %v2305, 0
        %v2322 = vsel %vm317, %v2306, 0
        %v2325 = vsel %vm317, %v2307, 0
        %v2328 = vsel %vm317, %v2308, 0
        %v2331 = vsel %vm317, %v2309, 0
        %v2334 = vsel %vm317, %v2310, 0
        %v2337 = vsel %vm317, %v2311, 0
        %v2340 = vsel %vm317, %v2312, 0
        %2342 = vmatprep.subr.mxu0 0.0
        %2343 = vmatpush1.msra.mxu0 0.0
        %2344 = vmatprep.subr.mxu0 0.0
        %2345 = vmatpush1.msra.mxu0 0.0
        %2346 = vmatprep.subr.mxu0 0.0
        %2347 = vmatpush1.msra.mxu0 0.0
        %2348 = vmatprep.subr.mxu0 0.0
        %2349 = vmatpush1.msra.mxu0 0.0
        %2350 = vmatprep.subr.mxu0 0.0
        %2351 = vmatpush1.msra.mxu0 0.0
        %2352 = vmatprep.subr.mxu0 0.0
        %2353 = vmatpush1.msra.mxu0 0.0
        %2354 = vmatprep.subr.mxu0 0.0
        %2355 = vmatpush1.msra.mxu0 0.0
        %2356 = vmatprep.subr.mxu0 0.0
        %2357 = vmatpush1.msra.mxu0 0.0
        %2358 = vmatprep.subr.mxu0 0.0
        %2359 = vmatpush1.msra.mxu0 0.0
        %2360 = vmatprep.subr.mxu0 0.0
        %2361 = vmatpush1.msra.mxu0 0.0
        %2362 = vmatprep.subr.mxu0 0.0
        %2363 = vmatpush1.msra.mxu0 0.0
        %2364 = vmatprep.subr.mxu0 0.0
        %2365 = vmatpush1.msra.mxu0 0.0
        %2366 = vmatprep.subr.mxu0 0.0
        %2367 = vmatpush1.msra.mxu0 %v2317
        %2368 = vmatprep.subr.mxu0 0.0
        %2369 = vmatpush1.msra.mxu0 %v2316
        %2370 = vmatprep.subr.mxu0 0.0
        %2371 = vmatpush1.msra.mxu0 %v2315
        %2372 = vmatprep.subr.mxu0 0.0
        %2373 = vmatpush1.msra.mxu0 %v2314
        %2374 = vmatprep.subr.mxu0 0.0
        %2375 = vmatpush2.msra.mxu0 0.0
        %2376 = vmatprep.subr.mxu0 0.0
        %2377 = vmatpush2.msra.mxu0 0.0
        %2378 = vmatprep.subr.mxu0 0.0
        %2379 = vmatpush2.msra.mxu0 0.0
        %2380 = vmatprep.subr.mxu0 0.0
        %2381 = vmatpush2.msra.mxu0 0.0
        %2382 = vmatprep.subr.mxu0 0.0
        %2383 = vmatpush2.msra.mxu0 0.0
        %2384 = vmatprep.subr.mxu0 0.0
        %2385 = vmatpush2.msra.mxu0 0.0
        %2386 = vmatprep.subr.mxu0 0.0
        %2387 = vmatpush2.msra.mxu0 0.0
        %2388 = vmatprep.subr.mxu0 0.0
        %2389 = vmatpush2.msra.mxu0 0.0
        %2390 = vmatprep.subr.mxu0 0.0
        %2391 = vmatpush2.msra.mxu0 0.0
        %2392 = vmatprep.subr.mxu0 0.0
        %2393 = vmatpush2.msra.mxu0 0.0
        %2394 = vmatprep.subr.mxu0 0.0
        %2395 = vmatpush2.msra.mxu0 0.0
        %2396 = vmatprep.subr.mxu0 0.0
        %2397 = vmatpush2.msra.mxu0 0.0
        %2398 = vmatprep.subr.mxu0 0.0
        %2399 = vmatpush2.msra.mxu0 0.0
        %2400 = vmatprep.subr.mxu0 0.0
        %2401 = vmatpush2.msra.mxu0 0.0
        %2402 = vmatprep.subr.mxu0 0.0
        %2403 = vmatpush2.msra.mxu0 0.0
        %2404 = vmatprep.subr.mxu0 0.0
        %2405 = vmatpush2.msra.mxu0 0.0
        %2406 = vmatprep.mubr.f32.mxu0 0.0
        %2407 = vmatmul.mubr.f32.gmra.mxu0 %v2319
        %v2408 = vpop.f32.mrf.mxu0
        %v2409 = vadd.f32 0.0, %v2408
        %v2410 = vpop.f32.mrf.mxu0
        %2411 = vmatprep.mubr.f32.mxu0 0.0
        %2412 = vmatmul.mubr.f32.gmra.mxu0 %v2322
        %v2413 = vpop.f32.mrf.mxu0
        %v2414 = vadd.f32 0.0, %v2413
        %v2415 = vpop.f32.mrf.mxu0
        %2416 = vmatprep.mubr.f32.mxu0 0.0
        %2417 = vmatmul.mubr.f32.gmra.mxu0 %v2325
        %v2418 = vpop.f32.mrf.mxu0
        %v2419 = vadd.f32 0.0, %v2418
        %v2420 = vpop.f32.mrf.mxu0
        %2421 = vmatprep.mubr.f32.mxu0 0.0
        %2422 = vmatmul.mubr.f32.gmra.mxu0 %v2328
        %v2423 = vpop.f32.mrf.mxu0
        %v2424 = vadd.f32 0.0, %v2423
        %v2425 = vpop.f32.mrf.mxu0
        %2426 = vmatprep.mubr.f32.mxu0 0.0
        %2427 = vmatmul.mubr.f32.gmra.mxu0 %v2331
        %v2428 = vpop.f32.mrf.mxu0
        %v2429 = vadd.f32 0.0, %v2428
        %v2430 = vpop.f32.mrf.mxu0
        %2431 = vmatprep.mubr.f32.mxu0 0.0
        %2432 = vmatmul.mubr.f32.gmra.mxu0 %v2334
        %v2433 = vpop.f32.mrf.mxu0
        %v2434 = vadd.f32 0.0, %v2433
        %v2435 = vpop.f32.mrf.mxu0
        %2436 = vmatprep.mubr.f32.mxu0 0.0
        %2437 = vmatmul.mubr.f32.gmra.mxu0 %v2337
        %v2438 = vpop.f32.mrf.mxu0
        %v2439 = vadd.f32 0.0, %v2438
        %v2440 = vpop.f32.mrf.mxu0
        %2441 = vmatprep.mubr.f32.mxu0 0.0
        %2442 = vmatmul.mubr.f32.gmra.mxu0 %v2340
        %v2443 = vpop.f32.mrf.mxu0
        %v2444 = vadd.f32 0.0, %v2443
        %v2445 = vpop.f32.mrf.mxu0
        %2446 = vdwg.mxu0
        %v2447 = vadd.f32 %v2297, %v2409
        %v2448 = vadd.f32 %v2298, %v2414
        %v2449 = vadd.f32 %v2299, %v2419
        %v2450 = vadd.f32 %v2300, %v2424
        %v2451 = vadd.f32 %v2301, %v2429
        %v2452 = vadd.f32 %v2302, %v2434
        %v2453 = vadd.f32 %v2303, %v2439
        %v2454 = vadd.f32 %v2304, %v2444
        %v2455 = vld [vmem:[%s347 + $0x2] sm:$0xff]
        %v2456 = vld [vmem:[%s347 + $0x12] sm:$0xff]
        %v2457 = vld [vmem:[%s347 + $0x22] sm:$0xff]
        %v2458 = vld [vmem:[%s347 + $0x32] sm:$0xff]
        %v2459 = vld [vmem:[%s347 + $0x42] sm:$0xff]
        %v2460 = vld [vmem:[%s347 + $0x52] sm:$0xff]
        %v2461 = vld [vmem:[%s347 + $0x62] sm:$0xff]
        %v2462 = vld [vmem:[%s347 + $0x72] sm:$0xff]
        %s2463 = scalar_lea.vmem %s1, 448
        %v2464 = vld [vmem:[%s2463] sm:$0xff]
        %v2465 = vld [vmem:[%s2463 + $0x8] sm:$0xff]
        %v2466 = vld [vmem:[%s2463 + $0x10] sm:$0xff]
        %v2467 = vld [vmem:[%s2463 + $0x18] sm:$0xff]
        %v2469 = vsel %vm317, %v2455, 0
        %v2472 = vsel %vm317, %v2456, 0
        %v2475 = vsel %vm317, %v2457, 0
        %v2478 = vsel %vm317, %v2458, 0
        %v2481 = vsel %vm317, %v2459, 0
        %v2484 = vsel %vm317, %v2460, 0
        %v2487 = vsel %vm317, %v2461, 0
        %v2490 = vsel %vm317, %v2462, 0
        %2492 = vmatprep.subr.mxu0 0.0
        %2493 = vmatpush1.msra.mxu0 0.0
        %2494 = vmatprep.subr.mxu0 0.0
        %2495 = vmatpush1.msra.mxu0 0.0
        %2496 = vmatprep.subr.mxu0 0.0
        %2497 = vmatpush1.msra.mxu0 0.0
        %2498 = vmatprep.subr.mxu0 0.0
        %2499 = vmatpush1.msra.mxu0 0.0
        %2500 = vmatprep.subr.mxu0 0.0
        %2501 = vmatpush1.msra.mxu0 0.0
        %2502 = vmatprep.subr.mxu0 0.0
        %2503 = vmatpush1.msra.mxu0 0.0
        %2504 = vmatprep.subr.mxu0 0.0
        %2505 = vmatpush1.msra.mxu0 0.0
        %2506 = vmatprep.subr.mxu0 0.0
        %2507 = vmatpush1.msra.mxu0 0.0
        %2508 = vmatprep.subr.mxu0 0.0
        %2509 = vmatpush1.msra.mxu0 0.0
        %2510 = vmatprep.subr.mxu0 0.0
        %2511 = vmatpush1.msra.mxu0 0.0
        %2512 = vmatprep.subr.mxu0 0.0
        %2513 = vmatpush1.msra.mxu0 0.0
        %2514 = vmatprep.subr.mxu0 0.0
        %2515 = vmatpush1.msra.mxu0 0.0
        %2516 = vmatprep.subr.mxu0 0.0
        %2517 = vmatpush1.msra.mxu0 %v2467
        %2518 = vmatprep.subr.mxu0 0.0
        %2519 = vmatpush1.msra.mxu0 %v2466
        %2520 = vmatprep.subr.mxu0 0.0
        %2521 = vmatpush1.msra.mxu0 %v2465
        %2522 = vmatprep.subr.mxu0 0.0
        %2523 = vmatpush1.msra.mxu0 %v2464
        %2524 = vmatprep.subr.mxu0 0.0
        %2525 = vmatpush2.msra.mxu0 0.0
        %2526 = vmatprep.subr.mxu0 0.0
        %2527 = vmatpush2.msra.mxu0 0.0
        %2528 = vmatprep.subr.mxu0 0.0
        %2529 = vmatpush2.msra.mxu0 0.0
        %2530 = vmatprep.subr.mxu0 0.0
        %2531 = vmatpush2.msra.mxu0 0.0
        %2532 = vmatprep.subr.mxu0 0.0
        %2533 = vmatpush2.msra.mxu0 0.0
        %2534 = vmatprep.subr.mxu0 0.0
        %2535 = vmatpush2.msra.mxu0 0.0
        %2536 = vmatprep.subr.mxu0 0.0
        %2537 = vmatpush2.msra.mxu0 0.0
        %2538 = vmatprep.subr.mxu0 0.0
        %2539 = vmatpush2.msra.mxu0 0.0
        %2540 = vmatprep.subr.mxu0 0.0
        %2541 = vmatpush2.msra.mxu0 0.0
        %2542 = vmatprep.subr.mxu0 0.0
        %2543 = vmatpush2.msra.mxu0 0.0
        %2544 = vmatprep.subr.mxu0 0.0
        %2545 = vmatpush2.msra.mxu0 0.0
        %2546 = vmatprep.subr.mxu0 0.0
        %2547 = vmatpush2.msra.mxu0 0.0
        %2548 = vmatprep.subr.mxu0 0.0
        %2549 = vmatpush2.msra.mxu0 0.0
        %2550 = vmatprep.subr.mxu0 0.0
        %2551 = vmatpush2.msra.mxu0 0.0
        %2552 = vmatprep.subr.mxu0 0.0
        %2553 = vmatpush2.msra.mxu0 0.0
        %2554 = vmatprep.subr.mxu0 0.0
        %2555 = vmatpush2.msra.mxu0 0.0
        %2556 = vmatprep.mubr.f32.mxu0 0.0
        %2557 = vmatmul.mubr.f32.gmra.mxu0 %v2469
        %v2558 = vpop.f32.mrf.mxu0
        %v2559 = vadd.f32 0.0, %v2558
        %v2560 = vpop.f32.mrf.mxu0
        %2561 = vmatprep.mubr.f32.mxu0 0.0
        %2562 = vmatmul.mubr.f32.gmra.mxu0 %v2472
        %v2563 = vpop.f32.mrf.mxu0
        %v2564 = vadd.f32 0.0, %v2563
        %v2565 = vpop.f32.mrf.mxu0
        %2566 = vmatprep.mubr.f32.mxu0 0.0
        %2567 = vmatmul.mubr.f32.gmra.mxu0 %v2475
        %v2568 = vpop.f32.mrf.mxu0
        %v2569 = vadd.f32 0.0, %v2568
        %v2570 = vpop.f32.mrf.mxu0
        %2571 = vmatprep.mubr.f32.mxu0 0.0
        %2572 = vmatmul.mubr.f32.gmra.mxu0 %v2478
        %v2573 = vpop.f32.mrf.mxu0
        %v2574 = vadd.f32 0.0, %v2573
        %v2575 = vpop.f32.mrf.mxu0
        %2576 = vmatprep.mubr.f32.mxu0 0.0
        %2577 = vmatmul.mubr.f32.gmra.mxu0 %v2481
        %v2578 = vpop.f32.mrf.mxu0
        %v2579 = vadd.f32 0.0, %v2578
        %v2580 = vpop.f32.mrf.mxu0
        %2581 = vmatprep.mubr.f32.mxu0 0.0
        %2582 = vmatmul.mubr.f32.gmra.mxu0 %v2484
        %v2583 = vpop.f32.mrf.mxu0
        %v2584 = vadd.f32 0.0, %v2583
        %v2585 = vpop.f32.mrf.mxu0
        %2586 = vmatprep.mubr.f32.mxu0 0.0
        %2587 = vmatmul.mubr.f32.gmra.mxu0 %v2487
        %v2588 = vpop.f32.mrf.mxu0
        %v2589 = vadd.f32 0.0, %v2588
        %v2590 = vpop.f32.mrf.mxu0
        %2591 = vmatprep.mubr.f32.mxu0 0.0
        %2592 = vmatmul.mubr.f32.gmra.mxu0 %v2490
        %v2593 = vpop.f32.mrf.mxu0
        %v2594 = vadd.f32 0.0, %v2593
        %v2595 = vpop.f32.mrf.mxu0
        %2596 = vdwg.mxu0
        %v2597 = vadd.f32 %v2447, %v2559
        %v2598 = vadd.f32 %v2448, %v2564
        %v2599 = vadd.f32 %v2449, %v2569
        %v2600 = vadd.f32 %v2450, %v2574
        %v2601 = vadd.f32 %v2451, %v2579
        %v2602 = vadd.f32 %v2452, %v2584
        %v2603 = vadd.f32 %v2453, %v2589
        %v2604 = vadd.f32 %v2454, %v2594
        %v2605 = vld [vmem:[%s1239] sm:$0xff]
        %v2606 = vld [vmem:[%s1239 + $0x10] sm:$0xff]
        %v2607 = vld [vmem:[%s1239 + $0x20] sm:$0xff]
        %v2608 = vld [vmem:[%s1239 + $0x30] sm:$0xff]
        %v2609 = vld [vmem:[%s1239 + $0x40] sm:$0xff]
        %v2610 = vld [vmem:[%s1239 + $0x50] sm:$0xff]
        %v2611 = vld [vmem:[%s1239 + $0x60] sm:$0xff]
        %v2612 = vld [vmem:[%s1239 + $0x70] sm:$0xff]
        %s2613 = scalar_lea.vmem %s1, 480
        %v2614 = vld [vmem:[%s2613] sm:$0xff]
        %v2615 = vld [vmem:[%s2613 + $0x8] sm:$0xff]
        %v2616 = vld [vmem:[%s2613 + $0x10] sm:$0xff]
        %v2617 = vld [vmem:[%s2613 + $0x18] sm:$0xff]
        %v2619 = vsel %vm317, %v2605, 0
        %v2622 = vsel %vm317, %v2606, 0
        %v2625 = vsel %vm317, %v2607, 0
        %v2628 = vsel %vm317, %v2608, 0
        %v2631 = vsel %vm317, %v2609, 0
        %v2634 = vsel %vm317, %v2610, 0
        %v2637 = vsel %vm317, %v2611, 0
        %v2640 = vsel %vm317, %v2612, 0
        %2642 = vmatprep.subr.mxu0 0.0
        %2643 = vmatpush1.msra.mxu0 0.0
        %2644 = vmatprep.subr.mxu0 0.0
        %2645 = vmatpush1.msra.mxu0 0.0
        %2646 = vmatprep.subr.mxu0 0.0
        %2647 = vmatpush1.msra.mxu0 0.0
        %2648 = vmatprep.subr.mxu0 0.0
        %2649 = vmatpush1.msra.mxu0 0.0
        %2650 = vmatprep.subr.mxu0 0.0
        %2651 = vmatpush1.msra.mxu0 0.0
        %2652 = vmatprep.subr.mxu0 0.0
        %2653 = vmatpush1.msra.mxu0 0.0
        %2654 = vmatprep.subr.mxu0 0.0
        %2655 = vmatpush1.msra.mxu0 0.0
        %2656 = vmatprep.subr.mxu0 0.0
        %2657 = vmatpush1.msra.mxu0 0.0
        %2658 = vmatprep.subr.mxu0 0.0
        %2659 = vmatpush1.msra.mxu0 0.0
        %2660 = vmatprep.subr.mxu0 0.0
        %2661 = vmatpush1.msra.mxu0 0.0
        %2662 = vmatprep.subr.mxu0 0.0
        %2663 = vmatpush1.msra.mxu0 0.0
        %2664 = vmatprep.subr.mxu0 0.0
        %2665 = vmatpush1.msra.mxu0 0.0
        %2666 = vmatprep.subr.mxu0 0.0
        %2667 = vmatpush1.msra.mxu0 %v2617
        %2668 = vmatprep.subr.mxu0 0.0
        %2669 = vmatpush1.msra.mxu0 %v2616
        %2670 = vmatprep.subr.mxu0 0.0
        %2671 = vmatpush1.msra.mxu0 %v2615
        %2672 = vmatprep.subr.mxu0 0.0
        %2673 = vmatpush1.msra.mxu0 %v2614
        %2674 = vmatprep.subr.mxu0 0.0
        %2675 = vmatpush2.msra.mxu0 0.0
        %2676 = vmatprep.subr.mxu0 0.0
        %2677 = vmatpush2.msra.mxu0 0.0
        %2678 = vmatprep.subr.mxu0 0.0
        %2679 = vmatpush2.msra.mxu0 0.0
        %2680 = vmatprep.subr.mxu0 0.0
        %2681 = vmatpush2.msra.mxu0 0.0
        %2682 = vmatprep.subr.mxu0 0.0
        %2683 = vmatpush2.msra.mxu0 0.0
        %2684 = vmatprep.subr.mxu0 0.0
        %2685 = vmatpush2.msra.mxu0 0.0
        %2686 = vmatprep.subr.mxu0 0.0
        %2687 = vmatpush2.msra.mxu0 0.0
        %2688 = vmatprep.subr.mxu0 0.0
        %2689 = vmatpush2.msra.mxu0 0.0
        %2690 = vmatprep.subr.mxu0 0.0
        %2691 = vmatpush2.msra.mxu0 0.0
        %2692 = vmatprep.subr.mxu0 0.0
        %2693 = vmatpush2.msra.mxu0 0.0
        %2694 = vmatprep.subr.mxu0 0.0
        %2695 = vmatpush2.msra.mxu0 0.0
        %2696 = vmatprep.subr.mxu0 0.0
        %2697 = vmatpush2.msra.mxu0 0.0
        %2698 = vmatprep.subr.mxu0 0.0
        %2699 = vmatpush2.msra.mxu0 0.0
        %2700 = vmatprep.subr.mxu0 0.0
        %2701 = vmatpush2.msra.mxu0 0.0
        %2702 = vmatprep.subr.mxu0 0.0
        %2703 = vmatpush2.msra.mxu0 0.0
        %2704 = vmatprep.subr.mxu0 0.0
        %2705 = vmatpush2.msra.mxu0 0.0
        %2706 = vmatprep.mubr.f32.mxu0 0.0
        %2707 = vmatmul.mubr.f32.gmra.mxu0 %v2619
        %v2708 = vpop.f32.mrf.mxu0
        %v2709 = vadd.f32 0.0, %v2708
        %v2710 = vpop.f32.mrf.mxu0
        %2711 = vmatprep.mubr.f32.mxu0 0.0
        %2712 = vmatmul.mubr.f32.gmra.mxu0 %v2622
        %v2713 = vpop.f32.mrf.mxu0
        %v2714 = vadd.f32 0.0, %v2713
        %v2715 = vpop.f32.mrf.mxu0
        %2716 = vmatprep.mubr.f32.mxu0 0.0
        %2717 = vmatmul.mubr.f32.gmra.mxu0 %v2625
        %v2718 = vpop.f32.mrf.mxu0
        %v2719 = vadd.f32 0.0, %v2718
        %v2720 = vpop.f32.mrf.mxu0
        %2721 = vmatprep.mubr.f32.mxu0 0.0
        %2722 = vmatmul.mubr.f32.gmra.mxu0 %v2628
        %v2723 = vpop.f32.mrf.mxu0
        %v2724 = vadd.f32 0.0, %v2723
        %v2725 = vpop.f32.mrf.mxu0
        %2726 = vmatprep.mubr.f32.mxu0 0.0
        %2727 = vmatmul.mubr.f32.gmra.mxu0 %v2631
        %v2728 = vpop.f32.mrf.mxu0
        %v2729 = vadd.f32 0.0, %v2728
        %v2730 = vpop.f32.mrf.mxu0
        %2731 = vmatprep.mubr.f32.mxu0 0.0
        %2732 = vmatmul.mubr.f32.gmra.mxu0 %v2634
        %v2733 = vpop.f32.mrf.mxu0
        %v2734 = vadd.f32 0.0, %v2733
        %v2735 = vpop.f32.mrf.mxu0
        %2736 = vmatprep.mubr.f32.mxu0 0.0
        %2737 = vmatmul.mubr.f32.gmra.mxu0 %v2637
        %v2738 = vpop.f32.mrf.mxu0
        %v2739 = vadd.f32 0.0, %v2738
        %v2740 = vpop.f32.mrf.mxu0
        %2741 = vmatprep.mubr.f32.mxu0 0.0
        %2742 = vmatmul.mubr.f32.gmra.mxu0 %v2640
        %v2743 = vpop.f32.mrf.mxu0
        %v2744 = vadd.f32 0.0, %v2743
        %v2745 = vpop.f32.mrf.mxu0
        %2746 = vdwg.mxu0
        %v2747 = vadd.f32 %v2597, %v2709
        %v2748 = vadd.f32 %v2598, %v2714
        %v2749 = vadd.f32 %v2599, %v2719
        %v2750 = vadd.f32 %v2600, %v2724
        %v2751 = vadd.f32 %v2601, %v2729
        %v2752 = vadd.f32 %v2602, %v2734
        %v2753 = vadd.f32 %v2603, %v2739
        %v2754 = vadd.f32 %v2604, %v2744
        %v2755 = vld [vmem:[%s1239 + $0x1] sm:$0xff]
        %v2756 = vld [vmem:[%s1239 + $0x11] sm:$0xff]
        %v2757 = vld [vmem:[%s1239 + $0x21] sm:$0xff]
        %v2758 = vld [vmem:[%s1239 + $0x31] sm:$0xff]
        %v2759 = vld [vmem:[%s1239 + $0x41] sm:$0xff]
        %v2760 = vld [vmem:[%s1239 + $0x51] sm:$0xff]
        %v2761 = vld [vmem:[%s1239 + $0x61] sm:$0xff]
        %v2762 = vld [vmem:[%s1239 + $0x71] sm:$0xff]
        %s2763 = scalar_lea.vmem %s1, 512
        %v2764 = vld [vmem:[%s2763] sm:$0xff]
        %v2765 = vld [vmem:[%s2763 + $0x8] sm:$0xff]
        %v2766 = vld [vmem:[%s2763 + $0x10] sm:$0xff]
        %v2767 = vld [vmem:[%s2763 + $0x18] sm:$0xff]
        %v2769 = vsel %vm317, %v2755, 0
        %v2772 = vsel %vm317, %v2756, 0
        %v2775 = vsel %vm317, %v2757, 0
        %v2778 = vsel %vm317, %v2758, 0
        %v2781 = vsel %vm317, %v2759, 0
        %v2784 = vsel %vm317, %v2760, 0
        %v2787 = vsel %vm317, %v2761, 0
        %v2790 = vsel %vm317, %v2762, 0
        %2792 = vmatprep.subr.mxu0 0.0
        %2793 = vmatpush1.msra.mxu0 0.0
        %2794 = vmatprep.subr.mxu0 0.0
        %2795 = vmatpush1.msra.mxu0 0.0
        %2796 = vmatprep.subr.mxu0 0.0
        %2797 = vmatpush1.msra.mxu0 0.0
        %2798 = vmatprep.subr.mxu0 0.0
        %2799 = vmatpush1.msra.mxu0 0.0
        %2800 = vmatprep.subr.mxu0 0.0
        %2801 = vmatpush1.msra.mxu0 0.0
        %2802 = vmatprep.subr.mxu0 0.0
        %2803 = vmatpush1.msra.mxu0 0.0
        %2804 = vmatprep.subr.mxu0 0.0
        %2805 = vmatpush1.msra.mxu0 0.0
        %2806 = vmatprep.subr.mxu0 0.0
        %2807 = vmatpush1.msra.mxu0 0.0
        %2808 = vmatprep.subr.mxu0 0.0
        %2809 = vmatpush1.msra.mxu0 0.0
        %2810 = vmatprep.subr.mxu0 0.0
        %2811 = vmatpush1.msra.mxu0 0.0
        %2812 = vmatprep.subr.mxu0 0.0
        %2813 = vmatpush1.msra.mxu0 0.0
        %2814 = vmatprep.subr.mxu0 0.0
        %2815 = vmatpush1.msra.mxu0 0.0
        %2816 = vmatprep.subr.mxu0 0.0
        %2817 = vmatpush1.msra.mxu0 %v2767
        %2818 = vmatprep.subr.mxu0 0.0
        %2819 = vmatpush1.msra.mxu0 %v2766
        %2820 = vmatprep.subr.mxu0 0.0
        %2821 = vmatpush1.msra.mxu0 %v2765
        %2822 = vmatprep.subr.mxu0 0.0
        %2823 = vmatpush1.msra.mxu0 %v2764
        %2824 = vmatprep.subr.mxu0 0.0
        %2825 = vmatpush2.msra.mxu0 0.0
        %2826 = vmatprep.subr.mxu0 0.0
        %2827 = vmatpush2.msra.mxu0 0.0
        %2828 = vmatprep.subr.mxu0 0.0
        %2829 = vmatpush2.msra.mxu0 0.0
        %2830 = vmatprep.subr.mxu0 0.0
        %2831 = vmatpush2.msra.mxu0 0.0
        %2832 = vmatprep.subr.mxu0 0.0
        %2833 = vmatpush2.msra.mxu0 0.0
        %2834 = vmatprep.subr.mxu0 0.0
        %2835 = vmatpush2.msra.mxu0 0.0
        %2836 = vmatprep.subr.mxu0 0.0
        %2837 = vmatpush2.msra.mxu0 0.0
        %2838 = vmatprep.subr.mxu0 0.0
        %2839 = vmatpush2.msra.mxu0 0.0
        %2840 = vmatprep.subr.mxu0 0.0
        %2841 = vmatpush2.msra.mxu0 0.0
        %2842 = vmatprep.subr.mxu0 0.0
        %2843 = vmatpush2.msra.mxu0 0.0
        %2844 = vmatprep.subr.mxu0 0.0
        %2845 = vmatpush2.msra.mxu0 0.0
        %2846 = vmatprep.subr.mxu0 0.0
        %2847 = vmatpush2.msra.mxu0 0.0
        %2848 = vmatprep.subr.mxu0 0.0
        %2849 = vmatpush2.msra.mxu0 0.0
        %2850 = vmatprep.subr.mxu0 0.0
        %2851 = vmatpush2.msra.mxu0 0.0
        %2852 = vmatprep.subr.mxu0 0.0
        %2853 = vmatpush2.msra.mxu0 0.0
        %2854 = vmatprep.subr.mxu0 0.0
        %2855 = vmatpush2.msra.mxu0 0.0
        %2856 = vmatprep.mubr.f32.mxu0 0.0
        %2857 = vmatmul.mubr.f32.gmra.mxu0 %v2769
        %v2858 = vpop.f32.mrf.mxu0
        %v2859 = vadd.f32 0.0, %v2858
        %v2860 = vpop.f32.mrf.mxu0
        %2861 = vmatprep.mubr.f32.mxu0 0.0
        %2862 = vmatmul.mubr.f32.gmra.mxu0 %v2772
        %v2863 = vpop.f32.mrf.mxu0
        %v2864 = vadd.f32 0.0, %v2863
        %v2865 = vpop.f32.mrf.mxu0
        %2866 = vmatprep.mubr.f32.mxu0 0.0
        %2867 = vmatmul.mubr.f32.gmra.mxu0 %v2775
        %v2868 = vpop.f32.mrf.mxu0
        %v2869 = vadd.f32 0.0, %v2868
        %v2870 = vpop.f32.mrf.mxu0
        %2871 = vmatprep.mubr.f32.mxu0 0.0
        %2872 = vmatmul.mubr.f32.gmra.mxu0 %v2778
        %v2873 = vpop.f32.mrf.mxu0
        %v2874 = vadd.f32 0.0, %v2873
        %v2875 = vpop.f32.mrf.mxu0
        %2876 = vmatprep.mubr.f32.mxu0 0.0
        %2877 = vmatmul.mubr.f32.gmra.mxu0 %v2781
        %v2878 = vpop.f32.mrf.mxu0
        %v2879 = vadd.f32 0.0, %v2878
        %v2880 = vpop.f32.mrf.mxu0
        %2881 = vmatprep.mubr.f32.mxu0 0.0
        %2882 = vmatmul.mubr.f32.gmra.mxu0 %v2784
        %v2883 = vpop.f32.mrf.mxu0
        %v2884 = vadd.f32 0.0, %v2883
        %v2885 = vpop.f32.mrf.mxu0
        %2886 = vmatprep.mubr.f32.mxu0 0.0
        %2887 = vmatmul.mubr.f32.gmra.mxu0 %v2787
        %v2888 = vpop.f32.mrf.mxu0
        %v2889 = vadd.f32 0.0, %v2888
        %v2890 = vpop.f32.mrf.mxu0
        %2891 = vmatprep.mubr.f32.mxu0 0.0
        %2892 = vmatmul.mubr.f32.gmra.mxu0 %v2790
        %v2893 = vpop.f32.mrf.mxu0
        %v2894 = vadd.f32 0.0, %v2893
        %v2895 = vpop.f32.mrf.mxu0
        %2896 = vdwg.mxu0
        %v2897 = vadd.f32 %v2747, %v2859
        %v2898 = vadd.f32 %v2748, %v2864
        %v2899 = vadd.f32 %v2749, %v2869
        %v2900 = vadd.f32 %v2750, %v2874
        %v2901 = vadd.f32 %v2751, %v2879
        %v2902 = vadd.f32 %v2752, %v2884
        %v2903 = vadd.f32 %v2753, %v2889
        %v2904 = vadd.f32 %v2754, %v2894
        %v2905 = vld [vmem:[%s1239 + $0x2] sm:$0xff]
        %v2906 = vld [vmem:[%s1239 + $0x12] sm:$0xff]
        %v2907 = vld [vmem:[%s1239 + $0x22] sm:$0xff]
        %v2908 = vld [vmem:[%s1239 + $0x32] sm:$0xff]
        %v2909 = vld [vmem:[%s1239 + $0x42] sm:$0xff]
        %v2910 = vld [vmem:[%s1239 + $0x52] sm:$0xff]
        %v2911 = vld [vmem:[%s1239 + $0x62] sm:$0xff]
        %v2912 = vld [vmem:[%s1239 + $0x72] sm:$0xff]
        %s2913 = scalar_lea.vmem %s1, 544
        %v2914 = vld [vmem:[%s2913] sm:$0xff]
        %v2915 = vld [vmem:[%s2913 + $0x8] sm:$0xff]
        %v2916 = vld [vmem:[%s2913 + $0x10] sm:$0xff]
        %v2917 = vld [vmem:[%s2913 + $0x18] sm:$0xff]
        %v2919 = vsel %vm317, %v2905, 0
        %v2922 = vsel %vm317, %v2906, 0
        %v2925 = vsel %vm317, %v2907, 0
        %v2928 = vsel %vm317, %v2908, 0
        %v2931 = vsel %vm317, %v2909, 0
        %v2934 = vsel %vm317, %v2910, 0
        %v2937 = vsel %vm317, %v2911, 0
        %v2940 = vsel %vm317, %v2912, 0
        %2942 = vmatprep.subr.mxu0 0.0
        %2943 = vmatpush1.msra.mxu0 0.0
        %2944 = vmatprep.subr.mxu0 0.0
        %2945 = vmatpush1.msra.mxu0 0.0
        %2946 = vmatprep.subr.mxu0 0.0
        %2947 = vmatpush1.msra.mxu0 0.0
        %2948 = vmatprep.subr.mxu0 0.0
        %2949 = vmatpush1.msra.mxu0 0.0
        %2950 = vmatprep.subr.mxu0 0.0
        %2951 = vmatpush1.msra.mxu0 0.0
        %2952 = vmatprep.subr.mxu0 0.0
        %2953 = vmatpush1.msra.mxu0 0.0
        %2954 = vmatprep.subr.mxu0 0.0
        %2955 = vmatpush1.msra.mxu0 0.0
        %2956 = vmatprep.subr.mxu0 0.0
        %2957 = vmatpush1.msra.mxu0 0.0
        %2958 = vmatprep.subr.mxu0 0.0
        %2959 = vmatpush1.msra.mxu0 0.0
        %2960 = vmatprep.subr.mxu0 0.0
        %2961 = vmatpush1.msra.mxu0 0.0
        %2962 = vmatprep.subr.mxu0 0.0
        %2963 = vmatpush1.msra.mxu0 0.0
        %2964 = vmatprep.subr.mxu0 0.0
        %2965 = vmatpush1.msra.mxu0 0.0
        %2966 = vmatprep.subr.mxu0 0.0
        %2967 = vmatpush1.msra.mxu0 %v2917
        %2968 = vmatprep.subr.mxu0 0.0
        %2969 = vmatpush1.msra.mxu0 %v2916
        %2970 = vmatprep.subr.mxu0 0.0
        %2971 = vmatpush1.msra.mxu0 %v2915
        %2972 = vmatprep.subr.mxu0 0.0
        %2973 = vmatpush1.msra.mxu0 %v2914
        %2974 = vmatprep.subr.mxu0 0.0
        %2975 = vmatpush2.msra.mxu0 0.0
        %2976 = vmatprep.subr.mxu0 0.0
        %2977 = vmatpush2.msra.mxu0 0.0
        %2978 = vmatprep.subr.mxu0 0.0
        %2979 = vmatpush2.msra.mxu0 0.0
        %2980 = vmatprep.subr.mxu0 0.0
        %2981 = vmatpush2.msra.mxu0 0.0
        %2982 = vmatprep.subr.mxu0 0.0
        %2983 = vmatpush2.msra.mxu0 0.0
        %2984 = vmatprep.subr.mxu0 0.0
        %2985 = vmatpush2.msra.mxu0 0.0
        %2986 = vmatprep.subr.mxu0 0.0
        %2987 = vmatpush2.msra.mxu0 0.0
        %2988 = vmatprep.subr.mxu0 0.0
        %2989 = vmatpush2.msra.mxu0 0.0
        %2990 = vmatprep.subr.mxu0 0.0
        %2991 = vmatpush2.msra.mxu0 0.0
        %2992 = vmatprep.subr.mxu0 0.0
        %2993 = vmatpush2.msra.mxu0 0.0
        %2994 = vmatprep.subr.mxu0 0.0
        %2995 = vmatpush2.msra.mxu0 0.0
        %2996 = vmatprep.subr.mxu0 0.0
        %2997 = vmatpush2.msra.mxu0 0.0
        %2998 = vmatprep.subr.mxu0 0.0
        %2999 = vmatpush2.msra.mxu0 0.0
        %3000 = vmatprep.subr.mxu0 0.0
        %3001 = vmatpush2.msra.mxu0 0.0
        %3002 = vmatprep.subr.mxu0 0.0
        %3003 = vmatpush2.msra.mxu0 0.0
        %3004 = vmatprep.subr.mxu0 0.0
        %3005 = vmatpush2.msra.mxu0 0.0
        %3006 = vmatprep.mubr.f32.mxu0 0.0
        %3007 = vmatmul.mubr.f32.gmra.mxu0 %v2919
        %v3008 = vpop.f32.mrf.mxu0
        %v3009 = vadd.f32 0.0, %v3008
        %v3010 = vpop.f32.mrf.mxu0
        %3011 = vmatprep.mubr.f32.mxu0 0.0
        %3012 = vmatmul.mubr.f32.gmra.mxu0 %v2922
        %v3013 = vpop.f32.mrf.mxu0
        %v3014 = vadd.f32 0.0, %v3013
        %v3015 = vpop.f32.mrf.mxu0
        %3016 = vmatprep.mubr.f32.mxu0 0.0
        %3017 = vmatmul.mubr.f32.gmra.mxu0 %v2925
        %v3018 = vpop.f32.mrf.mxu0
        %v3019 = vadd.f32 0.0, %v3018
        %v3020 = vpop.f32.mrf.mxu0
        %3021 = vmatprep.mubr.f32.mxu0 0.0
        %3022 = vmatmul.mubr.f32.gmra.mxu0 %v2928
        %v3023 = vpop.f32.mrf.mxu0
        %v3024 = vadd.f32 0.0, %v3023
        %v3025 = vpop.f32.mrf.mxu0
        %3026 = vmatprep.mubr.f32.mxu0 0.0
        %3027 = vmatmul.mubr.f32.gmra.mxu0 %v2931
        %v3028 = vpop.f32.mrf.mxu0
        %v3029 = vadd.f32 0.0, %v3028
        %v3030 = vpop.f32.mrf.mxu0
        %3031 = vmatprep.mubr.f32.mxu0 0.0
        %3032 = vmatmul.mubr.f32.gmra.mxu0 %v2934
        %v3033 = vpop.f32.mrf.mxu0
        %v3034 = vadd.f32 0.0, %v3033
        %v3035 = vpop.f32.mrf.mxu0
        %3036 = vmatprep.mubr.f32.mxu0 0.0
        %3037 = vmatmul.mubr.f32.gmra.mxu0 %v2937
        %v3038 = vpop.f32.mrf.mxu0
        %v3039 = vadd.f32 0.0, %v3038
        %v3040 = vpop.f32.mrf.mxu0
        %3041 = vmatprep.mubr.f32.mxu0 0.0
        %3042 = vmatmul.mubr.f32.gmra.mxu0 %v2940
        %v3043 = vpop.f32.mrf.mxu0
        %v3044 = vadd.f32 0.0, %v3043
        %v3045 = vpop.f32.mrf.mxu0
        %3046 = vdwg.mxu0
        %v3047 = vadd.f32 %v2897, %v3009
        %v3048 = vadd.f32 %v2898, %v3014
        %v3049 = vadd.f32 %v2899, %v3019
        %v3050 = vadd.f32 %v2900, %v3024
        %v3051 = vadd.f32 %v2901, %v3029
        %v3052 = vadd.f32 %v2902, %v3034
        %v3053 = vadd.f32 %v2903, %v3039
        %v3054 = vadd.f32 %v2904, %v3044
        %s3055 = scalar_lea.vmem %s2, 1
        %v3056 = vld [vmem:[%s3055] sm:$0x1]
        %v3058 = vlaneseq
        %v3059 = vshrl.u32 %v3058, 7
        %v3060 = vsub.s32 0, %v3059
        %v3061 = vrot.slane %v3056, %v3060
        %v3063 = vadd.f32 %v3047, %v3061
        %v3064 = vadd.f32 %v3048, %v3061
        %v3065 = vadd.f32 %v3049, %v3061
        %v3066 = vadd.f32 %v3050, %v3061
        %v3067 = vadd.f32 %v3051, %v3061
        %v3068 = vadd.f32 %v3052, %v3061
        %v3069 = vadd.f32 %v3053, %v3061
        %v3070 = vadd.f32 %v3054, %v3061
        %v3071 = vmax.f32 %v3063, 0.0
        %v3072 = vmax.f32 %v3064, 0.0
        %v3073 = vmax.f32 %v3065, 0.0
        %v3074 = vmax.f32 %v3066, 0.0
        %v3075 = vmax.f32 %v3067, 0.0
        %v3076 = vmax.f32 %v3068, 0.0
        %v3077 = vmax.f32 %v3069, 0.0
        %v3078 = vmax.f32 %v3070, 0.0
        %3079 = vst.msk [vmem:[%s347 + $0x1] sm:$0xff] %vm317, %v3071
        %3080 = vst.msk [vmem:[%s347 + $0x11] sm:$0xff] %vm317, %v3072
        %3081 = vst.msk [vmem:[%s347 + $0x21] sm:$0xff] %vm317, %v3073
        %3082 = vst.msk [vmem:[%s347 + $0x31] sm:$0xff] %vm317, %v3074
        %3083 = vst.msk [vmem:[%s347 + $0x41] sm:$0xff] %vm317, %v3075
        %3084 = vst.msk [vmem:[%s347 + $0x51] sm:$0xff] %vm317, %v3076
        %3085 = vst.msk [vmem:[%s347 + $0x61] sm:$0xff] %vm317, %v3077
        %3086 = vst.msk [vmem:[%s347 + $0x71] sm:$0xff] %vm317, %v3078
        %v3087 = vld [vmem:[#allocation2] sm:$0xff]
        %v3088 = vld [vmem:[#allocation2 + $0x10] sm:$0xff]
        %v3089 = vld [vmem:[#allocation2 + $0x20] sm:$0xff]
        %v3090 = vld [vmem:[#allocation2 + $0x30] sm:$0xff]
        %v3091 = vld [vmem:[#allocation2 + $0x40] sm:$0xff]
        %v3092 = vld [vmem:[#allocation2 + $0x50] sm:$0xff]
        %v3093 = vld [vmem:[#allocation2 + $0x60] sm:$0xff]
        %v3094 = vld [vmem:[#allocation2 + $0x70] sm:$0xff]
        %s3095 = scalar_lea.vmem %s1, 576
        %v3096 = vld [vmem:[%s3095] sm:$0xff]
        %v3097 = vld [vmem:[%s3095 + $0x8] sm:$0xff]
        %v3098 = vld [vmem:[%s3095 + $0x10] sm:$0xff]
        %v3099 = vld [vmem:[%s3095 + $0x18] sm:$0xff]
        %v3100 = vld [vmem:[#allocation2 + $0x1] sm:$0xff]
        %v3101 = vld [vmem:[#allocation2 + $0x11] sm:$0xff]
        %v3102 = vld [vmem:[#allocation2 + $0x21] sm:$0xff]
        %v3103 = vld [vmem:[#allocation2 + $0x31] sm:$0xff]
        %v3104 = vld [vmem:[#allocation2 + $0x41] sm:$0xff]
        %v3105 = vld [vmem:[#allocation2 + $0x51] sm:$0xff]
        %v3106 = vld [vmem:[#allocation2 + $0x61] sm:$0xff]
        %v3107 = vld [vmem:[#allocation2 + $0x71] sm:$0xff]
        %s3108 = scalar_lea.vmem %s1, 608
        %v3109 = vld [vmem:[%s3108] sm:$0xff]
        %v3110 = vld [vmem:[%s3108 + $0x8] sm:$0xff]
        %v3111 = vld [vmem:[%s3108 + $0x10] sm:$0xff]
        %v3112 = vld [vmem:[%s3108 + $0x18] sm:$0xff]
        %v3114 = vsel %vm317, %v3100, 0
        %v3117 = vsel %vm317, %v3101, 0
        %v3120 = vsel %vm317, %v3102, 0
        %v3123 = vsel %vm317, %v3103, 0
        %v3126 = vsel %vm317, %v3104, 0
        %v3129 = vsel %vm317, %v3105, 0
        %v3132 = vsel %vm317, %v3106, 0
        %v3135 = vsel %vm317, %v3107, 0
        %3137 = vmatprep.subr.mxu0 0.0
        %3138 = vmatpush1.msra.mxu0 0.0
        %3139 = vmatprep.subr.mxu0 0.0
        %3140 = vmatpush1.msra.mxu0 0.0
        %3141 = vmatprep.subr.mxu0 0.0
        %3142 = vmatpush1.msra.mxu0 0.0
        %3143 = vmatprep.subr.mxu0 0.0
        %3144 = vmatpush1.msra.mxu0 0.0
        %3145 = vmatprep.subr.mxu0 0.0
        %3146 = vmatpush1.msra.mxu0 0.0
        %3147 = vmatprep.subr.mxu0 0.0
        %3148 = vmatpush1.msra.mxu0 0.0
        %3149 = vmatprep.subr.mxu0 0.0
        %3150 = vmatpush1.msra.mxu0 0.0
        %3151 = vmatprep.subr.mxu0 0.0
        %3152 = vmatpush1.msra.mxu0 0.0
        %3153 = vmatprep.subr.mxu0 0.0
        %3154 = vmatpush1.msra.mxu0 0.0
        %3155 = vmatprep.subr.mxu0 0.0
        %3156 = vmatpush1.msra.mxu0 0.0
        %3157 = vmatprep.subr.mxu0 0.0
        %3158 = vmatpush1.msra.mxu0 0.0
        %3159 = vmatprep.subr.mxu0 0.0
        %3160 = vmatpush1.msra.mxu0 0.0
        %3161 = vmatprep.subr.mxu0 0.0
        %3162 = vmatpush1.msra.mxu0 %v3112
        %3163 = vmatprep.subr.mxu0 0.0
        %3164 = vmatpush1.msra.mxu0 %v3111
        %3165 = vmatprep.subr.mxu0 0.0
        %3166 = vmatpush1.msra.mxu0 %v3110
        %3167 = vmatprep.subr.mxu0 0.0
        %3168 = vmatpush1.msra.mxu0 %v3109
        %3169 = vmatprep.subr.mxu0 0.0
        %3170 = vmatpush2.msra.mxu0 0.0
        %3171 = vmatprep.subr.mxu0 0.0
        %3172 = vmatpush2.msra.mxu0 0.0
        %3173 = vmatprep.subr.mxu0 0.0
        %3174 = vmatpush2.msra.mxu0 0.0
        %3175 = vmatprep.subr.mxu0 0.0
        %3176 = vmatpush2.msra.mxu0 0.0
        %3177 = vmatprep.subr.mxu0 0.0
        %3178 = vmatpush2.msra.mxu0 0.0
        %3179 = vmatprep.subr.mxu0 0.0
        %3180 = vmatpush2.msra.mxu0 0.0
        %3181 = vmatprep.subr.mxu0 0.0
        %3182 = vmatpush2.msra.mxu0 0.0
        %3183 = vmatprep.subr.mxu0 0.0
        %3184 = vmatpush2.msra.mxu0 0.0
        %3185 = vmatprep.subr.mxu0 0.0
        %3186 = vmatpush2.msra.mxu0 0.0
        %3187 = vmatprep.subr.mxu0 0.0
        %3188 = vmatpush2.msra.mxu0 0.0
        %3189 = vmatprep.subr.mxu0 0.0
        %3190 = vmatpush2.msra.mxu0 0.0
        %3191 = vmatprep.subr.mxu0 0.0
        %3192 = vmatpush2.msra.mxu0 0.0
        %3193 = vmatprep.subr.mxu0 0.0
        %3194 = vmatpush2.msra.mxu0 0.0
        %3195 = vmatprep.subr.mxu0 0.0
        %3196 = vmatpush2.msra.mxu0 0.0
        %3197 = vmatprep.subr.mxu0 0.0
        %3198 = vmatpush2.msra.mxu0 0.0
        %3199 = vmatprep.subr.mxu0 0.0
        %3200 = vmatpush2.msra.mxu0 0.0
        %3201 = vmatprep.mubr.f32.mxu0 0.0
        %3202 = vmatmul.mubr.f32.gmra.mxu0 %v3114
        %v3203 = vpop.f32.mrf.mxu0
        %v3204 = vadd.f32 0.0, %v3203
        %v3205 = vpop.f32.mrf.mxu0
        %3206 = vmatprep.mubr.f32.mxu0 0.0
        %3207 = vmatmul.mubr.f32.gmra.mxu0 %v3117
        %v3208 = vpop.f32.mrf.mxu0
        %v3209 = vadd.f32 0.0, %v3208
        %v3210 = vpop.f32.mrf.mxu0
        %3211 = vmatprep.mubr.f32.mxu0 0.0
        %3212 = vmatmul.mubr.f32.gmra.mxu0 %v3120
        %v3213 = vpop.f32.mrf.mxu0
        %v3214 = vadd.f32 0.0, %v3213
        %v3215 = vpop.f32.mrf.mxu0
        %3216 = vmatprep.mubr.f32.mxu0 0.0
        %3217 = vmatmul.mubr.f32.gmra.mxu0 %v3123
        %v3218 = vpop.f32.mrf.mxu0
        %v3219 = vadd.f32 0.0, %v3218
        %v3220 = vpop.f32.mrf.mxu0
        %3221 = vmatprep.mubr.f32.mxu0 0.0
        %3222 = vmatmul.mubr.f32.gmra.mxu0 %v3126
        %v3223 = vpop.f32.mrf.mxu0
        %v3224 = vadd.f32 0.0, %v3223
        %v3225 = vpop.f32.mrf.mxu0
        %3226 = vmatprep.mubr.f32.mxu0 0.0
        %3227 = vmatmul.mubr.f32.gmra.mxu0 %v3129
        %v3228 = vpop.f32.mrf.mxu0
        %v3229 = vadd.f32 0.0, %v3228
        %v3230 = vpop.f32.mrf.mxu0
        %3231 = vmatprep.mubr.f32.mxu0 0.0
        %3232 = vmatmul.mubr.f32.gmra.mxu0 %v3132
        %v3233 = vpop.f32.mrf.mxu0
        %v3234 = vadd.f32 0.0, %v3233
        %v3235 = vpop.f32.mrf.mxu0
        %3236 = vmatprep.mubr.f32.mxu0 0.0
        %3237 = vmatmul.mubr.f32.gmra.mxu0 %v3135
        %v3238 = vpop.f32.mrf.mxu0
        %v3239 = vadd.f32 0.0, %v3238
        %v3240 = vpop.f32.mrf.mxu0
        %3241 = vdwg.mxu0
        %v3243 = vsel %vm317, %v3087, 0
        %v3246 = vsel %vm317, %v3088, 0
        %v3249 = vsel %vm317, %v3089, 0
        %v3252 = vsel %vm317, %v3090, 0
        %v3255 = vsel %vm317, %v3091, 0
        %v3258 = vsel %vm317, %v3092, 0
        %v3261 = vsel %vm317, %v3093, 0
        %v3264 = vsel %vm317, %v3094, 0
        %3266 = vmatprep.subr.mxu0 0.0
        %3267 = vmatpush1.msra.mxu0 0.0
        %3268 = vmatprep.subr.mxu0 0.0
        %3269 = vmatpush1.msra.mxu0 0.0
        %3270 = vmatprep.subr.mxu0 0.0
        %3271 = vmatpush1.msra.mxu0 0.0
        %3272 = vmatprep.subr.mxu0 0.0
        %3273 = vmatpush1.msra.mxu0 0.0
        %3274 = vmatprep.subr.mxu0 0.0
        %3275 = vmatpush1.msra.mxu0 0.0
        %3276 = vmatprep.subr.mxu0 0.0
        %3277 = vmatpush1.msra.mxu0 0.0
        %3278 = vmatprep.subr.mxu0 0.0
        %3279 = vmatpush1.msra.mxu0 0.0
        %3280 = vmatprep.subr.mxu0 0.0
        %3281 = vmatpush1.msra.mxu0 0.0
        %3282 = vmatprep.subr.mxu0 0.0
        %3283 = vmatpush1.msra.mxu0 0.0
        %3284 = vmatprep.subr.mxu0 0.0
        %3285 = vmatpush1.msra.mxu0 0.0
        %3286 = vmatprep.subr.mxu0 0.0
        %3287 = vmatpush1.msra.mxu0 0.0
        %3288 = vmatprep.subr.mxu0 0.0
        %3289 = vmatpush1.msra.mxu0 0.0
        %3290 = vmatprep.subr.mxu0 0.0
        %3291 = vmatpush1.msra.mxu0 %v3099
        %3292 = vmatprep.subr.mxu0 0.0
        %3293 = vmatpush1.msra.mxu0 %v3098
        %3294 = vmatprep.subr.mxu0 0.0
        %3295 = vmatpush1.msra.mxu0 %v3097
        %3296 = vmatprep.subr.mxu0 0.0
        %3297 = vmatpush1.msra.mxu0 %v3096
        %3298 = vmatprep.subr.mxu0 0.0
        %3299 = vmatpush2.msra.mxu0 0.0
        %3300 = vmatprep.subr.mxu0 0.0
        %3301 = vmatpush2.msra.mxu0 0.0
        %3302 = vmatprep.subr.mxu0 0.0
        %3303 = vmatpush2.msra.mxu0 0.0
        %3304 = vmatprep.subr.mxu0 0.0
        %3305 = vmatpush2.msra.mxu0 0.0
        %3306 = vmatprep.subr.mxu0 0.0
        %3307 = vmatpush2.msra.mxu0 0.0
        %3308 = vmatprep.subr.mxu0 0.0
        %3309 = vmatpush2.msra.mxu0 0.0
        %3310 = vmatprep.subr.mxu0 0.0
        %3311 = vmatpush2.msra.mxu0 0.0
        %3312 = vmatprep.subr.mxu0 0.0
        %3313 = vmatpush2.msra.mxu0 0.0
        %3314 = vmatprep.subr.mxu0 0.0
        %3315 = vmatpush2.msra.mxu0 0.0
        %3316 = vmatprep.subr.mxu0 0.0
        %3317 = vmatpush2.msra.mxu0 0.0
        %3318 = vmatprep.subr.mxu0 0.0
        %3319 = vmatpush2.msra.mxu0 0.0
        %3320 = vmatprep.subr.mxu0 0.0
        %3321 = vmatpush2.msra.mxu0 0.0
        %3322 = vmatprep.subr.mxu0 0.0
        %3323 = vmatpush2.msra.mxu0 0.0
        %3324 = vmatprep.subr.mxu0 0.0
        %3325 = vmatpush2.msra.mxu0 0.0
        %3326 = vmatprep.subr.mxu0 0.0
        %3327 = vmatpush2.msra.mxu0 0.0
        %3328 = vmatprep.subr.mxu0 0.0
        %3329 = vmatpush2.msra.mxu0 0.0
        %3330 = vmatprep.mubr.f32.mxu0 0.0
        %3331 = vmatmul.mubr.f32.gmra.mxu0 %v3243
        %v3332 = vpop.f32.mrf.mxu0
        %v3333 = vadd.f32 %v3204, %v3332
        %v3334 = vpop.f32.mrf.mxu0
        %3335 = vmatprep.mubr.f32.mxu0 0.0
        %3336 = vmatmul.mubr.f32.gmra.mxu0 %v3246
        %v3337 = vpop.f32.mrf.mxu0
        %v3338 = vadd.f32 %v3209, %v3337
        %v3339 = vpop.f32.mrf.mxu0
        %3340 = vmatprep.mubr.f32.mxu0 0.0
        %3341 = vmatmul.mubr.f32.gmra.mxu0 %v3249
        %v3342 = vpop.f32.mrf.mxu0
        %v3343 = vadd.f32 %v3214, %v3342
        %v3344 = vpop.f32.mrf.mxu0
        %3345 = vmatprep.mubr.f32.mxu0 0.0
        %3346 = vmatmul.mubr.f32.gmra.mxu0 %v3252
        %v3347 = vpop.f32.mrf.mxu0
        %v3348 = vadd.f32 %v3219, %v3347
        %v3349 = vpop.f32.mrf.mxu0
        %3350 = vmatprep.mubr.f32.mxu0 0.0
        %3351 = vmatmul.mubr.f32.gmra.mxu0 %v3255
        %v3352 = vpop.f32.mrf.mxu0
        %v3353 = vadd.f32 %v3224, %v3352
        %v3354 = vpop.f32.mrf.mxu0
        %3355 = vmatprep.mubr.f32.mxu0 0.0
        %3356 = vmatmul.mubr.f32.gmra.mxu0 %v3258
        %v3357 = vpop.f32.mrf.mxu0
        %v3358 = vadd.f32 %v3229, %v3357
        %v3359 = vpop.f32.mrf.mxu0
        %3360 = vmatprep.mubr.f32.mxu0 0.0
        %3361 = vmatmul.mubr.f32.gmra.mxu0 %v3261
        %v3362 = vpop.f32.mrf.mxu0
        %v3363 = vadd.f32 %v3234, %v3362
        %v3364 = vpop.f32.mrf.mxu0
        %3365 = vmatprep.mubr.f32.mxu0 0.0
        %3366 = vmatmul.mubr.f32.gmra.mxu0 %v3264
        %v3367 = vpop.f32.mrf.mxu0
        %v3368 = vadd.f32 %v3239, %v3367
        %v3369 = vpop.f32.mrf.mxu0
        %3370 = vdwg.mxu0
        %v3371 = vld [vmem:[#allocation2 + $0x2] sm:$0xff]
        %v3372 = vld [vmem:[#allocation2 + $0x12] sm:$0xff]
        %v3373 = vld [vmem:[#allocation2 + $0x22] sm:$0xff]
        %v3374 = vld [vmem:[#allocation2 + $0x32] sm:$0xff]
        %v3375 = vld [vmem:[#allocation2 + $0x42] sm:$0xff]
        %v3376 = vld [vmem:[#allocation2 + $0x52] sm:$0xff]
        %v3377 = vld [vmem:[#allocation2 + $0x62] sm:$0xff]
        %v3378 = vld [vmem:[#allocation2 + $0x72] sm:$0xff]
        %s3379 = scalar_lea.vmem %s1, 640
        %v3380 = vld [vmem:[%s3379] sm:$0xff]
        %v3381 = vld [vmem:[%s3379 + $0x8] sm:$0xff]
        %v3382 = vld [vmem:[%s3379 + $0x10] sm:$0xff]
        %v3383 = vld [vmem:[%s3379 + $0x18] sm:$0xff]
        %v3385 = vsel %vm317, %v3371, 0
        %v3388 = vsel %vm317, %v3372, 0
        %v3391 = vsel %vm317, %v3373, 0
        %v3394 = vsel %vm317, %v3374, 0
        %v3397 = vsel %vm317, %v3375, 0
        %v3400 = vsel %vm317, %v3376, 0
        %v3403 = vsel %vm317, %v3377, 0
        %v3406 = vsel %vm317, %v3378, 0
        %3408 = vmatprep.subr.mxu0 0.0
        %3409 = vmatpush1.msra.mxu0 0.0
        %3410 = vmatprep.subr.mxu0 0.0
        %3411 = vmatpush1.msra.mxu0 0.0
        %3412 = vmatprep.subr.mxu0 0.0
        %3413 = vmatpush1.msra.mxu0 0.0
        %3414 = vmatprep.subr.mxu0 0.0
        %3415 = vmatpush1.msra.mxu0 0.0
        %3416 = vmatprep.subr.mxu0 0.0
        %3417 = vmatpush1.msra.mxu0 0.0
        %3418 = vmatprep.subr.mxu0 0.0
        %3419 = vmatpush1.msra.mxu0 0.0
        %3420 = vmatprep.subr.mxu0 0.0
        %3421 = vmatpush1.msra.mxu0 0.0
        %3422 = vmatprep.subr.mxu0 0.0
        %3423 = vmatpush1.msra.mxu0 0.0
        %3424 = vmatprep.subr.mxu0 0.0
        %3425 = vmatpush1.msra.mxu0 0.0
        %3426 = vmatprep.subr.mxu0 0.0
        %3427 = vmatpush1.msra.mxu0 0.0
        %3428 = vmatprep.subr.mxu0 0.0
        %3429 = vmatpush1.msra.mxu0 0.0
        %3430 = vmatprep.subr.mxu0 0.0
        %3431 = vmatpush1.msra.mxu0 0.0
        %3432 = vmatprep.subr.mxu0 0.0
        %3433 = vmatpush1.msra.mxu0 %v3383
        %3434 = vmatprep.subr.mxu0 0.0
        %3435 = vmatpush1.msra.mxu0 %v3382
        %3436 = vmatprep.subr.mxu0 0.0
        %3437 = vmatpush1.msra.mxu0 %v3381
        %3438 = vmatprep.subr.mxu0 0.0
        %3439 = vmatpush1.msra.mxu0 %v3380
        %3440 = vmatprep.subr.mxu0 0.0
        %3441 = vmatpush2.msra.mxu0 0.0
        %3442 = vmatprep.subr.mxu0 0.0
        %3443 = vmatpush2.msra.mxu0 0.0
        %3444 = vmatprep.subr.mxu0 0.0
        %3445 = vmatpush2.msra.mxu0 0.0
        %3446 = vmatprep.subr.mxu0 0.0
        %3447 = vmatpush2.msra.mxu0 0.0
        %3448 = vmatprep.subr.mxu0 0.0
        %3449 = vmatpush2.msra.mxu0 0.0
        %3450 = vmatprep.subr.mxu0 0.0
        %3451 = vmatpush2.msra.mxu0 0.0
        %3452 = vmatprep.subr.mxu0 0.0
        %3453 = vmatpush2.msra.mxu0 0.0
        %3454 = vmatprep.subr.mxu0 0.0
        %3455 = vmatpush2.msra.mxu0 0.0
        %3456 = vmatprep.subr.mxu0 0.0
        %3457 = vmatpush2.msra.mxu0 0.0
        %3458 = vmatprep.subr.mxu0 0.0
        %3459 = vmatpush2.msra.mxu0 0.0
        %3460 = vmatprep.subr.mxu0 0.0
        %3461 = vmatpush2.msra.mxu0 0.0
        %3462 = vmatprep.subr.mxu0 0.0
        %3463 = vmatpush2.msra.mxu0 0.0
        %3464 = vmatprep.subr.mxu0 0.0
        %3465 = vmatpush2.msra.mxu0 0.0
        %3466 = vmatprep.subr.mxu0 0.0
        %3467 = vmatpush2.msra.mxu0 0.0
        %3468 = vmatprep.subr.mxu0 0.0
        %3469 = vmatpush2.msra.mxu0 0.0
        %3470 = vmatprep.subr.mxu0 0.0
        %3471 = vmatpush2.msra.mxu0 0.0
        %3472 = vmatprep.mubr.f32.mxu0 0.0
        %3473 = vmatmul.mubr.f32.gmra.mxu0 %v3385
        %v3474 = vpop.f32.mrf.mxu0
        %v3475 = vadd.f32 0.0, %v3474
        %v3476 = vpop.f32.mrf.mxu0
        %3477 = vmatprep.mubr.f32.mxu0 0.0
        %3478 = vmatmul.mubr.f32.gmra.mxu0 %v3388
        %v3479 = vpop.f32.mrf.mxu0
        %v3480 = vadd.f32 0.0, %v3479
        %v3481 = vpop.f32.mrf.mxu0
        %3482 = vmatprep.mubr.f32.mxu0 0.0
        %3483 = vmatmul.mubr.f32.gmra.mxu0 %v3391
        %v3484 = vpop.f32.mrf.mxu0
        %v3485 = vadd.f32 0.0, %v3484
        %v3486 = vpop.f32.mrf.mxu0
        %3487 = vmatprep.mubr.f32.mxu0 0.0
        %3488 = vmatmul.mubr.f32.gmra.mxu0 %v3394
        %v3489 = vpop.f32.mrf.mxu0
        %v3490 = vadd.f32 0.0, %v3489
        %v3491 = vpop.f32.mrf.mxu0
        %3492 = vmatprep.mubr.f32.mxu0 0.0
        %3493 = vmatmul.mubr.f32.gmra.mxu0 %v3397
        %v3494 = vpop.f32.mrf.mxu0
        %v3495 = vadd.f32 0.0, %v3494
        %v3496 = vpop.f32.mrf.mxu0
        %3497 = vmatprep.mubr.f32.mxu0 0.0
        %3498 = vmatmul.mubr.f32.gmra.mxu0 %v3400
        %v3499 = vpop.f32.mrf.mxu0
        %v3500 = vadd.f32 0.0, %v3499
        %v3501 = vpop.f32.mrf.mxu0
        %3502 = vmatprep.mubr.f32.mxu0 0.0
        %3503 = vmatmul.mubr.f32.gmra.mxu0 %v3403
        %v3504 = vpop.f32.mrf.mxu0
        %v3505 = vadd.f32 0.0, %v3504
        %v3506 = vpop.f32.mrf.mxu0
        %3507 = vmatprep.mubr.f32.mxu0 0.0
        %3508 = vmatmul.mubr.f32.gmra.mxu0 %v3406
        %v3509 = vpop.f32.mrf.mxu0
        %v3510 = vadd.f32 0.0, %v3509
        %v3511 = vpop.f32.mrf.mxu0
        %3512 = vdwg.mxu0
        %v3513 = vadd.f32 %v3333, %v3475
        %v3514 = vadd.f32 %v3338, %v3480
        %v3515 = vadd.f32 %v3343, %v3485
        %v3516 = vadd.f32 %v3348, %v3490
        %v3517 = vadd.f32 %v3353, %v3495
        %v3518 = vadd.f32 %v3358, %v3500
        %v3519 = vadd.f32 %v3363, %v3505
        %v3520 = vadd.f32 %v3368, %v3510
        %v3521 = vld [vmem:[%s347] sm:$0xff]
        %v3522 = vld [vmem:[%s347 + $0x10] sm:$0xff]
        %v3523 = vld [vmem:[%s347 + $0x20] sm:$0xff]
        %v3524 = vld [vmem:[%s347 + $0x30] sm:$0xff]
        %v3525 = vld [vmem:[%s347 + $0x40] sm:$0xff]
        %v3526 = vld [vmem:[%s347 + $0x50] sm:$0xff]
        %v3527 = vld [vmem:[%s347 + $0x60] sm:$0xff]
        %v3528 = vld [vmem:[%s347 + $0x70] sm:$0xff]
        %s3529 = scalar_lea.vmem %s1, 672
        %v3530 = vld [vmem:[%s3529] sm:$0xff]
        %v3531 = vld [vmem:[%s3529 + $0x8] sm:$0xff]
        %v3532 = vld [vmem:[%s3529 + $0x10] sm:$0xff]
        %v3533 = vld [vmem:[%s3529 + $0x18] sm:$0xff]
        %v3535 = vsel %vm317, %v3521, 0
        %v3538 = vsel %vm317, %v3522, 0
        %v3541 = vsel %vm317, %v3523, 0
        %v3544 = vsel %vm317, %v3524, 0
        %v3547 = vsel %vm317, %v3525, 0
        %v3550 = vsel %vm317, %v3526, 0
        %v3553 = vsel %vm317, %v3527, 0
        %v3556 = vsel %vm317, %v3528, 0
        %3558 = vmatprep.subr.mxu0 0.0
        %3559 = vmatpush1.msra.mxu0 0.0
        %3560 = vmatprep.subr.mxu0 0.0
        %3561 = vmatpush1.msra.mxu0 0.0
        %3562 = vmatprep.subr.mxu0 0.0
        %3563 = vmatpush1.msra.mxu0 0.0
        %3564 = vmatprep.subr.mxu0 0.0
        %3565 = vmatpush1.msra.mxu0 0.0
        %3566 = vmatprep.subr.mxu0 0.0
        %3567 = vmatpush1.msra.mxu0 0.0
        %3568 = vmatprep.subr.mxu0 0.0
        %3569 = vmatpush1.msra.mxu0 0.0
        %3570 = vmatprep.subr.mxu0 0.0
        %3571 = vmatpush1.msra.mxu0 0.0
        %3572 = vmatprep.subr.mxu0 0.0
        %3573 = vmatpush1.msra.mxu0 0.0
        %3574 = vmatprep.subr.mxu0 0.0
        %3575 = vmatpush1.msra.mxu0 0.0
        %3576 = vmatprep.subr.mxu0 0.0
        %3577 = vmatpush1.msra.mxu0 0.0
        %3578 = vmatprep.subr.mxu0 0.0
        %3579 = vmatpush1.msra.mxu0 0.0
        %3580 = vmatprep.subr.mxu0 0.0
        %3581 = vmatpush1.msra.mxu0 0.0
        %3582 = vmatprep.subr.mxu0 0.0
        %3583 = vmatpush1.msra.mxu0 %v3533
        %3584 = vmatprep.subr.mxu0 0.0
        %3585 = vmatpush1.msra.mxu0 %v3532
        %3586 = vmatprep.subr.mxu0 0.0
        %3587 = vmatpush1.msra.mxu0 %v3531
        %3588 = vmatprep.subr.mxu0 0.0
        %3589 = vmatpush1.msra.mxu0 %v3530
        %3590 = vmatprep.subr.mxu0 0.0
        %3591 = vmatpush2.msra.mxu0 0.0
        %3592 = vmatprep.subr.mxu0 0.0
        %3593 = vmatpush2.msra.mxu0 0.0
        %3594 = vmatprep.subr.mxu0 0.0
        %3595 = vmatpush2.msra.mxu0 0.0
        %3596 = vmatprep.subr.mxu0 0.0
        %3597 = vmatpush2.msra.mxu0 0.0
        %3598 = vmatprep.subr.mxu0 0.0
        %3599 = vmatpush2.msra.mxu0 0.0
        %3600 = vmatprep.subr.mxu0 0.0
        %3601 = vmatpush2.msra.mxu0 0.0
        %3602 = vmatprep.subr.mxu0 0.0
        %3603 = vmatpush2.msra.mxu0 0.0
        %3604 = vmatprep.subr.mxu0 0.0
        %3605 = vmatpush2.msra.mxu0 0.0
        %3606 = vmatprep.subr.mxu0 0.0
        %3607 = vmatpush2.msra.mxu0 0.0
        %3608 = vmatprep.subr.mxu0 0.0
        %3609 = vmatpush2.msra.mxu0 0.0
        %3610 = vmatprep.subr.mxu0 0.0
        %3611 = vmatpush2.msra.mxu0 0.0
        %3612 = vmatprep.subr.mxu0 0.0
        %3613 = vmatpush2.msra.mxu0 0.0
        %3614 = vmatprep.subr.mxu0 0.0
        %3615 = vmatpush2.msra.mxu0 0.0
        %3616 = vmatprep.subr.mxu0 0.0
        %3617 = vmatpush2.msra.mxu0 0.0
        %3618 = vmatprep.subr.mxu0 0.0
        %3619 = vmatpush2.msra.mxu0 0.0
        %3620 = vmatprep.subr.mxu0 0.0
        %3621 = vmatpush2.msra.mxu0 0.0
        %3622 = vmatprep.mubr.f32.mxu0 0.0
        %3623 = vmatmul.mubr.f32.gmra.mxu0 %v3535
        %v3624 = vpop.f32.mrf.mxu0
        %v3625 = vadd.f32 0.0, %v3624
        %v3626 = vpop.f32.mrf.mxu0
        %3627 = vmatprep.mubr.f32.mxu0 0.0
        %3628 = vmatmul.mubr.f32.gmra.mxu0 %v3538
        %v3629 = vpop.f32.mrf.mxu0
        %v3630 = vadd.f32 0.0, %v3629
        %v3631 = vpop.f32.mrf.mxu0
        %3632 = vmatprep.mubr.f32.mxu0 0.0
        %3633 = vmatmul.mubr.f32.gmra.mxu0 %v3541
        %v3634 = vpop.f32.mrf.mxu0
        %v3635 = vadd.f32 0.0, %v3634
        %v3636 = vpop.f32.mrf.mxu0
        %3637 = vmatprep.mubr.f32.mxu0 0.0
        %3638 = vmatmul.mubr.f32.gmra.mxu0 %v3544
        %v3639 = vpop.f32.mrf.mxu0
        %v3640 = vadd.f32 0.0, %v3639
        %v3641 = vpop.f32.mrf.mxu0
        %3642 = vmatprep.mubr.f32.mxu0 0.0
        %3643 = vmatmul.mubr.f32.gmra.mxu0 %v3547
        %v3644 = vpop.f32.mrf.mxu0
        %v3645 = vadd.f32 0.0, %v3644
        %v3646 = vpop.f32.mrf.mxu0
        %3647 = vmatprep.mubr.f32.mxu0 0.0
        %3648 = vmatmul.mubr.f32.gmra.mxu0 %v3550
        %v3649 = vpop.f32.mrf.mxu0
        %v3650 = vadd.f32 0.0, %v3649
        %v3651 = vpop.f32.mrf.mxu0
        %3652 = vmatprep.mubr.f32.mxu0 0.0
        %3653 = vmatmul.mubr.f32.gmra.mxu0 %v3553
        %v3654 = vpop.f32.mrf.mxu0
        %v3655 = vadd.f32 0.0, %v3654
        %v3656 = vpop.f32.mrf.mxu0
        %3657 = vmatprep.mubr.f32.mxu0 0.0
        %3658 = vmatmul.mubr.f32.gmra.mxu0 %v3556
        %v3659 = vpop.f32.mrf.mxu0
        %v3660 = vadd.f32 0.0, %v3659
        %v3661 = vpop.f32.mrf.mxu0
        %3662 = vdwg.mxu0
        %v3663 = vadd.f32 %v3513, %v3625
        %v3664 = vadd.f32 %v3514, %v3630
        %v3665 = vadd.f32 %v3515, %v3635
        %v3666 = vadd.f32 %v3516, %v3640
        %v3667 = vadd.f32 %v3517, %v3645
        %v3668 = vadd.f32 %v3518, %v3650
        %v3669 = vadd.f32 %v3519, %v3655
        %v3670 = vadd.f32 %v3520, %v3660
        %v3671 = vld [vmem:[%s347 + $0x1] sm:$0xff]
        %v3672 = vld [vmem:[%s347 + $0x11] sm:$0xff]
        %v3673 = vld [vmem:[%s347 + $0x21] sm:$0xff]
        %v3674 = vld [vmem:[%s347 + $0x31] sm:$0xff]
        %v3675 = vld [vmem:[%s347 + $0x41] sm:$0xff]
        %v3676 = vld [vmem:[%s347 + $0x51] sm:$0xff]
        %v3677 = vld [vmem:[%s347 + $0x61] sm:$0xff]
        %v3678 = vld [vmem:[%s347 + $0x71] sm:$0xff]
        %s3679 = scalar_lea.vmem %s1, 704
        %v3680 = vld [vmem:[%s3679] sm:$0xff]
        %v3681 = vld [vmem:[%s3679 + $0x8] sm:$0xff]
        %v3682 = vld [vmem:[%s3679 + $0x10] sm:$0xff]
        %v3683 = vld [vmem:[%s3679 + $0x18] sm:$0xff]
        %v3685 = vsel %vm317, %v3671, 0
        %v3688 = vsel %vm317, %v3672, 0
        %v3691 = vsel %vm317, %v3673, 0
        %v3694 = vsel %vm317, %v3674, 0
        %v3697 = vsel %vm317, %v3675, 0
        %v3700 = vsel %vm317, %v3676, 0
        %v3703 = vsel %vm317, %v3677, 0
        %v3706 = vsel %vm317, %v3678, 0
        %3708 = vmatprep.subr.mxu0 0.0
        %3709 = vmatpush1.msra.mxu0 0.0
        %3710 = vmatprep.subr.mxu0 0.0
        %3711 = vmatpush1.msra.mxu0 0.0
        %3712 = vmatprep.subr.mxu0 0.0
        %3713 = vmatpush1.msra.mxu0 0.0
        %3714 = vmatprep.subr.mxu0 0.0
        %3715 = vmatpush1.msra.mxu0 0.0
        %3716 = vmatprep.subr.mxu0 0.0
        %3717 = vmatpush1.msra.mxu0 0.0
        %3718 = vmatprep.subr.mxu0 0.0
        %3719 = vmatpush1.msra.mxu0 0.0
        %3720 = vmatprep.subr.mxu0 0.0
        %3721 = vmatpush1.msra.mxu0 0.0
        %3722 = vmatprep.subr.mxu0 0.0
        %3723 = vmatpush1.msra.mxu0 0.0
        %3724 = vmatprep.subr.mxu0 0.0
        %3725 = vmatpush1.msra.mxu0 0.0
        %3726 = vmatprep.subr.mxu0 0.0
        %3727 = vmatpush1.msra.mxu0 0.0
        %3728 = vmatprep.subr.mxu0 0.0
        %3729 = vmatpush1.msra.mxu0 0.0
        %3730 = vmatprep.subr.mxu0 0.0
        %3731 = vmatpush1.msra.mxu0 0.0
        %3732 = vmatprep.subr.mxu0 0.0
        %3733 = vmatpush1.msra.mxu0 %v3683
        %3734 = vmatprep.subr.mxu0 0.0
        %3735 = vmatpush1.msra.mxu0 %v3682
        %3736 = vmatprep.subr.mxu0 0.0
        %3737 = vmatpush1.msra.mxu0 %v3681
        %3738 = vmatprep.subr.mxu0 0.0
        %3739 = vmatpush1.msra.mxu0 %v3680
        %3740 = vmatprep.subr.mxu0 0.0
        %3741 = vmatpush2.msra.mxu0 0.0
        %3742 = vmatprep.subr.mxu0 0.0
        %3743 = vmatpush2.msra.mxu0 0.0
        %3744 = vmatprep.subr.mxu0 0.0
        %3745 = vmatpush2.msra.mxu0 0.0
        %3746 = vmatprep.subr.mxu0 0.0
        %3747 = vmatpush2.msra.mxu0 0.0
        %3748 = vmatprep.subr.mxu0 0.0
        %3749 = vmatpush2.msra.mxu0 0.0
        %3750 = vmatprep.subr.mxu0 0.0
        %3751 = vmatpush2.msra.mxu0 0.0
        %3752 = vmatprep.subr.mxu0 0.0
        %3753 = vmatpush2.msra.mxu0 0.0
        %3754 = vmatprep.subr.mxu0 0.0
        %3755 = vmatpush2.msra.mxu0 0.0
        %3756 = vmatprep.subr.mxu0 0.0
        %3757 = vmatpush2.msra.mxu0 0.0
        %3758 = vmatprep.subr.mxu0 0.0
        %3759 = vmatpush2.msra.mxu0 0.0
        %3760 = vmatprep.subr.mxu0 0.0
        %3761 = vmatpush2.msra.mxu0 0.0
        %3762 = vmatprep.subr.mxu0 0.0
        %3763 = vmatpush2.msra.mxu0 0.0
        %3764 = vmatprep.subr.mxu0 0.0
        %3765 = vmatpush2.msra.mxu0 0.0
        %3766 = vmatprep.subr.mxu0 0.0
        %3767 = vmatpush2.msra.mxu0 0.0
        %3768 = vmatprep.subr.mxu0 0.0
        %3769 = vmatpush2.msra.mxu0 0.0
        %3770 = vmatprep.subr.mxu0 0.0
        %3771 = vmatpush2.msra.mxu0 0.0
        %3772 = vmatprep.mubr.f32.mxu0 0.0
        %3773 = vmatmul.mubr.f32.gmra.mxu0 %v3685
        %v3774 = vpop.f32.mrf.mxu0
        %v3775 = vadd.f32 0.0, %v3774
        %v3776 = vpop.f32.mrf.mxu0
        %3777 = vmatprep.mubr.f32.mxu0 0.0
        %3778 = vmatmul.mubr.f32.gmra.mxu0 %v3688
        %v3779 = vpop.f32.mrf.mxu0
        %v3780 = vadd.f32 0.0, %v3779
        %v3781 = vpop.f32.mrf.mxu0
        %3782 = vmatprep.mubr.f32.mxu0 0.0
        %3783 = vmatmul.mubr.f32.gmra.mxu0 %v3691
        %v3784 = vpop.f32.mrf.mxu0
        %v3785 = vadd.f32 0.0, %v3784
        %v3786 = vpop.f32.mrf.mxu0
        %3787 = vmatprep.mubr.f32.mxu0 0.0
        %3788 = vmatmul.mubr.f32.gmra.mxu0 %v3694
        %v3789 = vpop.f32.mrf.mxu0
        %v3790 = vadd.f32 0.0, %v3789
        %v3791 = vpop.f32.mrf.mxu0
        %3792 = vmatprep.mubr.f32.mxu0 0.0
        %3793 = vmatmul.mubr.f32.gmra.mxu0 %v3697
        %v3794 = vpop.f32.mrf.mxu0
        %v3795 = vadd.f32 0.0, %v3794
        %v3796 = vpop.f32.mrf.mxu0
        %3797 = vmatprep.mubr.f32.mxu0 0.0
        %3798 = vmatmul.mubr.f32.gmra.mxu0 %v3700
        %v3799 = vpop.f32.mrf.mxu0
        %v3800 = vadd.f32 0.0, %v3799
        %v3801 = vpop.f32.mrf.mxu0
        %3802 = vmatprep.mubr.f32.mxu0 0.0
        %3803 = vmatmul.mubr.f32.gmra.mxu0 %v3703
        %v3804 = vpop.f32.mrf.mxu0
        %v3805 = vadd.f32 0.0, %v3804
        %v3806 = vpop.f32.mrf.mxu0
        %3807 = vmatprep.mubr.f32.mxu0 0.0
        %3808 = vmatmul.mubr.f32.gmra.mxu0 %v3706
        %v3809 = vpop.f32.mrf.mxu0
        %v3810 = vadd.f32 0.0, %v3809
        %v3811 = vpop.f32.mrf.mxu0
        %3812 = vdwg.mxu0
        %v3813 = vadd.f32 %v3663, %v3775
        %v3814 = vadd.f32 %v3664, %v3780
        %v3815 = vadd.f32 %v3665, %v3785
        %v3816 = vadd.f32 %v3666, %v3790
        %v3817 = vadd.f32 %v3667, %v3795
        %v3818 = vadd.f32 %v3668, %v3800
        %v3819 = vadd.f32 %v3669, %v3805
        %v3820 = vadd.f32 %v3670, %v3810
        %v3821 = vld [vmem:[%s347 + $0x2] sm:$0xff]
        %v3822 = vld [vmem:[%s347 + $0x12] sm:$0xff]
        %v3823 = vld [vmem:[%s347 + $0x22] sm:$0xff]
        %v3824 = vld [vmem:[%s347 + $0x32] sm:$0xff]
        %v3825 = vld [vmem:[%s347 + $0x42] sm:$0xff]
        %v3826 = vld [vmem:[%s347 + $0x52] sm:$0xff]
        %v3827 = vld [vmem:[%s347 + $0x62] sm:$0xff]
        %v3828 = vld [vmem:[%s347 + $0x72] sm:$0xff]
        %s3829 = scalar_lea.vmem %s1, 736
        %v3830 = vld [vmem:[%s3829] sm:$0xff]
        %v3831 = vld [vmem:[%s3829 + $0x8] sm:$0xff]
        %v3832 = vld [vmem:[%s3829 + $0x10] sm:$0xff]
        %v3833 = vld [vmem:[%s3829 + $0x18] sm:$0xff]
        %v3835 = vsel %vm317, %v3821, 0
        %v3838 = vsel %vm317, %v3822, 0
        %v3841 = vsel %vm317, %v3823, 0
        %v3844 = vsel %vm317, %v3824, 0
        %v3847 = vsel %vm317, %v3825, 0
        %v3850 = vsel %vm317, %v3826, 0
        %v3853 = vsel %vm317, %v3827, 0
        %v3856 = vsel %vm317, %v3828, 0
        %3858 = vmatprep.subr.mxu0 0.0
        %3859 = vmatpush1.msra.mxu0 0.0
        %3860 = vmatprep.subr.mxu0 0.0
        %3861 = vmatpush1.msra.mxu0 0.0
        %3862 = vmatprep.subr.mxu0 0.0
        %3863 = vmatpush1.msra.mxu0 0.0
        %3864 = vmatprep.subr.mxu0 0.0
        %3865 = vmatpush1.msra.mxu0 0.0
        %3866 = vmatprep.subr.mxu0 0.0
        %3867 = vmatpush1.msra.mxu0 0.0
        %3868 = vmatprep.subr.mxu0 0.0
        %3869 = vmatpush1.msra.mxu0 0.0
        %3870 = vmatprep.subr.mxu0 0.0
        %3871 = vmatpush1.msra.mxu0 0.0
        %3872 = vmatprep.subr.mxu0 0.0
        %3873 = vmatpush1.msra.mxu0 0.0
        %3874 = vmatprep.subr.mxu0 0.0
        %3875 = vmatpush1.msra.mxu0 0.0
        %3876 = vmatprep.subr.mxu0 0.0
        %3877 = vmatpush1.msra.mxu0 0.0
        %3878 = vmatprep.subr.mxu0 0.0
        %3879 = vmatpush1.msra.mxu0 0.0
        %3880 = vmatprep.subr.mxu0 0.0
        %3881 = vmatpush1.msra.mxu0 0.0
        %3882 = vmatprep.subr.mxu0 0.0
        %3883 = vmatpush1.msra.mxu0 %v3833
        %3884 = vmatprep.subr.mxu0 0.0
        %3885 = vmatpush1.msra.mxu0 %v3832
        %3886 = vmatprep.subr.mxu0 0.0
        %3887 = vmatpush1.msra.mxu0 %v3831
        %3888 = vmatprep.subr.mxu0 0.0
        %3889 = vmatpush1.msra.mxu0 %v3830
        %3890 = vmatprep.subr.mxu0 0.0
        %3891 = vmatpush2.msra.mxu0 0.0
        %3892 = vmatprep.subr.mxu0 0.0
        %3893 = vmatpush2.msra.mxu0 0.0
        %3894 = vmatprep.subr.mxu0 0.0
        %3895 = vmatpush2.msra.mxu0 0.0
        %3896 = vmatprep.subr.mxu0 0.0
        %3897 = vmatpush2.msra.mxu0 0.0
        %3898 = vmatprep.subr.mxu0 0.0
        %3899 = vmatpush2.msra.mxu0 0.0
        %3900 = vmatprep.subr.mxu0 0.0
        %3901 = vmatpush2.msra.mxu0 0.0
        %3902 = vmatprep.subr.mxu0 0.0
        %3903 = vmatpush2.msra.mxu0 0.0
        %3904 = vmatprep.subr.mxu0 0.0
        %3905 = vmatpush2.msra.mxu0 0.0
        %3906 = vmatprep.subr.mxu0 0.0
        %3907 = vmatpush2.msra.mxu0 0.0
        %3908 = vmatprep.subr.mxu0 0.0
        %3909 = vmatpush2.msra.mxu0 0.0
        %3910 = vmatprep.subr.mxu0 0.0
        %3911 = vmatpush2.msra.mxu0 0.0
        %3912 = vmatprep.subr.mxu0 0.0
        %3913 = vmatpush2.msra.mxu0 0.0
        %3914 = vmatprep.subr.mxu0 0.0
        %3915 = vmatpush2.msra.mxu0 0.0
        %3916 = vmatprep.subr.mxu0 0.0
        %3917 = vmatpush2.msra.mxu0 0.0
        %3918 = vmatprep.subr.mxu0 0.0
        %3919 = vmatpush2.msra.mxu0 0.0
        %3920 = vmatprep.subr.mxu0 0.0
        %3921 = vmatpush2.msra.mxu0 0.0
        %3922 = vmatprep.mubr.f32.mxu0 0.0
        %3923 = vmatmul.mubr.f32.gmra.mxu0 %v3835
        %v3924 = vpop.f32.mrf.mxu0
        %v3925 = vadd.f32 0.0, %v3924
        %v3926 = vpop.f32.mrf.mxu0
        %3927 = vmatprep.mubr.f32.mxu0 0.0
        %3928 = vmatmul.mubr.f32.gmra.mxu0 %v3838
        %v3929 = vpop.f32.mrf.mxu0
        %v3930 = vadd.f32 0.0, %v3929
        %v3931 = vpop.f32.mrf.mxu0
        %3932 = vmatprep.mubr.f32.mxu0 0.0
        %3933 = vmatmul.mubr.f32.gmra.mxu0 %v3841
        %v3934 = vpop.f32.mrf.mxu0
        %v3935 = vadd.f32 0.0, %v3934
        %v3936 = vpop.f32.mrf.mxu0
        %3937 = vmatprep.mubr.f32.mxu0 0.0
        %3938 = vmatmul.mubr.f32.gmra.mxu0 %v3844
        %v3939 = vpop.f32.mrf.mxu0
        %v3940 = vadd.f32 0.0, %v3939
        %v3941 = vpop.f32.mrf.mxu0
        %3942 = vmatprep.mubr.f32.mxu0 0.0
        %3943 = vmatmul.mubr.f32.gmra.mxu0 %v3847
        %v3944 = vpop.f32.mrf.mxu0
        %v3945 = vadd.f32 0.0, %v3944
        %v3946 = vpop.f32.mrf.mxu0
        %3947 = vmatprep.mubr.f32.mxu0 0.0
        %3948 = vmatmul.mubr.f32.gmra.mxu0 %v3850
        %v3949 = vpop.f32.mrf.mxu0
        %v3950 = vadd.f32 0.0, %v3949
        %v3951 = vpop.f32.mrf.mxu0
        %3952 = vmatprep.mubr.f32.mxu0 0.0
        %3953 = vmatmul.mubr.f32.gmra.mxu0 %v3853
        %v3954 = vpop.f32.mrf.mxu0
        %v3955 = vadd.f32 0.0, %v3954
        %v3956 = vpop.f32.mrf.mxu0
        %3957 = vmatprep.mubr.f32.mxu0 0.0
        %3958 = vmatmul.mubr.f32.gmra.mxu0 %v3856
        %v3959 = vpop.f32.mrf.mxu0
        %v3960 = vadd.f32 0.0, %v3959
        %v3961 = vpop.f32.mrf.mxu0
        %3962 = vdwg.mxu0
        %v3963 = vadd.f32 %v3813, %v3925
        %v3964 = vadd.f32 %v3814, %v3930
        %v3965 = vadd.f32 %v3815, %v3935
        %v3966 = vadd.f32 %v3816, %v3940
        %v3967 = vadd.f32 %v3817, %v3945
        %v3968 = vadd.f32 %v3818, %v3950
        %v3969 = vadd.f32 %v3819, %v3955
        %v3970 = vadd.f32 %v3820, %v3960
        %v3971 = vld [vmem:[%s1239] sm:$0xff]
        %v3972 = vld [vmem:[%s1239 + $0x10] sm:$0xff]
        %v3973 = vld [vmem:[%s1239 + $0x20] sm:$0xff]
        %v3974 = vld [vmem:[%s1239 + $0x30] sm:$0xff]
        %v3975 = vld [vmem:[%s1239 + $0x40] sm:$0xff]
        %v3976 = vld [vmem:[%s1239 + $0x50] sm:$0xff]
        %v3977 = vld [vmem:[%s1239 + $0x60] sm:$0xff]
        %v3978 = vld [vmem:[%s1239 + $0x70] sm:$0xff]
        %s3979 = scalar_lea.vmem %s1, 768
        %v3980 = vld [vmem:[%s3979] sm:$0xff]
        %v3981 = vld [vmem:[%s3979 + $0x8] sm:$0xff]
        %v3982 = vld [vmem:[%s3979 + $0x10] sm:$0xff]
        %v3983 = vld [vmem:[%s3979 + $0x18] sm:$0xff]
        %v3985 = vsel %vm317, %v3971, 0
        %v3988 = vsel %vm317, %v3972, 0
        %v3991 = vsel %vm317, %v3973, 0
        %v3994 = vsel %vm317, %v3974, 0
        %v3997 = vsel %vm317, %v3975, 0
        %v4000 = vsel %vm317, %v3976, 0
        %v4003 = vsel %vm317, %v3977, 0
        %v4006 = vsel %vm317, %v3978, 0
        %4008 = vmatprep.subr.mxu0 0.0
        %4009 = vmatpush1.msra.mxu0 0.0
        %4010 = vmatprep.subr.mxu0 0.0
        %4011 = vmatpush1.msra.mxu0 0.0
        %4012 = vmatprep.subr.mxu0 0.0
        %4013 = vmatpush1.msra.mxu0 0.0
        %4014 = vmatprep.subr.mxu0 0.0
        %4015 = vmatpush1.msra.mxu0 0.0
        %4016 = vmatprep.subr.mxu0 0.0
        %4017 = vmatpush1.msra.mxu0 0.0
        %4018 = vmatprep.subr.mxu0 0.0
        %4019 = vmatpush1.msra.mxu0 0.0
        %4020 = vmatprep.subr.mxu0 0.0
        %4021 = vmatpush1.msra.mxu0 0.0
        %4022 = vmatprep.subr.mxu0 0.0
        %4023 = vmatpush1.msra.mxu0 0.0
        %4024 = vmatprep.subr.mxu0 0.0
        %4025 = vmatpush1.msra.mxu0 0.0
        %4026 = vmatprep.subr.mxu0 0.0
        %4027 = vmatpush1.msra.mxu0 0.0
        %4028 = vmatprep.subr.mxu0 0.0
        %4029 = vmatpush1.msra.mxu0 0.0
        %4030 = vmatprep.subr.mxu0 0.0
        %4031 = vmatpush1.msra.mxu0 0.0
        %4032 = vmatprep.subr.mxu0 0.0
        %4033 = vmatpush1.msra.mxu0 %v3983
        %4034 = vmatprep.subr.mxu0 0.0
        %4035 = vmatpush1.msra.mxu0 %v3982
        %4036 = vmatprep.subr.mxu0 0.0
        %4037 = vmatpush1.msra.mxu0 %v3981
        %4038 = vmatprep.subr.mxu0 0.0
        %4039 = vmatpush1.msra.mxu0 %v3980
        %4040 = vmatprep.subr.mxu0 0.0
        %4041 = vmatpush2.msra.mxu0 0.0
        %4042 = vmatprep.subr.mxu0 0.0
        %4043 = vmatpush2.msra.mxu0 0.0
        %4044 = vmatprep.subr.mxu0 0.0
        %4045 = vmatpush2.msra.mxu0 0.0
        %4046 = vmatprep.subr.mxu0 0.0
        %4047 = vmatpush2.msra.mxu0 0.0
        %4048 = vmatprep.subr.mxu0 0.0
        %4049 = vmatpush2.msra.mxu0 0.0
        %4050 = vmatprep.subr.mxu0 0.0
        %4051 = vmatpush2.msra.mxu0 0.0
        %4052 = vmatprep.subr.mxu0 0.0
        %4053 = vmatpush2.msra.mxu0 0.0
        %4054 = vmatprep.subr.mxu0 0.0
        %4055 = vmatpush2.msra.mxu0 0.0
        %4056 = vmatprep.subr.mxu0 0.0
        %4057 = vmatpush2.msra.mxu0 0.0
        %4058 = vmatprep.subr.mxu0 0.0
        %4059 = vmatpush2.msra.mxu0 0.0
        %4060 = vmatprep.subr.mxu0 0.0
        %4061 = vmatpush2.msra.mxu0 0.0
        %4062 = vmatprep.subr.mxu0 0.0
        %4063 = vmatpush2.msra.mxu0 0.0
        %4064 = vmatprep.subr.mxu0 0.0
        %4065 = vmatpush2.msra.mxu0 0.0
        %4066 = vmatprep.subr.mxu0 0.0
        %4067 = vmatpush2.msra.mxu0 0.0
        %4068 = vmatprep.subr.mxu0 0.0
        %4069 = vmatpush2.msra.mxu0 0.0
        %4070 = vmatprep.subr.mxu0 0.0
        %4071 = vmatpush2.msra.mxu0 0.0
        %4072 = vmatprep.mubr.f32.mxu0 0.0
        %4073 = vmatmul.mubr.f32.gmra.mxu0 %v3985
        %v4074 = vpop.f32.mrf.mxu0
        %v4075 = vadd.f32 0.0, %v4074
        %v4076 = vpop.f32.mrf.mxu0
        %4077 = vmatprep.mubr.f32.mxu0 0.0
        %4078 = vmatmul.mubr.f32.gmra.mxu0 %v3988
        %v4079 = vpop.f32.mrf.mxu0
        %v4080 = vadd.f32 0.0, %v4079
        %v4081 = vpop.f32.mrf.mxu0
        %4082 = vmatprep.mubr.f32.mxu0 0.0
        %4083 = vmatmul.mubr.f32.gmra.mxu0 %v3991
        %v4084 = vpop.f32.mrf.mxu0
        %v4085 = vadd.f32 0.0, %v4084
        %v4086 = vpop.f32.mrf.mxu0
        %4087 = vmatprep.mubr.f32.mxu0 0.0
        %4088 = vmatmul.mubr.f32.gmra.mxu0 %v3994
        %v4089 = vpop.f32.mrf.mxu0
        %v4090 = vadd.f32 0.0, %v4089
        %v4091 = vpop.f32.mrf.mxu0
        %4092 = vmatprep.mubr.f32.mxu0 0.0
        %4093 = vmatmul.mubr.f32.gmra.mxu0 %v3997
        %v4094 = vpop.f32.mrf.mxu0
        %v4095 = vadd.f32 0.0, %v4094
        %v4096 = vpop.f32.mrf.mxu0
        %4097 = vmatprep.mubr.f32.mxu0 0.0
        %4098 = vmatmul.mubr.f32.gmra.mxu0 %v4000
        %v4099 = vpop.f32.mrf.mxu0
        %v4100 = vadd.f32 0.0, %v4099
        %v4101 = vpop.f32.mrf.mxu0
        %4102 = vmatprep.mubr.f32.mxu0 0.0
        %4103 = vmatmul.mubr.f32.gmra.mxu0 %v4003
        %v4104 = vpop.f32.mrf.mxu0
        %v4105 = vadd.f32 0.0, %v4104
        %v4106 = vpop.f32.mrf.mxu0
        %4107 = vmatprep.mubr.f32.mxu0 0.0
        %4108 = vmatmul.mubr.f32.gmra.mxu0 %v4006
        %v4109 = vpop.f32.mrf.mxu0
        %v4110 = vadd.f32 0.0, %v4109
        %v4111 = vpop.f32.mrf.mxu0
        %4112 = vdwg.mxu0
        %v4113 = vadd.f32 %v3963, %v4075
        %v4114 = vadd.f32 %v3964, %v4080
        %v4115 = vadd.f32 %v3965, %v4085
        %v4116 = vadd.f32 %v3966, %v4090
        %v4117 = vadd.f32 %v3967, %v4095
        %v4118 = vadd.f32 %v3968, %v4100
        %v4119 = vadd.f32 %v3969, %v4105
        %v4120 = vadd.f32 %v3970, %v4110
        %v4121 = vld [vmem:[%s1239 + $0x1] sm:$0xff]
        %v4122 = vld [vmem:[%s1239 + $0x11] sm:$0xff]
        %v4123 = vld [vmem:[%s1239 + $0x21] sm:$0xff]
        %v4124 = vld [vmem:[%s1239 + $0x31] sm:$0xff]
        %v4125 = vld [vmem:[%s1239 + $0x41] sm:$0xff]
        %v4126 = vld [vmem:[%s1239 + $0x51] sm:$0xff]
        %v4127 = vld [vmem:[%s1239 + $0x61] sm:$0xff]
        %v4128 = vld [vmem:[%s1239 + $0x71] sm:$0xff]
        %s4129 = scalar_lea.vmem %s1, 800
        %v4130 = vld [vmem:[%s4129] sm:$0xff]
        %v4131 = vld [vmem:[%s4129 + $0x8] sm:$0xff]
        %v4132 = vld [vmem:[%s4129 + $0x10] sm:$0xff]
        %v4133 = vld [vmem:[%s4129 + $0x18] sm:$0xff]
        %v4135 = vsel %vm317, %v4121, 0
        %v4138 = vsel %vm317, %v4122, 0
        %v4141 = vsel %vm317, %v4123, 0
        %v4144 = vsel %vm317, %v4124, 0
        %v4147 = vsel %vm317, %v4125, 0
        %v4150 = vsel %vm317, %v4126, 0
        %v4153 = vsel %vm317, %v4127, 0
        %v4156 = vsel %vm317, %v4128, 0
        %4158 = vmatprep.subr.mxu0 0.0
        %4159 = vmatpush1.msra.mxu0 0.0
        %4160 = vmatprep.subr.mxu0 0.0
        %4161 = vmatpush1.msra.mxu0 0.0
        %4162 = vmatprep.subr.mxu0 0.0
        %4163 = vmatpush1.msra.mxu0 0.0
        %4164 = vmatprep.subr.mxu0 0.0
        %4165 = vmatpush1.msra.mxu0 0.0
        %4166 = vmatprep.subr.mxu0 0.0
        %4167 = vmatpush1.msra.mxu0 0.0
        %4168 = vmatprep.subr.mxu0 0.0
        %4169 = vmatpush1.msra.mxu0 0.0
        %4170 = vmatprep.subr.mxu0 0.0
        %4171 = vmatpush1.msra.mxu0 0.0
        %4172 = vmatprep.subr.mxu0 0.0
        %4173 = vmatpush1.msra.mxu0 0.0
        %4174 = vmatprep.subr.mxu0 0.0
        %4175 = vmatpush1.msra.mxu0 0.0
        %4176 = vmatprep.subr.mxu0 0.0
        %4177 = vmatpush1.msra.mxu0 0.0
        %4178 = vmatprep.subr.mxu0 0.0
        %4179 = vmatpush1.msra.mxu0 0.0
        %4180 = vmatprep.subr.mxu0 0.0
        %4181 = vmatpush1.msra.mxu0 0.0
        %4182 = vmatprep.subr.mxu0 0.0
        %4183 = vmatpush1.msra.mxu0 %v4133
        %4184 = vmatprep.subr.mxu0 0.0
        %4185 = vmatpush1.msra.mxu0 %v4132
        %4186 = vmatprep.subr.mxu0 0.0
        %4187 = vmatpush1.msra.mxu0 %v4131
        %4188 = vmatprep.subr.mxu0 0.0
        %4189 = vmatpush1.msra.mxu0 %v4130
        %4190 = vmatprep.subr.mxu0 0.0
        %4191 = vmatpush2.msra.mxu0 0.0
        %4192 = vmatprep.subr.mxu0 0.0
        %4193 = vmatpush2.msra.mxu0 0.0
        %4194 = vmatprep.subr.mxu0 0.0
        %4195 = vmatpush2.msra.mxu0 0.0
        %4196 = vmatprep.subr.mxu0 0.0
        %4197 = vmatpush2.msra.mxu0 0.0
        %4198 = vmatprep.subr.mxu0 0.0
        %4199 = vmatpush2.msra.mxu0 0.0
        %4200 = vmatprep.subr.mxu0 0.0
        %4201 = vmatpush2.msra.mxu0 0.0
        %4202 = vmatprep.subr.mxu0 0.0
        %4203 = vmatpush2.msra.mxu0 0.0
        %4204 = vmatprep.subr.mxu0 0.0
        %4205 = vmatpush2.msra.mxu0 0.0
        %4206 = vmatprep.subr.mxu0 0.0
        %4207 = vmatpush2.msra.mxu0 0.0
        %4208 = vmatprep.subr.mxu0 0.0
        %4209 = vmatpush2.msra.mxu0 0.0
        %4210 = vmatprep.subr.mxu0 0.0
        %4211 = vmatpush2.msra.mxu0 0.0
        %4212 = vmatprep.subr.mxu0 0.0
        %4213 = vmatpush2.msra.mxu0 0.0
        %4214 = vmatprep.subr.mxu0 0.0
        %4215 = vmatpush2.msra.mxu0 0.0
        %4216 = vmatprep.subr.mxu0 0.0
        %4217 = vmatpush2.msra.mxu0 0.0
        %4218 = vmatprep.subr.mxu0 0.0
        %4219 = vmatpush2.msra.mxu0 0.0
        %4220 = vmatprep.subr.mxu0 0.0
        %4221 = vmatpush2.msra.mxu0 0.0
        %4222 = vmatprep.mubr.f32.mxu0 0.0
        %4223 = vmatmul.mubr.f32.gmra.mxu0 %v4135
        %v4224 = vpop.f32.mrf.mxu0
        %v4225 = vadd.f32 0.0, %v4224
        %v4226 = vpop.f32.mrf.mxu0
        %4227 = vmatprep.mubr.f32.mxu0 0.0
        %4228 = vmatmul.mubr.f32.gmra.mxu0 %v4138
        %v4229 = vpop.f32.mrf.mxu0
        %v4230 = vadd.f32 0.0, %v4229
        %v4231 = vpop.f32.mrf.mxu0
        %4232 = vmatprep.mubr.f32.mxu0 0.0
        %4233 = vmatmul.mubr.f32.gmra.mxu0 %v4141
        %v4234 = vpop.f32.mrf.mxu0
        %v4235 = vadd.f32 0.0, %v4234
        %v4236 = vpop.f32.mrf.mxu0
        %4237 = vmatprep.mubr.f32.mxu0 0.0
        %4238 = vmatmul.mubr.f32.gmra.mxu0 %v4144
        %v4239 = vpop.f32.mrf.mxu0
        %v4240 = vadd.f32 0.0, %v4239
        %v4241 = vpop.f32.mrf.mxu0
        %4242 = vmatprep.mubr.f32.mxu0 0.0
        %4243 = vmatmul.mubr.f32.gmra.mxu0 %v4147
        %v4244 = vpop.f32.mrf.mxu0
        %v4245 = vadd.f32 0.0, %v4244
        %v4246 = vpop.f32.mrf.mxu0
        %4247 = vmatprep.mubr.f32.mxu0 0.0
        %4248 = vmatmul.mubr.f32.gmra.mxu0 %v4150
        %v4249 = vpop.f32.mrf.mxu0
        %v4250 = vadd.f32 0.0, %v4249
        %v4251 = vpop.f32.mrf.mxu0
        %4252 = vmatprep.mubr.f32.mxu0 0.0
        %4253 = vmatmul.mubr.f32.gmra.mxu0 %v4153
        %v4254 = vpop.f32.mrf.mxu0
        %v4255 = vadd.f32 0.0, %v4254
        %v4256 = vpop.f32.mrf.mxu0
        %4257 = vmatprep.mubr.f32.mxu0 0.0
        %4258 = vmatmul.mubr.f32.gmra.mxu0 %v4156
        %v4259 = vpop.f32.mrf.mxu0
        %v4260 = vadd.f32 0.0, %v4259
        %v4261 = vpop.f32.mrf.mxu0
        %4262 = vdwg.mxu0
        %v4263 = vadd.f32 %v4113, %v4225
        %v4264 = vadd.f32 %v4114, %v4230
        %v4265 = vadd.f32 %v4115, %v4235
        %v4266 = vadd.f32 %v4116, %v4240
        %v4267 = vadd.f32 %v4117, %v4245
        %v4268 = vadd.f32 %v4118, %v4250
        %v4269 = vadd.f32 %v4119, %v4255
        %v4270 = vadd.f32 %v4120, %v4260
        %v4271 = vld [vmem:[%s1239 + $0x2] sm:$0xff]
        %v4272 = vld [vmem:[%s1239 + $0x12] sm:$0xff]
        %v4273 = vld [vmem:[%s1239 + $0x22] sm:$0xff]
        %v4274 = vld [vmem:[%s1239 + $0x32] sm:$0xff]
        %v4275 = vld [vmem:[%s1239 + $0x42] sm:$0xff]
        %v4276 = vld [vmem:[%s1239 + $0x52] sm:$0xff]
        %v4277 = vld [vmem:[%s1239 + $0x62] sm:$0xff]
        %v4278 = vld [vmem:[%s1239 + $0x72] sm:$0xff]
        %s4279 = scalar_lea.vmem %s1, 832
        %v4280 = vld [vmem:[%s4279] sm:$0xff]
        %v4281 = vld [vmem:[%s4279 + $0x8] sm:$0xff]
        %v4282 = vld [vmem:[%s4279 + $0x10] sm:$0xff]
        %v4283 = vld [vmem:[%s4279 + $0x18] sm:$0xff]
        %v4285 = vsel %vm317, %v4271, 0
        %v4288 = vsel %vm317, %v4272, 0
        %v4291 = vsel %vm317, %v4273, 0
        %v4294 = vsel %vm317, %v4274, 0
        %v4297 = vsel %vm317, %v4275, 0
        %v4300 = vsel %vm317, %v4276, 0
        %v4303 = vsel %vm317, %v4277, 0
        %v4306 = vsel %vm317, %v4278, 0
        %4308 = vmatprep.subr.mxu0 0.0
        %4309 = vmatpush1.msra.mxu0 0.0
        %4310 = vmatprep.subr.mxu0 0.0
        %4311 = vmatpush1.msra.mxu0 0.0
        %4312 = vmatprep.subr.mxu0 0.0
        %4313 = vmatpush1.msra.mxu0 0.0
        %4314 = vmatprep.subr.mxu0 0.0
        %4315 = vmatpush1.msra.mxu0 0.0
        %4316 = vmatprep.subr.mxu0 0.0
        %4317 = vmatpush1.msra.mxu0 0.0
        %4318 = vmatprep.subr.mxu0 0.0
        %4319 = vmatpush1.msra.mxu0 0.0
        %4320 = vmatprep.subr.mxu0 0.0
        %4321 = vmatpush1.msra.mxu0 0.0
        %4322 = vmatprep.subr.mxu0 0.0
        %4323 = vmatpush1.msra.mxu0 0.0
        %4324 = vmatprep.subr.mxu0 0.0
        %4325 = vmatpush1.msra.mxu0 0.0
        %4326 = vmatprep.subr.mxu0 0.0
        %4327 = vmatpush1.msra.mxu0 0.0
        %4328 = vmatprep.subr.mxu0 0.0
        %4329 = vmatpush1.msra.mxu0 0.0
        %4330 = vmatprep.subr.mxu0 0.0
        %4331 = vmatpush1.msra.mxu0 0.0
        %4332 = vmatprep.subr.mxu0 0.0
        %4333 = vmatpush1.msra.mxu0 %v4283
        %4334 = vmatprep.subr.mxu0 0.0
        %4335 = vmatpush1.msra.mxu0 %v4282
        %4336 = vmatprep.subr.mxu0 0.0
        %4337 = vmatpush1.msra.mxu0 %v4281
        %4338 = vmatprep.subr.mxu0 0.0
        %4339 = vmatpush1.msra.mxu0 %v4280
        %4340 = vmatprep.subr.mxu0 0.0
        %4341 = vmatpush2.msra.mxu0 0.0
        %4342 = vmatprep.subr.mxu0 0.0
        %4343 = vmatpush2.msra.mxu0 0.0
        %4344 = vmatprep.subr.mxu0 0.0
        %4345 = vmatpush2.msra.mxu0 0.0
        %4346 = vmatprep.subr.mxu0 0.0
        %4347 = vmatpush2.msra.mxu0 0.0
        %4348 = vmatprep.subr.mxu0 0.0
        %4349 = vmatpush2.msra.mxu0 0.0
        %4350 = vmatprep.subr.mxu0 0.0
        %4351 = vmatpush2.msra.mxu0 0.0
        %4352 = vmatprep.subr.mxu0 0.0
        %4353 = vmatpush2.msra.mxu0 0.0
        %4354 = vmatprep.subr.mxu0 0.0
        %4355 = vmatpush2.msra.mxu0 0.0
        %4356 = vmatprep.subr.mxu0 0.0
        %4357 = vmatpush2.msra.mxu0 0.0
        %4358 = vmatprep.subr.mxu0 0.0
        %4359 = vmatpush2.msra.mxu0 0.0
        %4360 = vmatprep.subr.mxu0 0.0
        %4361 = vmatpush2.msra.mxu0 0.0
        %4362 = vmatprep.subr.mxu0 0.0
        %4363 = vmatpush2.msra.mxu0 0.0
        %4364 = vmatprep.subr.mxu0 0.0
        %4365 = vmatpush2.msra.mxu0 0.0
        %4366 = vmatprep.subr.mxu0 0.0
        %4367 = vmatpush2.msra.mxu0 0.0
        %4368 = vmatprep.subr.mxu0 0.0
        %4369 = vmatpush2.msra.mxu0 0.0
        %4370 = vmatprep.subr.mxu0 0.0
        %4371 = vmatpush2.msra.mxu0 0.0
        %4372 = vmatprep.mubr.f32.mxu0 0.0
        %4373 = vmatmul.mubr.f32.gmra.mxu0 %v4285
        %v4374 = vpop.f32.mrf.mxu0
        %v4375 = vadd.f32 0.0, %v4374
        %v4376 = vpop.f32.mrf.mxu0
        %4377 = vmatprep.mubr.f32.mxu0 0.0
        %4378 = vmatmul.mubr.f32.gmra.mxu0 %v4288
        %v4379 = vpop.f32.mrf.mxu0
        %v4380 = vadd.f32 0.0, %v4379
        %v4381 = vpop.f32.mrf.mxu0
        %4382 = vmatprep.mubr.f32.mxu0 0.0
        %4383 = vmatmul.mubr.f32.gmra.mxu0 %v4291
        %v4384 = vpop.f32.mrf.mxu0
        %v4385 = vadd.f32 0.0, %v4384
        %v4386 = vpop.f32.mrf.mxu0
        %4387 = vmatprep.mubr.f32.mxu0 0.0
        %4388 = vmatmul.mubr.f32.gmra.mxu0 %v4294
        %v4389 = vpop.f32.mrf.mxu0
        %v4390 = vadd.f32 0.0, %v4389
        %v4391 = vpop.f32.mrf.mxu0
        %4392 = vmatprep.mubr.f32.mxu0 0.0
        %4393 = vmatmul.mubr.f32.gmra.mxu0 %v4297
        %v4394 = vpop.f32.mrf.mxu0
        %v4395 = vadd.f32 0.0, %v4394
        %v4396 = vpop.f32.mrf.mxu0
        %4397 = vmatprep.mubr.f32.mxu0 0.0
        %4398 = vmatmul.mubr.f32.gmra.mxu0 %v4300
        %v4399 = vpop.f32.mrf.mxu0
        %v4400 = vadd.f32 0.0, %v4399
        %v4401 = vpop.f32.mrf.mxu0
        %4402 = vmatprep.mubr.f32.mxu0 0.0
        %4403 = vmatmul.mubr.f32.gmra.mxu0 %v4303
        %v4404 = vpop.f32.mrf.mxu0
        %v4405 = vadd.f32 0.0, %v4404
        %v4406 = vpop.f32.mrf.mxu0
        %4407 = vmatprep.mubr.f32.mxu0 0.0
        %4408 = vmatmul.mubr.f32.gmra.mxu0 %v4306
        %v4409 = vpop.f32.mrf.mxu0
        %v4410 = vadd.f32 0.0, %v4409
        %v4411 = vpop.f32.mrf.mxu0
        %4412 = vdwg.mxu0
        %v4413 = vadd.f32 %v4263, %v4375
        %v4414 = vadd.f32 %v4264, %v4380
        %v4415 = vadd.f32 %v4265, %v4385
        %v4416 = vadd.f32 %v4266, %v4390
        %v4417 = vadd.f32 %v4267, %v4395
        %v4418 = vadd.f32 %v4268, %v4400
        %v4419 = vadd.f32 %v4269, %v4405
        %v4420 = vadd.f32 %v4270, %v4410
        %s4421 = scalar_lea.vmem %s2, 2
        %v4422 = vld [vmem:[%s4421] sm:$0x1]
        %v4424 = vlaneseq
        %v4425 = vshrl.u32 %v4424, 7
        %v4426 = vsub.s32 0, %v4425
        %v4427 = vrot.slane %v4422, %v4426
        %v4429 = vadd.f32 %v4413, %v4427
        %v4430 = vadd.f32 %v4414, %v4427
        %v4431 = vadd.f32 %v4415, %v4427
        %v4432 = vadd.f32 %v4416, %v4427
        %v4433 = vadd.f32 %v4417, %v4427
        %v4434 = vadd.f32 %v4418, %v4427
        %v4435 = vadd.f32 %v4419, %v4427
        %v4436 = vadd.f32 %v4420, %v4427
        %v4437 = vmax.f32 %v4429, 0.0
        %v4438 = vmax.f32 %v4430, 0.0
        %v4439 = vmax.f32 %v4431, 0.0
        %v4440 = vmax.f32 %v4432, 0.0
        %v4441 = vmax.f32 %v4433, 0.0
        %v4442 = vmax.f32 %v4434, 0.0
        %v4443 = vmax.f32 %v4435, 0.0
        %v4444 = vmax.f32 %v4436, 0.0
        %4445 = vst.msk [vmem:[%s347 + $0x1] sm:$0xff] %vm317, %v4437
        %4446 = vst.msk [vmem:[%s347 + $0x11] sm:$0xff] %vm317, %v4438
        %4447 = vst.msk [vmem:[%s347 + $0x21] sm:$0xff] %vm317, %v4439
        %4448 = vst.msk [vmem:[%s347 + $0x31] sm:$0xff] %vm317, %v4440
        %4449 = vst.msk [vmem:[%s347 + $0x41] sm:$0xff] %vm317, %v4441
        %4450 = vst.msk [vmem:[%s347 + $0x51] sm:$0xff] %vm317, %v4442
        %4451 = vst.msk [vmem:[%s347 + $0x61] sm:$0xff] %vm317, %v4443
        %4452 = vst.msk [vmem:[%s347 + $0x71] sm:$0xff] %vm317, %v4444
        %v4453 = vld [vmem:[#allocation2] sm:$0xff]
        %v4454 = vld [vmem:[#allocation2 + $0x10] sm:$0xff]
        %v4455 = vld [vmem:[#allocation2 + $0x20] sm:$0xff]
        %v4456 = vld [vmem:[#allocation2 + $0x30] sm:$0xff]
        %v4457 = vld [vmem:[#allocation2 + $0x40] sm:$0xff]
        %v4458 = vld [vmem:[#allocation2 + $0x50] sm:$0xff]
        %v4459 = vld [vmem:[#allocation2 + $0x60] sm:$0xff]
        %v4460 = vld [vmem:[#allocation2 + $0x70] sm:$0xff]
        %s4461 = scalar_lea.vmem %s1, 864
        %v4462 = vld [vmem:[%s4461] sm:$0xff]
        %v4463 = vld [vmem:[%s4461 + $0x8] sm:$0xff]
        %v4464 = vld [vmem:[%s4461 + $0x10] sm:$0xff]
        %v4465 = vld [vmem:[%s4461 + $0x18] sm:$0xff]
        %v4466 = vld [vmem:[#allocation2 + $0x1] sm:$0xff]
        %v4467 = vld [vmem:[#allocation2 + $0x11] sm:$0xff]
        %v4468 = vld [vmem:[#allocation2 + $0x21] sm:$0xff]
        %v4469 = vld [vmem:[#allocation2 + $0x31] sm:$0xff]
        %v4470 = vld [vmem:[#allocation2 + $0x41] sm:$0xff]
        %v4471 = vld [vmem:[#allocation2 + $0x51] sm:$0xff]
        %v4472 = vld [vmem:[#allocation2 + $0x61] sm:$0xff]
        %v4473 = vld [vmem:[#allocation2 + $0x71] sm:$0xff]
        %s4474 = scalar_lea.vmem %s1, 896
        %v4475 = vld [vmem:[%s4474] sm:$0xff]
        %v4476 = vld [vmem:[%s4474 + $0x8] sm:$0xff]
        %v4477 = vld [vmem:[%s4474 + $0x10] sm:$0xff]
        %v4478 = vld [vmem:[%s4474 + $0x18] sm:$0xff]
        %v4480 = vsel %vm317, %v4466, 0
        %v4483 = vsel %vm317, %v4467, 0
        %v4486 = vsel %vm317, %v4468, 0
        %v4489 = vsel %vm317, %v4469, 0
        %v4492 = vsel %vm317, %v4470, 0
        %v4495 = vsel %vm317, %v4471, 0
        %v4498 = vsel %vm317, %v4472, 0
        %v4501 = vsel %vm317, %v4473, 0
        %4503 = vmatprep.subr.mxu0 0.0
        %4504 = vmatpush1.msra.mxu0 0.0
        %4505 = vmatprep.subr.mxu0 0.0
        %4506 = vmatpush1.msra.mxu0 0.0
        %4507 = vmatprep.subr.mxu0 0.0
        %4508 = vmatpush1.msra.mxu0 0.0
        %4509 = vmatprep.subr.mxu0 0.0
        %4510 = vmatpush1.msra.mxu0 0.0
        %4511 = vmatprep.subr.mxu0 0.0
        %4512 = vmatpush1.msra.mxu0 0.0
        %4513 = vmatprep.subr.mxu0 0.0
        %4514 = vmatpush1.msra.mxu0 0.0
        %4515 = vmatprep.subr.mxu0 0.0
        %4516 = vmatpush1.msra.mxu0 0.0
        %4517 = vmatprep.subr.mxu0 0.0
        %4518 = vmatpush1.msra.mxu0 0.0
        %4519 = vmatprep.subr.mxu0 0.0
        %4520 = vmatpush1.msra.mxu0 0.0
        %4521 = vmatprep.subr.mxu0 0.0
        %4522 = vmatpush1.msra.mxu0 0.0
        %4523 = vmatprep.subr.mxu0 0.0
        %4524 = vmatpush1.msra.mxu0 0.0
        %4525 = vmatprep.subr.mxu0 0.0
        %4526 = vmatpush1.msra.mxu0 0.0
        %4527 = vmatprep.subr.mxu0 0.0
        %4528 = vmatpush1.msra.mxu0 %v4478
        %4529 = vmatprep.subr.mxu0 0.0
        %4530 = vmatpush1.msra.mxu0 %v4477
        %4531 = vmatprep.subr.mxu0 0.0
        %4532 = vmatpush1.msra.mxu0 %v4476
        %4533 = vmatprep.subr.mxu0 0.0
        %4534 = vmatpush1.msra.mxu0 %v4475
        %4535 = vmatprep.subr.mxu0 0.0
        %4536 = vmatpush2.msra.mxu0 0.0
        %4537 = vmatprep.subr.mxu0 0.0
        %4538 = vmatpush2.msra.mxu0 0.0
        %4539 = vmatprep.subr.mxu0 0.0
        %4540 = vmatpush2.msra.mxu0 0.0
        %4541 = vmatprep.subr.mxu0 0.0
        %4542 = vmatpush2.msra.mxu0 0.0
        %4543 = vmatprep.subr.mxu0 0.0
        %4544 = vmatpush2.msra.mxu0 0.0
        %4545 = vmatprep.subr.mxu0 0.0
        %4546 = vmatpush2.msra.mxu0 0.0
        %4547 = vmatprep.subr.mxu0 0.0
        %4548 = vmatpush2.msra.mxu0 0.0
        %4549 = vmatprep.subr.mxu0 0.0
        %4550 = vmatpush2.msra.mxu0 0.0
        %4551 = vmatprep.subr.mxu0 0.0
        %4552 = vmatpush2.msra.mxu0 0.0
        %4553 = vmatprep.subr.mxu0 0.0
        %4554 = vmatpush2.msra.mxu0 0.0
        %4555 = vmatprep.subr.mxu0 0.0
        %4556 = vmatpush2.msra.mxu0 0.0
        %4557 = vmatprep.subr.mxu0 0.0
        %4558 = vmatpush2.msra.mxu0 0.0
        %4559 = vmatprep.subr.mxu0 0.0
        %4560 = vmatpush2.msra.mxu0 0.0
        %4561 = vmatprep.subr.mxu0 0.0
        %4562 = vmatpush2.msra.mxu0 0.0
        %4563 = vmatprep.subr.mxu0 0.0
        %4564 = vmatpush2.msra.mxu0 0.0
        %4565 = vmatprep.subr.mxu0 0.0
        %4566 = vmatpush2.msra.mxu0 0.0
        %4567 = vmatprep.mubr.f32.mxu0 0.0
        %4568 = vmatmul.mubr.f32.gmra.mxu0 %v4480
        %v4569 = vpop.f32.mrf.mxu0
        %v4570 = vadd.f32 0.0, %v4569
        %v4571 = vpop.f32.mrf.mxu0
        %4572 = vmatprep.mubr.f32.mxu0 0.0
        %4573 = vmatmul.mubr.f32.gmra.mxu0 %v4483
        %v4574 = vpop.f32.mrf.mxu0
        %v4575 = vadd.f32 0.0, %v4574
        %v4576 = vpop.f32.mrf.mxu0
        %4577 = vmatprep.mubr.f32.mxu0 0.0
        %4578 = vmatmul.mubr.f32.gmra.mxu0 %v4486
        %v4579 = vpop.f32.mrf.mxu0
        %v4580 = vadd.f32 0.0, %v4579
        %v4581 = vpop.f32.mrf.mxu0
        %4582 = vmatprep.mubr.f32.mxu0 0.0
        %4583 = vmatmul.mubr.f32.gmra.mxu0 %v4489
        %v4584 = vpop.f32.mrf.mxu0
        %v4585 = vadd.f32 0.0, %v4584
        %v4586 = vpop.f32.mrf.mxu0
        %4587 = vmatprep.mubr.f32.mxu0 0.0
        %4588 = vmatmul.mubr.f32.gmra.mxu0 %v4492
        %v4589 = vpop.f32.mrf.mxu0
        %v4590 = vadd.f32 0.0, %v4589
        %v4591 = vpop.f32.mrf.mxu0
        %4592 = vmatprep.mubr.f32.mxu0 0.0
        %4593 = vmatmul.mubr.f32.gmra.mxu0 %v4495
        %v4594 = vpop.f32.mrf.mxu0
        %v4595 = vadd.f32 0.0, %v4594
        %v4596 = vpop.f32.mrf.mxu0
        %4597 = vmatprep.mubr.f32.mxu0 0.0
        %4598 = vmatmul.mubr.f32.gmra.mxu0 %v4498
        %v4599 = vpop.f32.mrf.mxu0
        %v4600 = vadd.f32 0.0, %v4599
        %v4601 = vpop.f32.mrf.mxu0
        %4602 = vmatprep.mubr.f32.mxu0 0.0
        %4603 = vmatmul.mubr.f32.gmra.mxu0 %v4501
        %v4604 = vpop.f32.mrf.mxu0
        %v4605 = vadd.f32 0.0, %v4604
        %v4606 = vpop.f32.mrf.mxu0
        %4607 = vdwg.mxu0
        %v4609 = vsel %vm317, %v4453, 0
        %v4612 = vsel %vm317, %v4454, 0
        %v4615 = vsel %vm317, %v4455, 0
        %v4618 = vsel %vm317, %v4456, 0
        %v4621 = vsel %vm317, %v4457, 0
        %v4624 = vsel %vm317, %v4458, 0
        %v4627 = vsel %vm317, %v4459, 0
        %v4630 = vsel %vm317, %v4460, 0
        %4632 = vmatprep.subr.mxu0 0.0
        %4633 = vmatpush1.msra.mxu0 0.0
        %4634 = vmatprep.subr.mxu0 0.0
        %4635 = vmatpush1.msra.mxu0 0.0
        %4636 = vmatprep.subr.mxu0 0.0
        %4637 = vmatpush1.msra.mxu0 0.0
        %4638 = vmatprep.subr.mxu0 0.0
        %4639 = vmatpush1.msra.mxu0 0.0
        %4640 = vmatprep.subr.mxu0 0.0
        %4641 = vmatpush1.msra.mxu0 0.0
        %4642 = vmatprep.subr.mxu0 0.0
        %4643 = vmatpush1.msra.mxu0 0.0
        %4644 = vmatprep.subr.mxu0 0.0
        %4645 = vmatpush1.msra.mxu0 0.0
        %4646 = vmatprep.subr.mxu0 0.0
        %4647 = vmatpush1.msra.mxu0 0.0
        %4648 = vmatprep.subr.mxu0 0.0
        %4649 = vmatpush1.msra.mxu0 0.0
        %4650 = vmatprep.subr.mxu0 0.0
        %4651 = vmatpush1.msra.mxu0 0.0
        %4652 = vmatprep.subr.mxu0 0.0
        %4653 = vmatpush1.msra.mxu0 0.0
        %4654 = vmatprep.subr.mxu0 0.0
        %4655 = vmatpush1.msra.mxu0 0.0
        %4656 = vmatprep.subr.mxu0 0.0
        %4657 = vmatpush1.msra.mxu0 %v4465
        %4658 = vmatprep.subr.mxu0 0.0
        %4659 = vmatpush1.msra.mxu0 %v4464
        %4660 = vmatprep.subr.mxu0 0.0
        %4661 = vmatpush1.msra.mxu0 %v4463
        %4662 = vmatprep.subr.mxu0 0.0
        %4663 = vmatpush1.msra.mxu0 %v4462
        %4664 = vmatprep.subr.mxu0 0.0
        %4665 = vmatpush2.msra.mxu0 0.0
        %4666 = vmatprep.subr.mxu0 0.0
        %4667 = vmatpush2.msra.mxu0 0.0
        %4668 = vmatprep.subr.mxu0 0.0
        %4669 = vmatpush2.msra.mxu0 0.0
        %4670 = vmatprep.subr.mxu0 0.0
        %4671 = vmatpush2.msra.mxu0 0.0
        %4672 = vmatprep.subr.mxu0 0.0
        %4673 = vmatpush2.msra.mxu0 0.0
        %4674 = vmatprep.subr.mxu0 0.0
        %4675 = vmatpush2.msra.mxu0 0.0
        %4676 = vmatprep.subr.mxu0 0.0
        %4677 = vmatpush2.msra.mxu0 0.0
        %4678 = vmatprep.subr.mxu0 0.0
        %4679 = vmatpush2.msra.mxu0 0.0
        %4680 = vmatprep.subr.mxu0 0.0
        %4681 = vmatpush2.msra.mxu0 0.0
        %4682 = vmatprep.subr.mxu0 0.0
        %4683 = vmatpush2.msra.mxu0 0.0
        %4684 = vmatprep.subr.mxu0 0.0
        %4685 = vmatpush2.msra.mxu0 0.0
        %4686 = vmatprep.subr.mxu0 0.0
        %4687 = vmatpush2.msra.mxu0 0.0
        %4688 = vmatprep.subr.mxu0 0.0
        %4689 = vmatpush2.msra.mxu0 0.0
        %4690 = vmatprep.subr.mxu0 0.0
        %4691 = vmatpush2.msra.mxu0 0.0
        %4692 = vmatprep.subr.mxu0 0.0
        %4693 = vmatpush2.msra.mxu0 0.0
        %4694 = vmatprep.subr.mxu0 0.0
        %4695 = vmatpush2.msra.mxu0 0.0
        %4696 = vmatprep.mubr.f32.mxu0 0.0
        %4697 = vmatmul.mubr.f32.gmra.mxu0 %v4609
        %v4698 = vpop.f32.mrf.mxu0
        %v4699 = vadd.f32 %v4570, %v4698
        %v4700 = vpop.f32.mrf.mxu0
        %4701 = vmatprep.mubr.f32.mxu0 0.0
        %4702 = vmatmul.mubr.f32.gmra.mxu0 %v4612
        %v4703 = vpop.f32.mrf.mxu0
        %v4704 = vadd.f32 %v4575, %v4703
        %v4705 = vpop.f32.mrf.mxu0
        %4706 = vmatprep.mubr.f32.mxu0 0.0
        %4707 = vmatmul.mubr.f32.gmra.mxu0 %v4615
        %v4708 = vpop.f32.mrf.mxu0
        %v4709 = vadd.f32 %v4580, %v4708
        %v4710 = vpop.f32.mrf.mxu0
        %4711 = vmatprep.mubr.f32.mxu0 0.0
        %4712 = vmatmul.mubr.f32.gmra.mxu0 %v4618
        %v4713 = vpop.f32.mrf.mxu0
        %v4714 = vadd.f32 %v4585, %v4713
        %v4715 = vpop.f32.mrf.mxu0
        %4716 = vmatprep.mubr.f32.mxu0 0.0
        %4717 = vmatmul.mubr.f32.gmra.mxu0 %v4621
        %v4718 = vpop.f32.mrf.mxu0
        %v4719 = vadd.f32 %v4590, %v4718
        %v4720 = vpop.f32.mrf.mxu0
        %4721 = vmatprep.mubr.f32.mxu0 0.0
        %4722 = vmatmul.mubr.f32.gmra.mxu0 %v4624
        %v4723 = vpop.f32.mrf.mxu0
        %v4724 = vadd.f32 %v4595, %v4723
        %v4725 = vpop.f32.mrf.mxu0
        %4726 = vmatprep.mubr.f32.mxu0 0.0
        %4727 = vmatmul.mubr.f32.gmra.mxu0 %v4627
        %v4728 = vpop.f32.mrf.mxu0
        %v4729 = vadd.f32 %v4600, %v4728
        %v4730 = vpop.f32.mrf.mxu0
        %4731 = vmatprep.mubr.f32.mxu0 0.0
        %4732 = vmatmul.mubr.f32.gmra.mxu0 %v4630
        %v4733 = vpop.f32.mrf.mxu0
        %v4734 = vadd.f32 %v4605, %v4733
        %v4735 = vpop.f32.mrf.mxu0
        %4736 = vdwg.mxu0
        %v4737 = vld [vmem:[#allocation2 + $0x2] sm:$0xff]
        %v4738 = vld [vmem:[#allocation2 + $0x12] sm:$0xff]
        %v4739 = vld [vmem:[#allocation2 + $0x22] sm:$0xff]
        %v4740 = vld [vmem:[#allocation2 + $0x32] sm:$0xff]
        %v4741 = vld [vmem:[#allocation2 + $0x42] sm:$0xff]
        %v4742 = vld [vmem:[#allocation2 + $0x52] sm:$0xff]
        %v4743 = vld [vmem:[#allocation2 + $0x62] sm:$0xff]
        %v4744 = vld [vmem:[#allocation2 + $0x72] sm:$0xff]
        %s4745 = scalar_lea.vmem %s1, 928
        %v4746 = vld [vmem:[%s4745] sm:$0xff]
        %v4747 = vld [vmem:[%s4745 + $0x8] sm:$0xff]
        %v4748 = vld [vmem:[%s4745 + $0x10] sm:$0xff]
        %v4749 = vld [vmem:[%s4745 + $0x18] sm:$0xff]
        %v4751 = vsel %vm317, %v4737, 0
        %v4754 = vsel %vm317, %v4738, 0
        %v4757 = vsel %vm317, %v4739, 0
        %v4760 = vsel %vm317, %v4740, 0
        %v4763 = vsel %vm317, %v4741, 0
        %v4766 = vsel %vm317, %v4742, 0
        %v4769 = vsel %vm317, %v4743, 0
        %v4772 = vsel %vm317, %v4744, 0
        %4774 = vmatprep.subr.mxu0 0.0
        %4775 = vmatpush1.msra.mxu0 0.0
        %4776 = vmatprep.subr.mxu0 0.0
        %4777 = vmatpush1.msra.mxu0 0.0
        %4778 = vmatprep.subr.mxu0 0.0
        %4779 = vmatpush1.msra.mxu0 0.0
        %4780 = vmatprep.subr.mxu0 0.0
        %4781 = vmatpush1.msra.mxu0 0.0
        %4782 = vmatprep.subr.mxu0 0.0
        %4783 = vmatpush1.msra.mxu0 0.0
        %4784 = vmatprep.subr.mxu0 0.0
        %4785 = vmatpush1.msra.mxu0 0.0
        %4786 = vmatprep.subr.mxu0 0.0
        %4787 = vmatpush1.msra.mxu0 0.0
        %4788 = vmatprep.subr.mxu0 0.0
        %4789 = vmatpush1.msra.mxu0 0.0
        %4790 = vmatprep.subr.mxu0 0.0
        %4791 = vmatpush1.msra.mxu0 0.0
        %4792 = vmatprep.subr.mxu0 0.0
        %4793 = vmatpush1.msra.mxu0 0.0
        %4794 = vmatprep.subr.mxu0 0.0
        %4795 = vmatpush1.msra.mxu0 0.0
        %4796 = vmatprep.subr.mxu0 0.0
        %4797 = vmatpush1.msra.mxu0 0.0
        %4798 = vmatprep.subr.mxu0 0.0
        %4799 = vmatpush1.msra.mxu0 %v4749
        %4800 = vmatprep.subr.mxu0 0.0
        %4801 = vmatpush1.msra.mxu0 %v4748
        %4802 = vmatprep.subr.mxu0 0.0
        %4803 = vmatpush1.msra.mxu0 %v4747
        %4804 = vmatprep.subr.mxu0 0.0
        %4805 = vmatpush1.msra.mxu0 %v4746
        %4806 = vmatprep.subr.mxu0 0.0
        %4807 = vmatpush2.msra.mxu0 0.0
        %4808 = vmatprep.subr.mxu0 0.0
        %4809 = vmatpush2.msra.mxu0 0.0
        %4810 = vmatprep.subr.mxu0 0.0
        %4811 = vmatpush2.msra.mxu0 0.0
        %4812 = vmatprep.subr.mxu0 0.0
        %4813 = vmatpush2.msra.mxu0 0.0
        %4814 = vmatprep.subr.mxu0 0.0
        %4815 = vmatpush2.msra.mxu0 0.0
        %4816 = vmatprep.subr.mxu0 0.0
        %4817 = vmatpush2.msra.mxu0 0.0
        %4818 = vmatprep.subr.mxu0 0.0
        %4819 = vmatpush2.msra.mxu0 0.0
        %4820 = vmatprep.subr.mxu0 0.0
        %4821 = vmatpush2.msra.mxu0 0.0
        %4822 = vmatprep.subr.mxu0 0.0
        %4823 = vmatpush2.msra.mxu0 0.0
        %4824 = vmatprep.subr.mxu0 0.0
        %4825 = vmatpush2.msra.mxu0 0.0
        %4826 = vmatprep.subr.mxu0 0.0
        %4827 = vmatpush2.msra.mxu0 0.0
        %4828 = vmatprep.subr.mxu0 0.0
        %4829 = vmatpush2.msra.mxu0 0.0
        %4830 = vmatprep.subr.mxu0 0.0
        %4831 = vmatpush2.msra.mxu0 0.0
        %4832 = vmatprep.subr.mxu0 0.0
        %4833 = vmatpush2.msra.mxu0 0.0
        %4834 = vmatprep.subr.mxu0 0.0
        %4835 = vmatpush2.msra.mxu0 0.0
        %4836 = vmatprep.subr.mxu0 0.0
        %4837 = vmatpush2.msra.mxu0 0.0
        %4838 = vmatprep.mubr.f32.mxu0 0.0
        %4839 = vmatmul.mubr.f32.gmra.mxu0 %v4751
        %v4840 = vpop.f32.mrf.mxu0
        %v4841 = vadd.f32 0.0, %v4840
        %v4842 = vpop.f32.mrf.mxu0
        %4843 = vmatprep.mubr.f32.mxu0 0.0
        %4844 = vmatmul.mubr.f32.gmra.mxu0 %v4754
        %v4845 = vpop.f32.mrf.mxu0
        %v4846 = vadd.f32 0.0, %v4845
        %v4847 = vpop.f32.mrf.mxu0
        %4848 = vmatprep.mubr.f32.mxu0 0.0
        %4849 = vmatmul.mubr.f32.gmra.mxu0 %v4757
        %v4850 = vpop.f32.mrf.mxu0
        %v4851 = vadd.f32 0.0, %v4850
        %v4852 = vpop.f32.mrf.mxu0
        %4853 = vmatprep.mubr.f32.mxu0 0.0
        %4854 = vmatmul.mubr.f32.gmra.mxu0 %v4760
        %v4855 = vpop.f32.mrf.mxu0
        %v4856 = vadd.f32 0.0, %v4855
        %v4857 = vpop.f32.mrf.mxu0
        %4858 = vmatprep.mubr.f32.mxu0 0.0
        %4859 = vmatmul.mubr.f32.gmra.mxu0 %v4763
        %v4860 = vpop.f32.mrf.mxu0
        %v4861 = vadd.f32 0.0, %v4860
        %v4862 = vpop.f32.mrf.mxu0
        %4863 = vmatprep.mubr.f32.mxu0 0.0
        %4864 = vmatmul.mubr.f32.gmra.mxu0 %v4766
        %v4865 = vpop.f32.mrf.mxu0
        %v4866 = vadd.f32 0.0, %v4865
        %v4867 = vpop.f32.mrf.mxu0
        %4868 = vmatprep.mubr.f32.mxu0 0.0
        %4869 = vmatmul.mubr.f32.gmra.mxu0 %v4769
        %v4870 = vpop.f32.mrf.mxu0
        %v4871 = vadd.f32 0.0, %v4870
        %v4872 = vpop.f32.mrf.mxu0
        %4873 = vmatprep.mubr.f32.mxu0 0.0
        %4874 = vmatmul.mubr.f32.gmra.mxu0 %v4772
        %v4875 = vpop.f32.mrf.mxu0
        %v4876 = vadd.f32 0.0, %v4875
        %v4877 = vpop.f32.mrf.mxu0
        %4878 = vdwg.mxu0
        %v4879 = vadd.f32 %v4699, %v4841
        %v4880 = vadd.f32 %v4704, %v4846
        %v4881 = vadd.f32 %v4709, %v4851
        %v4882 = vadd.f32 %v4714, %v4856
        %v4883 = vadd.f32 %v4719, %v4861
        %v4884 = vadd.f32 %v4724, %v4866
        %v4885 = vadd.f32 %v4729, %v4871
        %v4886 = vadd.f32 %v4734, %v4876
        %v4887 = vld [vmem:[%s347] sm:$0xff]
        %v4888 = vld [vmem:[%s347 + $0x10] sm:$0xff]
        %v4889 = vld [vmem:[%s347 + $0x20] sm:$0xff]
        %v4890 = vld [vmem:[%s347 + $0x30] sm:$0xff]
        %v4891 = vld [vmem:[%s347 + $0x40] sm:$0xff]
        %v4892 = vld [vmem:[%s347 + $0x50] sm:$0xff]
        %v4893 = vld [vmem:[%s347 + $0x60] sm:$0xff]
        %v4894 = vld [vmem:[%s347 + $0x70] sm:$0xff]
        %s4895 = scalar_lea.vmem %s1, 960
        %v4896 = vld [vmem:[%s4895] sm:$0xff]
        %v4897 = vld [vmem:[%s4895 + $0x8] sm:$0xff]
        %v4898 = vld [vmem:[%s4895 + $0x10] sm:$0xff]
        %v4899 = vld [vmem:[%s4895 + $0x18] sm:$0xff]
        %v4901 = vsel %vm317, %v4887, 0
        %v4904 = vsel %vm317, %v4888, 0
        %v4907 = vsel %vm317, %v4889, 0
        %v4910 = vsel %vm317, %v4890, 0
        %v4913 = vsel %vm317, %v4891, 0
        %v4916 = vsel %vm317, %v4892, 0
        %v4919 = vsel %vm317, %v4893, 0
        %v4922 = vsel %vm317, %v4894, 0
        %4924 = vmatprep.subr.mxu0 0.0
        %4925 = vmatpush1.msra.mxu0 0.0
        %4926 = vmatprep.subr.mxu0 0.0
        %4927 = vmatpush1.msra.mxu0 0.0
        %4928 = vmatprep.subr.mxu0 0.0
        %4929 = vmatpush1.msra.mxu0 0.0
        %4930 = vmatprep.subr.mxu0 0.0
        %4931 = vmatpush1.msra.mxu0 0.0
        %4932 = vmatprep.subr.mxu0 0.0
        %4933 = vmatpush1.msra.mxu0 0.0
        %4934 = vmatprep.subr.mxu0 0.0
        %4935 = vmatpush1.msra.mxu0 0.0
        %4936 = vmatprep.subr.mxu0 0.0
        %4937 = vmatpush1.msra.mxu0 0.0
        %4938 = vmatprep.subr.mxu0 0.0
        %4939 = vmatpush1.msra.mxu0 0.0
        %4940 = vmatprep.subr.mxu0 0.0
        %4941 = vmatpush1.msra.mxu0 0.0
        %4942 = vmatprep.subr.mxu0 0.0
        %4943 = vmatpush1.msra.mxu0 0.0
        %4944 = vmatprep.subr.mxu0 0.0
        %4945 = vmatpush1.msra.mxu0 0.0
        %4946 = vmatprep.subr.mxu0 0.0
        %4947 = vmatpush1.msra.mxu0 0.0
        %4948 = vmatprep.subr.mxu0 0.0
        %4949 = vmatpush1.msra.mxu0 %v4899
        %4950 = vmatprep.subr.mxu0 0.0
        %4951 = vmatpush1.msra.mxu0 %v4898
        %4952 = vmatprep.subr.mxu0 0.0
        %4953 = vmatpush1.msra.mxu0 %v4897
        %4954 = vmatprep.subr.mxu0 0.0
        %4955 = vmatpush1.msra.mxu0 %v4896
        %4956 = vmatprep.subr.mxu0 0.0
        %4957 = vmatpush2.msra.mxu0 0.0
        %4958 = vmatprep.subr.mxu0 0.0
        %4959 = vmatpush2.msra.mxu0 0.0
        %4960 = vmatprep.subr.mxu0 0.0
        %4961 = vmatpush2.msra.mxu0 0.0
        %4962 = vmatprep.subr.mxu0 0.0
        %4963 = vmatpush2.msra.mxu0 0.0
        %4964 = vmatprep.subr.mxu0 0.0
        %4965 = vmatpush2.msra.mxu0 0.0
        %4966 = vmatprep.subr.mxu0 0.0
        %4967 = vmatpush2.msra.mxu0 0.0
        %4968 = vmatprep.subr.mxu0 0.0
        %4969 = vmatpush2.msra.mxu0 0.0
        %4970 = vmatprep.subr.mxu0 0.0
        %4971 = vmatpush2.msra.mxu0 0.0
        %4972 = vmatprep.subr.mxu0 0.0
        %4973 = vmatpush2.msra.mxu0 0.0
        %4974 = vmatprep.subr.mxu0 0.0
        %4975 = vmatpush2.msra.mxu0 0.0
        %4976 = vmatprep.subr.mxu0 0.0
        %4977 = vmatpush2.msra.mxu0 0.0
        %4978 = vmatprep.subr.mxu0 0.0
        %4979 = vmatpush2.msra.mxu0 0.0
        %4980 = vmatprep.subr.mxu0 0.0
        %4981 = vmatpush2.msra.mxu0 0.0
        %4982 = vmatprep.subr.mxu0 0.0
        %4983 = vmatpush2.msra.mxu0 0.0
        %4984 = vmatprep.subr.mxu0 0.0
        %4985 = vmatpush2.msra.mxu0 0.0
        %4986 = vmatprep.subr.mxu0 0.0
        %4987 = vmatpush2.msra.mxu0 0.0
        %4988 = vmatprep.mubr.f32.mxu0 0.0
        %4989 = vmatmul.mubr.f32.gmra.mxu0 %v4901
        %v4990 = vpop.f32.mrf.mxu0
        %v4991 = vadd.f32 0.0, %v4990
        %v4992 = vpop.f32.mrf.mxu0
        %4993 = vmatprep.mubr.f32.mxu0 0.0
        %4994 = vmatmul.mubr.f32.gmra.mxu0 %v4904
        %v4995 = vpop.f32.mrf.mxu0
        %v4996 = vadd.f32 0.0, %v4995
        %v4997 = vpop.f32.mrf.mxu0
        %4998 = vmatprep.mubr.f32.mxu0 0.0
        %4999 = vmatmul.mubr.f32.gmra.mxu0 %v4907
        %v5000 = vpop.f32.mrf.mxu0
        %v5001 = vadd.f32 0.0, %v5000
        %v5002 = vpop.f32.mrf.mxu0
        %5003 = vmatprep.mubr.f32.mxu0 0.0
        %5004 = vmatmul.mubr.f32.gmra.mxu0 %v4910
        %v5005 = vpop.f32.mrf.mxu0
        %v5006 = vadd.f32 0.0, %v5005
        %v5007 = vpop.f32.mrf.mxu0
        %5008 = vmatprep.mubr.f32.mxu0 0.0
        %5009 = vmatmul.mubr.f32.gmra.mxu0 %v4913
        %v5010 = vpop.f32.mrf.mxu0
        %v5011 = vadd.f32 0.0, %v5010
        %v5012 = vpop.f32.mrf.mxu0
        %5013 = vmatprep.mubr.f32.mxu0 0.0
        %5014 = vmatmul.mubr.f32.gmra.mxu0 %v4916
        %v5015 = vpop.f32.mrf.mxu0
        %v5016 = vadd.f32 0.0, %v5015
        %v5017 = vpop.f32.mrf.mxu0
        %5018 = vmatprep.mubr.f32.mxu0 0.0
        %5019 = vmatmul.mubr.f32.gmra.mxu0 %v4919
        %v5020 = vpop.f32.mrf.mxu0
        %v5021 = vadd.f32 0.0, %v5020
        %v5022 = vpop.f32.mrf.mxu0
        %5023 = vmatprep.mubr.f32.mxu0 0.0
        %5024 = vmatmul.mubr.f32.gmra.mxu0 %v4922
        %v5025 = vpop.f32.mrf.mxu0
        %v5026 = vadd.f32 0.0, %v5025
        %v5027 = vpop.f32.mrf.mxu0
        %5028 = vdwg.mxu0
        %v5029 = vadd.f32 %v4879, %v4991
        %v5030 = vadd.f32 %v4880, %v4996
        %v5031 = vadd.f32 %v4881, %v5001
        %v5032 = vadd.f32 %v4882, %v5006
        %v5033 = vadd.f32 %v4883, %v5011
        %v5034 = vadd.f32 %v4884, %v5016
        %v5035 = vadd.f32 %v4885, %v5021
        %v5036 = vadd.f32 %v4886, %v5026
        %v5037 = vld [vmem:[%s347 + $0x1] sm:$0xff]
        %v5038 = vld [vmem:[%s347 + $0x11] sm:$0xff]
        %v5039 = vld [vmem:[%s347 + $0x21] sm:$0xff]
        %v5040 = vld [vmem:[%s347 + $0x31] sm:$0xff]
        %v5041 = vld [vmem:[%s347 + $0x41] sm:$0xff]
        %v5042 = vld [vmem:[%s347 + $0x51] sm:$0xff]
        %v5043 = vld [vmem:[%s347 + $0x61] sm:$0xff]
        %v5044 = vld [vmem:[%s347 + $0x71] sm:$0xff]
        %s5045 = scalar_lea.vmem %s1, 992
        %v5046 = vld [vmem:[%s5045] sm:$0xff]
        %v5047 = vld [vmem:[%s5045 + $0x8] sm:$0xff]
        %v5048 = vld [vmem:[%s5045 + $0x10] sm:$0xff]
        %v5049 = vld [vmem:[%s5045 + $0x18] sm:$0xff]
        %v5051 = vsel %vm317, %v5037, 0
        %v5054 = vsel %vm317, %v5038, 0
        %v5057 = vsel %vm317, %v5039, 0
        %v5060 = vsel %vm317, %v5040, 0
        %v5063 = vsel %vm317, %v5041, 0
        %v5066 = vsel %vm317, %v5042, 0
        %v5069 = vsel %vm317, %v5043, 0
        %v5072 = vsel %vm317, %v5044, 0
        %5074 = vmatprep.subr.mxu0 0.0
        %5075 = vmatpush1.msra.mxu0 0.0
        %5076 = vmatprep.subr.mxu0 0.0
        %5077 = vmatpush1.msra.mxu0 0.0
        %5078 = vmatprep.subr.mxu0 0.0
        %5079 = vmatpush1.msra.mxu0 0.0
        %5080 = vmatprep.subr.mxu0 0.0
        %5081 = vmatpush1.msra.mxu0 0.0
        %5082 = vmatprep.subr.mxu0 0.0
        %5083 = vmatpush1.msra.mxu0 0.0
        %5084 = vmatprep.subr.mxu0 0.0
        %5085 = vmatpush1.msra.mxu0 0.0
        %5086 = vmatprep.subr.mxu0 0.0
        %5087 = vmatpush1.msra.mxu0 0.0
        %5088 = vmatprep.subr.mxu0 0.0
        %5089 = vmatpush1.msra.mxu0 0.0
        %5090 = vmatprep.subr.mxu0 0.0
        %5091 = vmatpush1.msra.mxu0 0.0
        %5092 = vmatprep.subr.mxu0 0.0
        %5093 = vmatpush1.msra.mxu0 0.0
        %5094 = vmatprep.subr.mxu0 0.0
        %5095 = vmatpush1.msra.mxu0 0.0
        %5096 = vmatprep.subr.mxu0 0.0
        %5097 = vmatpush1.msra.mxu0 0.0
        %5098 = vmatprep.subr.mxu0 0.0
        %5099 = vmatpush1.msra.mxu0 %v5049
        %5100 = vmatprep.subr.mxu0 0.0
        %5101 = vmatpush1.msra.mxu0 %v5048
        %5102 = vmatprep.subr.mxu0 0.0
        %5103 = vmatpush1.msra.mxu0 %v5047
        %5104 = vmatprep.subr.mxu0 0.0
        %5105 = vmatpush1.msra.mxu0 %v5046
        %5106 = vmatprep.subr.mxu0 0.0
        %5107 = vmatpush2.msra.mxu0 0.0
        %5108 = vmatprep.subr.mxu0 0.0
        %5109 = vmatpush2.msra.mxu0 0.0
        %5110 = vmatprep.subr.mxu0 0.0
        %5111 = vmatpush2.msra.mxu0 0.0
        %5112 = vmatprep.subr.mxu0 0.0
        %5113 = vmatpush2.msra.mxu0 0.0
        %5114 = vmatprep.subr.mxu0 0.0
        %5115 = vmatpush2.msra.mxu0 0.0
        %5116 = vmatprep.subr.mxu0 0.0
        %5117 = vmatpush2.msra.mxu0 0.0
        %5118 = vmatprep.subr.mxu0 0.0
        %5119 = vmatpush2.msra.mxu0 0.0
        %5120 = vmatprep.subr.mxu0 0.0
        %5121 = vmatpush2.msra.mxu0 0.0
        %5122 = vmatprep.subr.mxu0 0.0
        %5123 = vmatpush2.msra.mxu0 0.0
        %5124 = vmatprep.subr.mxu0 0.0
        %5125 = vmatpush2.msra.mxu0 0.0
        %5126 = vmatprep.subr.mxu0 0.0
        %5127 = vmatpush2.msra.mxu0 0.0
        %5128 = vmatprep.subr.mxu0 0.0
        %5129 = vmatpush2.msra.mxu0 0.0
        %5130 = vmatprep.subr.mxu0 0.0
        %5131 = vmatpush2.msra.mxu0 0.0
        %5132 = vmatprep.subr.mxu0 0.0
        %5133 = vmatpush2.msra.mxu0 0.0
        %5134 = vmatprep.subr.mxu0 0.0
        %5135 = vmatpush2.msra.mxu0 0.0
        %5136 = vmatprep.subr.mxu0 0.0
        %5137 = vmatpush2.msra.mxu0 0.0
        %5138 = vmatprep.mubr.f32.mxu0 0.0
        %5139 = vmatmul.mubr.f32.gmra.mxu0 %v5051
        %v5140 = vpop.f32.mrf.mxu0
        %v5141 = vadd.f32 0.0, %v5140
        %v5142 = vpop.f32.mrf.mxu0
        %5143 = vmatprep.mubr.f32.mxu0 0.0
        %5144 = vmatmul.mubr.f32.gmra.mxu0 %v5054
        %v5145 = vpop.f32.mrf.mxu0
        %v5146 = vadd.f32 0.0, %v5145
        %v5147 = vpop.f32.mrf.mxu0
        %5148 = vmatprep.mubr.f32.mxu0 0.0
        %5149 = vmatmul.mubr.f32.gmra.mxu0 %v5057
        %v5150 = vpop.f32.mrf.mxu0
        %v5151 = vadd.f32 0.0, %v5150
        %v5152 = vpop.f32.mrf.mxu0
        %5153 = vmatprep.mubr.f32.mxu0 0.0
        %5154 = vmatmul.mubr.f32.gmra.mxu0 %v5060
        %v5155 = vpop.f32.mrf.mxu0
        %v5156 = vadd.f32 0.0, %v5155
        %v5157 = vpop.f32.mrf.mxu0
        %5158 = vmatprep.mubr.f32.mxu0 0.0
        %5159 = vmatmul.mubr.f32.gmra.mxu0 %v5063
        %v5160 = vpop.f32.mrf.mxu0
        %v5161 = vadd.f32 0.0, %v5160
        %v5162 = vpop.f32.mrf.mxu0
        %5163 = vmatprep.mubr.f32.mxu0 0.0
        %5164 = vmatmul.mubr.f32.gmra.mxu0 %v5066
        %v5165 = vpop.f32.mrf.mxu0
        %v5166 = vadd.f32 0.0, %v5165
        %v5167 = vpop.f32.mrf.mxu0
        %5168 = vmatprep.mubr.f32.mxu0 0.0
        %5169 = vmatmul.mubr.f32.gmra.mxu0 %v5069
        %v5170 = vpop.f32.mrf.mxu0
        %v5171 = vadd.f32 0.0, %v5170
        %v5172 = vpop.f32.mrf.mxu0
        %5173 = vmatprep.mubr.f32.mxu0 0.0
        %5174 = vmatmul.mubr.f32.gmra.mxu0 %v5072
        %v5175 = vpop.f32.mrf.mxu0
        %v5176 = vadd.f32 0.0, %v5175
        %v5177 = vpop.f32.mrf.mxu0
        %5178 = vdwg.mxu0
        %v5179 = vadd.f32 %v5029, %v5141
        %v5180 = vadd.f32 %v5030, %v5146
        %v5181 = vadd.f32 %v5031, %v5151
        %v5182 = vadd.f32 %v5032, %v5156
        %v5183 = vadd.f32 %v5033, %v5161
        %v5184 = vadd.f32 %v5034, %v5166
        %v5185 = vadd.f32 %v5035, %v5171
        %v5186 = vadd.f32 %v5036, %v5176
        %v5187 = vld [vmem:[%s347 + $0x2] sm:$0xff]
        %v5188 = vld [vmem:[%s347 + $0x12] sm:$0xff]
        %v5189 = vld [vmem:[%s347 + $0x22] sm:$0xff]
        %v5190 = vld [vmem:[%s347 + $0x32] sm:$0xff]
        %v5191 = vld [vmem:[%s347 + $0x42] sm:$0xff]
        %v5192 = vld [vmem:[%s347 + $0x52] sm:$0xff]
        %v5193 = vld [vmem:[%s347 + $0x62] sm:$0xff]
        %v5194 = vld [vmem:[%s347 + $0x72] sm:$0xff]
        %s5195 = scalar_lea.vmem %s1, 1024
        %v5196 = vld [vmem:[%s5195] sm:$0xff]
        %v5197 = vld [vmem:[%s5195 + $0x8] sm:$0xff]
        %v5198 = vld [vmem:[%s5195 + $0x10] sm:$0xff]
        %v5199 = vld [vmem:[%s5195 + $0x18] sm:$0xff]
        %v5201 = vsel %vm317, %v5187, 0
        %v5204 = vsel %vm317, %v5188, 0
        %v5207 = vsel %vm317, %v5189, 0
        %v5210 = vsel %vm317, %v5190, 0
        %v5213 = vsel %vm317, %v5191, 0
        %v5216 = vsel %vm317, %v5192, 0
        %v5219 = vsel %vm317, %v5193, 0
        %v5222 = vsel %vm317, %v5194, 0
        %5224 = vmatprep.subr.mxu0 0.0
        %5225 = vmatpush1.msra.mxu0 0.0
        %5226 = vmatprep.subr.mxu0 0.0
        %5227 = vmatpush1.msra.mxu0 0.0
        %5228 = vmatprep.subr.mxu0 0.0
        %5229 = vmatpush1.msra.mxu0 0.0
        %5230 = vmatprep.subr.mxu0 0.0
        %5231 = vmatpush1.msra.mxu0 0.0
        %5232 = vmatprep.subr.mxu0 0.0
        %5233 = vmatpush1.msra.mxu0 0.0
        %5234 = vmatprep.subr.mxu0 0.0
        %5235 = vmatpush1.msra.mxu0 0.0
        %5236 = vmatprep.subr.mxu0 0.0
        %5237 = vmatpush1.msra.mxu0 0.0
        %5238 = vmatprep.subr.mxu0 0.0
        %5239 = vmatpush1.msra.mxu0 0.0
        %5240 = vmatprep.subr.mxu0 0.0
        %5241 = vmatpush1.msra.mxu0 0.0
        %5242 = vmatprep.subr.mxu0 0.0
        %5243 = vmatpush1.msra.mxu0 0.0
        %5244 = vmatprep.subr.mxu0 0.0
        %5245 = vmatpush1.msra.mxu0 0.0
        %5246 = vmatprep.subr.mxu0 0.0
        %5247 = vmatpush1.msra.mxu0 0.0
        %5248 = vmatprep.subr.mxu0 0.0
        %5249 = vmatpush1.msra.mxu0 %v5199
        %5250 = vmatprep.subr.mxu0 0.0
        %5251 = vmatpush1.msra.mxu0 %v5198
        %5252 = vmatprep.subr.mxu0 0.0
        %5253 = vmatpush1.msra.mxu0 %v5197
        %5254 = vmatprep.subr.mxu0 0.0
        %5255 = vmatpush1.msra.mxu0 %v5196
        %5256 = vmatprep.subr.mxu0 0.0
        %5257 = vmatpush2.msra.mxu0 0.0
        %5258 = vmatprep.subr.mxu0 0.0
        %5259 = vmatpush2.msra.mxu0 0.0
        %5260 = vmatprep.subr.mxu0 0.0
        %5261 = vmatpush2.msra.mxu0 0.0
        %5262 = vmatprep.subr.mxu0 0.0
        %5263 = vmatpush2.msra.mxu0 0.0
        %5264 = vmatprep.subr.mxu0 0.0
        %5265 = vmatpush2.msra.mxu0 0.0
        %5266 = vmatprep.subr.mxu0 0.0
        %5267 = vmatpush2.msra.mxu0 0.0
        %5268 = vmatprep.subr.mxu0 0.0
        %5269 = vmatpush2.msra.mxu0 0.0
        %5270 = vmatprep.subr.mxu0 0.0
        %5271 = vmatpush2.msra.mxu0 0.0
        %5272 = vmatprep.subr.mxu0 0.0
        %5273 = vmatpush2.msra.mxu0 0.0
        %5274 = vmatprep.subr.mxu0 0.0
        %5275 = vmatpush2.msra.mxu0 0.0
        %5276 = vmatprep.subr.mxu0 0.0
        %5277 = vmatpush2.msra.mxu0 0.0
        %5278 = vmatprep.subr.mxu0 0.0
        %5279 = vmatpush2.msra.mxu0 0.0
        %5280 = vmatprep.subr.mxu0 0.0
        %5281 = vmatpush2.msra.mxu0 0.0
        %5282 = vmatprep.subr.mxu0 0.0
        %5283 = vmatpush2.msra.mxu0 0.0
        %5284 = vmatprep.subr.mxu0 0.0
        %5285 = vmatpush2.msra.mxu0 0.0
        %5286 = vmatprep.subr.mxu0 0.0
        %5287 = vmatpush2.msra.mxu0 0.0
        %5288 = vmatprep.mubr.f32.mxu0 0.0
        %5289 = vmatmul.mubr.f32.gmra.mxu0 %v5201
        %v5290 = vpop.f32.mrf.mxu0
        %v5291 = vadd.f32 0.0, %v5290
        %v5292 = vpop.f32.mrf.mxu0
        %5293 = vmatprep.mubr.f32.mxu0 0.0
        %5294 = vmatmul.mubr.f32.gmra.mxu0 %v5204
        %v5295 = vpop.f32.mrf.mxu0
        %v5296 = vadd.f32 0.0, %v5295
        %v5297 = vpop.f32.mrf.mxu0
        %5298 = vmatprep.mubr.f32.mxu0 0.0
        %5299 = vmatmul.mubr.f32.gmra.mxu0 %v5207
        %v5300 = vpop.f32.mrf.mxu0
        %v5301 = vadd.f32 0.0, %v5300
        %v5302 = vpop.f32.mrf.mxu0
        %5303 = vmatprep.mubr.f32.mxu0 0.0
        %5304 = vmatmul.mubr.f32.gmra.mxu0 %v5210
        %v5305 = vpop.f32.mrf.mxu0
        %v5306 = vadd.f32 0.0, %v5305
        %v5307 = vpop.f32.mrf.mxu0
        %5308 = vmatprep.mubr.f32.mxu0 0.0
        %5309 = vmatmul.mubr.f32.gmra.mxu0 %v5213
        %v5310 = vpop.f32.mrf.mxu0
        %v5311 = vadd.f32 0.0, %v5310
        %v5312 = vpop.f32.mrf.mxu0
        %5313 = vmatprep.mubr.f32.mxu0 0.0
        %5314 = vmatmul.mubr.f32.gmra.mxu0 %v5216
        %v5315 = vpop.f32.mrf.mxu0
        %v5316 = vadd.f32 0.0, %v5315
        %v5317 = vpop.f32.mrf.mxu0
        %5318 = vmatprep.mubr.f32.mxu0 0.0
        %5319 = vmatmul.mubr.f32.gmra.mxu0 %v5219
        %v5320 = vpop.f32.mrf.mxu0
        %v5321 = vadd.f32 0.0, %v5320
        %v5322 = vpop.f32.mrf.mxu0
        %5323 = vmatprep.mubr.f32.mxu0 0.0
        %5324 = vmatmul.mubr.f32.gmra.mxu0 %v5222
        %v5325 = vpop.f32.mrf.mxu0
        %v5326 = vadd.f32 0.0, %v5325
        %v5327 = vpop.f32.mrf.mxu0
        %5328 = vdwg.mxu0
        %v5329 = vadd.f32 %v5179, %v5291
        %v5330 = vadd.f32 %v5180, %v5296
        %v5331 = vadd.f32 %v5181, %v5301
        %v5332 = vadd.f32 %v5182, %v5306
        %v5333 = vadd.f32 %v5183, %v5311
        %v5334 = vadd.f32 %v5184, %v5316
        %v5335 = vadd.f32 %v5185, %v5321
        %v5336 = vadd.f32 %v5186, %v5326
        %v5337 = vld [vmem:[%s1239] sm:$0xff]
        %v5338 = vld [vmem:[%s1239 + $0x10] sm:$0xff]
        %v5339 = vld [vmem:[%s1239 + $0x20] sm:$0xff]
        %v5340 = vld [vmem:[%s1239 + $0x30] sm:$0xff]
        %v5341 = vld [vmem:[%s1239 + $0x40] sm:$0xff]
        %v5342 = vld [vmem:[%s1239 + $0x50] sm:$0xff]
        %v5343 = vld [vmem:[%s1239 + $0x60] sm:$0xff]
        %v5344 = vld [vmem:[%s1239 + $0x70] sm:$0xff]
        %s5345 = scalar_lea.vmem %s1, 1056
        %v5346 = vld [vmem:[%s5345] sm:$0xff]
        %v5347 = vld [vmem:[%s5345 + $0x8] sm:$0xff]
        %v5348 = vld [vmem:[%s5345 + $0x10] sm:$0xff]
        %v5349 = vld [vmem:[%s5345 + $0x18] sm:$0xff]
        %v5351 = vsel %vm317, %v5337, 0
        %v5354 = vsel %vm317, %v5338, 0
        %v5357 = vsel %vm317, %v5339, 0
        %v5360 = vsel %vm317, %v5340, 0
        %v5363 = vsel %vm317, %v5341, 0
        %v5366 = vsel %vm317, %v5342, 0
        %v5369 = vsel %vm317, %v5343, 0
        %v5372 = vsel %vm317, %v5344, 0
        %5374 = vmatprep.subr.mxu0 0.0
        %5375 = vmatpush1.msra.mxu0 0.0
        %5376 = vmatprep.subr.mxu0 0.0
        %5377 = vmatpush1.msra.mxu0 0.0
        %5378 = vmatprep.subr.mxu0 0.0
        %5379 = vmatpush1.msra.mxu0 0.0
        %5380 = vmatprep.subr.mxu0 0.0
        %5381 = vmatpush1.msra.mxu0 0.0
        %5382 = vmatprep.subr.mxu0 0.0
        %5383 = vmatpush1.msra.mxu0 0.0
        %5384 = vmatprep.subr.mxu0 0.0
        %5385 = vmatpush1.msra.mxu0 0.0
        %5386 = vmatprep.subr.mxu0 0.0
        %5387 = vmatpush1.msra.mxu0 0.0
        %5388 = vmatprep.subr.mxu0 0.0
        %5389 = vmatpush1.msra.mxu0 0.0
        %5390 = vmatprep.subr.mxu0 0.0
        %5391 = vmatpush1.msra.mxu0 0.0
        %5392 = vmatprep.subr.mxu0 0.0
        %5393 = vmatpush1.msra.mxu0 0.0
        %5394 = vmatprep.subr.mxu0 0.0
        %5395 = vmatpush1.msra.mxu0 0.0
        %5396 = vmatprep.subr.mxu0 0.0
        %5397 = vmatpush1.msra.mxu0 0.0
        %5398 = vmatprep.subr.mxu0 0.0
        %5399 = vmatpush1.msra.mxu0 %v5349
        %5400 = vmatprep.subr.mxu0 0.0
        %5401 = vmatpush1.msra.mxu0 %v5348
        %5402 = vmatprep.subr.mxu0 0.0
        %5403 = vmatpush1.msra.mxu0 %v5347
        %5404 = vmatprep.subr.mxu0 0.0
        %5405 = vmatpush1.msra.mxu0 %v5346
        %5406 = vmatprep.subr.mxu0 0.0
        %5407 = vmatpush2.msra.mxu0 0.0
        %5408 = vmatprep.subr.mxu0 0.0
        %5409 = vmatpush2.msra.mxu0 0.0
        %5410 = vmatprep.subr.mxu0 0.0
        %5411 = vmatpush2.msra.mxu0 0.0
        %5412 = vmatprep.subr.mxu0 0.0
        %5413 = vmatpush2.msra.mxu0 0.0
        %5414 = vmatprep.subr.mxu0 0.0
        %5415 = vmatpush2.msra.mxu0 0.0
        %5416 = vmatprep.subr.mxu0 0.0
        %5417 = vmatpush2.msra.mxu0 0.0
        %5418 = vmatprep.subr.mxu0 0.0
        %5419 = vmatpush2.msra.mxu0 0.0
        %5420 = vmatprep.subr.mxu0 0.0
        %5421 = vmatpush2.msra.mxu0 0.0
        %5422 = vmatprep.subr.mxu0 0.0
        %5423 = vmatpush2.msra.mxu0 0.0
        %5424 = vmatprep.subr.mxu0 0.0
        %5425 = vmatpush2.msra.mxu0 0.0
        %5426 = vmatprep.subr.mxu0 0.0
        %5427 = vmatpush2.msra.mxu0 0.0
        %5428 = vmatprep.subr.mxu0 0.0
        %5429 = vmatpush2.msra.mxu0 0.0
        %5430 = vmatprep.subr.mxu0 0.0
        %5431 = vmatpush2.msra.mxu0 0.0
        %5432 = vmatprep.subr.mxu0 0.0
        %5433 = vmatpush2.msra.mxu0 0.0
        %5434 = vmatprep.subr.mxu0 0.0
        %5435 = vmatpush2.msra.mxu0 0.0
        %5436 = vmatprep.subr.mxu0 0.0
        %5437 = vmatpush2.msra.mxu0 0.0
        %5438 = vmatprep.mubr.f32.mxu0 0.0
        %5439 = vmatmul.mubr.f32.gmra.mxu0 %v5351
        %v5440 = vpop.f32.mrf.mxu0
        %v5441 = vadd.f32 0.0, %v5440
        %v5442 = vpop.f32.mrf.mxu0
        %5443 = vmatprep.mubr.f32.mxu0 0.0
        %5444 = vmatmul.mubr.f32.gmra.mxu0 %v5354
        %v5445 = vpop.f32.mrf.mxu0
        %v5446 = vadd.f32 0.0, %v5445
        %v5447 = vpop.f32.mrf.mxu0
        %5448 = vmatprep.mubr.f32.mxu0 0.0
        %5449 = vmatmul.mubr.f32.gmra.mxu0 %v5357
        %v5450 = vpop.f32.mrf.mxu0
        %v5451 = vadd.f32 0.0, %v5450
        %v5452 = vpop.f32.mrf.mxu0
        %5453 = vmatprep.mubr.f32.mxu0 0.0
        %5454 = vmatmul.mubr.f32.gmra.mxu0 %v5360
        %v5455 = vpop.f32.mrf.mxu0
        %v5456 = vadd.f32 0.0, %v5455
        %v5457 = vpop.f32.mrf.mxu0
        %5458 = vmatprep.mubr.f32.mxu0 0.0
        %5459 = vmatmul.mubr.f32.gmra.mxu0 %v5363
        %v5460 = vpop.f32.mrf.mxu0
        %v5461 = vadd.f32 0.0, %v5460
        %v5462 = vpop.f32.mrf.mxu0
        %5463 = vmatprep.mubr.f32.mxu0 0.0
        %5464 = vmatmul.mubr.f32.gmra.mxu0 %v5366
        %v5465 = vpop.f32.mrf.mxu0
        %v5466 = vadd.f32 0.0, %v5465
        %v5467 = vpop.f32.mrf.mxu0
        %5468 = vmatprep.mubr.f32.mxu0 0.0
        %5469 = vmatmul.mubr.f32.gmra.mxu0 %v5369
        %v5470 = vpop.f32.mrf.mxu0
        %v5471 = vadd.f32 0.0, %v5470
        %v5472 = vpop.f32.mrf.mxu0
        %5473 = vmatprep.mubr.f32.mxu0 0.0
        %5474 = vmatmul.mubr.f32.gmra.mxu0 %v5372
        %v5475 = vpop.f32.mrf.mxu0
        %v5476 = vadd.f32 0.0, %v5475
        %v5477 = vpop.f32.mrf.mxu0
        %5478 = vdwg.mxu0
        %v5479 = vadd.f32 %v5329, %v5441
        %v5480 = vadd.f32 %v5330, %v5446
        %v5481 = vadd.f32 %v5331, %v5451
        %v5482 = vadd.f32 %v5332, %v5456
        %v5483 = vadd.f32 %v5333, %v5461
        %v5484 = vadd.f32 %v5334, %v5466
        %v5485 = vadd.f32 %v5335, %v5471
        %v5486 = vadd.f32 %v5336, %v5476
        %v5487 = vld [vmem:[%s1239 + $0x1] sm:$0xff]
        %v5488 = vld [vmem:[%s1239 + $0x11] sm:$0xff]
        %v5489 = vld [vmem:[%s1239 + $0x21] sm:$0xff]
        %v5490 = vld [vmem:[%s1239 + $0x31] sm:$0xff]
        %v5491 = vld [vmem:[%s1239 + $0x41] sm:$0xff]
        %v5492 = vld [vmem:[%s1239 + $0x51] sm:$0xff]
        %v5493 = vld [vmem:[%s1239 + $0x61] sm:$0xff]
        %v5494 = vld [vmem:[%s1239 + $0x71] sm:$0xff]
        %s5495 = scalar_lea.vmem %s1, 1088
        %v5496 = vld [vmem:[%s5495] sm:$0xff]
        %v5497 = vld [vmem:[%s5495 + $0x8] sm:$0xff]
        %v5498 = vld [vmem:[%s5495 + $0x10] sm:$0xff]
        %v5499 = vld [vmem:[%s5495 + $0x18] sm:$0xff]
        %v5501 = vsel %vm317, %v5487, 0
        %v5504 = vsel %vm317, %v5488, 0
        %v5507 = vsel %vm317, %v5489, 0
        %v5510 = vsel %vm317, %v5490, 0
        %v5513 = vsel %vm317, %v5491, 0
        %v5516 = vsel %vm317, %v5492, 0
        %v5519 = vsel %vm317, %v5493, 0
        %v5522 = vsel %vm317, %v5494, 0
        %5524 = vmatprep.subr.mxu0 0.0
        %5525 = vmatpush1.msra.mxu0 0.0
        %5526 = vmatprep.subr.mxu0 0.0
        %5527 = vmatpush1.msra.mxu0 0.0
        %5528 = vmatprep.subr.mxu0 0.0
        %5529 = vmatpush1.msra.mxu0 0.0
        %5530 = vmatprep.subr.mxu0 0.0
        %5531 = vmatpush1.msra.mxu0 0.0
        %5532 = vmatprep.subr.mxu0 0.0
        %5533 = vmatpush1.msra.mxu0 0.0
        %5534 = vmatprep.subr.mxu0 0.0
        %5535 = vmatpush1.msra.mxu0 0.0
        %5536 = vmatprep.subr.mxu0 0.0
        %5537 = vmatpush1.msra.mxu0 0.0
        %5538 = vmatprep.subr.mxu0 0.0
        %5539 = vmatpush1.msra.mxu0 0.0
        %5540 = vmatprep.subr.mxu0 0.0
        %5541 = vmatpush1.msra.mxu0 0.0
        %5542 = vmatprep.subr.mxu0 0.0
        %5543 = vmatpush1.msra.mxu0 0.0
        %5544 = vmatprep.subr.mxu0 0.0
        %5545 = vmatpush1.msra.mxu0 0.0
        %5546 = vmatprep.subr.mxu0 0.0
        %5547 = vmatpush1.msra.mxu0 0.0
        %5548 = vmatprep.subr.mxu0 0.0
        %5549 = vmatpush1.msra.mxu0 %v5499
        %5550 = vmatprep.subr.mxu0 0.0
        %5551 = vmatpush1.msra.mxu0 %v5498
        %5552 = vmatprep.subr.mxu0 0.0
        %5553 = vmatpush1.msra.mxu0 %v5497
        %5554 = vmatprep.subr.mxu0 0.0
        %5555 = vmatpush1.msra.mxu0 %v5496
        %5556 = vmatprep.subr.mxu0 0.0
        %5557 = vmatpush2.msra.mxu0 0.0
        %5558 = vmatprep.subr.mxu0 0.0
        %5559 = vmatpush2.msra.mxu0 0.0
        %5560 = vmatprep.subr.mxu0 0.0
        %5561 = vmatpush2.msra.mxu0 0.0
        %5562 = vmatprep.subr.mxu0 0.0
        %5563 = vmatpush2.msra.mxu0 0.0
        %5564 = vmatprep.subr.mxu0 0.0
        %5565 = vmatpush2.msra.mxu0 0.0
        %5566 = vmatprep.subr.mxu0 0.0
        %5567 = vmatpush2.msra.mxu0 0.0
        %5568 = vmatprep.subr.mxu0 0.0
        %5569 = vmatpush2.msra.mxu0 0.0
        %5570 = vmatprep.subr.mxu0 0.0
        %5571 = vmatpush2.msra.mxu0 0.0
        %5572 = vmatprep.subr.mxu0 0.0
        %5573 = vmatpush2.msra.mxu0 0.0
        %5574 = vmatprep.subr.mxu0 0.0
        %5575 = vmatpush2.msra.mxu0 0.0
        %5576 = vmatprep.subr.mxu0 0.0
        %5577 = vmatpush2.msra.mxu0 0.0
        %5578 = vmatprep.subr.mxu0 0.0
        %5579 = vmatpush2.msra.mxu0 0.0
        %5580 = vmatprep.subr.mxu0 0.0
        %5581 = vmatpush2.msra.mxu0 0.0
        %5582 = vmatprep.subr.mxu0 0.0
        %5583 = vmatpush2.msra.mxu0 0.0
        %5584 = vmatprep.subr.mxu0 0.0
        %5585 = vmatpush2.msra.mxu0 0.0
        %5586 = vmatprep.subr.mxu0 0.0
        %5587 = vmatpush2.msra.mxu0 0.0
        %5588 = vmatprep.mubr.f32.mxu0 0.0
        %5589 = vmatmul.mubr.f32.gmra.mxu0 %v5501
        %v5590 = vpop.f32.mrf.mxu0
        %v5591 = vadd.f32 0.0, %v5590
        %v5592 = vpop.f32.mrf.mxu0
        %5593 = vmatprep.mubr.f32.mxu0 0.0
        %5594 = vmatmul.mubr.f32.gmra.mxu0 %v5504
        %v5595 = vpop.f32.mrf.mxu0
        %v5596 = vadd.f32 0.0, %v5595
        %v5597 = vpop.f32.mrf.mxu0
        %5598 = vmatprep.mubr.f32.mxu0 0.0
        %5599 = vmatmul.mubr.f32.gmra.mxu0 %v5507
        %v5600 = vpop.f32.mrf.mxu0
        %v5601 = vadd.f32 0.0, %v5600
        %v5602 = vpop.f32.mrf.mxu0
        %5603 = vmatprep.mubr.f32.mxu0 0.0
        %5604 = vmatmul.mubr.f32.gmra.mxu0 %v5510
        %v5605 = vpop.f32.mrf.mxu0
        %v5606 = vadd.f32 0.0, %v5605
        %v5607 = vpop.f32.mrf.mxu0
        %5608 = vmatprep.mubr.f32.mxu0 0.0
        %5609 = vmatmul.mubr.f32.gmra.mxu0 %v5513
        %v5610 = vpop.f32.mrf.mxu0
        %v5611 = vadd.f32 0.0, %v5610
        %v5612 = vpop.f32.mrf.mxu0
        %5613 = vmatprep.mubr.f32.mxu0 0.0
        %5614 = vmatmul.mubr.f32.gmra.mxu0 %v5516
        %v5615 = vpop.f32.mrf.mxu0
        %v5616 = vadd.f32 0.0, %v5615
        %v5617 = vpop.f32.mrf.mxu0
        %5618 = vmatprep.mubr.f32.mxu0 0.0
        %5619 = vmatmul.mubr.f32.gmra.mxu0 %v5519
        %v5620 = vpop.f32.mrf.mxu0
        %v5621 = vadd.f32 0.0, %v5620
        %v5622 = vpop.f32.mrf.mxu0
        %5623 = vmatprep.mubr.f32.mxu0 0.0
        %5624 = vmatmul.mubr.f32.gmra.mxu0 %v5522
        %v5625 = vpop.f32.mrf.mxu0
        %v5626 = vadd.f32 0.0, %v5625
        %v5627 = vpop.f32.mrf.mxu0
        %5628 = vdwg.mxu0
        %v5629 = vadd.f32 %v5479, %v5591
        %v5630 = vadd.f32 %v5480, %v5596
        %v5631 = vadd.f32 %v5481, %v5601
        %v5632 = vadd.f32 %v5482, %v5606
        %v5633 = vadd.f32 %v5483, %v5611
        %v5634 = vadd.f32 %v5484, %v5616
        %v5635 = vadd.f32 %v5485, %v5621
        %v5636 = vadd.f32 %v5486, %v5626
        %v5637 = vld [vmem:[%s1239 + $0x2] sm:$0xff]
        %v5638 = vld [vmem:[%s1239 + $0x12] sm:$0xff]
        %v5639 = vld [vmem:[%s1239 + $0x22] sm:$0xff]
        %v5640 = vld [vmem:[%s1239 + $0x32] sm:$0xff]
        %v5641 = vld [vmem:[%s1239 + $0x42] sm:$0xff]
        %v5642 = vld [vmem:[%s1239 + $0x52] sm:$0xff]
        %v5643 = vld [vmem:[%s1239 + $0x62] sm:$0xff]
        %v5644 = vld [vmem:[%s1239 + $0x72] sm:$0xff]
        %s5645 = scalar_lea.vmem %s1, 1120
        %v5646 = vld [vmem:[%s5645] sm:$0xff]
        %v5647 = vld [vmem:[%s5645 + $0x8] sm:$0xff]
        %v5648 = vld [vmem:[%s5645 + $0x10] sm:$0xff]
        %v5649 = vld [vmem:[%s5645 + $0x18] sm:$0xff]
        %v5651 = vsel %vm317, %v5637, 0
        %v5654 = vsel %vm317, %v5638, 0
        %v5657 = vsel %vm317, %v5639, 0
        %v5660 = vsel %vm317, %v5640, 0
        %v5663 = vsel %vm317, %v5641, 0
        %v5666 = vsel %vm317, %v5642, 0
        %v5669 = vsel %vm317, %v5643, 0
        %v5672 = vsel %vm317, %v5644, 0
        %5674 = vmatprep.subr.mxu0 0.0
        %5675 = vmatpush1.msra.mxu0 0.0
        %5676 = vmatprep.subr.mxu0 0.0
        %5677 = vmatpush1.msra.mxu0 0.0
        %5678 = vmatprep.subr.mxu0 0.0
        %5679 = vmatpush1.msra.mxu0 0.0
        %5680 = vmatprep.subr.mxu0 0.0
        %5681 = vmatpush1.msra.mxu0 0.0
        %5682 = vmatprep.subr.mxu0 0.0
        %5683 = vmatpush1.msra.mxu0 0.0
        %5684 = vmatprep.subr.mxu0 0.0
        %5685 = vmatpush1.msra.mxu0 0.0
        %5686 = vmatprep.subr.mxu0 0.0
        %5687 = vmatpush1.msra.mxu0 0.0
        %5688 = vmatprep.subr.mxu0 0.0
        %5689 = vmatpush1.msra.mxu0 0.0
        %5690 = vmatprep.subr.mxu0 0.0
        %5691 = vmatpush1.msra.mxu0 0.0
        %5692 = vmatprep.subr.mxu0 0.0
        %5693 = vmatpush1.msra.mxu0 0.0
        %5694 = vmatprep.subr.mxu0 0.0
        %5695 = vmatpush1.msra.mxu0 0.0
        %5696 = vmatprep.subr.mxu0 0.0
        %5697 = vmatpush1.msra.mxu0 0.0
        %5698 = vmatprep.subr.mxu0 0.0
        %5699 = vmatpush1.msra.mxu0 %v5649
        %5700 = vmatprep.subr.mxu0 0.0
        %5701 = vmatpush1.msra.mxu0 %v5648
        %5702 = vmatprep.subr.mxu0 0.0
        %5703 = vmatpush1.msra.mxu0 %v5647
        %5704 = vmatprep.subr.mxu0 0.0
        %5705 = vmatpush1.msra.mxu0 %v5646
        %5706 = vmatprep.subr.mxu0 0.0
        %5707 = vmatpush2.msra.mxu0 0.0
        %5708 = vmatprep.subr.mxu0 0.0
        %5709 = vmatpush2.msra.mxu0 0.0
        %5710 = vmatprep.subr.mxu0 0.0
        %5711 = vmatpush2.msra.mxu0 0.0
        %5712 = vmatprep.subr.mxu0 0.0
        %5713 = vmatpush2.msra.mxu0 0.0
        %5714 = vmatprep.subr.mxu0 0.0
        %5715 = vmatpush2.msra.mxu0 0.0
        %5716 = vmatprep.subr.mxu0 0.0
        %5717 = vmatpush2.msra.mxu0 0.0
        %5718 = vmatprep.subr.mxu0 0.0
        %5719 = vmatpush2.msra.mxu0 0.0
        %5720 = vmatprep.subr.mxu0 0.0
        %5721 = vmatpush2.msra.mxu0 0.0
        %5722 = vmatprep.subr.mxu0 0.0
        %5723 = vmatpush2.msra.mxu0 0.0
        %5724 = vmatprep.subr.mxu0 0.0
        %5725 = vmatpush2.msra.mxu0 0.0
        %5726 = vmatprep.subr.mxu0 0.0
        %5727 = vmatpush2.msra.mxu0 0.0
        %5728 = vmatprep.subr.mxu0 0.0
        %5729 = vmatpush2.msra.mxu0 0.0
        %5730 = vmatprep.subr.mxu0 0.0
        %5731 = vmatpush2.msra.mxu0 0.0
        %5732 = vmatprep.subr.mxu0 0.0
        %5733 = vmatpush2.msra.mxu0 0.0
        %5734 = vmatprep.subr.mxu0 0.0
        %5735 = vmatpush2.msra.mxu0 0.0
        %5736 = vmatprep.subr.mxu0 0.0
        %5737 = vmatpush2.msra.mxu0 0.0
        %5738 = vmatprep.mubr.f32.mxu0 0.0
        %5739 = vmatmul.mubr.f32.gmra.mxu0 %v5651
        %v5740 = vpop.f32.mrf.mxu0
        %v5741 = vadd.f32 0.0, %v5740
        %v5742 = vpop.f32.mrf.mxu0
        %5743 = vmatprep.mubr.f32.mxu0 0.0
        %5744 = vmatmul.mubr.f32.gmra.mxu0 %v5654
        %v5745 = vpop.f32.mrf.mxu0
        %v5746 = vadd.f32 0.0, %v5745
        %v5747 = vpop.f32.mrf.mxu0
        %5748 = vmatprep.mubr.f32.mxu0 0.0
        %5749 = vmatmul.mubr.f32.gmra.mxu0 %v5657
        %v5750 = vpop.f32.mrf.mxu0
        %v5751 = vadd.f32 0.0, %v5750
        %v5752 = vpop.f32.mrf.mxu0
        %5753 = vmatprep.mubr.f32.mxu0 0.0
        %5754 = vmatmul.mubr.f32.gmra.mxu0 %v5660
        %v5755 = vpop.f32.mrf.mxu0
        %v5756 = vadd.f32 0.0, %v5755
        %v5757 = vpop.f32.mrf.mxu0
        %5758 = vmatprep.mubr.f32.mxu0 0.0
        %5759 = vmatmul.mubr.f32.gmra.mxu0 %v5663
        %v5760 = vpop.f32.mrf.mxu0
        %v5761 = vadd.f32 0.0, %v5760
        %v5762 = vpop.f32.mrf.mxu0
        %5763 = vmatprep.mubr.f32.mxu0 0.0
        %5764 = vmatmul.mubr.f32.gmra.mxu0 %v5666
        %v5765 = vpop.f32.mrf.mxu0
        %v5766 = vadd.f32 0.0, %v5765
        %v5767 = vpop.f32.mrf.mxu0
        %5768 = vmatprep.mubr.f32.mxu0 0.0
        %5769 = vmatmul.mubr.f32.gmra.mxu0 %v5669
        %v5770 = vpop.f32.mrf.mxu0
        %v5771 = vadd.f32 0.0, %v5770
        %v5772 = vpop.f32.mrf.mxu0
        %5773 = vmatprep.mubr.f32.mxu0 0.0
        %5774 = vmatmul.mubr.f32.gmra.mxu0 %v5672
        %v5775 = vpop.f32.mrf.mxu0
        %v5776 = vadd.f32 0.0, %v5775
        %v5777 = vpop.f32.mrf.mxu0
        %5778 = vdwg.mxu0
        %v5779 = vadd.f32 %v5629, %v5741
        %v5780 = vadd.f32 %v5630, %v5746
        %v5781 = vadd.f32 %v5631, %v5751
        %v5782 = vadd.f32 %v5632, %v5756
        %v5783 = vadd.f32 %v5633, %v5761
        %v5784 = vadd.f32 %v5634, %v5766
        %v5785 = vadd.f32 %v5635, %v5771
        %v5786 = vadd.f32 %v5636, %v5776
        %s5787 = scalar_lea.vmem %s2, 3
        %v5788 = vld [vmem:[%s5787] sm:$0x1]
        %v5790 = vlaneseq
        %v5791 = vshrl.u32 %v5790, 7
        %v5792 = vsub.s32 0, %v5791
        %v5793 = vrot.slane %v5788, %v5792
        %v5795 = vadd.f32 %v5779, %v5793
        %v5796 = vadd.f32 %v5780, %v5793
        %v5797 = vadd.f32 %v5781, %v5793
        %v5798 = vadd.f32 %v5782, %v5793
        %v5799 = vadd.f32 %v5783, %v5793
        %v5800 = vadd.f32 %v5784, %v5793
        %v5801 = vadd.f32 %v5785, %v5793
        %v5802 = vadd.f32 %v5786, %v5793
        %v5803 = vmax.f32 %v5795, 0.0
        %v5804 = vmax.f32 %v5796, 0.0
        %v5805 = vmax.f32 %v5797, 0.0
        %v5806 = vmax.f32 %v5798, 0.0
        %v5807 = vmax.f32 %v5799, 0.0
        %v5808 = vmax.f32 %v5800, 0.0
        %v5809 = vmax.f32 %v5801, 0.0
        %v5810 = vmax.f32 %v5802, 0.0
        %5811 = vst.msk [vmem:[%s299] sm:$0xff] %vm317, %v5803
        %5812 = vst.msk [vmem:[%s299 + $0x8] sm:$0xff] %vm317, %v5804
        %5813 = vst.msk [vmem:[%s299 + $0x10] sm:$0xff] %vm317, %v5805
        %5814 = vst.msk [vmem:[%s299 + $0x18] sm:$0xff] %vm317, %v5806
        %5815 = vst.msk [vmem:[%s299 + $0x20] sm:$0xff] %vm317, %v5807
        %5816 = vst.msk [vmem:[%s299 + $0x28] sm:$0xff] %vm317, %v5808
        %5817 = vst.msk [vmem:[%s299 + $0x30] sm:$0xff] %vm317, %v5809
        %5818 = vst.msk [vmem:[%s299 + $0x38] sm:$0xff] %vm317, %v5810
        %v5819 = vld [vmem:[%s3] sm:$0xff]
        %v5820 = vld [vmem:[%s3 + $0x8] sm:$0xff]
        %v5821 = vld [vmem:[%s3 + $0x10] sm:$0xff]
        %v5822 = vld [vmem:[%s3 + $0x18] sm:$0xff]
        %v5823 = vld [vmem:[%s4] sm:$0x1]
        %v5825 = vlaneseq
        %v5826 = vshrl.u32 %v5825, 7
        %v5827 = vsub.s32 0, %v5826
        %v5828 = vrot.slane %v5823, %v5827
        %v5831 = vsel %vm317, %v5803, 0
        %v5834 = vsel %vm317, %v5804, 0
        %v5837 = vsel %vm317, %v5805, 0
        %v5840 = vsel %vm317, %v5806, 0
        %v5843 = vsel %vm317, %v5807, 0
        %v5846 = vsel %vm317, %v5808, 0
        %v5849 = vsel %vm317, %v5809, 0
        %v5852 = vsel %vm317, %v5810, 0
        %5854 = vmatprep.subr.mxu0 0.0
        %5855 = vmatpush1.msra.mxu0 0.0
        %5856 = vmatprep.subr.mxu0 0.0
        %5857 = vmatpush1.msra.mxu0 0.0
        %5858 = vmatprep.subr.mxu0 0.0
        %5859 = vmatpush1.msra.mxu0 0.0
        %5860 = vmatprep.subr.mxu0 0.0
        %5861 = vmatpush1.msra.mxu0 0.0
        %5862 = vmatprep.subr.mxu0 0.0
        %5863 = vmatpush1.msra.mxu0 0.0
        %5864 = vmatprep.subr.mxu0 0.0
        %5865 = vmatpush1.msra.mxu0 0.0
        %5866 = vmatprep.subr.mxu0 0.0
        %5867 = vmatpush1.msra.mxu0 0.0
        %5868 = vmatprep.subr.mxu0 0.0
        %5869 = vmatpush1.msra.mxu0 0.0
        %5870 = vmatprep.subr.mxu0 0.0
        %5871 = vmatpush1.msra.mxu0 0.0
        %5872 = vmatprep.subr.mxu0 0.0
        %5873 = vmatpush1.msra.mxu0 0.0
        %5874 = vmatprep.subr.mxu0 0.0
        %5875 = vmatpush1.msra.mxu0 0.0
        %5876 = vmatprep.subr.mxu0 0.0
        %5877 = vmatpush1.msra.mxu0 0.0
        %5878 = vmatprep.subr.mxu0 0.0
        %5879 = vmatpush1.msra.mxu0 %v5822
        %5880 = vmatprep.subr.mxu0 0.0
        %5881 = vmatpush1.msra.mxu0 %v5821
        %5882 = vmatprep.subr.mxu0 0.0
        %5883 = vmatpush1.msra.mxu0 %v5820
        %5884 = vmatprep.subr.mxu0 0.0
        %5885 = vmatpush1.msra.mxu0 %v5819
        %5886 = vmatprep.subr.mxu0 0.0
        %5887 = vmatpush2.msra.mxu0 0.0
        %5888 = vmatprep.subr.mxu0 0.0
        %5889 = vmatpush2.msra.mxu0 0.0
        %5890 = vmatprep.subr.mxu0 0.0
        %5891 = vmatpush2.msra.mxu0 0.0
        %5892 = vmatprep.subr.mxu0 0.0
        %5893 = vmatpush2.msra.mxu0 0.0
        %5894 = vmatprep.subr.mxu0 0.0
        %5895 = vmatpush2.msra.mxu0 0.0
        %5896 = vmatprep.subr.mxu0 0.0
        %5897 = vmatpush2.msra.mxu0 0.0
        %5898 = vmatprep.subr.mxu0 0.0
        %5899 = vmatpush2.msra.mxu0 0.0
        %5900 = vmatprep.subr.mxu0 0.0
        %5901 = vmatpush2.msra.mxu0 0.0
        %5902 = vmatprep.subr.mxu0 0.0
        %5903 = vmatpush2.msra.mxu0 0.0
        %5904 = vmatprep.subr.mxu0 0.0
        %5905 = vmatpush2.msra.mxu0 0.0
        %5906 = vmatprep.subr.mxu0 0.0
        %5907 = vmatpush2.msra.mxu0 0.0
        %5908 = vmatprep.subr.mxu0 0.0
        %5909 = vmatpush2.msra.mxu0 0.0
        %5910 = vmatprep.subr.mxu0 0.0
        %5911 = vmatpush2.msra.mxu0 0.0
        %5912 = vmatprep.subr.mxu0 0.0
        %5913 = vmatpush2.msra.mxu0 0.0
        %5914 = vmatprep.subr.mxu0 0.0
        %5915 = vmatpush2.msra.mxu0 0.0
        %5916 = vmatprep.subr.mxu0 0.0
        %5917 = vmatpush2.msra.mxu0 0.0
        %5918 = vmatprep.mubr.f32.mxu0 0.0
        %5919 = vmatmul.mubr.f32.gmra.mxu0 %v5831
        %v5920 = vpop.f32.mrf.mxu0
        %v5921 = vadd.f32 %v5828, %v5920
        %v5922 = vpop.f32.mrf.mxu0
        %5923 = vmatprep.mubr.f32.mxu0 0.0
        %5924 = vmatmul.mubr.f32.gmra.mxu0 %v5834
        %v5925 = vpop.f32.mrf.mxu0
        %v5926 = vadd.f32 %v5828, %v5925
        %v5927 = vpop.f32.mrf.mxu0
        %5928 = vmatprep.mubr.f32.mxu0 0.0
        %5929 = vmatmul.mubr.f32.gmra.mxu0 %v5837
        %v5930 = vpop.f32.mrf.mxu0
        %v5931 = vadd.f32 %v5828, %v5930
        %v5932 = vpop.f32.mrf.mxu0
        %5933 = vmatprep.mubr.f32.mxu0 0.0
        %5934 = vmatmul.mubr.f32.gmra.mxu0 %v5840
        %v5935 = vpop.f32.mrf.mxu0
        %v5936 = vadd.f32 %v5828, %v5935
        %v5937 = vpop.f32.mrf.mxu0
        %5938 = vmatprep.mubr.f32.mxu0 0.0
        %5939 = vmatmul.mubr.f32.gmra.mxu0 %v5843
        %v5940 = vpop.f32.mrf.mxu0
        %v5941 = vadd.f32 %v5828, %v5940
        %v5942 = vpop.f32.mrf.mxu0
        %5943 = vmatprep.mubr.f32.mxu0 0.0
        %5944 = vmatmul.mubr.f32.gmra.mxu0 %v5846
        %v5945 = vpop.f32.mrf.mxu0
        %v5946 = vadd.f32 %v5828, %v5945
        %v5947 = vpop.f32.mrf.mxu0
        %5948 = vmatprep.mubr.f32.mxu0 0.0
        %5949 = vmatmul.mubr.f32.gmra.mxu0 %v5849
        %v5950 = vpop.f32.mrf.mxu0
        %v5951 = vadd.f32 %v5828, %v5950
        %v5952 = vpop.f32.mrf.mxu0
        %5953 = vmatprep.mubr.f32.mxu0 0.0
        %5954 = vmatmul.mubr.f32.gmra.mxu0 %v5852
        %v5955 = vpop.f32.mrf.mxu0
        %v5956 = vadd.f32 %v5828, %v5955
        %v5957 = vpop.f32.mrf.mxu0
        %5958 = vdwg.mxu0
        %v5959 = vmax.f32 %v5921, 0.0
        %v5960 = vmax.f32 %v5926, 0.0
        %v5961 = vmax.f32 %v5931, 0.0
        %v5962 = vmax.f32 %v5936, 0.0
        %v5963 = vmax.f32 %v5941, 0.0
        %v5964 = vmax.f32 %v5946, 0.0
        %v5965 = vmax.f32 %v5951, 0.0
        %v5966 = vmax.f32 %v5956, 0.0
        %v5967 = vld [vmem:[%s5] sm:$0xff]
        %v5968 = vld [vmem:[%s5 + $0x8] sm:$0xff]
        %v5969 = vld [vmem:[%s5 + $0x10] sm:$0xff]
        %v5970 = vld [vmem:[%s5 + $0x18] sm:$0xff]
        %v5971 = vld [vmem:[%s5 + $0x20] sm:$0xff]
        %v5972 = vld [vmem:[%s5 + $0x28] sm:$0xff]
        %v5973 = vld [vmem:[%s5 + $0x30] sm:$0xff]
        %v5974 = vld [vmem:[%s5 + $0x38] sm:$0xff]
        %v5975 = vld [vmem:[%s5 + $0x40] sm:$0xff]
        %v5976 = vld [vmem:[%s5 + $0x48] sm:$0xff]
        %v5977 = vld [vmem:[%s5 + $0x50] sm:$0xff]
        %v5978 = vld [vmem:[%s5 + $0x58] sm:$0xff]
        %v5979 = vld [vmem:[%s5 + $0x60] sm:$0xff]
        %v5980 = vld [vmem:[%s5 + $0x68] sm:$0xff]
        %v5981 = vld [vmem:[%s5 + $0x70] sm:$0xff]
        %v5982 = vld [vmem:[%s5 + $0x78] sm:$0xff]
        %v5983 = vld [vmem:[%s6] sm:$0x1]
        %v5985 = vlaneseq
        %v5986 = vshrl.u32 %v5985, 7
        %v5987 = vsub.s32 0, %v5986
        %v5988 = vrot.slane %v5983, %v5987
        %5990 = vmatprep.subr.mxu0 0.0
        %5991 = vmatpush1.msra.mxu0 %v5982
        %5992 = vmatprep.subr.mxu0 0.0
        %5993 = vmatpush1.msra.mxu0 %v5981
        %5994 = vmatprep.subr.mxu0 0.0
        %5995 = vmatpush1.msra.mxu0 %v5980
        %5996 = vmatprep.subr.mxu0 0.0
        %5997 = vmatpush1.msra.mxu0 %v5979
        %5998 = vmatprep.subr.mxu0 0.0
        %5999 = vmatpush1.msra.mxu0 %v5978
        %6000 = vmatprep.subr.mxu0 0.0
        %6001 = vmatpush1.msra.mxu0 %v5977
        %6002 = vmatprep.subr.mxu0 0.0
        %6003 = vmatpush1.msra.mxu0 %v5976
        %6004 = vmatprep.subr.mxu0 0.0
        %6005 = vmatpush1.msra.mxu0 %v5975
        %6006 = vmatprep.subr.mxu0 0.0
        %6007 = vmatpush1.msra.mxu0 %v5974
        %6008 = vmatprep.subr.mxu0 0.0
        %6009 = vmatpush1.msra.mxu0 %v5973
        %6010 = vmatprep.subr.mxu0 0.0
        %6011 = vmatpush1.msra.mxu0 %v5972
        %6012 = vmatprep.subr.mxu0 0.0
        %6013 = vmatpush1.msra.mxu0 %v5971
        %6014 = vmatprep.subr.mxu0 0.0
        %6015 = vmatpush1.msra.mxu0 %v5970
        %6016 = vmatprep.subr.mxu0 0.0
        %6017 = vmatpush1.msra.mxu0 %v5969
        %6018 = vmatprep.subr.mxu0 0.0
        %6019 = vmatpush1.msra.mxu0 %v5968
        %6020 = vmatprep.subr.mxu0 0.0
        %6021 = vmatpush1.msra.mxu0 %v5967
        %6022 = vmatprep.subr.mxu0 0.0
        %6023 = vmatpush2.msra.mxu0 0.0
        %6024 = vmatprep.subr.mxu0 0.0
        %6025 = vmatpush2.msra.mxu0 0.0
        %6026 = vmatprep.subr.mxu0 0.0
        %6027 = vmatpush2.msra.mxu0 0.0
        %6028 = vmatprep.subr.mxu0 0.0
        %6029 = vmatpush2.msra.mxu0 0.0
        %6030 = vmatprep.subr.mxu0 0.0
        %6031 = vmatpush2.msra.mxu0 0.0
        %6032 = vmatprep.subr.mxu0 0.0
        %6033 = vmatpush2.msra.mxu0 0.0
        %6034 = vmatprep.subr.mxu0 0.0
        %6035 = vmatpush2.msra.mxu0 0.0
        %6036 = vmatprep.subr.mxu0 0.0
        %6037 = vmatpush2.msra.mxu0 0.0
        %6038 = vmatprep.subr.mxu0 0.0
        %6039 = vmatpush2.msra.mxu0 0.0
        %6040 = vmatprep.subr.mxu0 0.0
        %6041 = vmatpush2.msra.mxu0 0.0
        %6042 = vmatprep.subr.mxu0 0.0
        %6043 = vmatpush2.msra.mxu0 0.0
        %6044 = vmatprep.subr.mxu0 0.0
        %6045 = vmatpush2.msra.mxu0 0.0
        %6046 = vmatprep.subr.mxu0 0.0
        %6047 = vmatpush2.msra.mxu0 0.0
        %6048 = vmatprep.subr.mxu0 0.0
        %6049 = vmatpush2.msra.mxu0 0.0
        %6050 = vmatprep.subr.mxu0 0.0
        %6051 = vmatpush2.msra.mxu0 0.0
        %6052 = vmatprep.subr.mxu0 0.0
        %6053 = vmatpush2.msra.mxu0 0.0
        %6054 = vmatprep.mubr.f32.mxu0 0.0
        %6055 = vmatmul.mubr.f32.gmra.mxu0 %v5959
        %v6056 = vpop.f32.mrf.mxu0
        %v6057 = vadd.f32 %v5988, %v6056
        %v6058 = vpop.f32.mrf.mxu0
        %6059 = vmatprep.mubr.f32.mxu0 0.0
        %6060 = vmatmul.mubr.f32.gmra.mxu0 %v5960
        %v6061 = vpop.f32.mrf.mxu0
        %v6062 = vadd.f32 %v5988, %v6061
        %v6063 = vpop.f32.mrf.mxu0
        %6064 = vmatprep.mubr.f32.mxu0 0.0
        %6065 = vmatmul.mubr.f32.gmra.mxu0 %v5961
        %v6066 = vpop.f32.mrf.mxu0
        %v6067 = vadd.f32 %v5988, %v6066
        %v6068 = vpop.f32.mrf.mxu0
        %6069 = vmatprep.mubr.f32.mxu0 0.0
        %6070 = vmatmul.mubr.f32.gmra.mxu0 %v5962
        %v6071 = vpop.f32.mrf.mxu0
        %v6072 = vadd.f32 %v5988, %v6071
        %v6073 = vpop.f32.mrf.mxu0
        %6074 = vmatprep.mubr.f32.mxu0 0.0
        %6075 = vmatmul.mubr.f32.gmra.mxu0 %v5963
        %v6076 = vpop.f32.mrf.mxu0
        %v6077 = vadd.f32 %v5988, %v6076
        %v6078 = vpop.f32.mrf.mxu0
        %6079 = vmatprep.mubr.f32.mxu0 0.0
        %6080 = vmatmul.mubr.f32.gmra.mxu0 %v5964
        %v6081 = vpop.f32.mrf.mxu0
        %v6082 = vadd.f32 %v5988, %v6081
        %v6083 = vpop.f32.mrf.mxu0
        %6084 = vmatprep.mubr.f32.mxu0 0.0
        %6085 = vmatmul.mubr.f32.gmra.mxu0 %v5965
        %v6086 = vpop.f32.mrf.mxu0
        %v6087 = vadd.f32 %v5988, %v6086
        %v6088 = vpop.f32.mrf.mxu0
        %6089 = vmatprep.mubr.f32.mxu0 0.0
        %6090 = vmatmul.mubr.f32.gmra.mxu0 %v5966
        %v6091 = vpop.f32.mrf.mxu0
        %v6092 = vadd.f32 %v5988, %v6091
        %v6093 = vpop.f32.mrf.mxu0
        %6094 = vdwg.mxu0
        %6095 = vst [vmem:[%s316] sm:$0xff] %v6057
        %6096 = vst [vmem:[%s316 + $0x8] sm:$0xff] %v6062
        %6097 = vst [vmem:[%s316 + $0x10] sm:$0xff] %v6067
        %6098 = vst [vmem:[%s316 + $0x18] sm:$0xff] %v6072
        %6099 = vst [vmem:[%s316 + $0x20] sm:$0xff] %v6077
        %6100 = vst [vmem:[%s316 + $0x28] sm:$0xff] %v6082
        %6101 = vst [vmem:[%s316 + $0x30] sm:$0xff] %v6087
        %6102 = vst [vmem:[%s316 + $0x38] sm:$0xff] %v6092
        %s6103 = sand.u32 %s183, 1
        %s6104 = scalar_lea.sflag [#allocation4], %s6103
        %s6105 = sand.u32 %s183, 1
        %s6106 = smul.addr %s6105, 64
        %s6107 = scalar_lea.vmem [#allocation3], %s6106
        %p6108 = scmp.lt.s32.totalorder %s23, 3
        %s6109 = scalar_select %p6108, %s23, 3
        %s6110 = smul.addr %s6109, 8
        %s6111 = smul.addr %s6110, 8
        %s6112 = scalar_lea.vmem %s8, %s6111
        // Predicated region
        $region49: #{roi_ke_head_forward.1} parent=47 // pred_check
          %p6113 = pneg %p193
        $region50: #{roi_ke_head_forward.1} parent=47 // pred_check_branch
          %6115 = sbr.rel (%p6113) target = $region52
        $region51: #{roi_ke_head_forward.1} parent=47 // pred_region
          %s6117 = ssub.s32 1024, 1024
          %6118 = vsyncadd %s6104, %s6117
          %s6119 = smul.addr %s23, 8
          %s6120 = smul.addr %s6119, 128
          %s6121 = scalar_lea.hbm %s7, %s6120
          %s6122 = sshll.u32 %s6107, 4
          %s6123 = int_to_ptr.vmem [resolvable:$true] %s6122
          %6128 = dma.vmem_to_hbm [thread:$0]  %s6123, 1024, %s6121, %s6104, 128, 128, 8
        $region52: #{roi_ke_head_forward.1} parent=47 // pred_fallthru
          _
        // Predicated region
        $region53: #{roi_ke_head_forward.1} parent=47 // pred_check
          %p6129 = pneg %p219
        $region54: #{roi_ke_head_forward.1} parent=47 // pred_check_branch
          %6131 = sbr.rel (%p6129) target = $region56
        $region55: #{roi_ke_head_forward.1} parent=47 // pred_region
          _
        $region56: #{roi_ke_head_forward.1} parent=47 // pred_fallthru
          _
      $region48: #{roi_ke_head_forward.1} parent=5 // pred_fallthru
        _
      %p6132 = scmp.le.s32.totalorder 2, %s18
      // Predicated region
      $region57: #{roi_ke_head_forward.1} parent=5 // pred_check
        %p6133 = pneg %p6132
      $region58: #{roi_ke_head_forward.1} parent=5 // pred_check_branch
        %6135 = sbr.rel (%p6133) target = $region60
      $region59: #{roi_ke_head_forward.1} parent=5 // pred_region
        %s6136 = ssub.s32 %s18, 2
        // Predicated region
        $region61: #{roi_ke_head_forward.1} parent=59 // pred_check
          %p6137 = pneg %p199
        $region62: #{roi_ke_head_forward.1} parent=59 // pred_check_branch
          %6139 = sbr.rel (%p6137) target = $region64
        $region63: #{roi_ke_head_forward.1} parent=59 // pred_region
          %s6140 = sand.u32 %s184, 1
          %s6141 = scalar_lea.sflag [#allocation4], %s6140
          %s6142 = sand.u32 %s184, 1
          %s6143 = smul.addr %s6142, 64
          %s6144 = scalar_lea.vmem [#allocation3], %s6143
          %6145 = dma.done %s6141, 1024
        $region64: #{roi_ke_head_forward.1} parent=59 // pred_fallthru
          _
        // Predicated region
        $region65: #{roi_ke_head_forward.1} parent=59 // pred_check
          %p6146 = pneg %p225
        $region66: #{roi_ke_head_forward.1} parent=59 // pred_check_branch
          %6148 = sbr.rel (%p6146) target = $region68
        $region67: #{roi_ke_head_forward.1} parent=59 // pred_region
          %p6149 = scmp.lt.s32.totalorder %s24, 3
          %s6150 = scalar_select %p6149, %s24, 3
          %s6151 = smul.addr %s6150, 8
          %s6152 = smul.addr %s6151, 8
          %s6153 = scalar_lea.vmem %s8, %s6152
        $region68: #{roi_ke_head_forward.1} parent=59 // pred_fallthru
          _
      $region60: #{roi_ke_head_forward.1} parent=5 // pred_fallthru
        _
    $region6: #{roi_ke_head_forward.1} parent=1 // loop_footer
      %s22 = sadd.s32 1, %s18
    $region7: #{roi_ke_head_forward.1} parent=1 // loop_footer_branch
      %17 = sbr.rel target = $region3
    $region8: #{roi_ke_head_forward.1} parent=1 // loop_exit
      _
    %6154 = vsyncpa [#allocation4], 1
    %s6155 = scalar_lea.sflag [#allocation4], 1
    %6156 = vsyncpa %s6155, 1

</llo_original>
